<compile_context>
chip_gen: v6e
topology: v6e:2x2x1
jax: 0.10.0
libtpu: 0.0.40
codegen_flags: <defaults>
</compile_context>

<pallas_src>
import math

import jax
import jax.numpy as jnp
from jax.experimental import pallas as pl
from jax.experimental.pallas import tpu as pltpu

# ---------------- config (small synthetic CLIP) ----------------
B = 2              # image batch
C_IN = 3           # image channels (NCHW)
IMG = 16           # image H = W
PATCH = 4          # ViT patch size
GRID = IMG // PATCH          # 4
N_PATCH = GRID * GRID        # 16 patches
KP = C_IN * PATCH * PATCH    # 48 flattened patch size
WIDTH = 32         # transformer width
N_HEADS = 2
HD = WIDTH // N_HEADS        # 16
MLP_HIDDEN = 4 * WIDTH       # 128
FFN_NUM = 64                 # adapter bottleneck (design_details['ffn_num'] = 64)
MLP_FUSED = MLP_HIDDEN + FFN_NUM   # 192 fused MLP+adapter hidden width
ADAPTER_SCALE = 0.1  # TODO(synk): exact adapter placement/scale of clip_loader unavailable; standard residual adapter used.
LAYERS = 2
EMBED_DIM = 32
VOCAB = 64
CONTEXT = 16
N_CLASSES = 3
N_TOK_IMG = N_PATCH + 1      # 17 tokens (cls + patches)
S_IMG_PAD = 24               # image tokens padded to a multiple of 8 sublanes
ROWS_IMG = B * S_IMG_PAD     # 48
ROWS_TXT = N_CLASSES * CONTEXT  # 48


# ---------------- in-kernel helpers ----------------

def _ln(x, g, b, eps=1e-5):
    """Row-wise layernorm over the last (lane) axis, f32."""
    mu = jnp.mean(x, axis=-1, keepdims=True)
    xc = x - mu
    var = jnp.mean(xc * xc, axis=-1, keepdims=True)
    return xc * jax.lax.rsqrt(var + eps) * g + b


# ---------------- single fused kernel ----------------

def _adapter_clip_kernel(
    pat_ref, patw_ref, scat_ref, base_ref, lpre_g_ref, lpre_b_ref,
    tok_ref, emb_ref, ptxt_ref, imask_ref, tmask_ref,
    ln1g_ref, ln1b_ref, qkvw_ref, qkvb_ref, wow_ref, wob_ref,
    ln2g_ref, ln2b_ref, miw_ref, mib_ref, mow_ref, mob_ref,
    lnp_g_ref, lnp_b_ref, lnf_g_ref, lnf_b_ref,
    wimg_ref, wtxt_ref, selimg_ref, seltxt_ref, ls_ref,
    probs_ref, imf_ref, txf_ref,
):
    f32, bf16 = jnp.float32, jnp.bfloat16

    # ---- image tower embed: patch matmul (real rows only) + scatter + cls/pos + ln_pre
    pe = jnp.dot(pat_ref[...].astype(bf16), patw_ref[...],
                 preferred_element_type=f32)                         # (B*N_PATCH, W)
    x = jnp.dot(scat_ref[...], pe.astype(bf16),
                preferred_element_type=f32)                          # scatter to token slab
    x = x.reshape(B, S_IMG_PAD, WIDTH) + base_ref[...][None]         # cls/pos add
    x_img = _ln(x.reshape(ROWS_IMG, WIDTH), lpre_g_ref[...], lpre_b_ref[...])

    # ---- text tower embed: one-hot @ embedding table + positional
    lane = jax.lax.broadcasted_iota(jnp.int32, (ROWS_TXT, VOCAB), 1)
    onehot = (lane == tok_ref[...]).astype(bf16)
    xt = jnp.dot(onehot, emb_ref[...], preferred_element_type=f32)
    x_txt = (xt.reshape(N_CLASSES, CONTEXT, WIDTH)
             + ptxt_ref[...][None]).reshape(ROWS_TXT, WIDTH)

    # ---- fused residual block (attention + merged MLP/adapter), all VMEM-resident
    def block(x, mask, nb, seq, tw, l):
        # attention branch: x = x + Wo(MHA(LN1(x)))
        y = _ln(x, ln1g_ref[tw, l], ln1b_ref[tw, l])
        qkv = jnp.dot(y.astype(bf16), qkvw_ref[tw, l],
                      preferred_element_type=f32) + qkvb_ref[tw, l]  # (rows, 3W)
        qkv = qkv.reshape(nb, seq, 3 * WIDTH)

        def split_heads(off):   # heads stacked into the batch dim: (heads*nb, seq, hd)
            return jnp.concatenate(
                [qkv[:, :, off + h * HD: off + (h + 1) * HD] for h in range(N_HEADS)],
                axis=0).astype(bf16)

        qh = split_heads(0)
        kh = split_heads(WIDTH)
        vh = split_heads(2 * WIDTH)
        s = jnp.einsum('bqd,bkd->bqk', qh, kh,
                       preferred_element_type=f32) * (1.0 / math.sqrt(HD))
        s = s + mask[None]
        s = s - jnp.max(s, axis=-1, keepdims=True)
        p = jnp.exp(s)
        p = p * pl.reciprocal(jnp.sum(p, axis=-1, keepdims=True), approx=True)
        o = jnp.einsum('bqk,bkd->bqd', p.astype(bf16), vh,
                       preferred_element_type=f32)                   # (heads*nb, seq, hd)
        o = jnp.concatenate([o[h * nb:(h + 1) * nb] for h in range(N_HEADS)],
                            axis=-1).reshape(nb * seq, WIDTH)        # merge heads -> (rows, W)
        x = x + jnp.dot(o.astype(bf16), wow_ref[tw, l],
                        preferred_element_type=f32) + wob_ref[tw, l]

        # MLP + adapter branch (merged): x = x + MLP(LN2(x)) + scale * Adapter(LN2(x))
        z = _ln(x, ln2g_ref[tw, l], ln2b_ref[tw, l])
        hmid = jnp.dot(z.astype(bf16), miw_ref[tw, l],
                       preferred_element_type=f32) + mib_ref[tw, l]  # (rows, 192)
        lane2 = jax.lax.broadcasted_iota(jnp.int32, hmid.shape, 1)
        act = jnp.where(lane2 < MLP_HIDDEN,
                        hmid * jax.nn.sigmoid(1.702 * hmid),         # QuickGELU lanes
                        jnp.maximum(hmid, 0.0))                      # adapter ReLU lanes
        return x + jnp.dot(act.astype(bf16), mow_ref[tw, l],
                           preferred_element_type=f32) + mob_ref[tw, l]

    imask = imask_ref[...]
    tmask = tmask_ref[...]
    for l in range(LAYERS):                      # image tower (tw = 0)
        x_img = block(x_img, imask, B, S_IMG_PAD, 0, l)
    for l in range(LAYERS):                      # text tower (tw = 1)
        x_txt = block(x_txt, tmask, N_CLASSES, CONTEXT, 1, l)

    # ---- head: cls/EOT selection, ln_post/ln_final, joint proj, normalize, softmax
    cls = jnp.dot(selimg_ref[...], x_img, preferred_element_type=f32)
    cls = _ln(cls, lnp_g_ref[...], lnp_b_ref[...])
    img_f = jnp.dot(cls.astype(bf16), wimg_ref[...], preferred_element_type=f32)

    eot = jnp.dot(seltxt_ref[...], x_txt, preferred_element_type=f32)
    eot = _ln(eot, lnf_g_ref[...], lnf_b_ref[...])
    txt_f = jnp.dot(eot.astype(bf16), wtxt_ref[...], preferred_element_type=f32)

    img_n = img_f * jax.lax.rsqrt(jnp.sum(img_f * img_f, -1, keepdims=True) + 1e-12)
    txt_n = txt_f * jax.lax.rsqrt(jnp.sum(txt_f * txt_f, -1, keepdims=True) + 1e-12)

    lscale = jnp.exp(jnp.minimum(ls_ref[...], math.log(100.0)))      # CLIP logit_scale clamp
    logits = lscale * jax.lax.dot_general(img_n, txt_n, (((1,), (1,)), ((), ())),
                                          preferred_element_type=f32)
    logits = logits - jnp.max(logits, axis=-1, keepdims=True)
    e = jnp.exp(logits)
    probs_ref[...] = e / jnp.sum(e, axis=-1, keepdims=True)          # exact: rows sum to 1
    imf_ref[...] = img_n
    txf_ref[...] = txt_n


# ---------------- host-side weight packing & wrapper ----------------

def _pack_tower(blocks):
    """Stack per-layer block params along a leading LAYERS axis; fuse MLP+adapter."""
    def stk(fn):
        return jnp.stack([fn(blk) for blk in blocks])
    return {
        "ln1g": stk(lambda b: b["ln1"]["g"].reshape(1, WIDTH)),
        "ln1b": stk(lambda b: b["ln1"]["b"].reshape(1, WIDTH)),
        "qkvw": stk(lambda b: b["qkv"]["w"]),
        "qkvb": stk(lambda b: b["qkv"]["b"].reshape(1, 3 * WIDTH)),
        "wow": stk(lambda b: b["wo"]["w"]),
        "wob": stk(lambda b: b["wo"]["b"].reshape(1, WIDTH)),
        "ln2g": stk(lambda b: b["ln2"]["g"].reshape(1, WIDTH)),
        "ln2b": stk(lambda b: b["ln2"]["b"].reshape(1, WIDTH)),
        # fused MLP-in:  z @ [fc | ad_down]     (WIDTH, 192)
        "miw": stk(lambda b: jnp.concatenate([b["fc"]["w"], b["ad_down"]["w"]], axis=1)),
        "mib": stk(lambda b: jnp.concatenate(
            [b["fc"]["b"], b["ad_down"]["b"]]).reshape(1, MLP_FUSED)),
        # fused MLP-out: [gelu | relu] @ [proj ; scale*ad_up]   (192, WIDTH), scale folded
        "mow": stk(lambda b: jnp.concatenate(
            [b["proj"]["w"], ADAPTER_SCALE * b["ad_up"]["w"]], axis=0)),
        "mob": stk(lambda b: (b["proj"]["b"]
                              + ADAPTER_SCALE * b["ad_up"]["b"]).reshape(1, WIDTH)),
    }


def adapter_clip_forward(params, image, text_tokens):
    # ---- image patches: non-overlapping (c,i,j) flatten order matches Conv2d weights
    patches = image.reshape(B, C_IN, GRID, PATCH, GRID, PATCH)
    patches = patches.transpose(0, 2, 4, 1, 3, 5).reshape(B * N_PATCH, KP)

    # constant scatter selector: token row (b,t) <- patch row b*N_PATCH + (t-1), 1<=t<=N_PATCH
    rt = jnp.arange(ROWS_IMG) % S_IMG_PAD
    rb = jnp.arange(ROWS_IMG) // S_IMG_PAD
    col = jnp.arange(B * N_PATCH)
    scat = ((rt[:, None] >= 1) & (rt[:, None] <= N_PATCH)
            & (col[None, :] == rb[:, None] * N_PATCH + rt[:, None] - 1)
            ).astype(jnp.bfloat16)

    # base token slab: row 0 = cls+pos0, rows 1..16 = pos, rows 17..23 = 0 (padding)
    base = jnp.zeros((S_IMG_PAD, WIDTH), jnp.float32)
    base = base.at[0].set(params["cls"] + params["pos_img"][0])
    base = base.at[1:N_TOK_IMG].set(params["pos_img"][1:])

    img_mask = jnp.broadcast_to(
        jnp.where(jnp.arange(S_IMG_PAD)[None, :] >= N_TOK_IMG, -1e9, 0.0),
        (S_IMG_PAD, S_IMG_PAD)).astype(jnp.float32)
    txt_mask = jnp.where(jnp.triu(jnp.ones((CONTEXT, CONTEXT), jnp.bool_), k=1),
                         -1e9, 0.0).astype(jnp.float32)

    sel_img = jax.nn.one_hot(jnp.arange(B) * S_IMG_PAD, ROWS_IMG, dtype=jnp.float32)
    eot_idx = jnp.argmax(text_tokens, axis=-1)   # EOT = highest id (as in real CLIP)
    sel_txt = jax.nn.one_hot(jnp.arange(N_CLASSES) * CONTEXT + eot_idx, ROWS_TXT,
                             dtype=jnp.float32)

    ti = _pack_tower(params["img_blocks"])
    tt = _pack_tower(params["txt_blocks"])

    def two(name, dtype=None):   # stack towers -> (2, LAYERS, ...); weights pre-cast bf16
        a = jnp.stack([ti[name], tt[name]])
        return a.astype(dtype) if dtype is not None else a

    bf16 = jnp.bfloat16
    args = (
        patches, params["patch_w"].astype(bf16), scat, base,
        params["ln_pre"]["g"].reshape(1, WIDTH), params["ln_pre"]["b"].reshape(1, WIDTH),
        text_tokens.reshape(ROWS_TXT, 1).astype(jnp.int32),
        params["tok_emb"].astype(bf16), params["pos_txt"],
        img_mask, txt_mask,
        two("ln1g"), two("ln1b"), two("qkvw", bf16), two("qkvb"),
        two("wow", bf16), two("wob"), two("ln2g"), two("ln2b"),
        two("miw", bf16), two("mib"), two("mow", bf16), two("mob"),
        params["ln_post"]["g"].reshape(1, WIDTH), params["ln_post"]["b"].reshape(1, WIDTH),
        params["ln_final"]["g"].reshape(1, WIDTH), params["ln_final"]["b"].reshape(1, WIDTH),
        params["img_proj"].astype(bf16), params["txt_proj"].astype(bf16),
        sel_img, sel_txt, params["logit_scale"],
    )

    vmem = pl.BlockSpec(memory_space=pltpu.MemorySpace.VMEM)
    probs, img_n, txt_n = pl.pallas_call(
        _adapter_clip_kernel,
        out_shape=(
            jax.ShapeDtypeStruct((B, N_CLASSES), jnp.float32),
            jax.ShapeDtypeStruct((B, EMBED_DIM), jnp.float32),
            jax.ShapeDtypeStruct((N_CLASSES, EMBED_DIM), jnp.float32),
        ),
        in_specs=[vmem] * len(args),
        out_specs=(vmem, vmem, vmem),
        cost_estimate=pl.CostEstimate(flops=7_500_000, transcendentals=60_000,
                                      bytes_accessed=250_000),
    )(*args)
    # matches: probs = logits_per_image.softmax(-1); features returned L2-normalized
    return probs, img_n, txt_n


# ---------------- deterministic parameter init ----------------

def init_params(key):
    keys = iter(jax.random.split(key, 256))

    def nrm(shape, std=0.02):
        return jax.random.normal(next(keys), shape, jnp.float32) * std

    def lin(din, dout, std=0.02):
        return {"w": nrm((din, dout), std), "b": jnp.zeros((dout,), jnp.float32)}

    def ln_p(d):
        return {"g": jnp.ones((d,), jnp.float32), "b": jnp.zeros((d,), jnp.float32)}

    def block():
        return {
            "ln1": ln_p(WIDTH), "ln2": ln_p(WIDTH),
            "qkv": lin(WIDTH, 3 * WIDTH),          # fused Q/K/V projection
            "wo": lin(WIDTH, WIDTH),
            "fc": lin(WIDTH, MLP_HIDDEN), "proj": lin(MLP_HIDDEN, WIDTH),
            "ad_down": lin(WIDTH, FFN_NUM), "ad_up": lin(FFN_NUM, WIDTH),
        }

    return {
        "patch_w": nrm((KP, WIDTH)),
        "cls": nrm((WIDTH,)),
        "pos_img": nrm((N_TOK_IMG, WIDTH), 0.01),
        "ln_pre": ln_p(WIDTH),
        "img_blocks": [block() for _ in range(LAYERS)],
        "ln_post": ln_p(WIDTH),
        "img_proj": nrm((WIDTH, EMBED_DIM)),
        "tok_emb": nrm((VOCAB, WIDTH)),
        "pos_txt": nrm((CONTEXT, WIDTH), 0.01),
        "txt_blocks": [block() for _ in range(LAYERS)],
        "ln_final": ln_p(WIDTH),
        "txt_proj": nrm((WIDTH, EMBED_DIM)),
        "logit_scale": jnp.full((1, 1), math.log(1.0 / 0.07), jnp.float32),
    }


def make_text_tokens():
    # mirrors labels_tokenize: [SOT] + body + [EOT] + zero padding
    # TODO(synk): real BPE tokenization of 'a bad photo of a {}.' is host-side string
    # processing with no Pallas equivalent; synthetic token ids are used instead.
    sot, eot = VOCAB - 2, VOCAB - 1
    lengths = [5, 7, 6]
    rows = []
    for i, L in enumerate(lengths):
        body = [((7 * i + 3 * j) % (sot - 1)) + 1 for j in range(L)]
        row = [sot] + body + [eot]
        row = row + [0] * (CONTEXT - len(row))
        rows.append(row[:CONTEXT])
    return jnp.array(rows, dtype=jnp.int32)


if __name__ == "__main__":
    key = jax.random.PRNGKey(0)
    k_param, k_img = jax.random.split(key)
    params = init_params(k_param)
    image = jax.random.normal(k_img, (B, C_IN, IMG, IMG), jnp.float32)   # NCHW
    text_tokens = make_text_tokens()                                     # (N_CLASSES, CONTEXT)

    fwd = jax.jit(adapter_clip_forward)
    probs, image_features, text_features = fwd(params, image, text_tokens)
    jax.block_until_ready((probs, image_features, text_features))

    assert probs.shape == (B, N_CLASSES)
    assert image_features.shape == (B, EMBED_DIM)
    assert text_features.shape == (N_CLASSES, EMBED_DIM)
    assert bool(jnp.all(jnp.isfinite(probs)))
    assert bool(jnp.allclose(jnp.sum(probs, axis=-1), 1.0, atol=1e-5))
    print("KERNEL_OK")
</pallas_src>

<mosaic_0001>
module attributes {stable_mosaic.version = 11 : i64} {
  func.func @_adapter_clip_kernel(%arg0: memref<32x48xf32, #tpu.memory_space<vmem>>, %arg1: memref<48x32xbf16, #tpu.memory_space<vmem>>, %arg2: memref<48x32xbf16, #tpu.memory_space<vmem>>, %arg3: memref<24x32xf32, #tpu.memory_space<vmem>>, %arg4: memref<1x32xf32, #tpu.memory_space<vmem>>, %arg5: memref<1x32xf32, #tpu.memory_space<vmem>>, %arg6: memref<48x1xi32, #tpu.memory_space<vmem>>, %arg7: memref<64x32xbf16, #tpu.memory_space<vmem>>, %arg8: memref<16x32xf32, #tpu.memory_space<vmem>>, %arg9: memref<24x24xf32, #tpu.memory_space<vmem>>, %arg10: memref<16x16xf32, #tpu.memory_space<vmem>>, %arg11: memref<2x2x1x32xf32, #tpu.memory_space<vmem>>, %arg12: memref<2x2x1x32xf32, #tpu.memory_space<vmem>>, %arg13: memref<2x2x32x96xbf16, #tpu.memory_space<vmem>>, %arg14: memref<2x2x1x96xf32, #tpu.memory_space<vmem>>, %arg15: memref<2x2x32x32xbf16, #tpu.memory_space<vmem>>, %arg16: memref<2x2x1x32xf32, #tpu.memory_space<vmem>>, %arg17: memref<2x2x1x32xf32, #tpu.memory_space<vmem>>, %arg18: memref<2x2x1x32xf32, #tpu.memory_space<vmem>>, %arg19: memref<2x2x32x192xbf16, #tpu.memory_space<vmem>>, %arg20: memref<2x2x1x192xf32, #tpu.memory_space<vmem>>, %arg21: memref<2x2x192x32xbf16, #tpu.memory_space<vmem>>, %arg22: memref<2x2x1x32xf32, #tpu.memory_space<vmem>>, %arg23: memref<1x32xf32, #tpu.memory_space<vmem>>, %arg24: memref<1x32xf32, #tpu.memory_space<vmem>>, %arg25: memref<1x32xf32, #tpu.memory_space<vmem>>, %arg26: memref<1x32xf32, #tpu.memory_space<vmem>>, %arg27: memref<32x32xbf16, #tpu.memory_space<vmem>>, %arg28: memref<32x32xbf16, #tpu.memory_space<vmem>>, %arg29: memref<2x48xf32, #tpu.memory_space<vmem>>, %arg30: memref<3x48xf32, #tpu.memory_space<vmem>>, %arg31: memref<1x1xf32, #tpu.memory_space<vmem>>, %arg32: memref<2x3xf32, #tpu.memory_space<vmem>>, %arg33: memref<2x32xf32, #tpu.memory_space<vmem>>, %arg34: memref<3x32xf32, #tpu.memory_space<vmem>>) attributes {dimension_semantics = [], scalar_prefetch = 0 : i64, scratch_operands = 0 : i64, tpu.core_type = #tpu.core_type<tc>} {
    %c0 = arith.constant 0 : index
    %c0_0 = arith.constant 0 : index
    %0 = vector.load %arg0[%c0, %c0_0] : memref<32x48xf32, #tpu.memory_space<vmem>>, vector<32x48xf32>
    %1 = arith.truncf %0 : vector<32x48xf32> to vector<32x48xbf16>
    %c0_1 = arith.constant 0 : index
    %c0_2 = arith.constant 0 : index
    %2 = vector.load %arg1[%c0_1, %c0_2] : memref<48x32xbf16, #tpu.memory_space<vmem>>, vector<48x32xbf16>
    %cst = arith.constant dense<0.000000e+00> : vector<32x32xf32>
    %3 = tpu.matmul %1, %2, %cst {dimension_numbers = #tpu.dot_dimension_numbers<[1], [0], [0], [1], [0, 0, 1, 1], [], []>} : vector<32x48xbf16>, vector<48x32xbf16>, vector<32x32xf32> -> vector<32x32xf32>
    %c0_3 = arith.constant 0 : index
    %c0_4 = arith.constant 0 : index
    %4 = vector.load %arg2[%c0_3, %c0_4] : memref<48x32xbf16, #tpu.memory_space<vmem>>, vector<48x32xbf16>
    %5 = arith.truncf %3 : vector<32x32xf32> to vector<32x32xbf16>
    %cst_5 = arith.constant dense<0.000000e+00> : vector<48x32xf32>
    %6 = tpu.matmul %4, %5, %cst_5 {dimension_numbers = #tpu.dot_dimension_numbers<[1], [0], [0], [1], [0, 0, 1, 1], [], []>} : vector<48x32xbf16>, vector<32x32xbf16>, vector<48x32xf32> -> vector<48x32xf32>
    %7 = vector.shape_cast %6 : vector<48x32xf32> to vector<2x24x32xf32>
    %c0_6 = arith.constant 0 : index
    %c0_7 = arith.constant 0 : index
    %8 = vector.load %arg3[%c0_6, %c0_7] : memref<24x32xf32, #tpu.memory_space<vmem>>, vector<24x32xf32>
    %9 = vector.shape_cast %8 : vector<24x32xf32> to vector<1x24x32xf32>
    %10 = vector.broadcast %9 : vector<1x24x32xf32> to vector<2x24x32xf32>
    %11 = arith.addf %7, %10 : vector<2x24x32xf32>
    %12 = vector.shape_cast %11 : vector<2x24x32xf32> to vector<48x32xf32>
    %c0_8 = arith.constant 0 : index
    %c0_9 = arith.constant 0 : index
    %13 = vector.load %arg4[%c0_8, %c0_9] : memref<1x32xf32, #tpu.memory_space<vmem>>, vector<1x32xf32>
    %c0_10 = arith.constant 0 : index
    %c0_11 = arith.constant 0 : index
    %14 = vector.load %arg5[%c0_10, %c0_11] : memref<1x32xf32, #tpu.memory_space<vmem>>, vector<1x32xf32>
    %cst_12 = arith.constant dense<0.000000e+00> : vector<48xf32>
    %15 = vector.multi_reduction <add>, %12, %cst_12 [1] : vector<48x32xf32> to vector<48xf32>
    %16 = vector.shape_cast %15 : vector<48xf32> to vector<48x1xf32>
    %cst_13 = arith.constant 3.200000e+01 : f32
    %17 = vector.broadcast %cst_13 : f32 to vector<48x1xf32>
    %18 = arith.divf %16, %17 : vector<48x1xf32>
    %19 = vector.broadcast %18 : vector<48x1xf32> to vector<48x32xf32>
    %20 = arith.subf %12, %19 : vector<48x32xf32>
    %21 = arith.mulf %20, %20 : vector<48x32xf32>
    %cst_14 = arith.constant dense<0.000000e+00> : vector<48xf32>
    %22 = vector.multi_reduction <add>, %21, %cst_14 [1] : vector<48x32xf32> to vector<48xf32>
    %23 = vector.shape_cast %22 : vector<48xf32> to vector<48x1xf32>
    %cst_15 = arith.constant 3.200000e+01 : f32
    %24 = vector.broadcast %cst_15 : f32 to vector<48x1xf32>
    %25 = arith.divf %23, %24 : vector<48x1xf32>
    %cst_16 = arith.constant 9.99999974E-6 : f32
    %26 = vector.broadcast %cst_16 : f32 to vector<48x1xf32>
    %27 = arith.addf %25, %26 : vector<48x1xf32>
    %28 = math.rsqrt %27 : vector<48x1xf32>
    %29 = vector.broadcast %28 : vector<48x1xf32> to vector<48x32xf32>
    %30 = arith.mulf %20, %29 : vector<48x32xf32>
    %31 = vector.broadcast %13 : vector<1x32xf32> to vector<48x32xf32>
    %32 = arith.mulf %30, %31 : vector<48x32xf32>
    %33 = vector.broadcast %14 : vector<1x32xf32> to vector<48x32xf32>
    %34 = arith.addf %32, %33 : vector<48x32xf32>
    %35 = tpu.iota {dimensions = array<i32: 1>} : vector<48x64xi32>
    %c0_17 = arith.constant 0 : index
    %c0_18 = arith.constant 0 : index
    %36 = vector.load %arg6[%c0_17, %c0_18] : memref<48x1xi32, #tpu.memory_space<vmem>>, vector<48x1xi32>
    %37 = vector.broadcast %36 : vector<48x1xi32> to vector<48x64xi32>
    %38 = arith.cmpi eq, %35, %37 : vector<48x64xi32>
    %39 = arith.extui %38 : vector<48x64xi1> to vector<48x64xi32>
    %40 = arith.sitofp %39 : vector<48x64xi32> to vector<48x64xf32>
    %41 = arith.truncf %40 : vector<48x64xf32> to vector<48x64xbf16>
    %c0_19 = arith.constant 0 : index
    %c0_20 = arith.constant 0 : index
    %42 = vector.load %arg7[%c0_19, %c0_20] : memref<64x32xbf16, #tpu.memory_space<vmem>>, vector<64x32xbf16>
    %cst_21 = arith.constant dense<0.000000e+00> : vector<48x32xf32>
    %43 = tpu.matmul %41, %42, %cst_21 {dimension_numbers = #tpu.dot_dimension_numbers<[1], [0], [0], [1], [0, 0, 1, 1], [], []>} : vector<48x64xbf16>, vector<64x32xbf16>, vector<48x32xf32> -> vector<48x32xf32>
    %44 = vector.shape_cast %43 : vector<48x32xf32> to vector<3x16x32xf32>
    %c0_22 = arith.constant 0 : index
    %c0_23 = arith.constant 0 : index
    %45 = vector.load %arg8[%c0_22, %c0_23] : memref<16x32xf32, #tpu.memory_space<vmem>>, vector<16x32xf32>
    %46 = vector.shape_cast %45 : vector<16x32xf32> to vector<1x16x32xf32>
    %47 = vector.broadcast %46 : vector<1x16x32xf32> to vector<3x16x32xf32>
    %48 = arith.addf %44, %47 : vector<3x16x32xf32>
    %49 = vector.shape_cast %48 : vector<3x16x32xf32> to vector<48x32xf32>
    %c0_24 = arith.constant 0 : index
    %c0_25 = arith.constant 0 : index
    %50 = vector.load %arg9[%c0_24, %c0_25] : memref<24x24xf32, #tpu.memory_space<vmem>>, vector<24x24xf32>
    %c0_26 = arith.constant 0 : index
    %c0_27 = arith.constant 0 : index
    %51 = vector.load %arg10[%c0_26, %c0_27] : memref<16x16xf32, #tpu.memory_space<vmem>>, vector<16x16xf32>
    %c0_28 = arith.constant 0 : index
    %c0_29 = arith.constant 0 : index
    %c0_30 = arith.constant 0 : index
    %c0_31 = arith.constant 0 : index
    %52 = vector.load %arg11[%c0_28, %c0_29, %c0_30, %c0_31] : memref<2x2x1x32xf32, #tpu.memory_space<vmem>>, vector<1x1x1x32xf32>
    %53 = vector.shape_cast %52 : vector<1x1x1x32xf32> to vector<1x32xf32>
    %c0_32 = arith.constant 0 : index
    %c0_33 = arith.constant 0 : index
    %c0_34 = arith.constant 0 : index
    %c0_35 = arith.constant 0 : index
    %54 = vector.load %arg12[%c0_32, %c0_33, %c0_34, %c0_35] : memref<2x2x1x32xf32, #tpu.memory_space<vmem>>, vector<1x1x1x32xf32>
    %55 = vector.shape_cast %54 : vector<1x1x1x32xf32> to vector<1x32xf32>
    %cst_36 = arith.constant dense<0.000000e+00> : vector<48xf32>
    %56 = vector.multi_reduction <add>, %34, %cst_36 [1] : vector<48x32xf32> to vector<48xf32>
    %57 = vector.shape_cast %56 : vector<48xf32> to vector<48x1xf32>
    %cst_37 = arith.constant 3.200000e+01 : f32
    %58 = vector.broadcast %cst_37 : f32 to vector<48x1xf32>
    %59 = arith.divf %57, %58 : vector<48x1xf32>
    %60 = vector.broadcast %59 : vector<48x1xf32> to vector<48x32xf32>
    %61 = arith.subf %34, %60 : vector<48x32xf32>
    %62 = arith.mulf %61, %61 : vector<48x32xf32>
    %cst_38 = arith.constant dense<0.000000e+00> : vector<48xf32>
    %63 = vector.multi_reduction <add>, %62, %cst_38 [1] : vector<48x32xf32> to vector<48xf32>
    %64 = vector.shape_cast %63 : vector<48xf32> to vector<48x1xf32>
    %cst_39 = arith.constant 3.200000e+01 : f32
    %65 = vector.broadcast %cst_39 : f32 to vector<48x1xf32>
    %66 = arith.divf %64, %65 : vector<48x1xf32>
    %cst_40 = arith.constant 9.99999974E-6 : f32
    %67 = vector.broadcast %cst_40 : f32 to vector<48x1xf32>
    %68 = arith.addf %66, %67 : vector<48x1xf32>
    %69 = math.rsqrt %68 : vector<48x1xf32>
    %70 = vector.broadcast %69 : vector<48x1xf32> to vector<48x32xf32>
    %71 = arith.mulf %61, %70 : vector<48x32xf32>
    %72 = vector.broadcast %53 : vector<1x32xf32> to vector<48x32xf32>
    %73 = arith.mulf %71, %72 : vector<48x32xf32>
    %74 = vector.broadcast %55 : vector<1x32xf32> to vector<48x32xf32>
    %75 = arith.addf %73, %74 : vector<48x32xf32>
    %76 = arith.truncf %75 : vector<48x32xf32> to vector<48x32xbf16>
    %c0_41 = arith.constant 0 : index
    %c0_42 = arith.constant 0 : index
    %c0_43 = arith.constant 0 : index
    %c0_44 = arith.constant 0 : index
    %77 = vector.load %arg13[%c0_41, %c0_42, %c0_43, %c0_44] : memref<2x2x32x96xbf16, #tpu.memory_space<vmem>>, vector<1x1x32x96xbf16>
    %78 = vector.shape_cast %77 : vector<1x1x32x96xbf16> to vector<32x96xbf16>
    %cst_45 = arith.constant dense<0.000000e+00> : vector<48x96xf32>
    %79 = tpu.matmul %76, %78, %cst_45 {dimension_numbers = #tpu.dot_dimension_numbers<[1], [0], [0], [1], [0, 0, 1, 1], [], []>} : vector<48x32xbf16>, vector<32x96xbf16>, vector<48x96xf32> -> vector<48x96xf32>
    %c0_46 = arith.constant 0 : index
    %c0_47 = arith.constant 0 : index
    %c0_48 = arith.constant 0 : index
    %c0_49 = arith.constant 0 : index
    %80 = vector.load %arg14[%c0_46, %c0_47, %c0_48, %c0_49] : memref<2x2x1x96xf32, #tpu.memory_space<vmem>>, vector<1x1x1x96xf32>
    %81 = vector.shape_cast %80 : vector<1x1x1x96xf32> to vector<1x96xf32>
    %82 = vector.broadcast %81 : vector<1x96xf32> to vector<48x96xf32>
    %83 = arith.addf %79, %82 : vector<48x96xf32>
    %84 = vector.shape_cast %83 : vector<48x96xf32> to vector<2x24x96xf32>
    %85 = vector.extract_strided_slice %84 {offsets = [0, 0, 0], sizes = [2, 24, 16], strides = [1, 1, 1]} : vector<2x24x96xf32> to vector<2x24x16xf32>
    %86 = vector.extract_strided_slice %84 {offsets = [0, 0, 16], sizes = [2, 24, 16], strides = [1, 1, 1]} : vector<2x24x96xf32> to vector<2x24x16xf32>
    %87 = tpu.concatenate %85, %86 in 0 : vector<2x24x16xf32>, vector<2x24x16xf32> -> vector<4x24x16xf32>
    %88 = arith.truncf %87 : vector<4x24x16xf32> to vector<4x24x16xbf16>
    %89 = vector.extract_strided_slice %84 {offsets = [0, 0, 32], sizes = [2, 24, 16], strides = [1, 1, 1]} : vector<2x24x96xf32> to vector<2x24x16xf32>
    %90 = vector.extract_strided_slice %84 {offsets = [0, 0, 48], sizes = [2, 24, 16], strides = [1, 1, 1]} : vector<2x24x96xf32> to vector<2x24x16xf32>
    %91 = tpu.concatenate %89, %90 in 0 : vector<2x24x16xf32>, vector<2x24x16xf32> -> vector<4x24x16xf32>
    %92 = arith.truncf %91 : vector<4x24x16xf32> to vector<4x24x16xbf16>
    %93 = vector.extract_strided_slice %84 {offsets = [0, 0, 64], sizes = [2, 24, 16], strides = [1, 1, 1]} : vector<2x24x96xf32> to vector<2x24x16xf32>
    %94 = vector.extract_strided_slice %84 {offsets = [0, 0, 80], sizes = [2, 24, 16], strides = [1, 1, 1]} : vector<2x24x96xf32> to vector<2x24x16xf32>
    %95 = tpu.concatenate %93, %94 in 0 : vector<2x24x16xf32>, vector<2x24x16xf32> -> vector<4x24x16xf32>
    %96 = arith.truncf %95 : vector<4x24x16xf32> to vector<4x24x16xbf16>
    "tpu.trace_start"() <{level = 10 : i32, message = "bqd,bkd->bqk"}> : () -> ()
    %cst_50 = arith.constant dense<0.000000e+00> : vector<4x24x24xf32>
    %97 = tpu.matmul %88, %92, %cst_50 {dimension_numbers = #tpu.dot_dimension_numbers<[2], [2], [1], [1], [0, 0, 0, 1, 1, 1], [0], [0]>} : vector<4x24x16xbf16>, vector<4x24x16xbf16>, vector<4x24x24xf32> -> vector<4x24x24xf32>
    "tpu.trace_stop"() : () -> ()
    %cst_51 = arith.constant 2.500000e-01 : f32
    %98 = vector.broadcast %cst_51 : f32 to vector<4x24x24xf32>
    %99 = arith.mulf %97, %98 : vector<4x24x24xf32>
    %100 = vector.shape_cast %50 : vector<24x24xf32> to vector<1x24x24xf32>
    %101 = vector.broadcast %100 : vector<1x24x24xf32> to vector<4x24x24xf32>
    %102 = arith.addf %99, %101 : vector<4x24x24xf32>
    %cst_52 = arith.constant dense<0xFF800000> : vector<4x24xf32>
    %103 = vector.multi_reduction <maximumf>, %102, %cst_52 [2] : vector<4x24x24xf32> to vector<4x24xf32>
    %104 = vector.shape_cast %103 : vector<4x24xf32> to vector<4x24x1xf32>
    %105 = vector.broadcast %104 : vector<4x24x1xf32> to vector<4x24x24xf32>
    %106 = arith.subf %102, %105 : vector<4x24x24xf32>
    %107 = math.exp %106 : vector<4x24x24xf32>
    %cst_53 = arith.constant dense<0.000000e+00> : vector<4x24xf32>
    %108 = vector.multi_reduction <add>, %107, %cst_53 [2] : vector<4x24x24xf32> to vector<4x24xf32>
    %109 = vector.shape_cast %108 : vector<4x24xf32> to vector<4x24x1xf32>
    %110 = tpu.reciprocal %109 {approx = true} : vector<4x24x1xf32> -> vector<4x24x1xf32>
    %111 = vector.broadcast %110 : vector<4x24x1xf32> to vector<4x24x24xf32>
    %112 = arith.mulf %107, %111 : vector<4x24x24xf32>
    %113 = arith.truncf %112 : vector<4x24x24xf32> to vector<4x24x24xbf16>
    "tpu.trace_start"() <{level = 10 : i32, message = "bqk,bkd->bqd"}> : () -> ()
    %cst_54 = arith.constant dense<0.000000e+00> : vector<4x24x16xf32>
    %114 = tpu.matmul %113, %96, %cst_54 {dimension_numbers = #tpu.dot_dimension_numbers<[2], [1], [1], [2], [0, 0, 0, 1, 1, 2], [0], [0]>} : vector<4x24x24xbf16>, vector<4x24x16xbf16>, vector<4x24x16xf32> -> vector<4x24x16xf32>
    "tpu.trace_stop"() : () -> ()
    %115 = vector.extract_strided_slice %114 {offsets = [0, 0, 0], sizes = [2, 24, 16], strides = [1, 1, 1]} : vector<4x24x16xf32> to vector<2x24x16xf32>
    %116 = vector.extract_strided_slice %114 {offsets = [2, 0, 0], sizes = [2, 24, 16], strides = [1, 1, 1]} : vector<4x24x16xf32> to vector<2x24x16xf32>
    %117 = tpu.concatenate %115, %116 in 2 : vector<2x24x16xf32>, vector<2x24x16xf32> -> vector<2x24x32xf32>
    %118 = vector.shape_cast %117 : vector<2x24x32xf32> to vector<48x32xf32>
    %119 = arith.truncf %118 : vector<48x32xf32> to vector<48x32xbf16>
    %c0_55 = arith.constant 0 : index
    %c0_56 = arith.constant 0 : index
    %c0_57 = arith.constant 0 : index
    %c0_58 = arith.constant 0 : index
    %120 = vector.load %arg15[%c0_55, %c0_56, %c0_57, %c0_58] : memref<2x2x32x32xbf16, #tpu.memory_space<vmem>>, vector<1x1x32x32xbf16>
    %121 = vector.shape_cast %120 : vector<1x1x32x32xbf16> to vector<32x32xbf16>
    %cst_59 = arith.constant dense<0.000000e+00> : vector<48x32xf32>
    %122 = tpu.matmul %119, %121, %cst_59 {dimension_numbers = #tpu.dot_dimension_numbers<[1], [0], [0], [1], [0, 0, 1, 1], [], []>} : vector<48x32xbf16>, vector<32x32xbf16>, vector<48x32xf32> -> vector<48x32xf32>
    %123 = arith.addf %34, %122 : vector<48x32xf32>
    %c0_60 = arith.constant 0 : index
    %c0_61 = arith.constant 0 : index
    %c0_62 = arith.constant 0 : index
    %c0_63 = arith.constant 0 : index
    %124 = vector.load %arg16[%c0_60, %c0_61, %c0_62, %c0_63] : memref<2x2x1x32xf32, #tpu.memory_space<vmem>>, vector<1x1x1x32xf32>
    %125 = vector.shape_cast %124 : vector<1x1x1x32xf32> to vector<1x32xf32>
    %126 = vector.broadcast %125 : vector<1x32xf32> to vector<48x32xf32>
    %127 = arith.addf %123, %126 : vector<48x32xf32>
    %c0_64 = arith.constant 0 : index
    %c0_65 = arith.constant 0 : index
    %c0_66 = arith.constant 0 : index
    %c0_67 = arith.constant 0 : index
    %128 = vector.load %arg17[%c0_64, %c0_65, %c0_66, %c0_67] : memref<2x2x1x32xf32, #tpu.memory_space<vmem>>, vector<1x1x1x32xf32>
    %129 = vector.shape_cast %128 : vector<1x1x1x32xf32> to vector<1x32xf32>
    %c0_68 = arith.constant 0 : index
    %c0_69 = arith.constant 0 : index
    %c0_70 = arith.constant 0 : index
    %c0_71 = arith.constant 0 : index
    %130 = vector.load %arg18[%c0_68, %c0_69, %c0_70, %c0_71] : memref<2x2x1x32xf32, #tpu.memory_space<vmem>>, vector<1x1x1x32xf32>
    %131 = vector.shape_cast %130 : vector<1x1x1x32xf32> to vector<1x32xf32>
    %cst_72 = arith.constant dense<0.000000e+00> : vector<48xf32>
    %132 = vector.multi_reduction <add>, %127, %cst_72 [1] : vector<48x32xf32> to vector<48xf32>
    %133 = vector.shape_cast %132 : vector<48xf32> to vector<48x1xf32>
    %cst_73 = arith.constant 3.200000e+01 : f32
    %134 = vector.broadcast %cst_73 : f32 to vector<48x1xf32>
    %135 = arith.divf %133, %134 : vector<48x1xf32>
    %136 = vector.broadcast %135 : vector<48x1xf32> to vector<48x32xf32>
    %137 = arith.subf %127, %136 : vector<48x32xf32>
    %138 = arith.mulf %137, %137 : vector<48x32xf32>
    %cst_74 = arith.constant dense<0.000000e+00> : vector<48xf32>
    %139 = vector.multi_reduction <add>, %138, %cst_74 [1] : vector<48x32xf32> to vector<48xf32>
    %140 = vector.shape_cast %139 : vector<48xf32> to vector<48x1xf32>
    %cst_75 = arith.constant 3.200000e+01 : f32
    %141 = vector.broadcast %cst_75 : f32 to vector<48x1xf32>
    %142 = arith.divf %140, %141 : vector<48x1xf32>
    %cst_76 = arith.constant 9.99999974E-6 : f32
    %143 = vector.broadcast %cst_76 : f32 to vector<48x1xf32>
    %144 = arith.addf %142, %143 : vector<48x1xf32>
    %145 = math.rsqrt %144 : vector<48x1xf32>
    %146 = vector.broadcast %145 : vector<48x1xf32> to vector<48x32xf32>
    %147 = arith.mulf %137, %146 : vector<48x32xf32>
    %148 = vector.broadcast %129 : vector<1x32xf32> to vector<48x32xf32>
    %149 = arith.mulf %147, %148 : vector<48x32xf32>
    %150 = vector.broadcast %131 : vector<1x32xf32> to vector<48x32xf32>
    %151 = arith.addf %149, %150 : vector<48x32xf32>
    %152 = arith.truncf %151 : vector<48x32xf32> to vector<48x32xbf16>
    %c0_77 = arith.constant 0 : index
    %c0_78 = arith.constant 0 : index
    %c0_79 = arith.constant 0 : index
    %c0_80 = arith.constant 0 : index
    %153 = vector.load %arg19[%c0_77, %c0_78, %c0_79, %c0_80] : memref<2x2x32x192xbf16, #tpu.memory_space<vmem>>, vector<1x1x32x192xbf16>
    %154 = vector.shape_cast %153 : vector<1x1x32x192xbf16> to vector<32x192xbf16>
    %cst_81 = arith.constant dense<0.000000e+00> : vector<48x192xf32>
    %155 = tpu.matmul %152, %154, %cst_81 {dimension_numbers = #tpu.dot_dimension_numbers<[1], [0], [0], [1], [0, 0, 1, 1], [], []>} : vector<48x32xbf16>, vector<32x192xbf16>, vector<48x192xf32> -> vector<48x192xf32>
    %c0_82 = arith.constant 0 : index
    %c0_83 = arith.constant 0 : index
    %c0_84 = arith.constant 0 : index
    %c0_85 = arith.constant 0 : index
    %156 = vector.load %arg20[%c0_82, %c0_83, %c0_84, %c0_85] : memref<2x2x1x192xf32, #tpu.memory_space<vmem>>, vector<1x1x1x192xf32>
    %157 = vector.shape_cast %156 : vector<1x1x1x192xf32> to vector<1x192xf32>
    %158 = vector.broadcast %157 : vector<1x192xf32> to vector<48x192xf32>
    %159 = arith.addf %155, %158 : vector<48x192xf32>
    %160 = tpu.iota {dimensions = array<i32: 1>} : vector<48x192xi32>
    %c128_i32 = arith.constant 128 : i32
    %161 = vector.broadcast %c128_i32 : i32 to vector<48x192xi32>
    %162 = arith.cmpi slt, %160, %161 : vector<48x192xi32>
    %cst_86 = arith.constant 1.702000e+00 : f32
    %163 = vector.broadcast %cst_86 : f32 to vector<48x192xf32>
    %164 = arith.mulf %163, %159 : vector<48x192xf32>
    %165 = arith.negf %164 : vector<48x192xf32>
    %166 = math.exp %165 : vector<48x192xf32>
    %cst_87 = arith.constant 1.000000e+00 : f32
    %167 = vector.broadcast %cst_87 : f32 to vector<48x192xf32>
    %168 = arith.addf %167, %166 : vector<48x192xf32>
    %169 = arith.divf %167, %168 : vector<48x192xf32>
    %170 = arith.mulf %159, %169 : vector<48x192xf32>
    %cst_88 = arith.constant 0.000000e+00 : f32
    %171 = vector.broadcast %cst_88 : f32 to vector<48x192xf32>
    %172 = arith.maximumf %159, %171 : vector<48x192xf32>
    %173 = arith.select %162, %170, %172 : vector<48x192xi1>, vector<48x192xf32>
    %174 = arith.truncf %173 : vector<48x192xf32> to vector<48x192xbf16>
    %c0_89 = arith.constant 0 : index
    %c0_90 = arith.constant 0 : index
    %c0_91 = arith.constant 0 : index
    %c0_92 = arith.constant 0 : index
    %175 = vector.load %arg21[%c0_89, %c0_90, %c0_91, %c0_92] : memref<2x2x192x32xbf16, #tpu.memory_space<vmem>>, vector<1x1x192x32xbf16>
    %176 = vector.shape_cast %175 : vector<1x1x192x32xbf16> to vector<192x32xbf16>
    %cst_93 = arith.constant dense<0.000000e+00> : vector<48x32xf32>
    %177 = tpu.matmul %174, %176, %cst_93 {dimension_numbers = #tpu.dot_dimension_numbers<[1], [0], [0], [1], [0, 0, 1, 1], [], []>} : vector<48x192xbf16>, vector<192x32xbf16>, vector<48x32xf32> -> vector<48x32xf32>
    %178 = arith.addf %127, %177 : vector<48x32xf32>
    %c0_94 = arith.constant 0 : index
    %c0_95 = arith.constant 0 : index
    %c0_96 = arith.constant 0 : index
    %c0_97 = arith.constant 0 : index
    %179 = vector.load %arg22[%c0_94, %c0_95, %c0_96, %c0_97] : memref<2x2x1x32xf32, #tpu.memory_space<vmem>>, vector<1x1x1x32xf32>
    %180 = vector.shape_cast %179 : vector<1x1x1x32xf32> to vector<1x32xf32>
    %181 = vector.broadcast %180 : vector<1x32xf32> to vector<48x32xf32>
    %182 = arith.addf %178, %181 : vector<48x32xf32>
    %c0_98 = arith.constant 0 : index
    %c1 = arith.constant 1 : index
    %c0_99 = arith.constant 0 : index
    %c0_100 = arith.constant 0 : index
    %183 = vector.load %arg11[%c0_98, %c1, %c0_99, %c0_100] : memref<2x2x1x32xf32, #tpu.memory_space<vmem>>, vector<1x1x1x32xf32>
    %184 = vector.shape_cast %183 : vector<1x1x1x32xf32> to vector<1x32xf32>
    %c0_101 = arith.constant 0 : index
    %c1_102 = arith.constant 1 : index
    %c0_103 = arith.constant 0 : index
    %c0_104 = arith.constant 0 : index
    %185 = vector.load %arg12[%c0_101, %c1_102, %c0_103, %c0_104] : memref<2x2x1x32xf32, #tpu.memory_space<vmem>>, vector<1x1x1x32xf32>
    %186 = vector.shape_cast %185 : vector<1x1x1x32xf32> to vector<1x32xf32>
    %cst_105 = arith.constant dense<0.000000e+00> : vector<48xf32>
    %187 = vector.multi_reduction <add>, %182, %cst_105 [1] : vector<48x32xf32> to vector<48xf32>
    %188 = vector.shape_cast %187 : vector<48xf32> to vector<48x1xf32>
    %cst_106 = arith.constant 3.200000e+01 : f32
    %189 = vector.broadcast %cst_106 : f32 to vector<48x1xf32>
    %190 = arith.divf %188, %189 : vector<48x1xf32>
    %191 = vector.broadcast %190 : vector<48x1xf32> to vector<48x32xf32>
    %192 = arith.subf %182, %191 : vector<48x32xf32>
    %193 = arith.mulf %192, %192 : vector<48x32xf32>
    %cst_107 = arith.constant dense<0.000000e+00> : vector<48xf32>
    %194 = vector.multi_reduction <add>, %193, %cst_107 [1] : vector<48x32xf32> to vector<48xf32>
    %195 = vector.shape_cast %194 : vector<48xf32> to vector<48x1xf32>
    %cst_108 = arith.constant 3.200000e+01 : f32
    %196 = vector.broadcast %cst_108 : f32 to vector<48x1xf32>
    %197 = arith.divf %195, %196 : vector<48x1xf32>
    %cst_109 = arith.constant 9.99999974E-6 : f32
    %198 = vector.broadcast %cst_109 : f32 to vector<48x1xf32>
    %199 = arith.addf %197, %198 : vector<48x1xf32>
    %200 = math.rsqrt %199 : vector<48x1xf32>
    %201 = vector.broadcast %200 : vector<48x1xf32> to vector<48x32xf32>
    %202 = arith.mulf %192, %201 : vector<48x32xf32>
    %203 = vector.broadcast %184 : vector<1x32xf32> to vector<48x32xf32>
    %204 = arith.mulf %202, %203 : vector<48x32xf32>
    %205 = vector.broadcast %186 : vector<1x32xf32> to vector<48x32xf32>
    %206 = arith.addf %204, %205 : vector<48x32xf32>
    %207 = arith.truncf %206 : vector<48x32xf32> to vector<48x32xbf16>
    %c0_110 = arith.constant 0 : index
    %c1_111 = arith.constant 1 : index
    %c0_112 = arith.constant 0 : index
    %c0_113 = arith.constant 0 : index
    %208 = vector.load %arg13[%c0_110, %c1_111, %c0_112, %c0_113] : memref<2x2x32x96xbf16, #tpu.memory_space<vmem>>, vector<1x1x32x96xbf16>
    %209 = vector.shape_cast %208 : vector<1x1x32x96xbf16> to vector<32x96xbf16>
    %cst_114 = arith.constant dense<0.000000e+00> : vector<48x96xf32>
    %210 = tpu.matmul %207, %209, %cst_114 {dimension_numbers = #tpu.dot_dimension_numbers<[1], [0], [0], [1], [0, 0, 1, 1], [], []>} : vector<48x32xbf16>, vector<32x96xbf16>, vector<48x96xf32> -> vector<48x96xf32>
    %c0_115 = arith.constant 0 : index
    %c1_116 = arith.constant 1 : index
    %c0_117 = arith.constant 0 : index
    %c0_118 = arith.constant 0 : index
    %211 = vector.load %arg14[%c0_115, %c1_116, %c0_117, %c0_118] : memref<2x2x1x96xf32, #tpu.memory_space<vmem>>, vector<1x1x1x96xf32>
    %212 = vector.shape_cast %211 : vector<1x1x1x96xf32> to vector<1x96xf32>
    %213 = vector.broadcast %212 : vector<1x96xf32> to vector<48x96xf32>
    %214 = arith.addf %210, %213 : vector<48x96xf32>
    %215 = vector.shape_cast %214 : vector<48x96xf32> to vector<2x24x96xf32>
    %216 = vector.extract_strided_slice %215 {offsets = [0, 0, 0], sizes = [2, 24, 16], strides = [1, 1, 1]} : vector<2x24x96xf32> to vector<2x24x16xf32>
    %217 = vector.extract_strided_slice %215 {offsets = [0, 0, 16], sizes = [2, 24, 16], strides = [1, 1, 1]} : vector<2x24x96xf32> to vector<2x24x16xf32>
    %218 = tpu.concatenate %216, %217 in 0 : vector<2x24x16xf32>, vector<2x24x16xf32> -> vector<4x24x16xf32>
    %219 = arith.truncf %218 : vector<4x24x16xf32> to vector<4x24x16xbf16>
    %220 = vector.extract_strided_slice %215 {offsets = [0, 0, 32], sizes = [2, 24, 16], strides = [1, 1, 1]} : vector<2x24x96xf32> to vector<2x24x16xf32>
    %221 = vector.extract_strided_slice %215 {offsets = [0, 0, 48], sizes = [2, 24, 16], strides = [1, 1, 1]} : vector<2x24x96xf32> to vector<2x24x16xf32>
    %222 = tpu.concatenate %220, %221 in 0 : vector<2x24x16xf32>, vector<2x24x16xf32> -> vector<4x24x16xf32>
    %223 = arith.truncf %222 : vector<4x24x16xf32> to vector<4x24x16xbf16>
    %224 = vector.extract_strided_slice %215 {offsets = [0, 0, 64], sizes = [2, 24, 16], strides = [1, 1, 1]} : vector<2x24x96xf32> to vector<2x24x16xf32>
    %225 = vector.extract_strided_slice %215 {offsets = [0, 0, 80], sizes = [2, 24, 16], strides = [1, 1, 1]} : vector<2x24x96xf32> to vector<2x24x16xf32>
    %226 = tpu.concatenate %224, %225 in 0 : vector<2x24x16xf32>, vector<2x24x16xf32> -> vector<4x24x16xf32>
    %227 = arith.truncf %226 : vector<4x24x16xf32> to vector<4x24x16xbf16>
    "tpu.trace_start"() <{level = 10 : i32, message = "bqd,bkd->bqk"}> : () -> ()
    %cst_119 = arith.constant dense<0.000000e+00> : vector<4x24x24xf32>
    %228 = tpu.matmul %219, %223, %cst_119 {dimension_numbers = #tpu.dot_dimension_numbers<[2], [2], [1], [1], [0, 0, 0, 1, 1, 1], [0], [0]>} : vector<4x24x16xbf16>, vector<4x24x16xbf16>, vector<4x24x24xf32> -> vector<4x24x24xf32>
    "tpu.trace_stop"() : () -> ()
    %cst_120 = arith.constant 2.500000e-01 : f32
    %229 = vector.broadcast %cst_120 : f32 to vector<4x24x24xf32>
    %230 = arith.mulf %228, %229 : vector<4x24x24xf32>
    %231 = vector.shape_cast %50 : vector<24x24xf32> to vector<1x24x24xf32>
    %232 = vector.broadcast %231 : vector<1x24x24xf32> to vector<4x24x24xf32>
    %233 = arith.addf %230, %232 : vector<4x24x24xf32>
    %cst_121 = arith.constant dense<0xFF800000> : vector<4x24xf32>
    %234 = vector.multi_reduction <maximumf>, %233, %cst_121 [2] : vector<4x24x24xf32> to vector<4x24xf32>
    %235 = vector.shape_cast %234 : vector<4x24xf32> to vector<4x24x1xf32>
    %236 = vector.broadcast %235 : vector<4x24x1xf32> to vector<4x24x24xf32>
    %237 = arith.subf %233, %236 : vector<4x24x24xf32>
    %238 = math.exp %237 : vector<4x24x24xf32>
    %cst_122 = arith.constant dense<0.000000e+00> : vector<4x24xf32>
    %239 = vector.multi_reduction <add>, %238, %cst_122 [2] : vector<4x24x24xf32> to vector<4x24xf32>
    %240 = vector.shape_cast %239 : vector<4x24xf32> to vector<4x24x1xf32>
    %241 = tpu.reciprocal %240 {approx = true} : vector<4x24x1xf32> -> vector<4x24x1xf32>
    %242 = vector.broadcast %241 : vector<4x24x1xf32> to vector<4x24x24xf32>
    %243 = arith.mulf %238, %242 : vector<4x24x24xf32>
    %244 = arith.truncf %243 : vector<4x24x24xf32> to vector<4x24x24xbf16>
    "tpu.trace_start"() <{level = 10 : i32, message = "bqk,bkd->bqd"}> : () -> ()
    %cst_123 = arith.constant dense<0.000000e+00> : vector<4x24x16xf32>
    %245 = tpu.matmul %244, %227, %cst_123 {dimension_numbers = #tpu.dot_dimension_numbers<[2], [1], [1], [2], [0, 0, 0, 1, 1, 2], [0], [0]>} : vector<4x24x24xbf16>, vector<4x24x16xbf16>, vector<4x24x16xf32> -> vector<4x24x16xf32>
    "tpu.trace_stop"() : () -> ()
    %246 = vector.extract_strided_slice %245 {offsets = [0, 0, 0], sizes = [2, 24, 16], strides = [1, 1, 1]} : vector<4x24x16xf32> to vector<2x24x16xf32>
    %247 = vector.extract_strided_slice %245 {offsets = [2, 0, 0], sizes = [2, 24, 16], strides = [1, 1, 1]} : vector<4x24x16xf32> to vector<2x24x16xf32>
    %248 = tpu.concatenate %246, %247 in 2 : vector<2x24x16xf32>, vector<2x24x16xf32> -> vector<2x24x32xf32>
    %249 = vector.shape_cast %248 : vector<2x24x32xf32> to vector<48x32xf32>
    %250 = arith.truncf %249 : vector<48x32xf32> to vector<48x32xbf16>
    %c0_124 = arith.constant 0 : index
    %c1_125 = arith.constant 1 : index
    %c0_126 = arith.constant 0 : index
    %c0_127 = arith.constant 0 : index
    %251 = vector.load %arg15[%c0_124, %c1_125, %c0_126, %c0_127] : memref<2x2x32x32xbf16, #tpu.memory_space<vmem>>, vector<1x1x32x32xbf16>
    %252 = vector.shape_cast %251 : vector<1x1x32x32xbf16> to vector<32x32xbf16>
    %cst_128 = arith.constant dense<0.000000e+00> : vector<48x32xf32>
    %253 = tpu.matmul %250, %252, %cst_128 {dimension_numbers = #tpu.dot_dimension_numbers<[1], [0], [0], [1], [0, 0, 1, 1], [], []>} : vector<48x32xbf16>, vector<32x32xbf16>, vector<48x32xf32> -> vector<48x32xf32>
    %254 = arith.addf %182, %253 : vector<48x32xf32>
    %c0_129 = arith.constant 0 : index
    %c1_130 = arith.constant 1 : index
    %c0_131 = arith.constant 0 : index
    %c0_132 = arith.constant 0 : index
    %255 = vector.load %arg16[%c0_129, %c1_130, %c0_131, %c0_132] : memref<2x2x1x32xf32, #tpu.memory_space<vmem>>, vector<1x1x1x32xf32>
    %256 = vector.shape_cast %255 : vector<1x1x1x32xf32> to vector<1x32xf32>
    %257 = vector.broadcast %256 : vector<1x32xf32> to vector<48x32xf32>
    %258 = arith.addf %254, %257 : vector<48x32xf32>
    %c0_133 = arith.constant 0 : index
    %c1_134 = arith.constant 1 : index
    %c0_135 = arith.constant 0 : index
    %c0_136 = arith.constant 0 : index
    %259 = vector.load %arg17[%c0_133, %c1_134, %c0_135, %c0_136] : memref<2x2x1x32xf32, #tpu.memory_space<vmem>>, vector<1x1x1x32xf32>
    %260 = vector.shape_cast %259 : vector<1x1x1x32xf32> to vector<1x32xf32>
    %c0_137 = arith.constant 0 : index
    %c1_138 = arith.constant 1 : index
    %c0_139 = arith.constant 0 : index
    %c0_140 = arith.constant 0 : index
    %261 = vector.load %arg18[%c0_137, %c1_138, %c0_139, %c0_140] : memref<2x2x1x32xf32, #tpu.memory_space<vmem>>, vector<1x1x1x32xf32>
    %262 = vector.shape_cast %261 : vector<1x1x1x32xf32> to vector<1x32xf32>
    %cst_141 = arith.constant dense<0.000000e+00> : vector<48xf32>
    %263 = vector.multi_reduction <add>, %258, %cst_141 [1] : vector<48x32xf32> to vector<48xf32>
    %264 = vector.shape_cast %263 : vector<48xf32> to vector<48x1xf32>
    %cst_142 = arith.constant 3.200000e+01 : f32
    %265 = vector.broadcast %cst_142 : f32 to vector<48x1xf32>
    %266 = arith.divf %264, %265 : vector<48x1xf32>
    %267 = vector.broadcast %266 : vector<48x1xf32> to vector<48x32xf32>
    %268 = arith.subf %258, %267 : vector<48x32xf32>
    %269 = arith.mulf %268, %268 : vector<48x32xf32>
    %cst_143 = arith.constant dense<0.000000e+00> : vector<48xf32>
    %270 = vector.multi_reduction <add>, %269, %cst_143 [1] : vector<48x32xf32> to vector<48xf32>
    %271 = vector.shape_cast %270 : vector<48xf32> to vector<48x1xf32>
    %cst_144 = arith.constant 3.200000e+01 : f32
    %272 = vector.broadcast %cst_144 : f32 to vector<48x1xf32>
    %273 = arith.divf %271, %272 : vector<48x1xf32>
    %cst_145 = arith.constant 9.99999974E-6 : f32
    %274 = vector.broadcast %cst_145 : f32 to vector<48x1xf32>
    %275 = arith.addf %273, %274 : vector<48x1xf32>
    %276 = math.rsqrt %275 : vector<48x1xf32>
    %277 = vector.broadcast %276 : vector<48x1xf32> to vector<48x32xf32>
    %278 = arith.mulf %268, %277 : vector<48x32xf32>
    %279 = vector.broadcast %260 : vector<1x32xf32> to vector<48x32xf32>
    %280 = arith.mulf %278, %279 : vector<48x32xf32>
    %281 = vector.broadcast %262 : vector<1x32xf32> to vector<48x32xf32>
    %282 = arith.addf %280, %281 : vector<48x32xf32>
    %283 = arith.truncf %282 : vector<48x32xf32> to vector<48x32xbf16>
    %c0_146 = arith.constant 0 : index
    %c1_147 = arith.constant 1 : index
    %c0_148 = arith.constant 0 : index
    %c0_149 = arith.constant 0 : index
    %284 = vector.load %arg19[%c0_146, %c1_147, %c0_148, %c0_149] : memref<2x2x32x192xbf16, #tpu.memory_space<vmem>>, vector<1x1x32x192xbf16>
    %285 = vector.shape_cast %284 : vector<1x1x32x192xbf16> to vector<32x192xbf16>
    %cst_150 = arith.constant dense<0.000000e+00> : vector<48x192xf32>
    %286 = tpu.matmul %283, %285, %cst_150 {dimension_numbers = #tpu.dot_dimension_numbers<[1], [0], [0], [1], [0, 0, 1, 1], [], []>} : vector<48x32xbf16>, vector<32x192xbf16>, vector<48x192xf32> -> vector<48x192xf32>
    %c0_151 = arith.constant 0 : index
    %c1_152 = arith.constant 1 : index
    %c0_153 = arith.constant 0 : index
    %c0_154 = arith.constant 0 : index
    %287 = vector.load %arg20[%c0_151, %c1_152, %c0_153, %c0_154] : memref<2x2x1x192xf32, #tpu.memory_space<vmem>>, vector<1x1x1x192xf32>
    %288 = vector.shape_cast %287 : vector<1x1x1x192xf32> to vector<1x192xf32>
    %289 = vector.broadcast %288 : vector<1x192xf32> to vector<48x192xf32>
    %290 = arith.addf %286, %289 : vector<48x192xf32>
    %291 = tpu.iota {dimensions = array<i32: 1>} : vector<48x192xi32>
    %c128_i32_155 = arith.constant 128 : i32
    %292 = vector.broadcast %c128_i32_155 : i32 to vector<48x192xi32>
    %293 = arith.cmpi slt, %291, %292 : vector<48x192xi32>
    %cst_156 = arith.constant 1.702000e+00 : f32
    %294 = vector.broadcast %cst_156 : f32 to vector<48x192xf32>
    %295 = arith.mulf %294, %290 : vector<48x192xf32>
    %296 = arith.negf %295 : vector<48x192xf32>
    %297 = math.exp %296 : vector<48x192xf32>
    %cst_157 = arith.constant 1.000000e+00 : f32
    %298 = vector.broadcast %cst_157 : f32 to vector<48x192xf32>
    %299 = arith.addf %298, %297 : vector<48x192xf32>
    %300 = arith.divf %298, %299 : vector<48x192xf32>
    %301 = arith.mulf %290, %300 : vector<48x192xf32>
    %cst_158 = arith.constant 0.000000e+00 : f32
    %302 = vector.broadcast %cst_158 : f32 to vector<48x192xf32>
    %303 = arith.maximumf %290, %302 : vector<48x192xf32>
    %304 = arith.select %293, %301, %303 : vector<48x192xi1>, vector<48x192xf32>
    %305 = arith.truncf %304 : vector<48x192xf32> to vector<48x192xbf16>
    %c0_159 = arith.constant 0 : index
    %c1_160 = arith.constant 1 : index
    %c0_161 = arith.constant 0 : index
    %c0_162 = arith.constant 0 : index
    %306 = vector.load %arg21[%c0_159, %c1_160, %c0_161, %c0_162] : memref<2x2x192x32xbf16, #tpu.memory_space<vmem>>, vector<1x1x192x32xbf16>
    %307 = vector.shape_cast %306 : vector<1x1x192x32xbf16> to vector<192x32xbf16>
    %cst_163 = arith.constant dense<0.000000e+00> : vector<48x32xf32>
    %308 = tpu.matmul %305, %307, %cst_163 {dimension_numbers = #tpu.dot_dimension_numbers<[1], [0], [0], [1], [0, 0, 1, 1], [], []>} : vector<48x192xbf16>, vector<192x32xbf16>, vector<48x32xf32> -> vector<48x32xf32>
    %309 = arith.addf %258, %308 : vector<48x32xf32>
    %c0_164 = arith.constant 0 : index
    %c1_165 = arith.constant 1 : index
    %c0_166 = arith.constant 0 : index
    %c0_167 = arith.constant 0 : index
    %310 = vector.load %arg22[%c0_164, %c1_165, %c0_166, %c0_167] : memref<2x2x1x32xf32, #tpu.memory_space<vmem>>, vector<1x1x1x32xf32>
    %311 = vector.shape_cast %310 : vector<1x1x1x32xf32> to vector<1x32xf32>
    %312 = vector.broadcast %311 : vector<1x32xf32> to vector<48x32xf32>
    %313 = arith.addf %309, %312 : vector<48x32xf32>
    %c1_168 = arith.constant 1 : index
    %c0_169 = arith.constant 0 : index
    %c0_170 = arith.constant 0 : index
    %c0_171 = arith.constant 0 : index
    %314 = vector.load %arg11[%c1_168, %c0_169, %c0_170, %c0_171] : memref<2x2x1x32xf32, #tpu.memory_space<vmem>>, vector<1x1x1x32xf32>
    %315 = vector.shape_cast %314 : vector<1x1x1x32xf32> to vector<1x32xf32>
    %c1_172 = arith.constant 1 : index
    %c0_173 = arith.constant 0 : index
    %c0_174 = arith.constant 0 : index
    %c0_175 = arith.constant 0 : index
    %316 = vector.load %arg12[%c1_172, %c0_173, %c0_174, %c0_175] : memref<2x2x1x32xf32, #tpu.memory_space<vmem>>, vector<1x1x1x32xf32>
    %317 = vector.shape_cast %316 : vector<1x1x1x32xf32> to vector<1x32xf32>
    %cst_176 = arith.constant dense<0.000000e+00> : vector<48xf32>
    %318 = vector.multi_reduction <add>, %49, %cst_176 [1] : vector<48x32xf32> to vector<48xf32>
    %319 = vector.shape_cast %318 : vector<48xf32> to vector<48x1xf32>
    %cst_177 = arith.constant 3.200000e+01 : f32
    %320 = vector.broadcast %cst_177 : f32 to vector<48x1xf32>
    %321 = arith.divf %319, %320 : vector<48x1xf32>
    %322 = vector.broadcast %321 : vector<48x1xf32> to vector<48x32xf32>
    %323 = arith.subf %49, %322 : vector<48x32xf32>
    %324 = arith.mulf %323, %323 : vector<48x32xf32>
    %cst_178 = arith.constant dense<0.000000e+00> : vector<48xf32>
    %325 = vector.multi_reduction <add>, %324, %cst_178 [1] : vector<48x32xf32> to vector<48xf32>
    %326 = vector.shape_cast %325 : vector<48xf32> to vector<48x1xf32>
    %cst_179 = arith.constant 3.200000e+01 : f32
    %327 = vector.broadcast %cst_179 : f32 to vector<48x1xf32>
    %328 = arith.divf %326, %327 : vector<48x1xf32>
    %cst_180 = arith.constant 9.99999974E-6 : f32
    %329 = vector.broadcast %cst_180 : f32 to vector<48x1xf32>
    %330 = arith.addf %328, %329 : vector<48x1xf32>
    %331 = math.rsqrt %330 : vector<48x1xf32>
    %332 = vector.broadcast %331 : vector<48x1xf32> to vector<48x32xf32>
    %333 = arith.mulf %323, %332 : vector<48x32xf32>
    %334 = vector.broadcast %315 : vector<1x32xf32> to vector<48x32xf32>
    %335 = arith.mulf %333, %334 : vector<48x32xf32>
    %336 = vector.broadcast %317 : vector<1x32xf32> to vector<48x32xf32>
    %337 = arith.addf %335, %336 : vector<48x32xf32>
    %338 = arith.truncf %337 : vector<48x32xf32> to vector<48x32xbf16>
    %c1_181 = arith.constant 1 : index
    %c0_182 = arith.constant 0 : index
    %c0_183 = arith.constant 0 : index
    %c0_184 = arith.constant 0 : index
    %339 = vector.load %arg13[%c1_181, %c0_182, %c0_183, %c0_184] : memref<2x2x32x96xbf16, #tpu.memory_space<vmem>>, vector<1x1x32x96xbf16>
    %340 = vector.shape_cast %339 : vector<1x1x32x96xbf16> to vector<32x96xbf16>
    %cst_185 = arith.constant dense<0.000000e+00> : vector<48x96xf32>
    %341 = tpu.matmul %338, %340, %cst_185 {dimension_numbers = #tpu.dot_dimension_numbers<[1], [0], [0], [1], [0, 0, 1, 1], [], []>} : vector<48x32xbf16>, vector<32x96xbf16>, vector<48x96xf32> -> vector<48x96xf32>
    %c1_186 = arith.constant 1 : index
    %c0_187 = arith.constant 0 : index
    %c0_188 = arith.constant 0 : index
    %c0_189 = arith.constant 0 : index
    %342 = vector.load %arg14[%c1_186, %c0_187, %c0_188, %c0_189] : memref<2x2x1x96xf32, #tpu.memory_space<vmem>>, vector<1x1x1x96xf32>
    %343 = vector.shape_cast %342 : vector<1x1x1x96xf32> to vector<1x96xf32>
    %344 = vector.broadcast %343 : vector<1x96xf32> to vector<48x96xf32>
    %345 = arith.addf %341, %344 : vector<48x96xf32>
    %346 = vector.shape_cast %345 : vector<48x96xf32> to vector<3x16x96xf32>
    %347 = vector.extract_strided_slice %346 {offsets = [0, 0, 0], sizes = [3, 16, 16], strides = [1, 1, 1]} : vector<3x16x96xf32> to vector<3x16x16xf32>
    %348 = vector.extract_strided_slice %346 {offsets = [0, 0, 16], sizes = [3, 16, 16], strides = [1, 1, 1]} : vector<3x16x96xf32> to vector<3x16x16xf32>
    %349 = tpu.concatenate %347, %348 in 0 : vector<3x16x16xf32>, vector<3x16x16xf32> -> vector<6x16x16xf32>
    %350 = arith.truncf %349 : vector<6x16x16xf32> to vector<6x16x16xbf16>
    %351 = vector.extract_strided_slice %346 {offsets = [0, 0, 32], sizes = [3, 16, 16], strides = [1, 1, 1]} : vector<3x16x96xf32> to vector<3x16x16xf32>
    %352 = vector.extract_strided_slice %346 {offsets = [0, 0, 48], sizes = [3, 16, 16], strides = [1, 1, 1]} : vector<3x16x96xf32> to vector<3x16x16xf32>
    %353 = tpu.concatenate %351, %352 in 0 : vector<3x16x16xf32>, vector<3x16x16xf32> -> vector<6x16x16xf32>
    %354 = arith.truncf %353 : vector<6x16x16xf32> to vector<6x16x16xbf16>
    %355 = vector.extract_strided_slice %346 {offsets = [0, 0, 64], sizes = [3, 16, 16], strides = [1, 1, 1]} : vector<3x16x96xf32> to vector<3x16x16xf32>
    %356 = vector.extract_strided_slice %346 {offsets = [0, 0, 80], sizes = [3, 16, 16], strides = [1, 1, 1]} : vector<3x16x96xf32> to vector<3x16x16xf32>
    %357 = tpu.concatenate %355, %356 in 0 : vector<3x16x16xf32>, vector<3x16x16xf32> -> vector<6x16x16xf32>
    %358 = arith.truncf %357 : vector<6x16x16xf32> to vector<6x16x16xbf16>
    "tpu.trace_start"() <{level = 10 : i32, message = "bqd,bkd->bqk"}> : () -> ()
    %cst_190 = arith.constant dense<0.000000e+00> : vector<6x16x16xf32>
    %359 = tpu.matmul %350, %354, %cst_190 {dimension_numbers = #tpu.dot_dimension_numbers<[2], [2], [1], [1], [0, 0, 0, 1, 1, 1], [0], [0]>} : vector<6x16x16xbf16>, vector<6x16x16xbf16>, vector<6x16x16xf32> -> vector<6x16x16xf32>
    "tpu.trace_stop"() : () -> ()
    %cst_191 = arith.constant 2.500000e-01 : f32
    %360 = vector.broadcast %cst_191 : f32 to vector<6x16x16xf32>
    %361 = arith.mulf %359, %360 : vector<6x16x16xf32>
    %362 = vector.shape_cast %51 : vector<16x16xf32> to vector<1x16x16xf32>
    %363 = vector.broadcast %362 : vector<1x16x16xf32> to vector<6x16x16xf32>
    %364 = arith.addf %361, %363 : vector<6x16x16xf32>
    %cst_192 = arith.constant dense<0xFF800000> : vector<6x16xf32>
    %365 = vector.multi_reduction <maximumf>, %364, %cst_192 [2] : vector<6x16x16xf32> to vector<6x16xf32>
    %366 = vector.shape_cast %365 : vector<6x16xf32> to vector<6x16x1xf32>
    %367 = vector.broadcast %366 : vector<6x16x1xf32> to vector<6x16x16xf32>
    %368 = arith.subf %364, %367 : vector<6x16x16xf32>
    %369 = math.exp %368 : vector<6x16x16xf32>
    %cst_193 = arith.constant dense<0.000000e+00> : vector<6x16xf32>
    %370 = vector.multi_reduction <add>, %369, %cst_193 [2] : vector<6x16x16xf32> to vector<6x16xf32>
    %371 = vector.shape_cast %370 : vector<6x16xf32> to vector<6x16x1xf32>
    %372 = tpu.reciprocal %371 {approx = true} : vector<6x16x1xf32> -> vector<6x16x1xf32>
    %373 = vector.broadcast %372 : vector<6x16x1xf32> to vector<6x16x16xf32>
    %374 = arith.mulf %369, %373 : vector<6x16x16xf32>
    %375 = arith.truncf %374 : vector<6x16x16xf32> to vector<6x16x16xbf16>
    "tpu.trace_start"() <{level = 10 : i32, message = "bqk,bkd->bqd"}> : () -> ()
    %cst_194 = arith.constant dense<0.000000e+00> : vector<6x16x16xf32>
    %376 = tpu.matmul %375, %358, %cst_194 {dimension_numbers = #tpu.dot_dimension_numbers<[2], [1], [1], [2], [0, 0, 0, 1, 1, 2], [0], [0]>} : vector<6x16x16xbf16>, vector<6x16x16xbf16>, vector<6x16x16xf32> -> vector<6x16x16xf32>
    "tpu.trace_stop"() : () -> ()
    %377 = vector.extract_strided_slice %376 {offsets = [0, 0, 0], sizes = [3, 16, 16], strides = [1, 1, 1]} : vector<6x16x16xf32> to vector<3x16x16xf32>
    %378 = vector.extract_strided_slice %376 {offsets = [3, 0, 0], sizes = [3, 16, 16], strides = [1, 1, 1]} : vector<6x16x16xf32> to vector<3x16x16xf32>
    %379 = tpu.concatenate %377, %378 in 2 : vector<3x16x16xf32>, vector<3x16x16xf32> -> vector<3x16x32xf32>
    %380 = vector.shape_cast %379 : vector<3x16x32xf32> to vector<48x32xf32>
    %381 = arith.truncf %380 : vector<48x32xf32> to vector<48x32xbf16>
    %c1_195 = arith.constant 1 : index
    %c0_196 = arith.constant 0 : index
    %c0_197 = arith.constant 0 : index
    %c0_198 = arith.constant 0 : index
    %382 = vector.load %arg15[%c1_195, %c0_196, %c0_197, %c0_198] : memref<2x2x32x32xbf16, #tpu.memory_space<vmem>>, vector<1x1x32x32xbf16>
    %383 = vector.shape_cast %382 : vector<1x1x32x32xbf16> to vector<32x32xbf16>
    %cst_199 = arith.constant dense<0.000000e+00> : vector<48x32xf32>
    %384 = tpu.matmul %381, %383, %cst_199 {dimension_numbers = #tpu.dot_dimension_numbers<[1], [0], [0], [1], [0, 0, 1, 1], [], []>} : vector<48x32xbf16>, vector<32x32xbf16>, vector<48x32xf32> -> vector<48x32xf32>
    %385 = arith.addf %49, %384 : vector<48x32xf32>
    %c1_200 = arith.constant 1 : index
    %c0_201 = arith.constant 0 : index
    %c0_202 = arith.constant 0 : index
    %c0_203 = arith.constant 0 : index
    %386 = vector.load %arg16[%c1_200, %c0_201, %c0_202, %c0_203] : memref<2x2x1x32xf32, #tpu.memory_space<vmem>>, vector<1x1x1x32xf32>
    %387 = vector.shape_cast %386 : vector<1x1x1x32xf32> to vector<1x32xf32>
    %388 = vector.broadcast %387 : vector<1x32xf32> to vector<48x32xf32>
    %389 = arith.addf %385, %388 : vector<48x32xf32>
    %c1_204 = arith.constant 1 : index
    %c0_205 = arith.constant 0 : index
    %c0_206 = arith.constant 0 : index
    %c0_207 = arith.constant 0 : index
    %390 = vector.load %arg17[%c1_204, %c0_205, %c0_206, %c0_207] : memref<2x2x1x32xf32, #tpu.memory_space<vmem>>, vector<1x1x1x32xf32>
    %391 = vector.shape_cast %390 : vector<1x1x1x32xf32> to vector<1x32xf32>
    %c1_208 = arith.constant 1 : index
    %c0_209 = arith.constant 0 : index
    %c0_210 = arith.constant 0 : index
    %c0_211 = arith.constant 0 : index
    %392 = vector.load %arg18[%c1_208, %c0_209, %c0_210, %c0_211] : memref<2x2x1x32xf32, #tpu.memory_space<vmem>>, vector<1x1x1x32xf32>
    %393 = vector.shape_cast %392 : vector<1x1x1x32xf32> to vector<1x32xf32>
    %cst_212 = arith.constant dense<0.000000e+00> : vector<48xf32>
    %394 = vector.multi_reduction <add>, %389, %cst_212 [1] : vector<48x32xf32> to vector<48xf32>
    %395 = vector.shape_cast %394 : vector<48xf32> to vector<48x1xf32>
    %cst_213 = arith.constant 3.200000e+01 : f32
    %396 = vector.broadcast %cst_213 : f32 to vector<48x1xf32>
    %397 = arith.divf %395, %396 : vector<48x1xf32>
    %398 = vector.broadcast %397 : vector<48x1xf32> to vector<48x32xf32>
    %399 = arith.subf %389, %398 : vector<48x32xf32>
    %400 = arith.mulf %399, %399 : vector<48x32xf32>
    %cst_214 = arith.constant dense<0.000000e+00> : vector<48xf32>
    %401 = vector.multi_reduction <add>, %400, %cst_214 [1] : vector<48x32xf32> to vector<48xf32>
    %402 = vector.shape_cast %401 : vector<48xf32> to vector<48x1xf32>
    %cst_215 = arith.constant 3.200000e+01 : f32
    %403 = vector.broadcast %cst_215 : f32 to vector<48x1xf32>
    %404 = arith.divf %402, %403 : vector<48x1xf32>
    %cst_216 = arith.constant 9.99999974E-6 : f32
    %405 = vector.broadcast %cst_216 : f32 to vector<48x1xf32>
    %406 = arith.addf %404, %405 : vector<48x1xf32>
    %407 = math.rsqrt %406 : vector<48x1xf32>
    %408 = vector.broadcast %407 : vector<48x1xf32> to vector<48x32xf32>
    %409 = arith.mulf %399, %408 : vector<48x32xf32>
    %410 = vector.broadcast %391 : vector<1x32xf32> to vector<48x32xf32>
    %411 = arith.mulf %409, %410 : vector<48x32xf32>
    %412 = vector.broadcast %393 : vector<1x32xf32> to vector<48x32xf32>
    %413 = arith.addf %411, %412 : vector<48x32xf32>
    %414 = arith.truncf %413 : vector<48x32xf32> to vector<48x32xbf16>
    %c1_217 = arith.constant 1 : index
    %c0_218 = arith.constant 0 : index
    %c0_219 = arith.constant 0 : index
    %c0_220 = arith.constant 0 : index
    %415 = vector.load %arg19[%c1_217, %c0_218, %c0_219, %c0_220] : memref<2x2x32x192xbf16, #tpu.memory_space<vmem>>, vector<1x1x32x192xbf16>
    %416 = vector.shape_cast %415 : vector<1x1x32x192xbf16> to vector<32x192xbf16>
    %cst_221 = arith.constant dense<0.000000e+00> : vector<48x192xf32>
    %417 = tpu.matmul %414, %416, %cst_221 {dimension_numbers = #tpu.dot_dimension_numbers<[1], [0], [0], [1], [0, 0, 1, 1], [], []>} : vector<48x32xbf16>, vector<32x192xbf16>, vector<48x192xf32> -> vector<48x192xf32>
    %c1_222 = arith.constant 1 : index
    %c0_223 = arith.constant 0 : index
    %c0_224 = arith.constant 0 : index
    %c0_225 = arith.constant 0 : index
    %418 = vector.load %arg20[%c1_222, %c0_223, %c0_224, %c0_225] : memref<2x2x1x192xf32, #tpu.memory_space<vmem>>, vector<1x1x1x192xf32>
    %419 = vector.shape_cast %418 : vector<1x1x1x192xf32> to vector<1x192xf32>
    %420 = vector.broadcast %419 : vector<1x192xf32> to vector<48x192xf32>
    %421 = arith.addf %417, %420 : vector<48x192xf32>
    %422 = tpu.iota {dimensions = array<i32: 1>} : vector<48x192xi32>
    %c128_i32_226 = arith.constant 128 : i32
    %423 = vector.broadcast %c128_i32_226 : i32 to vector<48x192xi32>
    %424 = arith.cmpi slt, %422, %423 : vector<48x192xi32>
    %cst_227 = arith.constant 1.702000e+00 : f32
    %425 = vector.broadcast %cst_227 : f32 to vector<48x192xf32>
    %426 = arith.mulf %425, %421 : vector<48x192xf32>
    %427 = arith.negf %426 : vector<48x192xf32>
    %428 = math.exp %427 : vector<48x192xf32>
    %cst_228 = arith.constant 1.000000e+00 : f32
    %429 = vector.broadcast %cst_228 : f32 to vector<48x192xf32>
    %430 = arith.addf %429, %428 : vector<48x192xf32>
    %431 = arith.divf %429, %430 : vector<48x192xf32>
    %432 = arith.mulf %421, %431 : vector<48x192xf32>
    %cst_229 = arith.constant 0.000000e+00 : f32
    %433 = vector.broadcast %cst_229 : f32 to vector<48x192xf32>
    %434 = arith.maximumf %421, %433 : vector<48x192xf32>
    %435 = arith.select %424, %432, %434 : vector<48x192xi1>, vector<48x192xf32>
    %436 = arith.truncf %435 : vector<48x192xf32> to vector<48x192xbf16>
    %c1_230 = arith.constant 1 : index
    %c0_231 = arith.constant 0 : index
    %c0_232 = arith.constant 0 : index
    %c0_233 = arith.constant 0 : index
    %437 = vector.load %arg21[%c1_230, %c0_231, %c0_232, %c0_233] : memref<2x2x192x32xbf16, #tpu.memory_space<vmem>>, vector<1x1x192x32xbf16>
    %438 = vector.shape_cast %437 : vector<1x1x192x32xbf16> to vector<192x32xbf16>
    %cst_234 = arith.constant dense<0.000000e+00> : vector<48x32xf32>
    %439 = tpu.matmul %436, %438, %cst_234 {dimension_numbers = #tpu.dot_dimension_numbers<[1], [0], [0], [1], [0, 0, 1, 1], [], []>} : vector<48x192xbf16>, vector<192x32xbf16>, vector<48x32xf32> -> vector<48x32xf32>
    %440 = arith.addf %389, %439 : vector<48x32xf32>
    %c1_235 = arith.constant 1 : index
    %c0_236 = arith.constant 0 : index
    %c0_237 = arith.constant 0 : index
    %c0_238 = arith.constant 0 : index
    %441 = vector.load %arg22[%c1_235, %c0_236, %c0_237, %c0_238] : memref<2x2x1x32xf32, #tpu.memory_space<vmem>>, vector<1x1x1x32xf32>
    %442 = vector.shape_cast %441 : vector<1x1x1x32xf32> to vector<1x32xf32>
    %443 = vector.broadcast %442 : vector<1x32xf32> to vector<48x32xf32>
    %444 = arith.addf %440, %443 : vector<48x32xf32>
    %c1_239 = arith.constant 1 : index
    %c1_240 = arith.constant 1 : index
    %c0_241 = arith.constant 0 : index
    %c0_242 = arith.constant 0 : index
    %445 = vector.load %arg11[%c1_239, %c1_240, %c0_241, %c0_242] : memref<2x2x1x32xf32, #tpu.memory_space<vmem>>, vector<1x1x1x32xf32>
    %446 = vector.shape_cast %445 : vector<1x1x1x32xf32> to vector<1x32xf32>
    %c1_243 = arith.constant 1 : index
    %c1_244 = arith.constant 1 : index
    %c0_245 = arith.constant 0 : index
    %c0_246 = arith.constant 0 : index
    %447 = vector.load %arg12[%c1_243, %c1_244, %c0_245, %c0_246] : memref<2x2x1x32xf32, #tpu.memory_space<vmem>>, vector<1x1x1x32xf32>
    %448 = vector.shape_cast %447 : vector<1x1x1x32xf32> to vector<1x32xf32>
    %cst_247 = arith.constant dense<0.000000e+00> : vector<48xf32>
    %449 = vector.multi_reduction <add>, %444, %cst_247 [1] : vector<48x32xf32> to vector<48xf32>
    %450 = vector.shape_cast %449 : vector<48xf32> to vector<48x1xf32>
    %cst_248 = arith.constant 3.200000e+01 : f32
    %451 = vector.broadcast %cst_248 : f32 to vector<48x1xf32>
    %452 = arith.divf %450, %451 : vector<48x1xf32>
    %453 = vector.broadcast %452 : vector<48x1xf32> to vector<48x32xf32>
    %454 = arith.subf %444, %453 : vector<48x32xf32>
    %455 = arith.mulf %454, %454 : vector<48x32xf32>
    %cst_249 = arith.constant dense<0.000000e+00> : vector<48xf32>
    %456 = vector.multi_reduction <add>, %455, %cst_249 [1] : vector<48x32xf32> to vector<48xf32>
    %457 = vector.shape_cast %456 : vector<48xf32> to vector<48x1xf32>
    %cst_250 = arith.constant 3.200000e+01 : f32
    %458 = vector.broadcast %cst_250 : f32 to vector<48x1xf32>
    %459 = arith.divf %457, %458 : vector<48x1xf32>
    %cst_251 = arith.constant 9.99999974E-6 : f32
    %460 = vector.broadcast %cst_251 : f32 to vector<48x1xf32>
    %461 = arith.addf %459, %460 : vector<48x1xf32>
    %462 = math.rsqrt %461 : vector<48x1xf32>
    %463 = vector.broadcast %462 : vector<48x1xf32> to vector<48x32xf32>
    %464 = arith.mulf %454, %463 : vector<48x32xf32>
    %465 = vector.broadcast %446 : vector<1x32xf32> to vector<48x32xf32>
    %466 = arith.mulf %464, %465 : vector<48x32xf32>
    %467 = vector.broadcast %448 : vector<1x32xf32> to vector<48x32xf32>
    %468 = arith.addf %466, %467 : vector<48x32xf32>
    %469 = arith.truncf %468 : vector<48x32xf32> to vector<48x32xbf16>
    %c1_252 = arith.constant 1 : index
    %c1_253 = arith.constant 1 : index
    %c0_254 = arith.constant 0 : index
    %c0_255 = arith.constant 0 : index
    %470 = vector.load %arg13[%c1_252, %c1_253, %c0_254, %c0_255] : memref<2x2x32x96xbf16, #tpu.memory_space<vmem>>, vector<1x1x32x96xbf16>
    %471 = vector.shape_cast %470 : vector<1x1x32x96xbf16> to vector<32x96xbf16>
    %cst_256 = arith.constant dense<0.000000e+00> : vector<48x96xf32>
    %472 = tpu.matmul %469, %471, %cst_256 {dimension_numbers = #tpu.dot_dimension_numbers<[1], [0], [0], [1], [0, 0, 1, 1], [], []>} : vector<48x32xbf16>, vector<32x96xbf16>, vector<48x96xf32> -> vector<48x96xf32>
    %c1_257 = arith.constant 1 : index
    %c1_258 = arith.constant 1 : index
    %c0_259 = arith.constant 0 : index
    %c0_260 = arith.constant 0 : index
    %473 = vector.load %arg14[%c1_257, %c1_258, %c0_259, %c0_260] : memref<2x2x1x96xf32, #tpu.memory_space<vmem>>, vector<1x1x1x96xf32>
    %474 = vector.shape_cast %473 : vector<1x1x1x96xf32> to vector<1x96xf32>
    %475 = vector.broadcast %474 : vector<1x96xf32> to vector<48x96xf32>
    %476 = arith.addf %472, %475 : vector<48x96xf32>
    %477 = vector.shape_cast %476 : vector<48x96xf32> to vector<3x16x96xf32>
    %478 = vector.extract_strided_slice %477 {offsets = [0, 0, 0], sizes = [3, 16, 16], strides = [1, 1, 1]} : vector<3x16x96xf32> to vector<3x16x16xf32>
    %479 = vector.extract_strided_slice %477 {offsets = [0, 0, 16], sizes = [3, 16, 16], strides = [1, 1, 1]} : vector<3x16x96xf32> to vector<3x16x16xf32>
    %480 = tpu.concatenate %478, %479 in 0 : vector<3x16x16xf32>, vector<3x16x16xf32> -> vector<6x16x16xf32>
    %481 = arith.truncf %480 : vector<6x16x16xf32> to vector<6x16x16xbf16>
    %482 = vector.extract_strided_slice %477 {offsets = [0, 0, 32], sizes = [3, 16, 16], strides = [1, 1, 1]} : vector<3x16x96xf32> to vector<3x16x16xf32>
    %483 = vector.extract_strided_slice %477 {offsets = [0, 0, 48], sizes = [3, 16, 16], strides = [1, 1, 1]} : vector<3x16x96xf32> to vector<3x16x16xf32>
    %484 = tpu.concatenate %482, %483 in 0 : vector<3x16x16xf32>, vector<3x16x16xf32> -> vector<6x16x16xf32>
    %485 = arith.truncf %484 : vector<6x16x16xf32> to vector<6x16x16xbf16>
    %486 = vector.extract_strided_slice %477 {offsets = [0, 0, 64], sizes = [3, 16, 16], strides = [1, 1, 1]} : vector<3x16x96xf32> to vector<3x16x16xf32>
    %487 = vector.extract_strided_slice %477 {offsets = [0, 0, 80], sizes = [3, 16, 16], strides = [1, 1, 1]} : vector<3x16x96xf32> to vector<3x16x16xf32>
    %488 = tpu.concatenate %486, %487 in 0 : vector<3x16x16xf32>, vector<3x16x16xf32> -> vector<6x16x16xf32>
    %489 = arith.truncf %488 : vector<6x16x16xf32> to vector<6x16x16xbf16>
    "tpu.trace_start"() <{level = 10 : i32, message = "bqd,bkd->bqk"}> : () -> ()
    %cst_261 = arith.constant dense<0.000000e+00> : vector<6x16x16xf32>
    %490 = tpu.matmul %481, %485, %cst_261 {dimension_numbers = #tpu.dot_dimension_numbers<[2], [2], [1], [1], [0, 0, 0, 1, 1, 1], [0], [0]>} : vector<6x16x16xbf16>, vector<6x16x16xbf16>, vector<6x16x16xf32> -> vector<6x16x16xf32>
    "tpu.trace_stop"() : () -> ()
    %cst_262 = arith.constant 2.500000e-01 : f32
    %491 = vector.broadcast %cst_262 : f32 to vector<6x16x16xf32>
    %492 = arith.mulf %490, %491 : vector<6x16x16xf32>
    %493 = vector.shape_cast %51 : vector<16x16xf32> to vector<1x16x16xf32>
    %494 = vector.broadcast %493 : vector<1x16x16xf32> to vector<6x16x16xf32>
    %495 = arith.addf %492, %494 : vector<6x16x16xf32>
    %cst_263 = arith.constant dense<0xFF800000> : vector<6x16xf32>
    %496 = vector.multi_reduction <maximumf>, %495, %cst_263 [2] : vector<6x16x16xf32> to vector<6x16xf32>
    %497 = vector.shape_cast %496 : vector<6x16xf32> to vector<6x16x1xf32>
    %498 = vector.broadcast %497 : vector<6x16x1xf32> to vector<6x16x16xf32>
    %499 = arith.subf %495, %498 : vector<6x16x16xf32>
    %500 = math.exp %499 : vector<6x16x16xf32>
    %cst_264 = arith.constant dense<0.000000e+00> : vector<6x16xf32>
    %501 = vector.multi_reduction <add>, %500, %cst_264 [2] : vector<6x16x16xf32> to vector<6x16xf32>
    %502 = vector.shape_cast %501 : vector<6x16xf32> to vector<6x16x1xf32>
    %503 = tpu.reciprocal %502 {approx = true} : vector<6x16x1xf32> -> vector<6x16x1xf32>
    %504 = vector.broadcast %503 : vector<6x16x1xf32> to vector<6x16x16xf32>
    %505 = arith.mulf %500, %504 : vector<6x16x16xf32>
    %506 = arith.truncf %505 : vector<6x16x16xf32> to vector<6x16x16xbf16>
    "tpu.trace_start"() <{level = 10 : i32, message = "bqk,bkd->bqd"}> : () -> ()
    %cst_265 = arith.constant dense<0.000000e+00> : vector<6x16x16xf32>
    %507 = tpu.matmul %506, %489, %cst_265 {dimension_numbers = #tpu.dot_dimension_numbers<[2], [1], [1], [2], [0, 0, 0, 1, 1, 2], [0], [0]>} : vector<6x16x16xbf16>, vector<6x16x16xbf16>, vector<6x16x16xf32> -> vector<6x16x16xf32>
    "tpu.trace_stop"() : () -> ()
    %508 = vector.extract_strided_slice %507 {offsets = [0, 0, 0], sizes = [3, 16, 16], strides = [1, 1, 1]} : vector<6x16x16xf32> to vector<3x16x16xf32>
    %509 = vector.extract_strided_slice %507 {offsets = [3, 0, 0], sizes = [3, 16, 16], strides = [1, 1, 1]} : vector<6x16x16xf32> to vector<3x16x16xf32>
    %510 = tpu.concatenate %508, %509 in 2 : vector<3x16x16xf32>, vector<3x16x16xf32> -> vector<3x16x32xf32>
    %511 = vector.shape_cast %510 : vector<3x16x32xf32> to vector<48x32xf32>
    %512 = arith.truncf %511 : vector<48x32xf32> to vector<48x32xbf16>
    %c1_266 = arith.constant 1 : index
    %c1_267 = arith.constant 1 : index
    %c0_268 = arith.constant 0 : index
    %c0_269 = arith.constant 0 : index
    %513 = vector.load %arg15[%c1_266, %c1_267, %c0_268, %c0_269] : memref<2x2x32x32xbf16, #tpu.memory_space<vmem>>, vector<1x1x32x32xbf16>
    %514 = vector.shape_cast %513 : vector<1x1x32x32xbf16> to vector<32x32xbf16>
    %cst_270 = arith.constant dense<0.000000e+00> : vector<48x32xf32>
    %515 = tpu.matmul %512, %514, %cst_270 {dimension_numbers = #tpu.dot_dimension_numbers<[1], [0], [0], [1], [0, 0, 1, 1], [], []>} : vector<48x32xbf16>, vector<32x32xbf16>, vector<48x32xf32> -> vector<48x32xf32>
    %516 = arith.addf %444, %515 : vector<48x32xf32>
    %c1_271 = arith.constant 1 : index
    %c1_272 = arith.constant 1 : index
    %c0_273 = arith.constant 0 : index
    %c0_274 = arith.constant 0 : index
    %517 = vector.load %arg16[%c1_271, %c1_272, %c0_273, %c0_274] : memref<2x2x1x32xf32, #tpu.memory_space<vmem>>, vector<1x1x1x32xf32>
    %518 = vector.shape_cast %517 : vector<1x1x1x32xf32> to vector<1x32xf32>
    %519 = vector.broadcast %518 : vector<1x32xf32> to vector<48x32xf32>
    %520 = arith.addf %516, %519 : vector<48x32xf32>
    %c1_275 = arith.constant 1 : index
    %c1_276 = arith.constant 1 : index
    %c0_277 = arith.constant 0 : index
    %c0_278 = arith.constant 0 : index
    %521 = vector.load %arg17[%c1_275, %c1_276, %c0_277, %c0_278] : memref<2x2x1x32xf32, #tpu.memory_space<vmem>>, vector<1x1x1x32xf32>
    %522 = vector.shape_cast %521 : vector<1x1x1x32xf32> to vector<1x32xf32>
    %c1_279 = arith.constant 1 : index
    %c1_280 = arith.constant 1 : index
    %c0_281 = arith.constant 0 : index
    %c0_282 = arith.constant 0 : index
    %523 = vector.load %arg18[%c1_279, %c1_280, %c0_281, %c0_282] : memref<2x2x1x32xf32, #tpu.memory_space<vmem>>, vector<1x1x1x32xf32>
    %524 = vector.shape_cast %523 : vector<1x1x1x32xf32> to vector<1x32xf32>
    %cst_283 = arith.constant dense<0.000000e+00> : vector<48xf32>
    %525 = vector.multi_reduction <add>, %520, %cst_283 [1] : vector<48x32xf32> to vector<48xf32>
    %526 = vector.shape_cast %525 : vector<48xf32> to vector<48x1xf32>
    %cst_284 = arith.constant 3.200000e+01 : f32
    %527 = vector.broadcast %cst_284 : f32 to vector<48x1xf32>
    %528 = arith.divf %526, %527 : vector<48x1xf32>
    %529 = vector.broadcast %528 : vector<48x1xf32> to vector<48x32xf32>
    %530 = arith.subf %520, %529 : vector<48x32xf32>
    %531 = arith.mulf %530, %530 : vector<48x32xf32>
    %cst_285 = arith.constant dense<0.000000e+00> : vector<48xf32>
    %532 = vector.multi_reduction <add>, %531, %cst_285 [1] : vector<48x32xf32> to vector<48xf32>
    %533 = vector.shape_cast %532 : vector<48xf32> to vector<48x1xf32>
    %cst_286 = arith.constant 3.200000e+01 : f32
    %534 = vector.broadcast %cst_286 : f32 to vector<48x1xf32>
    %535 = arith.divf %533, %534 : vector<48x1xf32>
    %cst_287 = arith.constant 9.99999974E-6 : f32
    %536 = vector.broadcast %cst_287 : f32 to vector<48x1xf32>
    %537 = arith.addf %535, %536 : vector<48x1xf32>
    %538 = math.rsqrt %537 : vector<48x1xf32>
    %539 = vector.broadcast %538 : vector<48x1xf32> to vector<48x32xf32>
    %540 = arith.mulf %530, %539 : vector<48x32xf32>
    %541 = vector.broadcast %522 : vector<1x32xf32> to vector<48x32xf32>
    %542 = arith.mulf %540, %541 : vector<48x32xf32>
    %543 = vector.broadcast %524 : vector<1x32xf32> to vector<48x32xf32>
    %544 = arith.addf %542, %543 : vector<48x32xf32>
    %545 = arith.truncf %544 : vector<48x32xf32> to vector<48x32xbf16>
    %c1_288 = arith.constant 1 : index
    %c1_289 = arith.constant 1 : index
    %c0_290 = arith.constant 0 : index
    %c0_291 = arith.constant 0 : index
    %546 = vector.load %arg19[%c1_288, %c1_289, %c0_290, %c0_291] : memref<2x2x32x192xbf16, #tpu.memory_space<vmem>>, vector<1x1x32x192xbf16>
    %547 = vector.shape_cast %546 : vector<1x1x32x192xbf16> to vector<32x192xbf16>
    %cst_292 = arith.constant dense<0.000000e+00> : vector<48x192xf32>
    %548 = tpu.matmul %545, %547, %cst_292 {dimension_numbers = #tpu.dot_dimension_numbers<[1], [0], [0], [1], [0, 0, 1, 1], [], []>} : vector<48x32xbf16>, vector<32x192xbf16>, vector<48x192xf32> -> vector<48x192xf32>
    %c1_293 = arith.constant 1 : index
    %c1_294 = arith.constant 1 : index
    %c0_295 = arith.constant 0 : index
    %c0_296 = arith.constant 0 : index
    %549 = vector.load %arg20[%c1_293, %c1_294, %c0_295, %c0_296] : memref<2x2x1x192xf32, #tpu.memory_space<vmem>>, vector<1x1x1x192xf32>
    %550 = vector.shape_cast %549 : vector<1x1x1x192xf32> to vector<1x192xf32>
    %551 = vector.broadcast %550 : vector<1x192xf32> to vector<48x192xf32>
    %552 = arith.addf %548, %551 : vector<48x192xf32>
    %553 = tpu.iota {dimensions = array<i32: 1>} : vector<48x192xi32>
    %c128_i32_297 = arith.constant 128 : i32
    %554 = vector.broadcast %c128_i32_297 : i32 to vector<48x192xi32>
    %555 = arith.cmpi slt, %553, %554 : vector<48x192xi32>
    %cst_298 = arith.constant 1.702000e+00 : f32
    %556 = vector.broadcast %cst_298 : f32 to vector<48x192xf32>
    %557 = arith.mulf %556, %552 : vector<48x192xf32>
    %558 = arith.negf %557 : vector<48x192xf32>
    %559 = math.exp %558 : vector<48x192xf32>
    %cst_299 = arith.constant 1.000000e+00 : f32
    %560 = vector.broadcast %cst_299 : f32 to vector<48x192xf32>
    %561 = arith.addf %560, %559 : vector<48x192xf32>
    %562 = arith.divf %560, %561 : vector<48x192xf32>
    %563 = arith.mulf %552, %562 : vector<48x192xf32>
    %cst_300 = arith.constant 0.000000e+00 : f32
    %564 = vector.broadcast %cst_300 : f32 to vector<48x192xf32>
    %565 = arith.maximumf %552, %564 : vector<48x192xf32>
    %566 = arith.select %555, %563, %565 : vector<48x192xi1>, vector<48x192xf32>
    %567 = arith.truncf %566 : vector<48x192xf32> to vector<48x192xbf16>
    %c1_301 = arith.constant 1 : index
    %c1_302 = arith.constant 1 : index
    %c0_303 = arith.constant 0 : index
    %c0_304 = arith.constant 0 : index
    %568 = vector.load %arg21[%c1_301, %c1_302, %c0_303, %c0_304] : memref<2x2x192x32xbf16, #tpu.memory_space<vmem>>, vector<1x1x192x32xbf16>
    %569 = vector.shape_cast %568 : vector<1x1x192x32xbf16> to vector<192x32xbf16>
    %cst_305 = arith.constant dense<0.000000e+00> : vector<48x32xf32>
    %570 = tpu.matmul %567, %569, %cst_305 {dimension_numbers = #tpu.dot_dimension_numbers<[1], [0], [0], [1], [0, 0, 1, 1], [], []>} : vector<48x192xbf16>, vector<192x32xbf16>, vector<48x32xf32> -> vector<48x32xf32>
    %571 = arith.addf %520, %570 : vector<48x32xf32>
    %c1_306 = arith.constant 1 : index
    %c1_307 = arith.constant 1 : index
    %c0_308 = arith.constant 0 : index
    %c0_309 = arith.constant 0 : index
    %572 = vector.load %arg22[%c1_306, %c1_307, %c0_308, %c0_309] : memref<2x2x1x32xf32, #tpu.memory_space<vmem>>, vector<1x1x1x32xf32>
    %573 = vector.shape_cast %572 : vector<1x1x1x32xf32> to vector<1x32xf32>
    %574 = vector.broadcast %573 : vector<1x32xf32> to vector<48x32xf32>
    %575 = arith.addf %571, %574 : vector<48x32xf32>
    %c0_310 = arith.constant 0 : index
    %c0_311 = arith.constant 0 : index
    %576 = vector.load %arg29[%c0_310, %c0_311] : memref<2x48xf32, #tpu.memory_space<vmem>>, vector<2x48xf32>
    %cst_312 = arith.constant dense<0.000000e+00> : vector<2x32xf32>
    %577 = tpu.matmul %576, %313, %cst_312 {dimension_numbers = #tpu.dot_dimension_numbers<[1], [0], [0], [1], [0, 0, 1, 1], [], []>} : vector<2x48xf32>, vector<48x32xf32>, vector<2x32xf32> -> vector<2x32xf32>
    %c0_313 = arith.constant 0 : index
    %c0_314 = arith.constant 0 : index
    %578 = vector.load %arg23[%c0_313, %c0_314] : memref<1x32xf32, #tpu.memory_space<vmem>>, vector<1x32xf32>
    %c0_315 = arith.constant 0 : index
    %c0_316 = arith.constant 0 : index
    %579 = vector.load %arg24[%c0_315, %c0_316] : memref<1x32xf32, #tpu.memory_space<vmem>>, vector<1x32xf32>
    %cst_317 = arith.constant dense<0.000000e+00> : vector<2xf32>
    %580 = vector.multi_reduction <add>, %577, %cst_317 [1] : vector<2x32xf32> to vector<2xf32>
    %581 = vector.shape_cast %580 : vector<2xf32> to vector<2x1xf32>
    %cst_318 = arith.constant 3.200000e+01 : f32
    %582 = vector.broadcast %cst_318 : f32 to vector<2x1xf32>
    %583 = arith.divf %581, %582 : vector<2x1xf32>
    %584 = vector.broadcast %583 : vector<2x1xf32> to vector<2x32xf32>
    %585 = arith.subf %577, %584 : vector<2x32xf32>
    %586 = arith.mulf %585, %585 : vector<2x32xf32>
    %cst_319 = arith.constant dense<0.000000e+00> : vector<2xf32>
    %587 = vector.multi_reduction <add>, %586, %cst_319 [1] : vector<2x32xf32> to vector<2xf32>
    %588 = vector.shape_cast %587 : vector<2xf32> to vector<2x1xf32>
    %cst_320 = arith.constant 3.200000e+01 : f32
    %589 = vector.broadcast %cst_320 : f32 to vector<2x1xf32>
    %590 = arith.divf %588, %589 : vector<2x1xf32>
    %cst_321 = arith.constant 9.99999974E-6 : f32
    %591 = vector.broadcast %cst_321 : f32 to vector<2x1xf32>
    %592 = arith.addf %590, %591 : vector<2x1xf32>
    %593 = math.rsqrt %592 : vector<2x1xf32>
    %594 = vector.broadcast %593 : vector<2x1xf32> to vector<2x32xf32>
    %595 = arith.mulf %585, %594 : vector<2x32xf32>
    %596 = vector.broadcast %578 : vector<1x32xf32> to vector<2x32xf32>
    %597 = arith.mulf %595, %596 : vector<2x32xf32>
    %598 = vector.broadcast %579 : vector<1x32xf32> to vector<2x32xf32>
    %599 = arith.addf %597, %598 : vector<2x32xf32>
    %600 = arith.truncf %599 : vector<2x32xf32> to vector<2x32xbf16>
    %c0_322 = arith.constant 0 : index
    %c0_323 = arith.constant 0 : index
    %601 = vector.load %arg27[%c0_322, %c0_323] : memref<32x32xbf16, #tpu.memory_space<vmem>>, vector<32x32xbf16>
    %cst_324 = arith.constant dense<0.000000e+00> : vector<2x32xf32>
    %602 = tpu.matmul %600, %601, %cst_324 {dimension_numbers = #tpu.dot_dimension_numbers<[1], [0], [0], [1], [0, 0, 1, 1], [], []>} : vector<2x32xbf16>, vector<32x32xbf16>, vector<2x32xf32> -> vector<2x32xf32>
    %c0_325 = arith.constant 0 : index
    %c0_326 = arith.constant 0 : index
    %603 = vector.load %arg30[%c0_325, %c0_326] : memref<3x48xf32, #tpu.memory_space<vmem>>, vector<3x48xf32>
    %cst_327 = arith.constant dense<0.000000e+00> : vector<3x32xf32>
    %604 = tpu.matmul %603, %575, %cst_327 {dimension_numbers = #tpu.dot_dimension_numbers<[1], [0], [0], [1], [0, 0, 1, 1], [], []>} : vector<3x48xf32>, vector<48x32xf32>, vector<3x32xf32> -> vector<3x32xf32>
    %c0_328 = arith.constant 0 : index
    %c0_329 = arith.constant 0 : index
    %605 = vector.load %arg25[%c0_328, %c0_329] : memref<1x32xf32, #tpu.memory_space<vmem>>, vector<1x32xf32>
    %c0_330 = arith.constant 0 : index
    %c0_331 = arith.constant 0 : index
    %606 = vector.load %arg26[%c0_330, %c0_331] : memref<1x32xf32, #tpu.memory_space<vmem>>, vector<1x32xf32>
    %cst_332 = arith.constant dense<0.000000e+00> : vector<3xf32>
    %607 = vector.multi_reduction <add>, %604, %cst_332 [1] : vector<3x32xf32> to vector<3xf32>
    %608 = vector.shape_cast %607 : vector<3xf32> to vector<3x1xf32>
    %cst_333 = arith.constant 3.200000e+01 : f32
    %609 = vector.broadcast %cst_333 : f32 to vector<3x1xf32>
    %610 = arith.divf %608, %609 : vector<3x1xf32>
    %611 = vector.broadcast %610 : vector<3x1xf32> to vector<3x32xf32>
    %612 = arith.subf %604, %611 : vector<3x32xf32>
    %613 = arith.mulf %612, %612 : vector<3x32xf32>
    %cst_334 = arith.constant dense<0.000000e+00> : vector<3xf32>
    %614 = vector.multi_reduction <add>, %613, %cst_334 [1] : vector<3x32xf32> to vector<3xf32>
    %615 = vector.shape_cast %614 : vector<3xf32> to vector<3x1xf32>
    %cst_335 = arith.constant 3.200000e+01 : f32
    %616 = vector.broadcast %cst_335 : f32 to vector<3x1xf32>
    %617 = arith.divf %615, %616 : vector<3x1xf32>
    %cst_336 = arith.constant 9.99999974E-6 : f32
    %618 = vector.broadcast %cst_336 : f32 to vector<3x1xf32>
    %619 = arith.addf %617, %618 : vector<3x1xf32>
    %620 = math.rsqrt %619 : vector<3x1xf32>
    %621 = vector.broadcast %620 : vector<3x1xf32> to vector<3x32xf32>
    %622 = arith.mulf %612, %621 : vector<3x32xf32>
    %623 = vector.broadcast %605 : vector<1x32xf32> to vector<3x32xf32>
    %624 = arith.mulf %622, %623 : vector<3x32xf32>
    %625 = vector.broadcast %606 : vector<1x32xf32> to vector<3x32xf32>
    %626 = arith.addf %624, %625 : vector<3x32xf32>
    %627 = arith.truncf %626 : vector<3x32xf32> to vector<3x32xbf16>
    %c0_337 = arith.constant 0 : index
    %c0_338 = arith.constant 0 : index
    %628 = vector.load %arg28[%c0_337, %c0_338] : memref<32x32xbf16, #tpu.memory_space<vmem>>, vector<32x32xbf16>
    %cst_339 = arith.constant dense<0.000000e+00> : vector<3x32xf32>
    %629 = tpu.matmul %627, %628, %cst_339 {dimension_numbers = #tpu.dot_dimension_numbers<[1], [0], [0], [1], [0, 0, 1, 1], [], []>} : vector<3x32xbf16>, vector<32x32xbf16>, vector<3x32xf32> -> vector<3x32xf32>
    %630 = arith.mulf %602, %602 : vector<2x32xf32>
    %cst_340 = arith.constant dense<0.000000e+00> : vector<2xf32>
    %631 = vector.multi_reduction <add>, %630, %cst_340 [1] : vector<2x32xf32> to vector<2xf32>
    %632 = vector.shape_cast %631 : vector<2xf32> to vector<2x1xf32>
    %cst_341 = arith.constant 9.99999996E-13 : f32
    %633 = vector.broadcast %cst_341 : f32 to vector<2x1xf32>
    %634 = arith.addf %632, %633 : vector<2x1xf32>
    %635 = math.rsqrt %634 : vector<2x1xf32>
    %636 = vector.broadcast %635 : vector<2x1xf32> to vector<2x32xf32>
    %637 = arith.mulf %602, %636 : vector<2x32xf32>
    %638 = arith.mulf %629, %629 : vector<3x32xf32>
    %cst_342 = arith.constant dense<0.000000e+00> : vector<3xf32>
    %639 = vector.multi_reduction <add>, %638, %cst_342 [1] : vector<3x32xf32> to vector<3xf32>
    %640 = vector.shape_cast %639 : vector<3xf32> to vector<3x1xf32>
    %cst_343 = arith.constant 9.99999996E-13 : f32
    %641 = vector.broadcast %cst_343 : f32 to vector<3x1xf32>
    %642 = arith.addf %640, %641 : vector<3x1xf32>
    %643 = math.rsqrt %642 : vector<3x1xf32>
    %644 = vector.broadcast %643 : vector<3x1xf32> to vector<3x32xf32>
    %645 = arith.mulf %629, %644 : vector<3x32xf32>
    %c0_344 = arith.constant 0 : index
    %c0_345 = arith.constant 0 : index
    %646 = vector.load %arg31[%c0_344, %c0_345] : memref<1x1xf32, #tpu.memory_space<vmem>>, vector<1x1xf32>
    %cst_346 = arith.constant 4.60517025 : f32
    %647 = vector.broadcast %cst_346 : f32 to vector<1x1xf32>
    %648 = arith.minimumf %646, %647 : vector<1x1xf32>
    %649 = math.exp %648 : vector<1x1xf32>
    %cst_347 = arith.constant dense<0.000000e+00> : vector<2x3xf32>
    %650 = tpu.matmul %637, %645, %cst_347 {dimension_numbers = #tpu.dot_dimension_numbers<[1], [1], [0], [0], [0, 0, 1, 0], [], []>} : vector<2x32xf32>, vector<3x32xf32>, vector<2x3xf32> -> vector<2x3xf32>
    %651 = vector.broadcast %649 : vector<1x1xf32> to vector<2x3xf32>
    %652 = arith.mulf %651, %650 : vector<2x3xf32>
    %cst_348 = arith.constant dense<0xFF800000> : vector<2xf32>
    %653 = vector.multi_reduction <maximumf>, %652, %cst_348 [1] : vector<2x3xf32> to vector<2xf32>
    %654 = vector.shape_cast %653 : vector<2xf32> to vector<2x1xf32>
    %655 = vector.broadcast %654 : vector<2x1xf32> to vector<2x3xf32>
    %656 = arith.subf %652, %655 : vector<2x3xf32>
    %657 = math.exp %656 : vector<2x3xf32>
    %cst_349 = arith.constant dense<0.000000e+00> : vector<2xf32>
    %658 = vector.multi_reduction <add>, %657, %cst_349 [1] : vector<2x3xf32> to vector<2xf32>
    %659 = vector.shape_cast %658 : vector<2xf32> to vector<2x1xf32>
    %660 = vector.broadcast %659 : vector<2x1xf32> to vector<2x3xf32>
    %661 = arith.divf %657, %660 : vector<2x3xf32>
    %c0_350 = arith.constant 0 : index
    %c0_351 = arith.constant 0 : index
    %662 = vector.load %arg32[%c0_350, %c0_351] : memref<2x3xf32, #tpu.memory_space<vmem>>, vector<2x3xf32>
    tpu.vector_store %arg32[%c0_350, %c0_351], %661 {strides = array<i32>} : memref<2x3xf32, #tpu.memory_space<vmem>>, vector<2x3xf32>,
    %c0_352 = arith.constant 0 : index
    %c0_353 = arith.constant 0 : index
    %663 = vector.load %arg33[%c0_352, %c0_353] : memref<2x32xf32, #tpu.memory_space<vmem>>, vector<2x32xf32>
    tpu.vector_store %arg33[%c0_352, %c0_353], %637 {strides = array<i32>} : memref<2x32xf32, #tpu.memory_space<vmem>>, vector<2x32xf32>,
    %c0_354 = arith.constant 0 : index
    %c0_355 = arith.constant 0 : index
    %664 = vector.load %arg34[%c0_354, %c0_355] : memref<3x32xf32, #tpu.memory_space<vmem>>, vector<3x32xf32>
    tpu.vector_store %arg34[%c0_354, %c0_355], %645 {strides = array<i32>} : memref<3x32xf32, #tpu.memory_space<vmem>>, vector<3x32xf32>,
    return
  }
}

</mosaic_0001>

<llo_original>
// kernel: adapter_clip_forward.1
$region0: #{adapter_clip_forward.1}
  #allocation0 [shape = 'u32[]', space=smem, size = 0x4, offset = 0x4, fixed_abs, tag = 'smem constant byte address 0x4 - core index']
  #allocation1 [shape = 'u32[144,128]{1,0:T(1,128)}', space=vmem, size = 0x12000, scoped, tag = 'internal scratch']
  #allocation2 [shape = 'f32[1,1]{1,0:T(1,128)S(1)}', space=vmem, size = 0x200, scoped, tag = 'scoped memory for adapter_clip_forward.1']
  %s0 = inlined_call_operand.smem [shape: u32[35], index: -1, kind: input, shape index: {}]
  %s1 = sld [smem:[%s0]]
  %s2 = scalar_lea.smem %s0, 1
  %s3 = sld [smem:[%s2]]
  %s4 = scalar_lea.smem %s0, 2
  %s5 = sld [smem:[%s4]]
  %s6 = scalar_lea.smem %s0, 3
  %s7 = sld [smem:[%s6]]
  %s8 = scalar_lea.smem %s0, 4
  %s9 = sld [smem:[%s8]]
  %s10 = scalar_lea.smem %s0, 5
  %s11 = sld [smem:[%s10]]
  %s12 = scalar_lea.smem %s0, 6
  %s13 = sld [smem:[%s12]]
  %s14 = scalar_lea.smem %s0, 7
  %s15 = sld [smem:[%s14]]
  %s16 = scalar_lea.smem %s0, 8
  %s17 = sld [smem:[%s16]]
  %s18 = scalar_lea.smem %s0, 9
  %s19 = sld [smem:[%s18]]
  %s20 = scalar_lea.smem %s0, 10
  %s21 = sld [smem:[%s20]]
  %s22 = scalar_lea.smem %s0, 11
  %s23 = sld [smem:[%s22]]
  %s24 = scalar_lea.smem %s0, 12
  %s25 = sld [smem:[%s24]]
  %s26 = scalar_lea.smem %s0, 13
  %s27 = sld [smem:[%s26]]
  %s28 = scalar_lea.smem %s0, 14
  %s29 = sld [smem:[%s28]]
  %s30 = scalar_lea.smem %s0, 15
  %s31 = sld [smem:[%s30]]
  %s32 = scalar_lea.smem %s0, 16
  %s33 = sld [smem:[%s32]]
  %s34 = scalar_lea.smem %s0, 17
  %s35 = sld [smem:[%s34]]
  %s36 = scalar_lea.smem %s0, 18
  %s37 = sld [smem:[%s36]]
  %s38 = scalar_lea.smem %s0, 19
  %s39 = sld [smem:[%s38]]
  %s40 = scalar_lea.smem %s0, 20
  %s41 = sld [smem:[%s40]]
  %s42 = scalar_lea.smem %s0, 21
  %s43 = sld [smem:[%s42]]
  %s44 = scalar_lea.smem %s0, 22
  %s45 = sld [smem:[%s44]]
  %s46 = scalar_lea.smem %s0, 23
  %s47 = sld [smem:[%s46]]
  %s48 = scalar_lea.smem %s0, 24
  %s49 = sld [smem:[%s48]]
  %s50 = scalar_lea.smem %s0, 25
  %s51 = sld [smem:[%s50]]
  %s52 = scalar_lea.smem %s0, 26
  %s53 = sld [smem:[%s52]]
  %s54 = scalar_lea.smem %s0, 27
  %s55 = sld [smem:[%s54]]
  %s56 = scalar_lea.smem %s0, 28
  %s57 = sld [smem:[%s56]]
  %s58 = scalar_lea.smem %s0, 29
  %s59 = sld [smem:[%s58]]
  %s60 = scalar_lea.smem %s0, 30
  %s61 = sld [smem:[%s60]]
  %s62 = scalar_lea.smem %s0, 31
  %s63 = sld [smem:[%s62]]
  %s64 = scalar_lea.smem %s0, 32
  %s65 = sld [smem:[%s64]]
  %s66 = scalar_lea.smem %s0, 33
  %s67 = sld [smem:[%s66]]
  %s68 = scalar_lea.smem %s0, 34
  %s69 = sld [smem:[%s68]]
  %70 = xla_tuple %s65, %s67, %s69
  %s71 = sld [smem:[#allocation0]]
  $region154: #{adapter_clip_forward.1} parent=0
    _
  %s73 = ssub.s32 1, %s71
  %s74 = scalar_select 0, %s73, %s71
  %v75 = vstv %s63
  %76 = vst [vmem:[#allocation2] sm:$0x1] %v75
  $region1: #{adapter_clip_forward.1} parent=0
    #allocation3 [shape = 'u8[1024]{0}', space=vmem, size = 0x400, scoped, tag = 'output window, operand 0, single buffered']
    #allocation4 [shape = 's32[1]{0}', space=sflag, size = 0x4, scoped, tag = 'scoped memory for adapter_clip_forward.1']
    #allocation5 [shape = 'u8[1024]{0}', space=vmem, size = 0x400, scoped, tag = 'output window, operand 1, single buffered']
    #allocation6 [shape = 's32[1]{0}', space=sflag, size = 0x4, scoped, tag = 'scoped memory for adapter_clip_forward.1']
    #allocation7 [shape = 'u8[2048]{0}', space=vmem, size = 0x800, scoped, tag = 'output window, operand 2, single buffered']
    %77 = vsyncpa [#allocation4], 0
    %78 = vsyncpa [#allocation6], 0
    // Predicated region
    $region2: #{adapter_clip_forward.1} parent=1 // pred_check
      _
    $region3: #{adapter_clip_forward.1} parent=1 // pred_check_branch
      %80 = sbr.rel (0) target = $region5
    $region4: #{adapter_clip_forward.1} parent=1 // pred_region
      _
    $region5: #{adapter_clip_forward.1} parent=1 // pred_fallthru
      _
    // Predicated region
    $region6: #{adapter_clip_forward.1} parent=1 // pred_check
      _
    $region7: #{adapter_clip_forward.1} parent=1 // pred_check_branch
      %82 = sbr.rel (0) target = $region9
    $region8: #{adapter_clip_forward.1} parent=1 // pred_region
      _
    $region9: #{adapter_clip_forward.1} parent=1 // pred_fallthru
      _
    // Predicated region
    $region10: #{adapter_clip_forward.1} parent=1 // pred_check
      _
    $region11: #{adapter_clip_forward.1} parent=1 // pred_check_branch
      %84 = sbr.rel (0) target = $region13
    $region12: #{adapter_clip_forward.1} parent=1 // pred_region
      _
    $region13: #{adapter_clip_forward.1} parent=1 // pred_fallthru
      _
    // Predicated region
    $region14: #{adapter_clip_forward.1} parent=1 // pred_check
      _
    $region15: #{adapter_clip_forward.1} parent=1 // pred_check_branch
      %86 = sbr.rel (0) target = $region17
    $region16: #{adapter_clip_forward.1} parent=1 // pred_region
      _
    $region17: #{adapter_clip_forward.1} parent=1 // pred_fallthru
      _
    // Predicated region
    $region18: #{adapter_clip_forward.1} parent=1 // pred_check
      _
    $region19: #{adapter_clip_forward.1} parent=1 // pred_check_branch
      %88 = sbr.rel (0) target = $region21
    $region20: #{adapter_clip_forward.1} parent=1 // pred_region
      _
    $region21: #{adapter_clip_forward.1} parent=1 // pred_fallthru
      _
    // Predicated region
    $region22: #{adapter_clip_forward.1} parent=1 // pred_check
      _
    $region23: #{adapter_clip_forward.1} parent=1 // pred_check_branch
      %90 = sbr.rel (0) target = $region25
    $region24: #{adapter_clip_forward.1} parent=1 // pred_region
      _
    $region25: #{adapter_clip_forward.1} parent=1 // pred_fallthru
      _
    // Predicated region
    $region26: #{adapter_clip_forward.1} parent=1 // pred_check
      _
    $region27: #{adapter_clip_forward.1} parent=1 // pred_check_branch
      %92 = sbr.rel (0) target = $region29
    $region28: #{adapter_clip_forward.1} parent=1 // pred_region
      _
    $region29: #{adapter_clip_forward.1} parent=1 // pred_fallthru
      _
    // Predicated region
    $region30: #{adapter_clip_forward.1} parent=1 // pred_check
      _
    $region31: #{adapter_clip_forward.1} parent=1 // pred_check_branch
      %94 = sbr.rel (0) target = $region33
    $region32: #{adapter_clip_forward.1} parent=1 // pred_region
      _
    $region33: #{adapter_clip_forward.1} parent=1 // pred_fallthru
      _
    // Predicated region
    $region34: #{adapter_clip_forward.1} parent=1 // pred_check
      _
    $region35: #{adapter_clip_forward.1} parent=1 // pred_check_branch
      %96 = sbr.rel (0) target = $region37
    $region36: #{adapter_clip_forward.1} parent=1 // pred_region
      _
    $region37: #{adapter_clip_forward.1} parent=1 // pred_fallthru
      _
    // Predicated region
    $region38: #{adapter_clip_forward.1} parent=1 // pred_check
      _
    $region39: #{adapter_clip_forward.1} parent=1 // pred_check_branch
      %98 = sbr.rel (0) target = $region41
    $region40: #{adapter_clip_forward.1} parent=1 // pred_region
      _
    $region41: #{adapter_clip_forward.1} parent=1 // pred_fallthru
      _
    // Predicated region
    $region42: #{adapter_clip_forward.1} parent=1 // pred_check
      _
    $region43: #{adapter_clip_forward.1} parent=1 // pred_check_branch
      %100 = sbr.rel (0) target = $region45
    $region44: #{adapter_clip_forward.1} parent=1 // pred_region
      _
    $region45: #{adapter_clip_forward.1} parent=1 // pred_fallthru
      _
    // Predicated region
    $region46: #{adapter_clip_forward.1} parent=1 // pred_check
      _
    $region47: #{adapter_clip_forward.1} parent=1 // pred_check_branch
      %102 = sbr.rel (0) target = $region49
    $region48: #{adapter_clip_forward.1} parent=1 // pred_region
      _
    $region49: #{adapter_clip_forward.1} parent=1 // pred_fallthru
      _
    // Predicated region
    $region50: #{adapter_clip_forward.1} parent=1 // pred_check
      _
    $region51: #{adapter_clip_forward.1} parent=1 // pred_check_branch
      %104 = sbr.rel (0) target = $region53
    $region52: #{adapter_clip_forward.1} parent=1 // pred_region
      _
    $region53: #{adapter_clip_forward.1} parent=1 // pred_fallthru
      _
    // Predicated region
    $region54: #{adapter_clip_forward.1} parent=1 // pred_check
      _
    $region55: #{adapter_clip_forward.1} parent=1 // pred_check_branch
      %106 = sbr.rel (0) target = $region57
    $region56: #{adapter_clip_forward.1} parent=1 // pred_region
      _
    $region57: #{adapter_clip_forward.1} parent=1 // pred_fallthru
      _
    // Predicated region
    $region58: #{adapter_clip_forward.1} parent=1 // pred_check
      _
    $region59: #{adapter_clip_forward.1} parent=1 // pred_check_branch
      %108 = sbr.rel (0) target = $region61
    $region60: #{adapter_clip_forward.1} parent=1 // pred_region
      _
    $region61: #{adapter_clip_forward.1} parent=1 // pred_fallthru
      _
    // Predicated region
    $region62: #{adapter_clip_forward.1} parent=1 // pred_check
      _
    $region63: #{adapter_clip_forward.1} parent=1 // pred_check_branch
      %110 = sbr.rel (0) target = $region65
    $region64: #{adapter_clip_forward.1} parent=1 // pred_region
      _
    $region65: #{adapter_clip_forward.1} parent=1 // pred_fallthru
      _
    // Predicated region
    $region66: #{adapter_clip_forward.1} parent=1 // pred_check
      _
    $region67: #{adapter_clip_forward.1} parent=1 // pred_check_branch
      %112 = sbr.rel (0) target = $region69
    $region68: #{adapter_clip_forward.1} parent=1 // pred_region
      _
    $region69: #{adapter_clip_forward.1} parent=1 // pred_fallthru
      _
    // Predicated region
    $region70: #{adapter_clip_forward.1} parent=1 // pred_check
      _
    $region71: #{adapter_clip_forward.1} parent=1 // pred_check_branch
      %114 = sbr.rel (0) target = $region73
    $region72: #{adapter_clip_forward.1} parent=1 // pred_region
      _
    $region73: #{adapter_clip_forward.1} parent=1 // pred_fallthru
      _
    // Predicated region
    $region74: #{adapter_clip_forward.1} parent=1 // pred_check
      _
    $region75: #{adapter_clip_forward.1} parent=1 // pred_check_branch
      %116 = sbr.rel (0) target = $region77
    $region76: #{adapter_clip_forward.1} parent=1 // pred_region
      _
    $region77: #{adapter_clip_forward.1} parent=1 // pred_fallthru
      _
    // Predicated region
    $region78: #{adapter_clip_forward.1} parent=1 // pred_check
      _
    $region79: #{adapter_clip_forward.1} parent=1 // pred_check_branch
      %118 = sbr.rel (0) target = $region81
    $region80: #{adapter_clip_forward.1} parent=1 // pred_region
      _
    $region81: #{adapter_clip_forward.1} parent=1 // pred_fallthru
      _
    // Predicated region
    $region82: #{adapter_clip_forward.1} parent=1 // pred_check
      _
    $region83: #{adapter_clip_forward.1} parent=1 // pred_check_branch
      %120 = sbr.rel (0) target = $region85
    $region84: #{adapter_clip_forward.1} parent=1 // pred_region
      _
    $region85: #{adapter_clip_forward.1} parent=1 // pred_fallthru
      _
    // Predicated region
    $region86: #{adapter_clip_forward.1} parent=1 // pred_check
      _
    $region87: #{adapter_clip_forward.1} parent=1 // pred_check_branch
      %122 = sbr.rel (0) target = $region89
    $region88: #{adapter_clip_forward.1} parent=1 // pred_region
      _
    $region89: #{adapter_clip_forward.1} parent=1 // pred_fallthru
      _
    // Predicated region
    $region90: #{adapter_clip_forward.1} parent=1 // pred_check
      _
    $region91: #{adapter_clip_forward.1} parent=1 // pred_check_branch
      %124 = sbr.rel (0) target = $region93
    $region92: #{adapter_clip_forward.1} parent=1 // pred_region
      _
    $region93: #{adapter_clip_forward.1} parent=1 // pred_fallthru
      _
    // Predicated region
    $region94: #{adapter_clip_forward.1} parent=1 // pred_check
      _
    $region95: #{adapter_clip_forward.1} parent=1 // pred_check_branch
      %126 = sbr.rel (0) target = $region97
    $region96: #{adapter_clip_forward.1} parent=1 // pred_region
      _
    $region97: #{adapter_clip_forward.1} parent=1 // pred_fallthru
      _
    // Predicated region
    $region98: #{adapter_clip_forward.1} parent=1 // pred_check
      _
    $region99: #{adapter_clip_forward.1} parent=1 // pred_check_branch
      %128 = sbr.rel (0) target = $region101
    $region100: #{adapter_clip_forward.1} parent=1 // pred_region
      _
    $region101: #{adapter_clip_forward.1} parent=1 // pred_fallthru
      _
    // Predicated region
    $region102: #{adapter_clip_forward.1} parent=1 // pred_check
      _
    $region103: #{adapter_clip_forward.1} parent=1 // pred_check_branch
      %130 = sbr.rel (0) target = $region105
    $region104: #{adapter_clip_forward.1} parent=1 // pred_region
      _
    $region105: #{adapter_clip_forward.1} parent=1 // pred_fallthru
      _
    // Predicated region
    $region106: #{adapter_clip_forward.1} parent=1 // pred_check
      _
    $region107: #{adapter_clip_forward.1} parent=1 // pred_check_branch
      %132 = sbr.rel (0) target = $region109
    $region108: #{adapter_clip_forward.1} parent=1 // pred_region
      _
    $region109: #{adapter_clip_forward.1} parent=1 // pred_fallthru
      _
    // Predicated region
    $region110: #{adapter_clip_forward.1} parent=1 // pred_check
      _
    $region111: #{adapter_clip_forward.1} parent=1 // pred_check_branch
      %134 = sbr.rel (0) target = $region113
    $region112: #{adapter_clip_forward.1} parent=1 // pred_region
      _
    $region113: #{adapter_clip_forward.1} parent=1 // pred_fallthru
      _
    // Predicated region
    $region114: #{adapter_clip_forward.1} parent=1 // pred_check
      _
    $region115: #{adapter_clip_forward.1} parent=1 // pred_check_branch
      %136 = sbr.rel (0) target = $region117
    $region116: #{adapter_clip_forward.1} parent=1 // pred_region
      _
    $region117: #{adapter_clip_forward.1} parent=1 // pred_fallthru
      _
    // Predicated region
    $region118: #{adapter_clip_forward.1} parent=1 // pred_check
      _
    $region119: #{adapter_clip_forward.1} parent=1 // pred_check_branch
      %138 = sbr.rel (0) target = $region121
    $region120: #{adapter_clip_forward.1} parent=1 // pred_region
      _
    $region121: #{adapter_clip_forward.1} parent=1 // pred_fallthru
      _
    // Predicated region
    $region122: #{adapter_clip_forward.1} parent=1 // pred_check
      _
    $region123: #{adapter_clip_forward.1} parent=1 // pred_check_branch
      %140 = sbr.rel (0) target = $region125
    $region124: #{adapter_clip_forward.1} parent=1 // pred_region
      _
    $region125: #{adapter_clip_forward.1} parent=1 // pred_fallthru
      _
    // Predicated region
    $region126: #{adapter_clip_forward.1} parent=1 // pred_check
      _
    $region127: #{adapter_clip_forward.1} parent=1 // pred_check_branch
      %142 = sbr.rel (0) target = $region129
    $region128: #{adapter_clip_forward.1} parent=1 // pred_region
      _
    $region129: #{adapter_clip_forward.1} parent=1 // pred_fallthru
      _
    %v144 = vld [vmem:[%s1] sm:$0xff]
    %v145 = vld [vmem:[%s1 + $0x8] sm:$0xff]
    %v146 = vld [vmem:[%s1 + $0x10] sm:$0xff]
    %v147 = vld [vmem:[%s1 + $0x18] sm:$0xff]
    %v148 = vpack.c.bf16 %v145, %v144
    %v149 = vpack.c.bf16 %v147, %v146
    %v150 = vld [vmem:[%s3] sm:$0xf]
    %v151 = vld [vmem:[%s3 + $0x4] sm:$0xf]
    %v152 = vld [vmem:[%s3 + $0x8] sm:$0xf]
    %v153 = vld [vmem:[%s3 + $0xc] sm:$0xf]
    %v154 = vld [vmem:[%s3 + $0x10] sm:$0xf]
    %v155 = vld [vmem:[%s3 + $0x14] sm:$0xf]
    %v162 = vunpack.c.l.b16 %v150
    %v163 = vunpack.c.l.b16 %v151
    %v164 = vunpack.c.l.b16 %v152
    %v165 = vunpack.c.l.b16 %v153
    %v166 = vunpack.c.l.b16 %v154
    %v167 = vunpack.c.l.b16 %v155
    %v168 = vpack.c.b16 %v163, %v162
    %v169 = vpack.c.b16 %v165, %v164
    %v170 = vpack.c.b16 %v167, %v166
    %vm174 = vcmask 392192
    %v176 = vsel %vm174, %v148, 0
    %v179 = vsel %vm174, %v149, 0
    %181 = vmatprep.subr.bf16.mxu0 0
    %182 = vmatpush1.bf16.msra.mxu0 0
    %183 = vmatprep.subr.bf16.mxu0 0
    %184 = vmatpush1.bf16.msra.mxu0 0
    %185 = vmatprep.subr.bf16.mxu0 0
    %186 = vmatpush1.bf16.msra.mxu0 0
    %187 = vmatprep.subr.bf16.mxu0 0
    %188 = vmatpush1.bf16.msra.mxu0 0
    %189 = vmatprep.subr.bf16.mxu0 0
    %190 = vmatpush1.bf16.msra.mxu0 0
    %191 = vmatprep.subr.bf16.mxu0 0
    %192 = vmatpush1.bf16.msra.mxu0 %v170
    %193 = vmatprep.subr.bf16.mxu0 0
    %194 = vmatpush1.bf16.msra.mxu0 %v169
    %195 = vmatprep.subr.bf16.mxu0 0
    %196 = vmatpush1.bf16.msra.mxu0 %v168
    %197 = vmatprep.subr.bf16.mxu0 0
    %198 = vmatpush2.bf16.msra.mxu0 0
    %199 = vmatprep.subr.bf16.mxu0 0
    %200 = vmatpush2.bf16.msra.mxu0 0
    %201 = vmatprep.subr.bf16.mxu0 0
    %202 = vmatpush2.bf16.msra.mxu0 0
    %203 = vmatprep.subr.bf16.mxu0 0
    %204 = vmatpush2.bf16.msra.mxu0 0
    %205 = vmatprep.subr.bf16.mxu0 0
    %206 = vmatpush2.bf16.msra.mxu0 0
    %207 = vmatprep.subr.bf16.mxu0 0
    %208 = vmatpush2.bf16.msra.mxu0 0
    %209 = vmatprep.subr.bf16.mxu0 0
    %210 = vmatpush2.bf16.msra.mxu0 0
    %211 = vmatprep.subr.bf16.mxu0 0
    %212 = vmatpush2.bf16.msra.mxu0 0
    %213 = vmatprep.mubr.bf16.mxu0 0
    %214 = vmatmul.mubr.bf16.gmra.mxu0 %v176
    %v215 = vpop.f32.mrf.mxu0
    %v216 = vadd.f32 0.0, %v215
    %v217 = vpop.f32.mrf.mxu0
    %v218 = vpop.f32.mrf.mxu0
    %v219 = vadd.f32 0.0, %v218
    %v220 = vpop.f32.mrf.mxu0
    %221 = vmatprep.mubr.bf16.mxu0 0
    %222 = vmatmul.mubr.bf16.gmra.mxu0 %v179
    %v223 = vpop.f32.mrf.mxu0
    %v224 = vadd.f32 0.0, %v223
    %v225 = vpop.f32.mrf.mxu0
    %v226 = vpop.f32.mrf.mxu0
    %v227 = vadd.f32 0.0, %v226
    %v228 = vpop.f32.mrf.mxu0
    %229 = vdwg.mxu0
    %v230 = vld [vmem:[%s5] sm:$0xf]
    %v231 = vld [vmem:[%s5 + $0x4] sm:$0xf]
    %v232 = vld [vmem:[%s5 + $0x8] sm:$0xf]
    %v233 = vld [vmem:[%s5 + $0xc] sm:$0xf]
    %v234 = vld [vmem:[%s5 + $0x10] sm:$0xf]
    %v235 = vld [vmem:[%s5 + $0x14] sm:$0xf]
    %v236 = vpack.c.bf16 %v219, %v216
    %v237 = vpack.c.bf16 %v227, %v224
    %v244 = vunpack.c.l.b16 %v230
    %v245 = vunpack.c.l.b16 %v231
    %v246 = vunpack.c.l.b16 %v232
    %v247 = vunpack.c.l.b16 %v233
    %v248 = vunpack.c.l.b16 %v234
    %v249 = vunpack.c.l.b16 %v235
    %v250 = vpack.c.b16 %v245, %v244
    %v251 = vpack.c.b16 %v247, %v246
    %v252 = vpack.c.b16 %v249, %v248
    %vm253 = vcmask 261120
    %v255 = vsel %vm253, %v250, 0
    %v258 = vsel %vm253, %v251, 0
    %v261 = vsel %vm253, %v252, 0
    %263 = vmatprep.subr.bf16.mxu0 0
    %264 = vmatpush1.bf16.msra.mxu0 0
    %265 = vmatprep.subr.bf16.mxu0 0
    %266 = vmatpush1.bf16.msra.mxu0 0
    %267 = vmatprep.subr.bf16.mxu0 0
    %268 = vmatpush1.bf16.msra.mxu0 0
    %269 = vmatprep.subr.bf16.mxu0 0
    %270 = vmatpush1.bf16.msra.mxu0 0
    %271 = vmatprep.subr.bf16.mxu0 0
    %272 = vmatpush1.bf16.msra.mxu0 0
    %273 = vmatprep.subr.bf16.mxu0 0
    %274 = vmatpush1.bf16.msra.mxu0 0
    %275 = vmatprep.subr.bf16.mxu0 0
    %276 = vmatpush1.bf16.msra.mxu0 %v237
    %277 = vmatprep.subr.bf16.mxu0 0
    %278 = vmatpush1.bf16.msra.mxu0 %v236
    %279 = vmatprep.subr.bf16.mxu0 0
    %280 = vmatpush2.bf16.msra.mxu0 0
    %281 = vmatprep.subr.bf16.mxu0 0
    %282 = vmatpush2.bf16.msra.mxu0 0
    %283 = vmatprep.subr.bf16.mxu0 0
    %284 = vmatpush2.bf16.msra.mxu0 0
    %285 = vmatprep.subr.bf16.mxu0 0
    %286 = vmatpush2.bf16.msra.mxu0 0
    %287 = vmatprep.subr.bf16.mxu0 0
    %288 = vmatpush2.bf16.msra.mxu0 0
    %289 = vmatprep.subr.bf16.mxu0 0
    %290 = vmatpush2.bf16.msra.mxu0 0
    %291 = vmatprep.subr.bf16.mxu0 0
    %292 = vmatpush2.bf16.msra.mxu0 0
    %293 = vmatprep.subr.bf16.mxu0 0
    %294 = vmatpush2.bf16.msra.mxu0 0
    %295 = vmatprep.mubr.bf16.mxu0 0
    %296 = vmatmul.mubr.bf16.gmra.mxu0 %v255
    %v297 = vpop.f32.mrf.mxu0
    %v298 = vadd.f32 0.0, %v297
    %v299 = vpop.f32.mrf.mxu0
    %v300 = vpop.f32.mrf.mxu0
    %v301 = vadd.f32 0.0, %v300
    %v302 = vpop.f32.mrf.mxu0
    %303 = vmatprep.mubr.bf16.mxu0 0
    %304 = vmatmul.mubr.bf16.gmra.mxu0 %v258
    %v305 = vpop.f32.mrf.mxu0
    %v306 = vadd.f32 0.0, %v305
    %v307 = vpop.f32.mrf.mxu0
    %v308 = vpop.f32.mrf.mxu0
    %v309 = vadd.f32 0.0, %v308
    %v310 = vpop.f32.mrf.mxu0
    %311 = vmatprep.mubr.bf16.mxu0 0
    %312 = vmatmul.mubr.bf16.gmra.mxu0 %v261
    %v313 = vpop.f32.mrf.mxu0
    %v314 = vadd.f32 0.0, %v313
    %v315 = vpop.f32.mrf.mxu0
    %v316 = vpop.f32.mrf.mxu0
    %v317 = vadd.f32 0.0, %v316
    %v318 = vpop.f32.mrf.mxu0
    %319 = vdwg.mxu0
    %v320 = vld [vmem:[%s7] sm:$0xff]
    %v321 = vld [vmem:[%s7 + $0x8] sm:$0xff]
    %v322 = vld [vmem:[%s7 + $0x10] sm:$0xff]
    %v323 = vadd.f32 %v298, %v320
    %v324 = vadd.f32 %v301, %v321
    %v325 = vadd.f32 %v306, %v322
    %v326 = vadd.f32 %v309, %v320
    %v327 = vadd.f32 %v314, %v321
    %v328 = vadd.f32 %v317, %v322
    %v329 = vld [vmem:[%s9] sm:$0x1]
    %v330 = vld [vmem:[%s11] sm:$0x1]
    %v331 = vsel %vm253, %v323, 0.0
    %332 = vadd.xlane.f32.xlu0 %v331
    %v333 = vpop.xlane.xlu0 %332
    %v334 = vsel %vm253, %v324, 0.0
    %335 = vadd.xlane.f32.xlu0 %v334
    %v336 = vpop.xlane.xlu0 %335
    %v337 = vsel %vm253, %v325, 0.0
    %338 = vadd.xlane.f32.xlu0 %v337
    %v339 = vpop.xlane.xlu0 %338
    %v340 = vsel %vm253, %v326, 0.0
    %341 = vadd.xlane.f32.xlu0 %v340
    %v342 = vpop.xlane.xlu0 %341
    %v343 = vsel %vm253, %v327, 0.0
    %344 = vadd.xlane.f32.xlu0 %v343
    %v345 = vpop.xlane.xlu0 %344
    %v346 = vsel %vm253, %v328, 0.0
    %347 = vadd.xlane.f32.xlu0 %v346
    %v348 = vpop.xlane.xlu0 %347
    %v349 = vrcp.pop 32.0
    %v350 = vmul.f32 %v333, %v349
    %v351 = vmul.f32 %v336, %v349
    %v352 = vmul.f32 %v339, %v349
    %v353 = vmul.f32 %v342, %v349
    %v354 = vmul.f32 %v345, %v349
    %v355 = vmul.f32 %v348, %v349
    %v356 = vsub.f32 %v323, %v350
    %v357 = vsub.f32 %v324, %v351
    %v358 = vsub.f32 %v325, %v352
    %v359 = vsub.f32 %v326, %v353
    %v360 = vsub.f32 %v327, %v354
    %v361 = vsub.f32 %v328, %v355
    %v362 = vmul.f32 %v356, %v356
    %v363 = vmul.f32 %v357, %v357
    %v364 = vmul.f32 %v358, %v358
    %v365 = vmul.f32 %v359, %v359
    %v366 = vmul.f32 %v360, %v360
    %v367 = vmul.f32 %v361, %v361
    %v368 = vsel %vm253, %v362, 0.0
    %369 = vadd.xlane.f32.xlu0 %v368
    %v370 = vpop.xlane.xlu0 %369
    %v371 = vsel %vm253, %v363, 0.0
    %372 = vadd.xlane.f32.xlu0 %v371
    %v373 = vpop.xlane.xlu0 %372
    %v374 = vsel %vm253, %v364, 0.0
    %375 = vadd.xlane.f32.xlu0 %v374
    %v376 = vpop.xlane.xlu0 %375
    %v377 = vsel %vm253, %v365, 0.0
    %378 = vadd.xlane.f32.xlu0 %v377
    %v379 = vpop.xlane.xlu0 %378
    %v380 = vsel %vm253, %v366, 0.0
    %381 = vadd.xlane.f32.xlu0 %v380
    %v382 = vpop.xlane.xlu0 %381
    %v383 = vsel %vm253, %v367, 0.0
    %384 = vadd.xlane.f32.xlu0 %v383
    %v385 = vpop.xlane.xlu0 %384
    %v386 = vmul.f32 %v370, %v349
    %v387 = vmul.f32 %v373, %v349
    %v388 = vmul.f32 %v376, %v349
    %v389 = vmul.f32 %v379, %v349
    %v390 = vmul.f32 %v382, %v349
    %v391 = vmul.f32 %v385, %v349
    %v392 = vadd.f32 %v386, 1e-05
    %v393 = vadd.f32 %v387, 1e-05
    %v394 = vadd.f32 %v388, 1e-05
    %v395 = vadd.f32 %v389, 1e-05
    %v396 = vadd.f32 %v390, 1e-05
    %v397 = vadd.f32 %v391, 1e-05
    %v398 = vrsqrt.pop %v392
    %v399 = vrsqrt.pop %v393
    %v400 = vrsqrt.pop %v394
    %v401 = vrsqrt.pop %v395
    %v402 = vrsqrt.pop %v396
    %v403 = vrsqrt.pop %v397
    %v404 = vmul.f32 %v356, %v398
    %v405 = vmul.f32 %v357, %v399
    %v406 = vmul.f32 %v358, %v400
    %v407 = vmul.f32 %v359, %v401
    %v408 = vmul.f32 %v360, %v402
    %v409 = vmul.f32 %v361, %v403
    %v411 = vlaneseq
    %v412 = vshrl.u32 %v411, 7
    %v413 = vsub.s32 0, %v412
    %v414 = vrot.slane %v329, %v413
    %v416 = vmul.f32 %v404, %v414
    %v417 = vmul.f32 %v405, %v414
    %v418 = vmul.f32 %v406, %v414
    %v419 = vmul.f32 %v407, %v414
    %v420 = vmul.f32 %v408, %v414
    %v421 = vmul.f32 %v409, %v414
    %v423 = vlaneseq
    %v424 = vshrl.u32 %v423, 7
    %v425 = vsub.s32 0, %v424
    %v426 = vrot.slane %v330, %v425
    %v428 = vadd.f32 %v416, %v426
    %v429 = vadd.f32 %v417, %v426
    %v430 = vadd.f32 %v418, %v426
    %v431 = vadd.f32 %v419, %v426
    %v432 = vadd.f32 %v420, %v426
    %v433 = vadd.f32 %v421, %v426
    %v434 = vlaneseq
    %v435 = vand.u32 %v434, 127
    %v436 = vld [vmem:[%s13] sm:$0xff]
    %v437 = vld [vmem:[%s13 + $0x8] sm:$0xff]
    %v438 = vld [vmem:[%s13 + $0x10] sm:$0xff]
    %v439 = vld [vmem:[%s13 + $0x18] sm:$0xff]
    %v440 = vld [vmem:[%s13 + $0x20] sm:$0xff]
    %v441 = vld [vmem:[%s13 + $0x28] sm:$0xff]
    %442 = vset.pattern.permute.xlu0 0
    %443 = vperm.xlu0 %442, %v436
    %v444 = vpop.permute.xlu0 %443
    %445 = vset.pattern.permute.xlu0 0
    %446 = vperm.xlu0 %445, %v437
    %v447 = vpop.permute.xlu0 %446
    %448 = vset.pattern.permute.xlu0 0
    %449 = vperm.xlu0 %448, %v438
    %v450 = vpop.permute.xlu0 %449
    %451 = vset.pattern.permute.xlu0 0
    %452 = vperm.xlu0 %451, %v439
    %v453 = vpop.permute.xlu0 %452
    %454 = vset.pattern.permute.xlu0 0
    %455 = vperm.xlu0 %454, %v440
    %v456 = vpop.permute.xlu0 %455
    %457 = vset.pattern.permute.xlu0 0
    %458 = vperm.xlu0 %457, %v441
    %v459 = vpop.permute.xlu0 %458
    %vm460 = vcmp.eq.s32.totalorder %v435, %v444
    %vm461 = vcmp.eq.s32.totalorder %v435, %v447
    %vm462 = vcmp.eq.s32.totalorder %v435, %v450
    %vm463 = vcmp.eq.s32.totalorder %v435, %v453
    %vm464 = vcmp.eq.s32.totalorder %v435, %v456
    %vm465 = vcmp.eq.s32.totalorder %v435, %v459
    %v466 = vsel %vm460, 1, 0
    %v467 = vsel %vm461, 1, 0
    %v468 = vsel %vm462, 1, 0
    %v469 = vsel %vm463, 1, 0
    %v470 = vsel %vm464, 1, 0
    %v471 = vsel %vm465, 1, 0
    %v472 = vcvt.s32.f32 %v466
    %v473 = vcvt.s32.f32 %v467
    %v474 = vcvt.s32.f32 %v468
    %v475 = vcvt.s32.f32 %v469
    %v476 = vcvt.s32.f32 %v470
    %v477 = vcvt.s32.f32 %v471
    %v478 = vpack.c.bf16 %v473, %v472
    %v479 = vpack.c.bf16 %v475, %v474
    %v480 = vpack.c.bf16 %v477, %v476
    %v481 = vld [vmem:[%s15] sm:$0xf]
    %v482 = vld [vmem:[%s15 + $0x4] sm:$0xf]
    %v483 = vld [vmem:[%s15 + $0x8] sm:$0xf]
    %v484 = vld [vmem:[%s15 + $0xc] sm:$0xf]
    %v485 = vld [vmem:[%s15 + $0x10] sm:$0xf]
    %v486 = vld [vmem:[%s15 + $0x14] sm:$0xf]
    %v487 = vld [vmem:[%s15 + $0x18] sm:$0xf]
    %v488 = vld [vmem:[%s15 + $0x1c] sm:$0xf]
    %v497 = vunpack.c.l.b16 %v481
    %v498 = vunpack.c.l.b16 %v482
    %v499 = vunpack.c.l.b16 %v483
    %v500 = vunpack.c.l.b16 %v484
    %v501 = vunpack.c.l.b16 %v485
    %v502 = vunpack.c.l.b16 %v486
    %v503 = vunpack.c.l.b16 %v487
    %v504 = vunpack.c.l.b16 %v488
    %v505 = vpack.c.b16 %v498, %v497
    %v506 = vpack.c.b16 %v500, %v499
    %v507 = vpack.c.b16 %v502, %v501
    %v508 = vpack.c.b16 %v504, %v503
    %vm513 = vcmask 523264
    %v515 = vsel %vm513, %v478, 0
    %v518 = vsel %vm513, %v479, 0
    %v521 = vsel %vm513, %v480, 0
    %523 = vmatprep.subr.bf16.mxu0 0
    %524 = vmatpush1.bf16.msra.mxu0 0
    %525 = vmatprep.subr.bf16.mxu0 0
    %526 = vmatpush1.bf16.msra.mxu0 0
    %527 = vmatprep.subr.bf16.mxu0 0
    %528 = vmatpush1.bf16.msra.mxu0 0
    %529 = vmatprep.subr.bf16.mxu0 0
    %530 = vmatpush1.bf16.msra.mxu0 0
    %531 = vmatprep.subr.bf16.mxu0 0
    %532 = vmatpush1.bf16.msra.mxu0 %v508
    %533 = vmatprep.subr.bf16.mxu0 0
    %534 = vmatpush1.bf16.msra.mxu0 %v507
    %535 = vmatprep.subr.bf16.mxu0 0
    %536 = vmatpush1.bf16.msra.mxu0 %v506
    %537 = vmatprep.subr.bf16.mxu0 0
    %538 = vmatpush1.bf16.msra.mxu0 %v505
    %539 = vmatprep.subr.bf16.mxu0 0
    %540 = vmatpush2.bf16.msra.mxu0 0
    %541 = vmatprep.subr.bf16.mxu0 0
    %542 = vmatpush2.bf16.msra.mxu0 0
    %543 = vmatprep.subr.bf16.mxu0 0
    %544 = vmatpush2.bf16.msra.mxu0 0
    %545 = vmatprep.subr.bf16.mxu0 0
    %546 = vmatpush2.bf16.msra.mxu0 0
    %547 = vmatprep.subr.bf16.mxu0 0
    %548 = vmatpush2.bf16.msra.mxu0 0
    %549 = vmatprep.subr.bf16.mxu0 0
    %550 = vmatpush2.bf16.msra.mxu0 0
    %551 = vmatprep.subr.bf16.mxu0 0
    %552 = vmatpush2.bf16.msra.mxu0 0
    %553 = vmatprep.subr.bf16.mxu0 0
    %554 = vmatpush2.bf16.msra.mxu0 0
    %555 = vmatprep.mubr.bf16.mxu0 0
    %556 = vmatmul.mubr.bf16.gmra.mxu0 %v515
    %v557 = vpop.f32.mrf.mxu0
    %v558 = vadd.f32 0.0, %v557
    %v559 = vpop.f32.mrf.mxu0
    %v560 = vpop.f32.mrf.mxu0
    %v561 = vadd.f32 0.0, %v560
    %v562 = vpop.f32.mrf.mxu0
    %563 = vmatprep.mubr.bf16.mxu0 0
    %564 = vmatmul.mubr.bf16.gmra.mxu0 %v518
    %v565 = vpop.f32.mrf.mxu0
    %v566 = vadd.f32 0.0, %v565
    %v567 = vpop.f32.mrf.mxu0
    %v568 = vpop.f32.mrf.mxu0
    %v569 = vadd.f32 0.0, %v568
    %v570 = vpop.f32.mrf.mxu0
    %571 = vmatprep.mubr.bf16.mxu0 0
    %572 = vmatmul.mubr.bf16.gmra.mxu0 %v521
    %v573 = vpop.f32.mrf.mxu0
    %v574 = vadd.f32 0.0, %v573
    %v575 = vpop.f32.mrf.mxu0
    %v576 = vpop.f32.mrf.mxu0
    %v577 = vadd.f32 0.0, %v576
    %v578 = vpop.f32.mrf.mxu0
    %579 = vdwg.mxu0
    %v580 = vld [vmem:[%s17] sm:$0xff]
    %v581 = vld [vmem:[%s17 + $0x8] sm:$0xff]
    %v582 = vadd.f32 %v558, %v580
    %v583 = vadd.f32 %v561, %v581
    %v584 = vadd.f32 %v566, %v580
    %v585 = vadd.f32 %v569, %v581
    %v586 = vadd.f32 %v574, %v580
    %v587 = vadd.f32 %v577, %v581
    %v588 = vld [vmem:[%s19] sm:$0xff]
    %v589 = vld [vmem:[%s19 + $0x8] sm:$0xff]
    %v590 = vld [vmem:[%s19 + $0x10] sm:$0xff]
    %v591 = vld [vmem:[%s21] sm:$0xff]
    %v592 = vld [vmem:[%s21 + $0x8] sm:$0xff]
    %v593 = vld [vmem:[%s23] sm:$0x1]
    %v594 = vld [vmem:[%s25] sm:$0x1]
    %v595 = vsel %vm253, %v428, 0.0
    %596 = vadd.xlane.f32.xlu0 %v595
    %v597 = vpop.xlane.xlu0 %596
    %v598 = vsel %vm253, %v429, 0.0
    %599 = vadd.xlane.f32.xlu0 %v598
    %v600 = vpop.xlane.xlu0 %599
    %v601 = vsel %vm253, %v430, 0.0
    %602 = vadd.xlane.f32.xlu0 %v601
    %v603 = vpop.xlane.xlu0 %602
    %v604 = vsel %vm253, %v431, 0.0
    %605 = vadd.xlane.f32.xlu0 %v604
    %v606 = vpop.xlane.xlu0 %605
    %v607 = vsel %vm253, %v432, 0.0
    %608 = vadd.xlane.f32.xlu0 %v607
    %v609 = vpop.xlane.xlu0 %608
    %v610 = vsel %vm253, %v433, 0.0
    %611 = vadd.xlane.f32.xlu0 %v610
    %v612 = vpop.xlane.xlu0 %611
    %v613 = vmul.f32 %v597, %v349
    %v614 = vmul.f32 %v600, %v349
    %v615 = vmul.f32 %v603, %v349
    %v616 = vmul.f32 %v606, %v349
    %v617 = vmul.f32 %v609, %v349
    %v618 = vmul.f32 %v612, %v349
    %v619 = vsub.f32 %v428, %v613
    %v620 = vsub.f32 %v429, %v614
    %v621 = vsub.f32 %v430, %v615
    %v622 = vsub.f32 %v431, %v616
    %v623 = vsub.f32 %v432, %v617
    %v624 = vsub.f32 %v433, %v618
    %v625 = vmul.f32 %v619, %v619
    %v626 = vmul.f32 %v620, %v620
    %v627 = vmul.f32 %v621, %v621
    %v628 = vmul.f32 %v622, %v622
    %v629 = vmul.f32 %v623, %v623
    %v630 = vmul.f32 %v624, %v624
    %v631 = vsel %vm253, %v625, 0.0
    %632 = vadd.xlane.f32.xlu0 %v631
    %v633 = vpop.xlane.xlu0 %632
    %v634 = vsel %vm253, %v626, 0.0
    %635 = vadd.xlane.f32.xlu0 %v634
    %v636 = vpop.xlane.xlu0 %635
    %v637 = vsel %vm253, %v627, 0.0
    %638 = vadd.xlane.f32.xlu0 %v637
    %v639 = vpop.xlane.xlu0 %638
    %v640 = vsel %vm253, %v628, 0.0
    %641 = vadd.xlane.f32.xlu0 %v640
    %v642 = vpop.xlane.xlu0 %641
    %v643 = vsel %vm253, %v629, 0.0
    %644 = vadd.xlane.f32.xlu0 %v643
    %v645 = vpop.xlane.xlu0 %644
    %v646 = vsel %vm253, %v630, 0.0
    %647 = vadd.xlane.f32.xlu0 %v646
    %v648 = vpop.xlane.xlu0 %647
    %v649 = vmul.f32 %v633, %v349
    %v650 = vmul.f32 %v636, %v349
    %v651 = vmul.f32 %v639, %v349
    %v652 = vmul.f32 %v642, %v349
    %v653 = vmul.f32 %v645, %v349
    %v654 = vmul.f32 %v648, %v349
    %v655 = vadd.f32 %v649, 1e-05
    %v656 = vadd.f32 %v650, 1e-05
    %v657 = vadd.f32 %v651, 1e-05
    %v658 = vadd.f32 %v652, 1e-05
    %v659 = vadd.f32 %v653, 1e-05
    %v660 = vadd.f32 %v654, 1e-05
    %v661 = vrsqrt.pop %v655
    %v662 = vrsqrt.pop %v656
    %v663 = vrsqrt.pop %v657
    %v664 = vrsqrt.pop %v658
    %v665 = vrsqrt.pop %v659
    %v666 = vrsqrt.pop %v660
    %v667 = vmul.f32 %v619, %v661
    %v668 = vmul.f32 %v620, %v662
    %v669 = vmul.f32 %v621, %v663
    %v670 = vmul.f32 %v622, %v664
    %v671 = vmul.f32 %v623, %v665
    %v672 = vmul.f32 %v624, %v666
    %v674 = vlaneseq
    %v675 = vshrl.u32 %v674, 7
    %v676 = vsub.s32 0, %v675
    %v677 = vrot.slane %v593, %v676
    %v679 = vmul.f32 %v667, %v677
    %v680 = vmul.f32 %v668, %v677
    %v681 = vmul.f32 %v669, %v677
    %v682 = vmul.f32 %v670, %v677
    %v683 = vmul.f32 %v671, %v677
    %v684 = vmul.f32 %v672, %v677
    %v686 = vlaneseq
    %v687 = vshrl.u32 %v686, 7
    %v688 = vsub.s32 0, %v687
    %v689 = vrot.slane %v594, %v688
    %v691 = vadd.f32 %v679, %v689
    %v692 = vadd.f32 %v680, %v689
    %v693 = vadd.f32 %v681, %v689
    %v694 = vadd.f32 %v682, %v689
    %v695 = vadd.f32 %v683, %v689
    %v696 = vadd.f32 %v684, %v689
    %v697 = vpack.c.bf16 %v692, %v691
    %v698 = vpack.c.bf16 %v694, %v693
    %v699 = vpack.c.bf16 %v696, %v695
    %v700 = vld [vmem:[%s27] sm:$0xf]
    %v701 = vld [vmem:[%s27 + $0x4] sm:$0xf]
    %v702 = vld [vmem:[%s27 + $0x8] sm:$0xf]
    %v703 = vld [vmem:[%s27 + $0xc] sm:$0xf]
    %v704 = vld [vmem:[%s29] sm:$0x1]
    %v706 = vlaneseq
    %v707 = vshrl.u32 %v706, 7
    %v708 = vsub.s32 0, %v707
    %v709 = vrot.slane %v704, %v708
    %v715 = vunpack.c.l.b16 %v700
    %v716 = vunpack.c.l.b16 %v701
    %v717 = vunpack.c.l.b16 %v702
    %v718 = vunpack.c.l.b16 %v703
    %v719 = vpack.c.b16 %v716, %v715
    %v720 = vpack.c.b16 %v718, %v717
    %v724 = vsel %vm253, %v697, 0
    %v727 = vsel %vm253, %v698, 0
    %v730 = vsel %vm253, %v699, 0
    %732 = vmatprep.subr.bf16.mxu0 0
    %733 = vmatpush1.bf16.msra.mxu0 0
    %734 = vmatprep.subr.bf16.mxu0 0
    %735 = vmatpush1.bf16.msra.mxu0 0
    %736 = vmatprep.subr.bf16.mxu0 0
    %737 = vmatpush1.bf16.msra.mxu0 0
    %738 = vmatprep.subr.bf16.mxu0 0
    %739 = vmatpush1.bf16.msra.mxu0 0
    %740 = vmatprep.subr.bf16.mxu0 0
    %741 = vmatpush1.bf16.msra.mxu0 0
    %742 = vmatprep.subr.bf16.mxu0 0
    %743 = vmatpush1.bf16.msra.mxu0 0
    %744 = vmatprep.subr.bf16.mxu0 0
    %745 = vmatpush1.bf16.msra.mxu0 %v720
    %746 = vmatprep.subr.bf16.mxu0 0
    %747 = vmatpush1.bf16.msra.mxu0 %v719
    %748 = vmatprep.subr.bf16.mxu0 0
    %749 = vmatpush2.bf16.msra.mxu0 0
    %750 = vmatprep.subr.bf16.mxu0 0
    %751 = vmatpush2.bf16.msra.mxu0 0
    %752 = vmatprep.subr.bf16.mxu0 0
    %753 = vmatpush2.bf16.msra.mxu0 0
    %754 = vmatprep.subr.bf16.mxu0 0
    %755 = vmatpush2.bf16.msra.mxu0 0
    %756 = vmatprep.subr.bf16.mxu0 0
    %757 = vmatpush2.bf16.msra.mxu0 0
    %758 = vmatprep.subr.bf16.mxu0 0
    %759 = vmatpush2.bf16.msra.mxu0 0
    %760 = vmatprep.subr.bf16.mxu0 0
    %761 = vmatpush2.bf16.msra.mxu0 0
    %762 = vmatprep.subr.bf16.mxu0 0
    %763 = vmatpush2.bf16.msra.mxu0 0
    %764 = vmatprep.mubr.bf16.mxu0 0
    %765 = vmatmul.mubr.bf16.gmra.mxu0 %v724
    %v766 = vpop.f32.mrf.mxu0
    %v767 = vadd.f32 %v709, %v766
    %v768 = vpop.f32.mrf.mxu0
    %v769 = vpop.f32.mrf.mxu0
    %v770 = vadd.f32 %v709, %v769
    %v771 = vpop.f32.mrf.mxu0
    %772 = vmatprep.mubr.bf16.mxu0 0
    %773 = vmatmul.mubr.bf16.gmra.mxu0 %v727
    %v774 = vpop.f32.mrf.mxu0
    %v775 = vadd.f32 %v709, %v774
    %v776 = vpop.f32.mrf.mxu0
    %v777 = vpop.f32.mrf.mxu0
    %v778 = vadd.f32 %v709, %v777
    %v779 = vpop.f32.mrf.mxu0
    %780 = vmatprep.mubr.bf16.mxu0 0
    %781 = vmatmul.mubr.bf16.gmra.mxu0 %v730
    %v782 = vpop.f32.mrf.mxu0
    %v783 = vadd.f32 %v709, %v782
    %v784 = vpop.f32.mrf.mxu0
    %v785 = vpop.f32.mrf.mxu0
    %v786 = vadd.f32 %v709, %v785
    %v787 = vpop.f32.mrf.mxu0
    %788 = vdwg.mxu0
    %795 = vrot.lane.b32.xlu0 %v767, 112
    %v796 = vpop.permute.xlu0 %795
    %797 = vrot.lane.b32.xlu0 %v770, 112
    %v798 = vpop.permute.xlu0 %797
    %799 = vrot.lane.b32.xlu0 %v775, 112
    %v800 = vpop.permute.xlu0 %799
    %801 = vrot.lane.b32.xlu0 %v778, 112
    %v802 = vpop.permute.xlu0 %801
    %803 = vrot.lane.b32.xlu0 %v783, 112
    %v804 = vpop.permute.xlu0 %803
    %805 = vrot.lane.b32.xlu0 %v786, 112
    %v806 = vpop.permute.xlu0 %805
    %v813 = vpack.c.bf16 %v770, %v767
    %v814 = vpack.c.bf16 %v775, %v775
    %v815 = vpack.c.bf16 %v783, %v778
    %v816 = vpack.c.bf16 %v786, %v786
    %v817 = vpack.c.bf16 %v798, %v796
    %v818 = vpack.c.bf16 %v800, %v800
    %v819 = vpack.c.bf16 %v804, %v802
    %v820 = vpack.c.bf16 %v806, %v806
    %823 = vrot.lane.b32.xlu0 %v813, 96
    %v824 = vpop.permute.xlu0 %823
    %825 = vrot.lane.b32.xlu0 %v814, 96
    %v826 = vpop.permute.xlu0 %825
    %vm827 = vcmask 130048
    %v829 = vsel %vm827, %v813, 0
    %v832 = vsel %vm827, %v814, 0
    %v835 = vsel %vm827, %v824, 0
    %v838 = vsel %vm827, %v826, 0
    %840 = vmatprep.subr.bf16.mxu0 0
    %841 = vmatpush1.bf16.xpose.msra.mxu0 0
    %842 = vmatprep.subr.bf16.mxu0 0
    %843 = vmatpush1.bf16.xpose.msra.mxu0 0
    %844 = vmatprep.subr.bf16.mxu0 0
    %845 = vmatpush1.bf16.xpose.msra.mxu0 0
    %846 = vmatprep.subr.bf16.mxu0 0
    %847 = vmatpush1.bf16.xpose.msra.mxu0 0
    %848 = vmatprep.subr.bf16.mxu0 0
    %849 = vmatpush1.bf16.xpose.msra.mxu0 0
    %850 = vmatprep.subr.bf16.mxu0 0
    %851 = vmatpush1.bf16.xpose.msra.mxu0 0
    %852 = vmatprep.subr.bf16.mxu0 0
    %853 = vmatpush1.bf16.xpose.msra.mxu0 %v838
    %854 = vmatprep.subr.bf16.mxu0 0
    %855 = vmatpush1.bf16.xpose.msra.mxu0 %v835
    %856 = vmatprep.subr.bf16.mxu0 0
    %857 = vmatpush2.bf16.xpose.msra.mxu0 0
    %858 = vmatprep.subr.bf16.mxu0 0
    %859 = vmatpush2.bf16.xpose.msra.mxu0 0
    %860 = vmatprep.subr.bf16.mxu0 0
    %861 = vmatpush2.bf16.xpose.msra.mxu0 0
    %862 = vmatprep.subr.bf16.mxu0 0
    %863 = vmatpush2.bf16.xpose.msra.mxu0 0
    %864 = vmatprep.subr.bf16.mxu0 0
    %865 = vmatpush2.bf16.xpose.msra.mxu0 0
    %866 = vmatprep.subr.bf16.mxu0 0
    %867 = vmatpush2.bf16.xpose.msra.mxu0 0
    %868 = vmatprep.subr.bf16.mxu0 0
    %869 = vmatpush2.bf16.xpose.msra.mxu0 0
    %870 = vmatprep.subr.bf16.mxu0 0
    %871 = vmatpush2.bf16.xpose.msra.mxu0 0
    %872 = vmatprep.mubr.bf16.mxu0 0
    %873 = vmatmul.mubr.bf16.gmra.mxu0 %v829
    %v874 = vpop.f32.mrf.mxu0
    %v875 = vadd.f32 0.0, %v874
    %v876 = vpop.f32.mrf.mxu0
    %v877 = vpop.f32.mrf.mxu0
    %v878 = vadd.f32 0.0, %v877
    %v879 = vpop.f32.mrf.mxu0
    %880 = vmatprep.mubr.bf16.mxu0 0
    %881 = vmatmul.mubr.bf16.gmra.mxu0 %v832
    %v882 = vpop.f32.mrf.mxu0
    %v883 = vadd.f32 0.0, %v882
    %v884 = vpop.f32.mrf.mxu0
    %v885 = vpop.f32.mrf.mxu0
    %v886 = vpop.f32.mrf.mxu0
    %887 = vdwg.mxu0
    %890 = vrot.lane.b32.xlu0 %v815, 96
    %v891 = vpop.permute.xlu0 %890
    %892 = vrot.lane.b32.xlu0 %v816, 96
    %v893 = vpop.permute.xlu0 %892
    %v895 = vsel %vm827, %v815, 0
    %v898 = vsel %vm827, %v816, 0
    %v901 = vsel %vm827, %v891, 0
    %v904 = vsel %vm827, %v893, 0
    %906 = vmatprep.subr.bf16.mxu0 0
    %907 = vmatpush1.bf16.xpose.msra.mxu0 0
    %908 = vmatprep.subr.bf16.mxu0 0
    %909 = vmatpush1.bf16.xpose.msra.mxu0 0
    %910 = vmatprep.subr.bf16.mxu0 0
    %911 = vmatpush1.bf16.xpose.msra.mxu0 0
    %912 = vmatprep.subr.bf16.mxu0 0
    %913 = vmatpush1.bf16.xpose.msra.mxu0 0
    %914 = vmatprep.subr.bf16.mxu0 0
    %915 = vmatpush1.bf16.xpose.msra.mxu0 0
    %916 = vmatprep.subr.bf16.mxu0 0
    %917 = vmatpush1.bf16.xpose.msra.mxu0 0
    %918 = vmatprep.subr.bf16.mxu0 0
    %919 = vmatpush1.bf16.xpose.msra.mxu0 %v904
    %920 = vmatprep.subr.bf16.mxu0 0
    %921 = vmatpush1.bf16.xpose.msra.mxu0 %v901
    %922 = vmatprep.subr.bf16.mxu0 0
    %923 = vmatpush2.bf16.xpose.msra.mxu0 0
    %924 = vmatprep.subr.bf16.mxu0 0
    %925 = vmatpush2.bf16.xpose.msra.mxu0 0
    %926 = vmatprep.subr.bf16.mxu0 0
    %927 = vmatpush2.bf16.xpose.msra.mxu0 0
    %928 = vmatprep.subr.bf16.mxu0 0
    %929 = vmatpush2.bf16.xpose.msra.mxu0 0
    %930 = vmatprep.subr.bf16.mxu0 0
    %931 = vmatpush2.bf16.xpose.msra.mxu0 0
    %932 = vmatprep.subr.bf16.mxu0 0
    %933 = vmatpush2.bf16.xpose.msra.mxu0 0
    %934 = vmatprep.subr.bf16.mxu0 0
    %935 = vmatpush2.bf16.xpose.msra.mxu0 0
    %936 = vmatprep.subr.bf16.mxu0 0
    %937 = vmatpush2.bf16.xpose.msra.mxu0 0
    %938 = vmatprep.mubr.bf16.mxu0 0
    %939 = vmatmul.mubr.bf16.gmra.mxu0 %v895
    %v940 = vpop.f32.mrf.mxu0
    %v941 = vadd.f32 0.0, %v940
    %v942 = vpop.f32.mrf.mxu0
    %v943 = vpop.f32.mrf.mxu0
    %v944 = vadd.f32 0.0, %v943
    %v945 = vpop.f32.mrf.mxu0
    %946 = vmatprep.mubr.bf16.mxu0 0
    %947 = vmatmul.mubr.bf16.gmra.mxu0 %v898
    %v948 = vpop.f32.mrf.mxu0
    %v949 = vadd.f32 0.0, %v948
    %v950 = vpop.f32.mrf.mxu0
    %v951 = vpop.f32.mrf.mxu0
    %v952 = vpop.f32.mrf.mxu0
    %953 = vdwg.mxu0
    %956 = vrot.lane.b32.xlu0 %v817, 96
    %v957 = vpop.permute.xlu0 %956
    %958 = vrot.lane.b32.xlu0 %v818, 96
    %v959 = vpop.permute.xlu0 %958
    %v961 = vsel %vm827, %v817, 0
    %v964 = vsel %vm827, %v818, 0
    %v967 = vsel %vm827, %v957, 0
    %v970 = vsel %vm827, %v959, 0
    %972 = vmatprep.subr.bf16.mxu0 0
    %973 = vmatpush1.bf16.xpose.msra.mxu0 0
    %974 = vmatprep.subr.bf16.mxu0 0
    %975 = vmatpush1.bf16.xpose.msra.mxu0 0
    %976 = vmatprep.subr.bf16.mxu0 0
    %977 = vmatpush1.bf16.xpose.msra.mxu0 0
    %978 = vmatprep.subr.bf16.mxu0 0
    %979 = vmatpush1.bf16.xpose.msra.mxu0 0
    %980 = vmatprep.subr.bf16.mxu0 0
    %981 = vmatpush1.bf16.xpose.msra.mxu0 0
    %982 = vmatprep.subr.bf16.mxu0 0
    %983 = vmatpush1.bf16.xpose.msra.mxu0 0
    %984 = vmatprep.subr.bf16.mxu0 0
    %985 = vmatpush1.bf16.xpose.msra.mxu0 %v970
    %986 = vmatprep.subr.bf16.mxu0 0
    %987 = vmatpush1.bf16.xpose.msra.mxu0 %v967
    %988 = vmatprep.subr.bf16.mxu0 0
    %989 = vmatpush2.bf16.xpose.msra.mxu0 0
    %990 = vmatprep.subr.bf16.mxu0 0
    %991 = vmatpush2.bf16.xpose.msra.mxu0 0
    %992 = vmatprep.subr.bf16.mxu0 0
    %993 = vmatpush2.bf16.xpose.msra.mxu0 0
    %994 = vmatprep.subr.bf16.mxu0 0
    %995 = vmatpush2.bf16.xpose.msra.mxu0 0
    %996 = vmatprep.subr.bf16.mxu0 0
    %997 = vmatpush2.bf16.xpose.msra.mxu0 0
    %998 = vmatprep.subr.bf16.mxu0 0
    %999 = vmatpush2.bf16.xpose.msra.mxu0 0
    %1000 = vmatprep.subr.bf16.mxu0 0
    %1001 = vmatpush2.bf16.xpose.msra.mxu0 0
    %1002 = vmatprep.subr.bf16.mxu0 0
    %1003 = vmatpush2.bf16.xpose.msra.mxu0 0
    %1004 = vmatprep.mubr.bf16.mxu0 0
    %1005 = vmatmul.mubr.bf16.gmra.mxu0 %v961
    %v1006 = vpop.f32.mrf.mxu0
    %v1007 = vadd.f32 0.0, %v1006
    %v1008 = vpop.f32.mrf.mxu0
    %v1009 = vpop.f32.mrf.mxu0
    %v1010 = vadd.f32 0.0, %v1009
    %v1011 = vpop.f32.mrf.mxu0
    %1012 = vmatprep.mubr.bf16.mxu0 0
    %1013 = vmatmul.mubr.bf16.gmra.mxu0 %v964
    %v1014 = vpop.f32.mrf.mxu0
    %v1015 = vadd.f32 0.0, %v1014
    %v1016 = vpop.f32.mrf.mxu0
    %v1017 = vpop.f32.mrf.mxu0
    %v1018 = vpop.f32.mrf.mxu0
    %1019 = vdwg.mxu0
    %1022 = vrot.lane.b32.xlu0 %v819, 96
    %v1023 = vpop.permute.xlu0 %1022
    %1024 = vrot.lane.b32.xlu0 %v820, 96
    %v1025 = vpop.permute.xlu0 %1024
    %v1027 = vsel %vm827, %v819, 0
    %v1030 = vsel %vm827, %v820, 0
    %v1033 = vsel %vm827, %v1023, 0
    %v1036 = vsel %vm827, %v1025, 0
    %1038 = vmatprep.subr.bf16.mxu0 0
    %1039 = vmatpush1.bf16.xpose.msra.mxu0 0
    %1040 = vmatprep.subr.bf16.mxu0 0
    %1041 = vmatpush1.bf16.xpose.msra.mxu0 0
    %1042 = vmatprep.subr.bf16.mxu0 0
    %1043 = vmatpush1.bf16.xpose.msra.mxu0 0
    %1044 = vmatprep.subr.bf16.mxu0 0
    %1045 = vmatpush1.bf16.xpose.msra.mxu0 0
    %1046 = vmatprep.subr.bf16.mxu0 0
    %1047 = vmatpush1.bf16.xpose.msra.mxu0 0
    %1048 = vmatprep.subr.bf16.mxu0 0
    %1049 = vmatpush1.bf16.xpose.msra.mxu0 0
    %1050 = vmatprep.subr.bf16.mxu0 0
    %1051 = vmatpush1.bf16.xpose.msra.mxu0 %v1036
    %1052 = vmatprep.subr.bf16.mxu0 0
    %1053 = vmatpush1.bf16.xpose.msra.mxu0 %v1033
    %1054 = vmatprep.subr.bf16.mxu0 0
    %1055 = vmatpush2.bf16.xpose.msra.mxu0 0
    %1056 = vmatprep.subr.bf16.mxu0 0
    %1057 = vmatpush2.bf16.xpose.msra.mxu0 0
    %1058 = vmatprep.subr.bf16.mxu0 0
    %1059 = vmatpush2.bf16.xpose.msra.mxu0 0
    %1060 = vmatprep.subr.bf16.mxu0 0
    %1061 = vmatpush2.bf16.xpose.msra.mxu0 0
    %1062 = vmatprep.subr.bf16.mxu0 0
    %1063 = vmatpush2.bf16.xpose.msra.mxu0 0
    %1064 = vmatprep.subr.bf16.mxu0 0
    %1065 = vmatpush2.bf16.xpose.msra.mxu0 0
    %1066 = vmatprep.subr.bf16.mxu0 0
    %1067 = vmatpush2.bf16.xpose.msra.mxu0 0
    %1068 = vmatprep.subr.bf16.mxu0 0
    %1069 = vmatpush2.bf16.xpose.msra.mxu0 0
    %1070 = vmatprep.mubr.bf16.mxu0 0
    %1071 = vmatmul.mubr.bf16.gmra.mxu0 %v1027
    %v1072 = vpop.f32.mrf.mxu0
    %v1073 = vadd.f32 0.0, %v1072
    %v1074 = vpop.f32.mrf.mxu0
    %v1075 = vpop.f32.mrf.mxu0
    %v1076 = vadd.f32 0.0, %v1075
    %v1077 = vpop.f32.mrf.mxu0
    %1078 = vmatprep.mubr.bf16.mxu0 0
    %1079 = vmatmul.mubr.bf16.gmra.mxu0 %v1030
    %v1080 = vpop.f32.mrf.mxu0
    %v1081 = vadd.f32 0.0, %v1080
    %v1082 = vpop.f32.mrf.mxu0
    %v1083 = vpop.f32.mrf.mxu0
    %v1084 = vpop.f32.mrf.mxu0
    %1085 = vdwg.mxu0
    %v1086 = vmul.f32 %v875, 0.25
    %v1087 = vmul.f32 %v878, 0.25
    %v1088 = vmul.f32 %v883, 0.25
    %v1089 = vmul.f32 %v941, 0.25
    %v1090 = vmul.f32 %v944, 0.25
    %v1091 = vmul.f32 %v949, 0.25
    %v1092 = vmul.f32 %v1007, 0.25
    %v1093 = vmul.f32 %v1010, 0.25
    %v1094 = vmul.f32 %v1015, 0.25
    %v1095 = vmul.f32 %v1073, 0.25
    %v1096 = vmul.f32 %v1076, 0.25
    %v1097 = vmul.f32 %v1081, 0.25
    %v1098 = vadd.f32 %v1086, %v588
    %v1099 = vadd.f32 %v1087, %v589
    %v1100 = vadd.f32 %v1088, %v590
    %v1101 = vadd.f32 %v1089, %v588
    %v1102 = vadd.f32 %v1090, %v589
    %v1103 = vadd.f32 %v1091, %v590
    %v1104 = vadd.f32 %v1092, %v588
    %v1105 = vadd.f32 %v1093, %v589
    %v1106 = vadd.f32 %v1094, %v590
    %v1107 = vadd.f32 %v1095, %v588
    %v1108 = vadd.f32 %v1096, %v589
    %v1109 = vadd.f32 %v1097, %v590
    %vm1110 = vcmask 195584
    %v1111 = vsel %vm1110, %v1098, -inf
    %1112 = vmax.xlane.f32.xlu0 %v1111
    %v1113 = vpop.xlane.xlu0 %1112
    %v1114 = vsel %vm1110, %v1099, -inf
    %1115 = vmax.xlane.f32.xlu0 %v1114
    %v1116 = vpop.xlane.xlu0 %1115
    %v1117 = vsel %vm1110, %v1100, -inf
    %1118 = vmax.xlane.f32.xlu0 %v1117
    %v1119 = vpop.xlane.xlu0 %1118
    %v1120 = vsel %vm1110, %v1101, -inf
    %1121 = vmax.xlane.f32.xlu0 %v1120
    %v1122 = vpop.xlane.xlu0 %1121
    %v1123 = vsel %vm1110, %v1102, -inf
    %1124 = vmax.xlane.f32.xlu0 %v1123
    %v1125 = vpop.xlane.xlu0 %1124
    %v1126 = vsel %vm1110, %v1103, -inf
    %1127 = vmax.xlane.f32.xlu0 %v1126
    %v1128 = vpop.xlane.xlu0 %1127
    %v1129 = vsel %vm1110, %v1104, -inf
    %1130 = vmax.xlane.f32.xlu0 %v1129
    %v1131 = vpop.xlane.xlu0 %1130
    %v1132 = vsel %vm1110, %v1105, -inf
    %1133 = vmax.xlane.f32.xlu0 %v1132
    %v1134 = vpop.xlane.xlu0 %1133
    %v1135 = vsel %vm1110, %v1106, -inf
    %1136 = vmax.xlane.f32.xlu0 %v1135
    %v1137 = vpop.xlane.xlu0 %1136
    %v1138 = vsel %vm1110, %v1107, -inf
    %1139 = vmax.xlane.f32.xlu0 %v1138
    %v1140 = vpop.xlane.xlu0 %1139
    %v1141 = vsel %vm1110, %v1108, -inf
    %1142 = vmax.xlane.f32.xlu0 %v1141
    %v1143 = vpop.xlane.xlu0 %1142
    %v1144 = vsel %vm1110, %v1109, -inf
    %1145 = vmax.xlane.f32.xlu0 %v1144
    %v1146 = vpop.xlane.xlu0 %1145
    %v1147 = vsub.f32 %v1098, %v1113
    %v1148 = vsub.f32 %v1099, %v1116
    %v1149 = vsub.f32 %v1100, %v1119
    %v1150 = vsub.f32 %v1101, %v1122
    %v1151 = vsub.f32 %v1102, %v1125
    %v1152 = vsub.f32 %v1103, %v1128
    %v1153 = vsub.f32 %v1104, %v1131
    %v1154 = vsub.f32 %v1105, %v1134
    %v1155 = vsub.f32 %v1106, %v1137
    %v1156 = vsub.f32 %v1107, %v1140
    %v1157 = vsub.f32 %v1108, %v1143
    %v1158 = vsub.f32 %v1109, %v1146
    %v1159 = vmul.f32 %v1147, 1.442695
    %v1160 = vpow.pop %v1159
    %v1161 = vmul.f32 %v1148, 1.442695
    %v1162 = vpow.pop %v1161
    %v1163 = vmul.f32 %v1149, 1.442695
    %v1164 = vpow.pop %v1163
    %v1165 = vmul.f32 %v1150, 1.442695
    %v1166 = vpow.pop %v1165
    %v1167 = vmul.f32 %v1151, 1.442695
    %v1168 = vpow.pop %v1167
    %v1169 = vmul.f32 %v1152, 1.442695
    %v1170 = vpow.pop %v1169
    %v1171 = vmul.f32 %v1153, 1.442695
    %v1172 = vpow.pop %v1171
    %v1173 = vmul.f32 %v1154, 1.442695
    %v1174 = vpow.pop %v1173
    %v1175 = vmul.f32 %v1155, 1.442695
    %v1176 = vpow.pop %v1175
    %v1177 = vmul.f32 %v1156, 1.442695
    %v1178 = vpow.pop %v1177
    %v1179 = vmul.f32 %v1157, 1.442695
    %v1180 = vpow.pop %v1179
    %v1181 = vmul.f32 %v1158, 1.442695
    %v1182 = vpow.pop %v1181
    %v1183 = vsel %vm1110, %v1160, 0.0
    %1184 = vadd.xlane.f32.xlu0 %v1183
    %v1185 = vpop.xlane.xlu0 %1184
    %v1186 = vsel %vm1110, %v1162, 0.0
    %1187 = vadd.xlane.f32.xlu0 %v1186
    %v1188 = vpop.xlane.xlu0 %1187
    %v1189 = vsel %vm1110, %v1164, 0.0
    %1190 = vadd.xlane.f32.xlu0 %v1189
    %v1191 = vpop.xlane.xlu0 %1190
    %v1192 = vsel %vm1110, %v1166, 0.0
    %1193 = vadd.xlane.f32.xlu0 %v1192
    %v1194 = vpop.xlane.xlu0 %1193
    %v1195 = vsel %vm1110, %v1168, 0.0
    %1196 = vadd.xlane.f32.xlu0 %v1195
    %v1197 = vpop.xlane.xlu0 %1196
    %v1198 = vsel %vm1110, %v1170, 0.0
    %1199 = vadd.xlane.f32.xlu0 %v1198
    %v1200 = vpop.xlane.xlu0 %1199
    %v1201 = vsel %vm1110, %v1172, 0.0
    %1202 = vadd.xlane.f32.xlu0 %v1201
    %v1203 = vpop.xlane.xlu0 %1202
    %v1204 = vsel %vm1110, %v1174, 0.0
    %1205 = vadd.xlane.f32.xlu0 %v1204
    %v1206 = vpop.xlane.xlu0 %1205
    %v1207 = vsel %vm1110, %v1176, 0.0
    %1208 = vadd.xlane.f32.xlu0 %v1207
    %v1209 = vpop.xlane.xlu0 %1208
    %v1210 = vsel %vm1110, %v1178, 0.0
    %1211 = vadd.xlane.f32.xlu0 %v1210
    %v1212 = vpop.xlane.xlu0 %1211
    %v1213 = vsel %vm1110, %v1180, 0.0
    %1214 = vadd.xlane.f32.xlu0 %v1213
    %v1215 = vpop.xlane.xlu0 %1214
    %v1216 = vsel %vm1110, %v1182, 0.0
    %1217 = vadd.xlane.f32.xlu0 %v1216
    %v1218 = vpop.xlane.xlu0 %1217
    %v1219 = vrcp.pop %v1185
    %v1220 = vrcp.pop %v1188
    %v1221 = vrcp.pop %v1191
    %v1222 = vrcp.pop %v1194
    %v1223 = vrcp.pop %v1197
    %v1224 = vrcp.pop %v1200
    %v1225 = vrcp.pop %v1203
    %v1226 = vrcp.pop %v1206
    %v1227 = vrcp.pop %v1209
    %v1228 = vrcp.pop %v1212
    %v1229 = vrcp.pop %v1215
    %v1230 = vrcp.pop %v1218
    %v1231 = vmul.f32 %v1160, %v1219
    %v1232 = vmul.f32 %v1162, %v1220
    %v1233 = vmul.f32 %v1164, %v1221
    %v1234 = vmul.f32 %v1166, %v1222
    %v1235 = vmul.f32 %v1168, %v1223
    %v1236 = vmul.f32 %v1170, %v1224
    %v1237 = vmul.f32 %v1172, %v1225
    %v1238 = vmul.f32 %v1174, %v1226
    %v1239 = vmul.f32 %v1176, %v1227
    %v1240 = vmul.f32 %v1178, %v1228
    %v1241 = vmul.f32 %v1180, %v1229
    %v1242 = vmul.f32 %v1182, %v1230
    %v1243 = vpack.c.bf16 %v1232, %v1231
    %v1244 = vpack.c.bf16 %v1233, %v1233
    %v1245 = vpack.c.bf16 %v1235, %v1234
    %v1246 = vpack.c.bf16 %v1236, %v1236
    %v1247 = vpack.c.bf16 %v1238, %v1237
    %v1248 = vpack.c.bf16 %v1239, %v1239
    %v1249 = vpack.c.bf16 %v1241, %v1240
    %v1250 = vpack.c.bf16 %v1242, %v1242
    %1251 = vrot.lane.b32.xlu0 %v813, 64
    %v1252 = vpop.permute.xlu0 %1251
    %1253 = vrot.lane.b32.xlu0 %v814, 64
    %v1254 = vpop.permute.xlu0 %1253
    %v1257 = vsel %vm1110, %v1243, 0
    %v1260 = vsel %vm1110, %v1244, 0
    %vm1262 = vcmask 1043456
    %v1264 = vsel %vm1262, %v1254, 0
    %1266 = vmatprep.subr.bf16.mxu0 0
    %1267 = vmatpush1.bf16.msra.mxu0 0
    %1268 = vmatprep.subr.bf16.mxu0 0
    %1269 = vmatpush1.bf16.msra.mxu0 0
    %1270 = vmatprep.subr.bf16.mxu0 0
    %1271 = vmatpush1.bf16.msra.mxu0 0
    %1272 = vmatprep.subr.bf16.mxu0 0
    %1273 = vmatpush1.bf16.msra.mxu0 0
    %1274 = vmatprep.subr.bf16.mxu0 0
    %1275 = vmatpush1.bf16.msra.mxu0 0
    %1276 = vmatprep.subr.bf16.mxu0 0
    %1277 = vmatpush1.bf16.msra.mxu0 0
    %1278 = vmatprep.subr.bf16.mxu0 0
    %1279 = vmatpush1.bf16.msra.mxu0 %v1264
    %1280 = vmatprep.subr.bf16.mxu0 0
    %1281 = vmatpush1.bf16.msra.mxu0 %v1252
    %1282 = vmatprep.subr.bf16.mxu0 0
    %1283 = vmatpush2.bf16.msra.mxu0 0
    %1284 = vmatprep.subr.bf16.mxu0 0
    %1285 = vmatpush2.bf16.msra.mxu0 0
    %1286 = vmatprep.subr.bf16.mxu0 0
    %1287 = vmatpush2.bf16.msra.mxu0 0
    %1288 = vmatprep.subr.bf16.mxu0 0
    %1289 = vmatpush2.bf16.msra.mxu0 0
    %1290 = vmatprep.subr.bf16.mxu0 0
    %1291 = vmatpush2.bf16.msra.mxu0 0
    %1292 = vmatprep.subr.bf16.mxu0 0
    %1293 = vmatpush2.bf16.msra.mxu0 0
    %1294 = vmatprep.subr.bf16.mxu0 0
    %1295 = vmatpush2.bf16.msra.mxu0 0
    %1296 = vmatprep.subr.bf16.mxu0 0
    %1297 = vmatpush2.bf16.msra.mxu0 0
    %1298 = vmatprep.mubr.bf16.mxu0 0
    %1299 = vmatmul.mubr.bf16.gmra.mxu0 %v1257
    %v1300 = vpop.f32.mrf.mxu0
    %v1301 = vadd.f32 0.0, %v1300
    %v1302 = vpop.f32.mrf.mxu0
    %v1303 = vpop.f32.mrf.mxu0
    %v1304 = vadd.f32 0.0, %v1303
    %v1305 = vpop.f32.mrf.mxu0
    %1306 = vmatprep.mubr.bf16.mxu0 0
    %1307 = vmatmul.mubr.bf16.gmra.mxu0 %v1260
    %v1308 = vpop.f32.mrf.mxu0
    %v1309 = vadd.f32 0.0, %v1308
    %v1310 = vpop.f32.mrf.mxu0
    %v1311 = vpop.f32.mrf.mxu0
    %v1312 = vpop.f32.mrf.mxu0
    %1313 = vdwg.mxu0
    %1314 = vrot.lane.b32.xlu0 %v815, 64
    %v1315 = vpop.permute.xlu0 %1314
    %1316 = vrot.lane.b32.xlu0 %v816, 64
    %v1317 = vpop.permute.xlu0 %1316
    %v1320 = vsel %vm1110, %v1245, 0
    %v1323 = vsel %vm1110, %v1246, 0
    %v1326 = vsel %vm1262, %v1317, 0
    %1328 = vmatprep.subr.bf16.mxu0 0
    %1329 = vmatpush1.bf16.msra.mxu0 0
    %1330 = vmatprep.subr.bf16.mxu0 0
    %1331 = vmatpush1.bf16.msra.mxu0 0
    %1332 = vmatprep.subr.bf16.mxu0 0
    %1333 = vmatpush1.bf16.msra.mxu0 0
    %1334 = vmatprep.subr.bf16.mxu0 0
    %1335 = vmatpush1.bf16.msra.mxu0 0
    %1336 = vmatprep.subr.bf16.mxu0 0
    %1337 = vmatpush1.bf16.msra.mxu0 0
    %1338 = vmatprep.subr.bf16.mxu0 0
    %1339 = vmatpush1.bf16.msra.mxu0 0
    %1340 = vmatprep.subr.bf16.mxu0 0
    %1341 = vmatpush1.bf16.msra.mxu0 %v1326
    %1342 = vmatprep.subr.bf16.mxu0 0
    %1343 = vmatpush1.bf16.msra.mxu0 %v1315
    %1344 = vmatprep.subr.bf16.mxu0 0
    %1345 = vmatpush2.bf16.msra.mxu0 0
    %1346 = vmatprep.subr.bf16.mxu0 0
    %1347 = vmatpush2.bf16.msra.mxu0 0
    %1348 = vmatprep.subr.bf16.mxu0 0
    %1349 = vmatpush2.bf16.msra.mxu0 0
    %1350 = vmatprep.subr.bf16.mxu0 0
    %1351 = vmatpush2.bf16.msra.mxu0 0
    %1352 = vmatprep.subr.bf16.mxu0 0
    %1353 = vmatpush2.bf16.msra.mxu0 0
    %1354 = vmatprep.subr.bf16.mxu0 0
    %1355 = vmatpush2.bf16.msra.mxu0 0
    %1356 = vmatprep.subr.bf16.mxu0 0
    %1357 = vmatpush2.bf16.msra.mxu0 0
    %1358 = vmatprep.subr.bf16.mxu0 0
    %1359 = vmatpush2.bf16.msra.mxu0 0
    %1360 = vmatprep.mubr.bf16.mxu0 0
    %1361 = vmatmul.mubr.bf16.gmra.mxu0 %v1320
    %v1362 = vpop.f32.mrf.mxu0
    %v1363 = vadd.f32 0.0, %v1362
    %v1364 = vpop.f32.mrf.mxu0
    %v1365 = vpop.f32.mrf.mxu0
    %v1366 = vadd.f32 0.0, %v1365
    %v1367 = vpop.f32.mrf.mxu0
    %1368 = vmatprep.mubr.bf16.mxu0 0
    %1369 = vmatmul.mubr.bf16.gmra.mxu0 %v1323
    %v1370 = vpop.f32.mrf.mxu0
    %v1371 = vadd.f32 0.0, %v1370
    %v1372 = vpop.f32.mrf.mxu0
    %v1373 = vpop.f32.mrf.mxu0
    %v1374 = vpop.f32.mrf.mxu0
    %1375 = vdwg.mxu0
    %1376 = vrot.lane.b32.xlu0 %v817, 64
    %v1377 = vpop.permute.xlu0 %1376
    %1378 = vrot.lane.b32.xlu0 %v818, 64
    %v1379 = vpop.permute.xlu0 %1378
    %v1382 = vsel %vm1110, %v1247, 0
    %v1385 = vsel %vm1110, %v1248, 0
    %v1388 = vsel %vm1262, %v1379, 0
    %1390 = vmatprep.subr.bf16.mxu0 0
    %1391 = vmatpush1.bf16.msra.mxu0 0
    %1392 = vmatprep.subr.bf16.mxu0 0
    %1393 = vmatpush1.bf16.msra.mxu0 0
    %1394 = vmatprep.subr.bf16.mxu0 0
    %1395 = vmatpush1.bf16.msra.mxu0 0
    %1396 = vmatprep.subr.bf16.mxu0 0
    %1397 = vmatpush1.bf16.msra.mxu0 0
    %1398 = vmatprep.subr.bf16.mxu0 0
    %1399 = vmatpush1.bf16.msra.mxu0 0
    %1400 = vmatprep.subr.bf16.mxu0 0
    %1401 = vmatpush1.bf16.msra.mxu0 0
    %1402 = vmatprep.subr.bf16.mxu0 0
    %1403 = vmatpush1.bf16.msra.mxu0 %v1388
    %1404 = vmatprep.subr.bf16.mxu0 0
    %1405 = vmatpush1.bf16.msra.mxu0 %v1377
    %1406 = vmatprep.subr.bf16.mxu0 0
    %1407 = vmatpush2.bf16.msra.mxu0 0
    %1408 = vmatprep.subr.bf16.mxu0 0
    %1409 = vmatpush2.bf16.msra.mxu0 0
    %1410 = vmatprep.subr.bf16.mxu0 0
    %1411 = vmatpush2.bf16.msra.mxu0 0
    %1412 = vmatprep.subr.bf16.mxu0 0
    %1413 = vmatpush2.bf16.msra.mxu0 0
    %1414 = vmatprep.subr.bf16.mxu0 0
    %1415 = vmatpush2.bf16.msra.mxu0 0
    %1416 = vmatprep.subr.bf16.mxu0 0
    %1417 = vmatpush2.bf16.msra.mxu0 0
    %1418 = vmatprep.subr.bf16.mxu0 0
    %1419 = vmatpush2.bf16.msra.mxu0 0
    %1420 = vmatprep.subr.bf16.mxu0 0
    %1421 = vmatpush2.bf16.msra.mxu0 0
    %1422 = vmatprep.mubr.bf16.mxu0 0
    %1423 = vmatmul.mubr.bf16.gmra.mxu0 %v1382
    %v1424 = vpop.f32.mrf.mxu0
    %v1425 = vadd.f32 0.0, %v1424
    %v1426 = vpop.f32.mrf.mxu0
    %v1427 = vpop.f32.mrf.mxu0
    %v1428 = vadd.f32 0.0, %v1427
    %v1429 = vpop.f32.mrf.mxu0
    %1430 = vmatprep.mubr.bf16.mxu0 0
    %1431 = vmatmul.mubr.bf16.gmra.mxu0 %v1385
    %v1432 = vpop.f32.mrf.mxu0
    %v1433 = vadd.f32 0.0, %v1432
    %v1434 = vpop.f32.mrf.mxu0
    %v1435 = vpop.f32.mrf.mxu0
    %v1436 = vpop.f32.mrf.mxu0
    %1437 = vdwg.mxu0
    %1438 = vrot.lane.b32.xlu0 %v819, 64
    %v1439 = vpop.permute.xlu0 %1438
    %1440 = vrot.lane.b32.xlu0 %v820, 64
    %v1441 = vpop.permute.xlu0 %1440
    %v1444 = vsel %vm1110, %v1249, 0
    %v1447 = vsel %vm1110, %v1250, 0
    %v1450 = vsel %vm1262, %v1441, 0
    %1452 = vmatprep.subr.bf16.mxu0 0
    %1453 = vmatpush1.bf16.msra.mxu0 0
    %1454 = vmatprep.subr.bf16.mxu0 0
    %1455 = vmatpush1.bf16.msra.mxu0 0
    %1456 = vmatprep.subr.bf16.mxu0 0
    %1457 = vmatpush1.bf16.msra.mxu0 0
    %1458 = vmatprep.subr.bf16.mxu0 0
    %1459 = vmatpush1.bf16.msra.mxu0 0
    %1460 = vmatprep.subr.bf16.mxu0 0
    %1461 = vmatpush1.bf16.msra.mxu0 0
    %1462 = vmatprep.subr.bf16.mxu0 0
    %1463 = vmatpush1.bf16.msra.mxu0 0
    %1464 = vmatprep.subr.bf16.mxu0 0
    %1465 = vmatpush1.bf16.msra.mxu0 %v1450
    %1466 = vmatprep.subr.bf16.mxu0 0
    %1467 = vmatpush1.bf16.msra.mxu0 %v1439
    %1468 = vmatprep.subr.bf16.mxu0 0
    %1469 = vmatpush2.bf16.msra.mxu0 0
    %1470 = vmatprep.subr.bf16.mxu0 0
    %1471 = vmatpush2.bf16.msra.mxu0 0
    %1472 = vmatprep.subr.bf16.mxu0 0
    %1473 = vmatpush2.bf16.msra.mxu0 0
    %1474 = vmatprep.subr.bf16.mxu0 0
    %1475 = vmatpush2.bf16.msra.mxu0 0
    %1476 = vmatprep.subr.bf16.mxu0 0
    %1477 = vmatpush2.bf16.msra.mxu0 0
    %1478 = vmatprep.subr.bf16.mxu0 0
    %1479 = vmatpush2.bf16.msra.mxu0 0
    %1480 = vmatprep.subr.bf16.mxu0 0
    %1481 = vmatpush2.bf16.msra.mxu0 0
    %1482 = vmatprep.subr.bf16.mxu0 0
    %1483 = vmatpush2.bf16.msra.mxu0 0
    %1484 = vmatprep.mubr.bf16.mxu0 0
    %1485 = vmatmul.mubr.bf16.gmra.mxu0 %v1444
    %v1486 = vpop.f32.mrf.mxu0
    %v1487 = vadd.f32 0.0, %v1486
    %v1488 = vpop.f32.mrf.mxu0
    %v1489 = vpop.f32.mrf.mxu0
    %v1490 = vadd.f32 0.0, %v1489
    %v1491 = vpop.f32.mrf.mxu0
    %1492 = vmatprep.mubr.bf16.mxu0 0
    %1493 = vmatmul.mubr.bf16.gmra.mxu0 %v1447
    %v1494 = vpop.f32.mrf.mxu0
    %v1495 = vadd.f32 0.0, %v1494
    %v1496 = vpop.f32.mrf.mxu0
    %v1497 = vpop.f32.mrf.mxu0
    %v1498 = vpop.f32.mrf.mxu0
    %1499 = vdwg.mxu0
    %1506 = vrot.lane.b32.xlu0 %v1425, 16
    %v1507 = vpop.permute.xlu0 %1506
    %1508 = vrot.lane.b32.xlu0 %v1428, 16
    %v1509 = vpop.permute.xlu0 %1508
    %1510 = vrot.lane.b32.xlu0 %v1433, 16
    %v1511 = vpop.permute.xlu0 %1510
    %1512 = vrot.lane.b32.xlu0 %v1487, 16
    %v1513 = vpop.permute.xlu0 %1512
    %1514 = vrot.lane.b32.xlu0 %v1490, 16
    %v1515 = vpop.permute.xlu0 %1514
    %1516 = vrot.lane.b32.xlu0 %v1495, 16
    %v1517 = vpop.permute.xlu0 %1516
    %v1524 = vsel %vm827, %v1301, %v1507
    %v1525 = vsel %vm827, %v1304, %v1509
    %v1526 = vsel %vm827, %v1309, %v1511
    %v1527 = vsel %vm827, %v1363, %v1513
    %v1528 = vsel %vm827, %v1366, %v1515
    %v1529 = vsel %vm827, %v1371, %v1517
    %v1530 = vpack.c.bf16 %v1525, %v1524
    %v1531 = vpack.c.bf16 %v1527, %v1526
    %v1532 = vpack.c.bf16 %v1529, %v1528
    %v1533 = vld [vmem:[%s31] sm:$0xf]
    %v1534 = vld [vmem:[%s31 + $0x4] sm:$0xf]
    %v1535 = vld [vmem:[%s31 + $0x8] sm:$0xf]
    %v1536 = vld [vmem:[%s31 + $0xc] sm:$0xf]
    %v1541 = vunpack.c.l.b16 %v1533
    %v1542 = vunpack.c.l.b16 %v1534
    %v1543 = vunpack.c.l.b16 %v1535
    %v1544 = vunpack.c.l.b16 %v1536
    %v1545 = vpack.c.b16 %v1542, %v1541
    %v1546 = vpack.c.b16 %v1544, %v1543
    %v1550 = vsel %vm253, %v1530, 0
    %v1553 = vsel %vm253, %v1531, 0
    %v1556 = vsel %vm253, %v1532, 0
    %1558 = vmatprep.subr.bf16.mxu0 0
    %1559 = vmatpush1.bf16.msra.mxu0 0
    %1560 = vmatprep.subr.bf16.mxu0 0
    %1561 = vmatpush1.bf16.msra.mxu0 0
    %1562 = vmatprep.subr.bf16.mxu0 0
    %1563 = vmatpush1.bf16.msra.mxu0 0
    %1564 = vmatprep.subr.bf16.mxu0 0
    %1565 = vmatpush1.bf16.msra.mxu0 0
    %1566 = vmatprep.subr.bf16.mxu0 0
    %1567 = vmatpush1.bf16.msra.mxu0 0
    %1568 = vmatprep.subr.bf16.mxu0 0
    %1569 = vmatpush1.bf16.msra.mxu0 0
    %1570 = vmatprep.subr.bf16.mxu0 0
    %1571 = vmatpush1.bf16.msra.mxu0 %v1546
    %1572 = vmatprep.subr.bf16.mxu0 0
    %1573 = vmatpush1.bf16.msra.mxu0 %v1545
    %1574 = vmatprep.subr.bf16.mxu0 0
    %1575 = vmatpush2.bf16.msra.mxu0 0
    %1576 = vmatprep.subr.bf16.mxu0 0
    %1577 = vmatpush2.bf16.msra.mxu0 0
    %1578 = vmatprep.subr.bf16.mxu0 0
    %1579 = vmatpush2.bf16.msra.mxu0 0
    %1580 = vmatprep.subr.bf16.mxu0 0
    %1581 = vmatpush2.bf16.msra.mxu0 0
    %1582 = vmatprep.subr.bf16.mxu0 0
    %1583 = vmatpush2.bf16.msra.mxu0 0
    %1584 = vmatprep.subr.bf16.mxu0 0
    %1585 = vmatpush2.bf16.msra.mxu0 0
    %1586 = vmatprep.subr.bf16.mxu0 0
    %1587 = vmatpush2.bf16.msra.mxu0 0
    %1588 = vmatprep.subr.bf16.mxu0 0
    %1589 = vmatpush2.bf16.msra.mxu0 0
    %1590 = vmatprep.mubr.bf16.mxu0 0
    %1591 = vmatmul.mubr.bf16.gmra.mxu0 %v1550
    %v1592 = vpop.f32.mrf.mxu0
    %v1593 = vadd.f32 0.0, %v1592
    %v1594 = vpop.f32.mrf.mxu0
    %v1595 = vpop.f32.mrf.mxu0
    %v1596 = vadd.f32 0.0, %v1595
    %v1597 = vpop.f32.mrf.mxu0
    %1598 = vmatprep.mubr.bf16.mxu0 0
    %1599 = vmatmul.mubr.bf16.gmra.mxu0 %v1553
    %v1600 = vpop.f32.mrf.mxu0
    %v1601 = vadd.f32 0.0, %v1600
    %v1602 = vpop.f32.mrf.mxu0
    %v1603 = vpop.f32.mrf.mxu0
    %v1604 = vadd.f32 0.0, %v1603
    %v1605 = vpop.f32.mrf.mxu0
    %1606 = vmatprep.mubr.bf16.mxu0 0
    %1607 = vmatmul.mubr.bf16.gmra.mxu0 %v1556
    %v1608 = vpop.f32.mrf.mxu0
    %v1609 = vadd.f32 0.0, %v1608
    %v1610 = vpop.f32.mrf.mxu0
    %v1611 = vpop.f32.mrf.mxu0
    %v1612 = vadd.f32 0.0, %v1611
    %v1613 = vpop.f32.mrf.mxu0
    %1614 = vdwg.mxu0
    %v1615 = vadd.f32 %v428, %v1593
    %v1616 = vadd.f32 %v429, %v1596
    %v1617 = vadd.f32 %v430, %v1601
    %v1618 = vadd.f32 %v431, %v1604
    %v1619 = vadd.f32 %v432, %v1609
    %v1620 = vadd.f32 %v433, %v1612
    %v1621 = vld [vmem:[%s33] sm:$0x1]
    %v1623 = vlaneseq
    %v1624 = vshrl.u32 %v1623, 7
    %v1625 = vsub.s32 0, %v1624
    %v1626 = vrot.slane %v1621, %v1625
    %v1628 = vadd.f32 %v1615, %v1626
    %v1629 = vadd.f32 %v1616, %v1626
    %v1630 = vadd.f32 %v1617, %v1626
    %v1631 = vadd.f32 %v1618, %v1626
    %v1632 = vadd.f32 %v1619, %v1626
    %v1633 = vadd.f32 %v1620, %v1626
    %v1634 = vld [vmem:[%s35] sm:$0x1]
    %v1635 = vld [vmem:[%s37] sm:$0x1]
    %v1636 = vsel %vm253, %v1628, 0.0
    %1637 = vadd.xlane.f32.xlu0 %v1636
    %v1638 = vpop.xlane.xlu0 %1637
    %v1639 = vsel %vm253, %v1629, 0.0
    %1640 = vadd.xlane.f32.xlu0 %v1639
    %v1641 = vpop.xlane.xlu0 %1640
    %v1642 = vsel %vm253, %v1630, 0.0
    %1643 = vadd.xlane.f32.xlu0 %v1642
    %v1644 = vpop.xlane.xlu0 %1643
    %v1645 = vsel %vm253, %v1631, 0.0
    %1646 = vadd.xlane.f32.xlu0 %v1645
    %v1647 = vpop.xlane.xlu0 %1646
    %v1648 = vsel %vm253, %v1632, 0.0
    %1649 = vadd.xlane.f32.xlu0 %v1648
    %v1650 = vpop.xlane.xlu0 %1649
    %v1651 = vsel %vm253, %v1633, 0.0
    %1652 = vadd.xlane.f32.xlu0 %v1651
    %v1653 = vpop.xlane.xlu0 %1652
    %v1654 = vmul.f32 %v1638, %v349
    %v1655 = vmul.f32 %v1641, %v349
    %v1656 = vmul.f32 %v1644, %v349
    %v1657 = vmul.f32 %v1647, %v349
    %v1658 = vmul.f32 %v1650, %v349
    %v1659 = vmul.f32 %v1653, %v349
    %v1660 = vsub.f32 %v1628, %v1654
    %v1661 = vsub.f32 %v1629, %v1655
    %v1662 = vsub.f32 %v1630, %v1656
    %v1663 = vsub.f32 %v1631, %v1657
    %v1664 = vsub.f32 %v1632, %v1658
    %v1665 = vsub.f32 %v1633, %v1659
    %v1666 = vmul.f32 %v1660, %v1660
    %v1667 = vmul.f32 %v1661, %v1661
    %v1668 = vmul.f32 %v1662, %v1662
    %v1669 = vmul.f32 %v1663, %v1663
    %v1670 = vmul.f32 %v1664, %v1664
    %v1671 = vmul.f32 %v1665, %v1665
    %v1672 = vsel %vm253, %v1666, 0.0
    %1673 = vadd.xlane.f32.xlu0 %v1672
    %v1674 = vpop.xlane.xlu0 %1673
    %v1675 = vsel %vm253, %v1667, 0.0
    %1676 = vadd.xlane.f32.xlu0 %v1675
    %v1677 = vpop.xlane.xlu0 %1676
    %v1678 = vsel %vm253, %v1668, 0.0
    %1679 = vadd.xlane.f32.xlu0 %v1678
    %v1680 = vpop.xlane.xlu0 %1679
    %v1681 = vsel %vm253, %v1669, 0.0
    %1682 = vadd.xlane.f32.xlu0 %v1681
    %v1683 = vpop.xlane.xlu0 %1682
    %v1684 = vsel %vm253, %v1670, 0.0
    %1685 = vadd.xlane.f32.xlu0 %v1684
    %v1686 = vpop.xlane.xlu0 %1685
    %v1687 = vsel %vm253, %v1671, 0.0
    %1688 = vadd.xlane.f32.xlu0 %v1687
    %v1689 = vpop.xlane.xlu0 %1688
    %v1690 = vmul.f32 %v1674, %v349
    %v1691 = vmul.f32 %v1677, %v349
    %v1692 = vmul.f32 %v1680, %v349
    %v1693 = vmul.f32 %v1683, %v349
    %v1694 = vmul.f32 %v1686, %v349
    %v1695 = vmul.f32 %v1689, %v349
    %v1696 = vadd.f32 %v1690, 1e-05
    %v1697 = vadd.f32 %v1691, 1e-05
    %v1698 = vadd.f32 %v1692, 1e-05
    %v1699 = vadd.f32 %v1693, 1e-05
    %v1700 = vadd.f32 %v1694, 1e-05
    %v1701 = vadd.f32 %v1695, 1e-05
    %v1702 = vrsqrt.pop %v1696
    %v1703 = vrsqrt.pop %v1697
    %v1704 = vrsqrt.pop %v1698
    %v1705 = vrsqrt.pop %v1699
    %v1706 = vrsqrt.pop %v1700
    %v1707 = vrsqrt.pop %v1701
    %v1708 = vmul.f32 %v1660, %v1702
    %v1709 = vmul.f32 %v1661, %v1703
    %v1710 = vmul.f32 %v1662, %v1704
    %v1711 = vmul.f32 %v1663, %v1705
    %v1712 = vmul.f32 %v1664, %v1706
    %v1713 = vmul.f32 %v1665, %v1707
    %v1715 = vlaneseq
    %v1716 = vshrl.u32 %v1715, 7
    %v1717 = vsub.s32 0, %v1716
    %v1718 = vrot.slane %v1634, %v1717
    %v1720 = vmul.f32 %v1708, %v1718
    %v1721 = vmul.f32 %v1709, %v1718
    %v1722 = vmul.f32 %v1710, %v1718
    %v1723 = vmul.f32 %v1711, %v1718
    %v1724 = vmul.f32 %v1712, %v1718
    %v1725 = vmul.f32 %v1713, %v1718
    %v1727 = vlaneseq
    %v1728 = vshrl.u32 %v1727, 7
    %v1729 = vsub.s32 0, %v1728
    %v1730 = vrot.slane %v1635, %v1729
    %v1732 = vadd.f32 %v1720, %v1730
    %v1733 = vadd.f32 %v1721, %v1730
    %v1734 = vadd.f32 %v1722, %v1730
    %v1735 = vadd.f32 %v1723, %v1730
    %v1736 = vadd.f32 %v1724, %v1730
    %v1737 = vadd.f32 %v1725, %v1730
    %v1738 = vpack.c.bf16 %v1733, %v1732
    %v1739 = vpack.c.bf16 %v1735, %v1734
    %v1740 = vpack.c.bf16 %v1737, %v1736
    %v1741 = vld [vmem:[%s39] sm:$0xff]
    %v1742 = vld [vmem:[%s39 + $0x8] sm:$0xff]
    %v1743 = vld [vmem:[%s39 + $0x10] sm:$0xff]
    %v1744 = vld [vmem:[%s39 + $0x18] sm:$0xff]
    %v1745 = vld [vmem:[%s41] sm:$0x3]
    %v1747 = vlaneseq
    %v1748 = vshrl.u32 %v1747, 7
    %v1749 = vsub.s32 0, %v1748
    %v1750 = vrot.slane %v1745, %v1749
    %v1751 = vlaneseq
    %v1752 = vshrl.u32 %v1751, 7
    %v1753 = vsub.s32 1, %v1752
    %v1754 = vrot.slane %v1745, %v1753
    %v1761 = vunpack.c.l.b16 %v1741
    %v1762 = vunpack.c.h.b16 %v1741
    %v1763 = vunpack.c.l.b16 %v1742
    %v1764 = vunpack.c.h.b16 %v1742
    %v1765 = vunpack.c.l.b16 %v1743
    %v1766 = vunpack.c.h.b16 %v1743
    %v1767 = vunpack.c.l.b16 %v1744
    %v1768 = vunpack.c.h.b16 %v1744
    %v1769 = vpack.c.b16 %v1763, %v1761
    %v1770 = vpack.c.b16 %v1764, %v1762
    %v1771 = vpack.c.b16 %v1767, %v1765
    %v1772 = vpack.c.b16 %v1768, %v1766
    %v1778 = vsel %vm253, %v1738, 0
    %v1781 = vsel %vm253, %v1739, 0
    %v1784 = vsel %vm253, %v1740, 0
    %1786 = vmatprep.subr.bf16.mxu0 0
    %1787 = vmatpush1.bf16.msra.mxu0 0
    %1788 = vmatprep.subr.bf16.mxu0 0
    %1789 = vmatpush1.bf16.msra.mxu0 0
    %1790 = vmatprep.subr.bf16.mxu0 0
    %1791 = vmatpush1.bf16.msra.mxu0 0
    %1792 = vmatprep.subr.bf16.mxu0 0
    %1793 = vmatpush1.bf16.msra.mxu0 0
    %1794 = vmatprep.subr.bf16.mxu0 0
    %1795 = vmatpush1.bf16.msra.mxu0 0
    %1796 = vmatprep.subr.bf16.mxu0 0
    %1797 = vmatpush1.bf16.msra.mxu0 0
    %1798 = vmatprep.subr.bf16.mxu0 %v1772
    %1799 = vmatpush1.bf16.msra.mxu0 %v1771
    %1800 = vmatprep.subr.bf16.mxu0 %v1770
    %1801 = vmatpush1.bf16.msra.mxu0 %v1769
    %1802 = vmatprep.subr.bf16.mxu0 0
    %1803 = vmatpush2.bf16.msra.mxu0 0
    %1804 = vmatprep.subr.bf16.mxu0 0
    %1805 = vmatpush2.bf16.msra.mxu0 0
    %1806 = vmatprep.subr.bf16.mxu0 0
    %1807 = vmatpush2.bf16.msra.mxu0 0
    %1808 = vmatprep.subr.bf16.mxu0 0
    %1809 = vmatpush2.bf16.msra.mxu0 0
    %1810 = vmatprep.subr.bf16.mxu0 0
    %1811 = vmatpush2.bf16.msra.mxu0 0
    %1812 = vmatprep.subr.bf16.mxu0 0
    %1813 = vmatpush2.bf16.msra.mxu0 0
    %1814 = vmatprep.subr.bf16.mxu0 0
    %1815 = vmatpush2.bf16.msra.mxu0 0
    %1816 = vmatprep.subr.bf16.mxu0 0
    %1817 = vmatpush2.bf16.msra.mxu0 0
    %1818 = vmatprep.mubr.bf16.mxu0 0
    %1819 = vmatmul.mubr.bf16.gmra.mxu0 %v1778
    %v1820 = vpop.f32.mrf.mxu0
    %v1821 = vadd.f32 %v1750, %v1820
    %v1822 = vpop.f32.mrf.mxu0
    %v1823 = vadd.f32 %v1754, %v1822
    %v1824 = vpop.f32.mrf.mxu0
    %v1825 = vadd.f32 %v1750, %v1824
    %v1826 = vpop.f32.mrf.mxu0
    %v1827 = vadd.f32 %v1754, %v1826
    %1828 = vmatprep.mubr.bf16.mxu0 0
    %1829 = vmatmul.mubr.bf16.gmra.mxu0 %v1781
    %v1830 = vpop.f32.mrf.mxu0
    %v1831 = vadd.f32 %v1750, %v1830
    %v1832 = vpop.f32.mrf.mxu0
    %v1833 = vadd.f32 %v1754, %v1832
    %v1834 = vpop.f32.mrf.mxu0
    %v1835 = vadd.f32 %v1750, %v1834
    %v1836 = vpop.f32.mrf.mxu0
    %v1837 = vadd.f32 %v1754, %v1836
    %1838 = vmatprep.mubr.bf16.mxu0 0
    %1839 = vmatmul.mubr.bf16.gmra.mxu0 %v1784
    %v1840 = vpop.f32.mrf.mxu0
    %v1841 = vadd.f32 %v1750, %v1840
    %v1842 = vpop.f32.mrf.mxu0
    %v1843 = vadd.f32 %v1754, %v1842
    %v1844 = vpop.f32.mrf.mxu0
    %v1845 = vadd.f32 %v1750, %v1844
    %v1846 = vpop.f32.mrf.mxu0
    %v1847 = vadd.f32 %v1754, %v1846
    %1848 = vdwg.mxu0
    %v1849 = vadd.s32 %v435, 128
    %vm1850 = vcmp.lt.s32.totalorder %v435, 128
    %vm1851 = vcmp.lt.s32.totalorder %v1849, 128
    %v1852 = vmul.f32 %v1821, 1.702
    %v1853 = vmul.f32 %v1823, 1.702
    %v1854 = vmul.f32 %v1825, 1.702
    %v1855 = vmul.f32 %v1827, 1.702
    %v1856 = vmul.f32 %v1831, 1.702
    %v1857 = vmul.f32 %v1833, 1.702
    %v1858 = vmul.f32 %v1835, 1.702
    %v1859 = vmul.f32 %v1837, 1.702
    %v1860 = vmul.f32 %v1841, 1.702
    %v1861 = vmul.f32 %v1843, 1.702
    %v1862 = vmul.f32 %v1845, 1.702
    %v1863 = vmul.f32 %v1847, 1.702
    %v1864 = vxor.u32 %v1852, 2147483648
    %v1865 = vxor.u32 %v1853, 2147483648
    %v1866 = vxor.u32 %v1854, 2147483648
    %v1867 = vxor.u32 %v1855, 2147483648
    %v1868 = vxor.u32 %v1856, 2147483648
    %v1869 = vxor.u32 %v1857, 2147483648
    %v1870 = vxor.u32 %v1858, 2147483648
    %v1871 = vxor.u32 %v1859, 2147483648
    %v1872 = vxor.u32 %v1860, 2147483648
    %v1873 = vxor.u32 %v1861, 2147483648
    %v1874 = vxor.u32 %v1862, 2147483648
    %v1875 = vxor.u32 %v1863, 2147483648
    %v1876 = vmul.f32 %v1864, 1.442695
    %v1877 = vpow.pop %v1876
    %v1878 = vmul.f32 %v1865, 1.442695
    %v1879 = vpow.pop %v1878
    %v1880 = vmul.f32 %v1866, 1.442695
    %v1881 = vpow.pop %v1880
    %v1882 = vmul.f32 %v1867, 1.442695
    %v1883 = vpow.pop %v1882
    %v1884 = vmul.f32 %v1868, 1.442695
    %v1885 = vpow.pop %v1884
    %v1886 = vmul.f32 %v1869, 1.442695
    %v1887 = vpow.pop %v1886
    %v1888 = vmul.f32 %v1870, 1.442695
    %v1889 = vpow.pop %v1888
    %v1890 = vmul.f32 %v1871, 1.442695
    %v1891 = vpow.pop %v1890
    %v1892 = vmul.f32 %v1872, 1.442695
    %v1893 = vpow.pop %v1892
    %v1894 = vmul.f32 %v1873, 1.442695
    %v1895 = vpow.pop %v1894
    %v1896 = vmul.f32 %v1874, 1.442695
    %v1897 = vpow.pop %v1896
    %v1898 = vmul.f32 %v1875, 1.442695
    %v1899 = vpow.pop %v1898
    %v1900 = vadd.f32 %v1877, 1.0
    %v1901 = vadd.f32 %v1879, 1.0
    %v1902 = vadd.f32 %v1881, 1.0
    %v1903 = vadd.f32 %v1883, 1.0
    %v1904 = vadd.f32 %v1885, 1.0
    %v1905 = vadd.f32 %v1887, 1.0
    %v1906 = vadd.f32 %v1889, 1.0
    %v1907 = vadd.f32 %v1891, 1.0
    %v1908 = vadd.f32 %v1893, 1.0
    %v1909 = vadd.f32 %v1895, 1.0
    %v1910 = vadd.f32 %v1897, 1.0
    %v1911 = vadd.f32 %v1899, 1.0
    %v1912 = vrcp.pop %v1900
    %v1913 = vmul.f32 1.0, %v1912
    %v1914 = vrcp.pop %v1901
    %v1915 = vmul.f32 1.0, %v1914
    %v1916 = vrcp.pop %v1902
    %v1917 = vmul.f32 1.0, %v1916
    %v1918 = vrcp.pop %v1903
    %v1919 = vmul.f32 1.0, %v1918
    %v1920 = vrcp.pop %v1904
    %v1921 = vmul.f32 1.0, %v1920
    %v1922 = vrcp.pop %v1905
    %v1923 = vmul.f32 1.0, %v1922
    %v1924 = vrcp.pop %v1906
    %v1925 = vmul.f32 1.0, %v1924
    %v1926 = vrcp.pop %v1907
    %v1927 = vmul.f32 1.0, %v1926
    %v1928 = vrcp.pop %v1908
    %v1929 = vmul.f32 1.0, %v1928
    %v1930 = vrcp.pop %v1909
    %v1931 = vmul.f32 1.0, %v1930
    %v1932 = vrcp.pop %v1910
    %v1933 = vmul.f32 1.0, %v1932
    %v1934 = vrcp.pop %v1911
    %v1935 = vmul.f32 1.0, %v1934
    %v1936 = vmul.f32 %v1821, %v1913
    %v1937 = vmul.f32 %v1823, %v1915
    %v1938 = vmul.f32 %v1825, %v1917
    %v1939 = vmul.f32 %v1827, %v1919
    %v1940 = vmul.f32 %v1831, %v1921
    %v1941 = vmul.f32 %v1833, %v1923
    %v1942 = vmul.f32 %v1835, %v1925
    %v1943 = vmul.f32 %v1837, %v1927
    %v1944 = vmul.f32 %v1841, %v1929
    %v1945 = vmul.f32 %v1843, %v1931
    %v1946 = vmul.f32 %v1845, %v1933
    %v1947 = vmul.f32 %v1847, %v1935
    %v1948 = vmax.f32 %v1821, 0.0
    %v1949 = vmax.f32 %v1823, 0.0
    %v1950 = vmax.f32 %v1825, 0.0
    %v1951 = vmax.f32 %v1827, 0.0
    %v1952 = vmax.f32 %v1831, 0.0
    %v1953 = vmax.f32 %v1833, 0.0
    %v1954 = vmax.f32 %v1835, 0.0
    %v1955 = vmax.f32 %v1837, 0.0
    %v1956 = vmax.f32 %v1841, 0.0
    %v1957 = vmax.f32 %v1843, 0.0
    %v1958 = vmax.f32 %v1845, 0.0
    %v1959 = vmax.f32 %v1847, 0.0
    %v1960 = vsel %vm1850, %v1936, %v1948
    %v1961 = vsel %vm1851, %v1937, %v1949
    %v1962 = vsel %vm1850, %v1938, %v1950
    %v1963 = vsel %vm1851, %v1939, %v1951
    %v1964 = vsel %vm1850, %v1940, %v1952
    %v1965 = vsel %vm1851, %v1941, %v1953
    %v1966 = vsel %vm1850, %v1942, %v1954
    %v1967 = vsel %vm1851, %v1943, %v1955
    %v1968 = vsel %vm1850, %v1944, %v1956
    %v1969 = vsel %vm1851, %v1945, %v1957
    %v1970 = vsel %vm1850, %v1946, %v1958
    %v1971 = vsel %vm1851, %v1947, %v1959
    %v1972 = vpack.c.bf16 %v1962, %v1960
    %v1973 = vpack.c.bf16 %v1963, %v1961
    %v1974 = vpack.c.bf16 %v1966, %v1964
    %v1975 = vpack.c.bf16 %v1967, %v1965
    %v1976 = vpack.c.bf16 %v1970, %v1968
    %v1977 = vpack.c.bf16 %v1971, %v1969
    %v1978 = vld [vmem:[%s43] sm:$0xf]
    %v1979 = vld [vmem:[%s43 + $0x4] sm:$0xf]
    %v1980 = vld [vmem:[%s43 + $0x8] sm:$0xf]
    %v1981 = vld [vmem:[%s43 + $0xc] sm:$0xf]
    %v1982 = vld [vmem:[%s43 + $0x10] sm:$0xf]
    %v1983 = vld [vmem:[%s43 + $0x14] sm:$0xf]
    %v1984 = vld [vmem:[%s43 + $0x18] sm:$0xf]
    %v1985 = vld [vmem:[%s43 + $0x1c] sm:$0xf]
    %v1986 = vld [vmem:[%s43 + $0x20] sm:$0xf]
    %v1987 = vld [vmem:[%s43 + $0x24] sm:$0xf]
    %v1988 = vld [vmem:[%s43 + $0x28] sm:$0xf]
    %v1989 = vld [vmem:[%s43 + $0x2c] sm:$0xf]
    %v1990 = vld [vmem:[%s43 + $0x30] sm:$0xf]
    %v1991 = vld [vmem:[%s43 + $0x34] sm:$0xf]
    %v1992 = vld [vmem:[%s43 + $0x38] sm:$0xf]
    %v1993 = vld [vmem:[%s43 + $0x3c] sm:$0xf]
    %v1994 = vld [vmem:[%s43 + $0x40] sm:$0xf]
    %v1995 = vld [vmem:[%s43 + $0x44] sm:$0xf]
    %v1996 = vld [vmem:[%s43 + $0x48] sm:$0xf]
    %v1997 = vld [vmem:[%s43 + $0x4c] sm:$0xf]
    %v1998 = vld [vmem:[%s43 + $0x50] sm:$0xf]
    %v1999 = vld [vmem:[%s43 + $0x54] sm:$0xf]
    %v2000 = vld [vmem:[%s43 + $0x58] sm:$0xf]
    %v2001 = vld [vmem:[%s43 + $0x5c] sm:$0xf]
    %v2026 = vunpack.c.l.b16 %v1978
    %v2027 = vunpack.c.l.b16 %v1979
    %v2028 = vunpack.c.l.b16 %v1980
    %v2029 = vunpack.c.l.b16 %v1981
    %v2030 = vunpack.c.l.b16 %v1982
    %v2031 = vunpack.c.l.b16 %v1983
    %v2032 = vunpack.c.l.b16 %v1984
    %v2033 = vunpack.c.l.b16 %v1985
    %v2034 = vunpack.c.l.b16 %v1986
    %v2035 = vunpack.c.l.b16 %v1987
    %v2036 = vunpack.c.l.b16 %v1988
    %v2037 = vunpack.c.l.b16 %v1989
    %v2038 = vunpack.c.l.b16 %v1990
    %v2039 = vunpack.c.l.b16 %v1991
    %v2040 = vunpack.c.l.b16 %v1992
    %v2041 = vunpack.c.l.b16 %v1993
    %v2042 = vunpack.c.l.b16 %v1994
    %v2043 = vunpack.c.l.b16 %v1995
    %v2044 = vunpack.c.l.b16 %v1996
    %v2045 = vunpack.c.l.b16 %v1997
    %v2046 = vunpack.c.l.b16 %v1998
    %v2047 = vunpack.c.l.b16 %v1999
    %v2048 = vunpack.c.l.b16 %v2000
    %v2049 = vunpack.c.l.b16 %v2001
    %v2050 = vpack.c.b16 %v2027, %v2026
    %v2051 = vpack.c.b16 %v2029, %v2028
    %v2052 = vpack.c.b16 %v2031, %v2030
    %v2053 = vpack.c.b16 %v2033, %v2032
    %v2054 = vpack.c.b16 %v2035, %v2034
    %v2055 = vpack.c.b16 %v2037, %v2036
    %v2056 = vpack.c.b16 %v2039, %v2038
    %v2057 = vpack.c.b16 %v2041, %v2040
    %v2058 = vpack.c.b16 %v2043, %v2042
    %v2059 = vpack.c.b16 %v2045, %v2044
    %v2060 = vpack.c.b16 %v2047, %v2046
    %v2061 = vpack.c.b16 %v2049, %v2048
    %v2075 = vsel %vm513, %v1973, 0
    %v2078 = vsel %vm513, %v1975, 0
    %v2081 = vsel %vm513, %v1977, 0
    %2083 = vmatprep.subr.bf16.mxu0 0
    %2084 = vmatpush1.bf16.msra.mxu0 %v2057
    %2085 = vmatprep.subr.bf16.mxu0 0
    %2086 = vmatpush1.bf16.msra.mxu0 %v2056
    %2087 = vmatprep.subr.bf16.mxu0 0
    %2088 = vmatpush1.bf16.msra.mxu0 %v2055
    %2089 = vmatprep.subr.bf16.mxu0 0
    %2090 = vmatpush1.bf16.msra.mxu0 %v2054
    %2091 = vmatprep.subr.bf16.mxu0 0
    %2092 = vmatpush1.bf16.msra.mxu0 %v2053
    %2093 = vmatprep.subr.bf16.mxu0 0
    %2094 = vmatpush1.bf16.msra.mxu0 %v2052
    %2095 = vmatprep.subr.bf16.mxu0 0
    %2096 = vmatpush1.bf16.msra.mxu0 %v2051
    %2097 = vmatprep.subr.bf16.mxu0 0
    %2098 = vmatpush1.bf16.msra.mxu0 %v2050
    %2099 = vmatprep.subr.bf16.mxu0 0
    %2100 = vmatpush2.bf16.msra.mxu0 0
    %2101 = vmatprep.subr.bf16.mxu0 0
    %2102 = vmatpush2.bf16.msra.mxu0 0
    %2103 = vmatprep.subr.bf16.mxu0 0
    %2104 = vmatpush2.bf16.msra.mxu0 0
    %2105 = vmatprep.subr.bf16.mxu0 0
    %2106 = vmatpush2.bf16.msra.mxu0 0
    %2107 = vmatprep.subr.bf16.mxu0 0
    %2108 = vmatpush2.bf16.msra.mxu0 %v2061
    %2109 = vmatprep.subr.bf16.mxu0 0
    %2110 = vmatpush2.bf16.msra.mxu0 %v2060
    %2111 = vmatprep.subr.bf16.mxu0 0
    %2112 = vmatpush2.bf16.msra.mxu0 %v2059
    %2113 = vmatprep.subr.bf16.mxu0 0
    %2114 = vmatpush2.bf16.msra.mxu0 %v2058
    %2115 = vmatprep.mubr.bf16.mxu0 %v2075
    %2116 = vmatmul.mubr.bf16.gmra.mxu0 %v1972
    %v2117 = vpop.f32.mrf.mxu0
    %v2118 = vadd.f32 0.0, %v2117
    %v2119 = vpop.f32.mrf.mxu0
    %v2120 = vpop.f32.mrf.mxu0
    %v2121 = vadd.f32 0.0, %v2120
    %v2122 = vpop.f32.mrf.mxu0
    %2123 = vmatprep.mubr.bf16.mxu0 %v2078
    %2124 = vmatmul.mubr.bf16.gmra.mxu0 %v1974
    %v2125 = vpop.f32.mrf.mxu0
    %v2126 = vadd.f32 0.0, %v2125
    %v2127 = vpop.f32.mrf.mxu0
    %v2128 = vpop.f32.mrf.mxu0
    %v2129 = vadd.f32 0.0, %v2128
    %v2130 = vpop.f32.mrf.mxu0
    %2131 = vmatprep.mubr.bf16.mxu0 %v2081
    %2132 = vmatmul.mubr.bf16.gmra.mxu0 %v1976
    %v2133 = vpop.f32.mrf.mxu0
    %v2134 = vadd.f32 0.0, %v2133
    %v2135 = vpop.f32.mrf.mxu0
    %v2136 = vpop.f32.mrf.mxu0
    %v2137 = vadd.f32 0.0, %v2136
    %v2138 = vpop.f32.mrf.mxu0
    %2139 = vdwg.mxu0
    %v2140 = vadd.f32 %v1628, %v2118
    %v2141 = vadd.f32 %v1629, %v2121
    %v2142 = vadd.f32 %v1630, %v2126
    %v2143 = vadd.f32 %v1631, %v2129
    %v2144 = vadd.f32 %v1632, %v2134
    %v2145 = vadd.f32 %v1633, %v2137
    %v2146 = vld [vmem:[%s45] sm:$0x1]
    %v2148 = vlaneseq
    %v2149 = vshrl.u32 %v2148, 7
    %v2150 = vsub.s32 0, %v2149
    %v2151 = vrot.slane %v2146, %v2150
    %v2153 = vadd.f32 %v2140, %v2151
    %v2154 = vadd.f32 %v2141, %v2151
    %v2155 = vadd.f32 %v2142, %v2151
    %v2156 = vadd.f32 %v2143, %v2151
    %v2157 = vadd.f32 %v2144, %v2151
    %v2158 = vadd.f32 %v2145, %v2151
    %s2159 = scalar_lea.vmem %s23, 1
    %v2160 = vld [vmem:[%s2159] sm:$0x1]
    %s2161 = scalar_lea.vmem %s25, 1
    %v2162 = vld [vmem:[%s2161] sm:$0x1]
    %v2163 = vsel %vm253, %v2153, 0.0
    %2164 = vadd.xlane.f32.xlu0 %v2163
    %v2165 = vpop.xlane.xlu0 %2164
    %v2166 = vsel %vm253, %v2154, 0.0
    %2167 = vadd.xlane.f32.xlu0 %v2166
    %v2168 = vpop.xlane.xlu0 %2167
    %v2169 = vsel %vm253, %v2155, 0.0
    %2170 = vadd.xlane.f32.xlu0 %v2169
    %v2171 = vpop.xlane.xlu0 %2170
    %v2172 = vsel %vm253, %v2156, 0.0
    %2173 = vadd.xlane.f32.xlu0 %v2172
    %v2174 = vpop.xlane.xlu0 %2173
    %v2175 = vsel %vm253, %v2157, 0.0
    %2176 = vadd.xlane.f32.xlu0 %v2175
    %v2177 = vpop.xlane.xlu0 %2176
    %v2178 = vsel %vm253, %v2158, 0.0
    %2179 = vadd.xlane.f32.xlu0 %v2178
    %v2180 = vpop.xlane.xlu0 %2179
    %v2181 = vmul.f32 %v2165, %v349
    %v2182 = vmul.f32 %v2168, %v349
    %v2183 = vmul.f32 %v2171, %v349
    %v2184 = vmul.f32 %v2174, %v349
    %v2185 = vmul.f32 %v2177, %v349
    %v2186 = vmul.f32 %v2180, %v349
    %v2187 = vsub.f32 %v2153, %v2181
    %v2188 = vsub.f32 %v2154, %v2182
    %v2189 = vsub.f32 %v2155, %v2183
    %v2190 = vsub.f32 %v2156, %v2184
    %v2191 = vsub.f32 %v2157, %v2185
    %v2192 = vsub.f32 %v2158, %v2186
    %v2193 = vmul.f32 %v2187, %v2187
    %v2194 = vmul.f32 %v2188, %v2188
    %v2195 = vmul.f32 %v2189, %v2189
    %v2196 = vmul.f32 %v2190, %v2190
    %v2197 = vmul.f32 %v2191, %v2191
    %v2198 = vmul.f32 %v2192, %v2192
    %v2199 = vsel %vm253, %v2193, 0.0
    %2200 = vadd.xlane.f32.xlu0 %v2199
    %v2201 = vpop.xlane.xlu0 %2200
    %v2202 = vsel %vm253, %v2194, 0.0
    %2203 = vadd.xlane.f32.xlu0 %v2202
    %v2204 = vpop.xlane.xlu0 %2203
    %v2205 = vsel %vm253, %v2195, 0.0
    %2206 = vadd.xlane.f32.xlu0 %v2205
    %v2207 = vpop.xlane.xlu0 %2206
    %v2208 = vsel %vm253, %v2196, 0.0
    %2209 = vadd.xlane.f32.xlu0 %v2208
    %v2210 = vpop.xlane.xlu0 %2209
    %v2211 = vsel %vm253, %v2197, 0.0
    %2212 = vadd.xlane.f32.xlu0 %v2211
    %v2213 = vpop.xlane.xlu0 %2212
    %v2214 = vsel %vm253, %v2198, 0.0
    %2215 = vadd.xlane.f32.xlu0 %v2214
    %v2216 = vpop.xlane.xlu0 %2215
    %v2217 = vmul.f32 %v2201, %v349
    %v2218 = vmul.f32 %v2204, %v349
    %v2219 = vmul.f32 %v2207, %v349
    %v2220 = vmul.f32 %v2210, %v349
    %v2221 = vmul.f32 %v2213, %v349
    %v2222 = vmul.f32 %v2216, %v349
    %v2223 = vadd.f32 %v2217, 1e-05
    %v2224 = vadd.f32 %v2218, 1e-05
    %v2225 = vadd.f32 %v2219, 1e-05
    %v2226 = vadd.f32 %v2220, 1e-05
    %v2227 = vadd.f32 %v2221, 1e-05
    %v2228 = vadd.f32 %v2222, 1e-05
    %v2229 = vrsqrt.pop %v2223
    %v2230 = vrsqrt.pop %v2224
    %v2231 = vrsqrt.pop %v2225
    %v2232 = vrsqrt.pop %v2226
    %v2233 = vrsqrt.pop %v2227
    %v2234 = vrsqrt.pop %v2228
    %v2235 = vmul.f32 %v2187, %v2229
    %v2236 = vmul.f32 %v2188, %v2230
    %v2237 = vmul.f32 %v2189, %v2231
    %v2238 = vmul.f32 %v2190, %v2232
    %v2239 = vmul.f32 %v2191, %v2233
    %v2240 = vmul.f32 %v2192, %v2234
    %v2242 = vlaneseq
    %v2243 = vshrl.u32 %v2242, 7
    %v2244 = vsub.s32 0, %v2243
    %v2245 = vrot.slane %v2160, %v2244
    %v2247 = vmul.f32 %v2235, %v2245
    %v2248 = vmul.f32 %v2236, %v2245
    %v2249 = vmul.f32 %v2237, %v2245
    %v2250 = vmul.f32 %v2238, %v2245
    %v2251 = vmul.f32 %v2239, %v2245
    %v2252 = vmul.f32 %v2240, %v2245
    %v2254 = vlaneseq
    %v2255 = vshrl.u32 %v2254, 7
    %v2256 = vsub.s32 0, %v2255
    %v2257 = vrot.slane %v2162, %v2256
    %v2259 = vadd.f32 %v2247, %v2257
    %v2260 = vadd.f32 %v2248, %v2257
    %v2261 = vadd.f32 %v2249, %v2257
    %v2262 = vadd.f32 %v2250, %v2257
    %v2263 = vadd.f32 %v2251, %v2257
    %v2264 = vadd.f32 %v2252, %v2257
    %v2265 = vpack.c.bf16 %v2260, %v2259
    %v2266 = vpack.c.bf16 %v2262, %v2261
    %v2267 = vpack.c.bf16 %v2264, %v2263
    %s2268 = scalar_lea.vmem %s27, 16
    %v2269 = vld [vmem:[%s2268] sm:$0xf]
    %v2270 = vld [vmem:[%s2268 + $0x4] sm:$0xf]
    %v2271 = vld [vmem:[%s2268 + $0x8] sm:$0xf]
    %v2272 = vld [vmem:[%s2268 + $0xc] sm:$0xf]
    %s2273 = scalar_lea.vmem %s29, 1
    %v2274 = vld [vmem:[%s2273] sm:$0x1]
    %v2276 = vlaneseq
    %v2277 = vshrl.u32 %v2276, 7
    %v2278 = vsub.s32 0, %v2277
    %v2279 = vrot.slane %v2274, %v2278
    %v2285 = vunpack.c.l.b16 %v2269
    %v2286 = vunpack.c.l.b16 %v2270
    %v2287 = vunpack.c.l.b16 %v2271
    %v2288 = vunpack.c.l.b16 %v2272
    %v2289 = vpack.c.b16 %v2286, %v2285
    %v2290 = vpack.c.b16 %v2288, %v2287
    %v2294 = vsel %vm253, %v2265, 0
    %v2297 = vsel %vm253, %v2266, 0
    %v2300 = vsel %vm253, %v2267, 0
    %2302 = vmatprep.subr.bf16.mxu0 0
    %2303 = vmatpush1.bf16.msra.mxu0 0
    %2304 = vmatprep.subr.bf16.mxu0 0
    %2305 = vmatpush1.bf16.msra.mxu0 0
    %2306 = vmatprep.subr.bf16.mxu0 0
    %2307 = vmatpush1.bf16.msra.mxu0 0
    %2308 = vmatprep.subr.bf16.mxu0 0
    %2309 = vmatpush1.bf16.msra.mxu0 0
    %2310 = vmatprep.subr.bf16.mxu0 0
    %2311 = vmatpush1.bf16.msra.mxu0 0
    %2312 = vmatprep.subr.bf16.mxu0 0
    %2313 = vmatpush1.bf16.msra.mxu0 0
    %2314 = vmatprep.subr.bf16.mxu0 0
    %2315 = vmatpush1.bf16.msra.mxu0 %v2290
    %2316 = vmatprep.subr.bf16.mxu0 0
    %2317 = vmatpush1.bf16.msra.mxu0 %v2289
    %2318 = vmatprep.subr.bf16.mxu0 0
    %2319 = vmatpush2.bf16.msra.mxu0 0
    %2320 = vmatprep.subr.bf16.mxu0 0
    %2321 = vmatpush2.bf16.msra.mxu0 0
    %2322 = vmatprep.subr.bf16.mxu0 0
    %2323 = vmatpush2.bf16.msra.mxu0 0
    %2324 = vmatprep.subr.bf16.mxu0 0
    %2325 = vmatpush2.bf16.msra.mxu0 0
    %2326 = vmatprep.subr.bf16.mxu0 0
    %2327 = vmatpush2.bf16.msra.mxu0 0
    %2328 = vmatprep.subr.bf16.mxu0 0
    %2329 = vmatpush2.bf16.msra.mxu0 0
    %2330 = vmatprep.subr.bf16.mxu0 0
    %2331 = vmatpush2.bf16.msra.mxu0 0
    %2332 = vmatprep.subr.bf16.mxu0 0
    %2333 = vmatpush2.bf16.msra.mxu0 0
    %2334 = vmatprep.mubr.bf16.mxu0 0
    %2335 = vmatmul.mubr.bf16.gmra.mxu0 %v2294
    %v2336 = vpop.f32.mrf.mxu0
    %v2337 = vadd.f32 %v2279, %v2336
    %v2338 = vpop.f32.mrf.mxu0
    %v2339 = vpop.f32.mrf.mxu0
    %v2340 = vadd.f32 %v2279, %v2339
    %v2341 = vpop.f32.mrf.mxu0
    %2342 = vmatprep.mubr.bf16.mxu0 0
    %2343 = vmatmul.mubr.bf16.gmra.mxu0 %v2297
    %v2344 = vpop.f32.mrf.mxu0
    %v2345 = vadd.f32 %v2279, %v2344
    %v2346 = vpop.f32.mrf.mxu0
    %v2347 = vpop.f32.mrf.mxu0
    %v2348 = vadd.f32 %v2279, %v2347
    %v2349 = vpop.f32.mrf.mxu0
    %2350 = vmatprep.mubr.bf16.mxu0 0
    %2351 = vmatmul.mubr.bf16.gmra.mxu0 %v2300
    %v2352 = vpop.f32.mrf.mxu0
    %v2353 = vadd.f32 %v2279, %v2352
    %v2354 = vpop.f32.mrf.mxu0
    %v2355 = vpop.f32.mrf.mxu0
    %v2356 = vadd.f32 %v2279, %v2355
    %v2357 = vpop.f32.mrf.mxu0
    %2358 = vdwg.mxu0
    %2365 = vrot.lane.b32.xlu0 %v2337, 112
    %v2366 = vpop.permute.xlu0 %2365
    %2367 = vrot.lane.b32.xlu0 %v2340, 112
    %v2368 = vpop.permute.xlu0 %2367
    %2369 = vrot.lane.b32.xlu0 %v2345, 112
    %v2370 = vpop.permute.xlu0 %2369
    %2371 = vrot.lane.b32.xlu0 %v2348, 112
    %v2372 = vpop.permute.xlu0 %2371
    %2373 = vrot.lane.b32.xlu0 %v2353, 112
    %v2374 = vpop.permute.xlu0 %2373
    %2375 = vrot.lane.b32.xlu0 %v2356, 112
    %v2376 = vpop.permute.xlu0 %2375
    %v2383 = vpack.c.bf16 %v2340, %v2337
    %v2384 = vpack.c.bf16 %v2345, %v2345
    %v2385 = vpack.c.bf16 %v2353, %v2348
    %v2386 = vpack.c.bf16 %v2356, %v2356
    %v2387 = vpack.c.bf16 %v2368, %v2366
    %v2388 = vpack.c.bf16 %v2370, %v2370
    %v2389 = vpack.c.bf16 %v2374, %v2372
    %v2390 = vpack.c.bf16 %v2376, %v2376
    %2393 = vrot.lane.b32.xlu0 %v2383, 96
    %v2394 = vpop.permute.xlu0 %2393
    %2395 = vrot.lane.b32.xlu0 %v2384, 96
    %v2396 = vpop.permute.xlu0 %2395
    %v2398 = vsel %vm827, %v2383, 0
    %v2401 = vsel %vm827, %v2384, 0
    %v2404 = vsel %vm827, %v2394, 0
    %v2407 = vsel %vm827, %v2396, 0
    %2409 = vmatprep.subr.bf16.mxu0 0
    %2410 = vmatpush1.bf16.xpose.msra.mxu0 0
    %2411 = vmatprep.subr.bf16.mxu0 0
    %2412 = vmatpush1.bf16.xpose.msra.mxu0 0
    %2413 = vmatprep.subr.bf16.mxu0 0
    %2414 = vmatpush1.bf16.xpose.msra.mxu0 0
    %2415 = vmatprep.subr.bf16.mxu0 0
    %2416 = vmatpush1.bf16.xpose.msra.mxu0 0
    %2417 = vmatprep.subr.bf16.mxu0 0
    %2418 = vmatpush1.bf16.xpose.msra.mxu0 0
    %2419 = vmatprep.subr.bf16.mxu0 0
    %2420 = vmatpush1.bf16.xpose.msra.mxu0 0
    %2421 = vmatprep.subr.bf16.mxu0 0
    %2422 = vmatpush1.bf16.xpose.msra.mxu0 %v2407
    %2423 = vmatprep.subr.bf16.mxu0 0
    %2424 = vmatpush1.bf16.xpose.msra.mxu0 %v2404
    %2425 = vmatprep.subr.bf16.mxu0 0
    %2426 = vmatpush2.bf16.xpose.msra.mxu0 0
    %2427 = vmatprep.subr.bf16.mxu0 0
    %2428 = vmatpush2.bf16.xpose.msra.mxu0 0
    %2429 = vmatprep.subr.bf16.mxu0 0
    %2430 = vmatpush2.bf16.xpose.msra.mxu0 0
    %2431 = vmatprep.subr.bf16.mxu0 0
    %2432 = vmatpush2.bf16.xpose.msra.mxu0 0
    %2433 = vmatprep.subr.bf16.mxu0 0
    %2434 = vmatpush2.bf16.xpose.msra.mxu0 0
    %2435 = vmatprep.subr.bf16.mxu0 0
    %2436 = vmatpush2.bf16.xpose.msra.mxu0 0
    %2437 = vmatprep.subr.bf16.mxu0 0
    %2438 = vmatpush2.bf16.xpose.msra.mxu0 0
    %2439 = vmatprep.subr.bf16.mxu0 0
    %2440 = vmatpush2.bf16.xpose.msra.mxu0 0
    %2441 = vmatprep.mubr.bf16.mxu0 0
    %2442 = vmatmul.mubr.bf16.gmra.mxu0 %v2398
    %v2443 = vpop.f32.mrf.mxu0
    %v2444 = vadd.f32 0.0, %v2443
    %v2445 = vpop.f32.mrf.mxu0
    %v2446 = vpop.f32.mrf.mxu0
    %v2447 = vadd.f32 0.0, %v2446
    %v2448 = vpop.f32.mrf.mxu0
    %2449 = vmatprep.mubr.bf16.mxu0 0
    %2450 = vmatmul.mubr.bf16.gmra.mxu0 %v2401
    %v2451 = vpop.f32.mrf.mxu0
    %v2452 = vadd.f32 0.0, %v2451
    %v2453 = vpop.f32.mrf.mxu0
    %v2454 = vpop.f32.mrf.mxu0
    %v2455 = vpop.f32.mrf.mxu0
    %2456 = vdwg.mxu0
    %2459 = vrot.lane.b32.xlu0 %v2385, 96
    %v2460 = vpop.permute.xlu0 %2459
    %2461 = vrot.lane.b32.xlu0 %v2386, 96
    %v2462 = vpop.permute.xlu0 %2461
    %v2464 = vsel %vm827, %v2385, 0
    %v2467 = vsel %vm827, %v2386, 0
    %v2470 = vsel %vm827, %v2460, 0
    %v2473 = vsel %vm827, %v2462, 0
    %2475 = vmatprep.subr.bf16.mxu0 0
    %2476 = vmatpush1.bf16.xpose.msra.mxu0 0
    %2477 = vmatprep.subr.bf16.mxu0 0
    %2478 = vmatpush1.bf16.xpose.msra.mxu0 0
    %2479 = vmatprep.subr.bf16.mxu0 0
    %2480 = vmatpush1.bf16.xpose.msra.mxu0 0
    %2481 = vmatprep.subr.bf16.mxu0 0
    %2482 = vmatpush1.bf16.xpose.msra.mxu0 0
    %2483 = vmatprep.subr.bf16.mxu0 0
    %2484 = vmatpush1.bf16.xpose.msra.mxu0 0
    %2485 = vmatprep.subr.bf16.mxu0 0
    %2486 = vmatpush1.bf16.xpose.msra.mxu0 0
    %2487 = vmatprep.subr.bf16.mxu0 0
    %2488 = vmatpush1.bf16.xpose.msra.mxu0 %v2473
    %2489 = vmatprep.subr.bf16.mxu0 0
    %2490 = vmatpush1.bf16.xpose.msra.mxu0 %v2470
    %2491 = vmatprep.subr.bf16.mxu0 0
    %2492 = vmatpush2.bf16.xpose.msra.mxu0 0
    %2493 = vmatprep.subr.bf16.mxu0 0
    %2494 = vmatpush2.bf16.xpose.msra.mxu0 0
    %2495 = vmatprep.subr.bf16.mxu0 0
    %2496 = vmatpush2.bf16.xpose.msra.mxu0 0
    %2497 = vmatprep.subr.bf16.mxu0 0
    %2498 = vmatpush2.bf16.xpose.msra.mxu0 0
    %2499 = vmatprep.subr.bf16.mxu0 0
    %2500 = vmatpush2.bf16.xpose.msra.mxu0 0
    %2501 = vmatprep.subr.bf16.mxu0 0
    %2502 = vmatpush2.bf16.xpose.msra.mxu0 0
    %2503 = vmatprep.subr.bf16.mxu0 0
    %2504 = vmatpush2.bf16.xpose.msra.mxu0 0
    %2505 = vmatprep.subr.bf16.mxu0 0
    %2506 = vmatpush2.bf16.xpose.msra.mxu0 0
    %2507 = vmatprep.mubr.bf16.mxu0 0
    %2508 = vmatmul.mubr.bf16.gmra.mxu0 %v2464
    %v2509 = vpop.f32.mrf.mxu0
    %v2510 = vadd.f32 0.0, %v2509
    %v2511 = vpop.f32.mrf.mxu0
    %v2512 = vpop.f32.mrf.mxu0
    %v2513 = vadd.f32 0.0, %v2512
    %v2514 = vpop.f32.mrf.mxu0
    %2515 = vmatprep.mubr.bf16.mxu0 0
    %2516 = vmatmul.mubr.bf16.gmra.mxu0 %v2467
    %v2517 = vpop.f32.mrf.mxu0
    %v2518 = vadd.f32 0.0, %v2517
    %v2519 = vpop.f32.mrf.mxu0
    %v2520 = vpop.f32.mrf.mxu0
    %v2521 = vpop.f32.mrf.mxu0
    %2522 = vdwg.mxu0
    %2525 = vrot.lane.b32.xlu0 %v2387, 96
    %v2526 = vpop.permute.xlu0 %2525
    %2527 = vrot.lane.b32.xlu0 %v2388, 96
    %v2528 = vpop.permute.xlu0 %2527
    %v2530 = vsel %vm827, %v2387, 0
    %v2533 = vsel %vm827, %v2388, 0
    %v2536 = vsel %vm827, %v2526, 0
    %v2539 = vsel %vm827, %v2528, 0
    %2541 = vmatprep.subr.bf16.mxu0 0
    %2542 = vmatpush1.bf16.xpose.msra.mxu0 0
    %2543 = vmatprep.subr.bf16.mxu0 0
    %2544 = vmatpush1.bf16.xpose.msra.mxu0 0
    %2545 = vmatprep.subr.bf16.mxu0 0
    %2546 = vmatpush1.bf16.xpose.msra.mxu0 0
    %2547 = vmatprep.subr.bf16.mxu0 0
    %2548 = vmatpush1.bf16.xpose.msra.mxu0 0
    %2549 = vmatprep.subr.bf16.mxu0 0
    %2550 = vmatpush1.bf16.xpose.msra.mxu0 0
    %2551 = vmatprep.subr.bf16.mxu0 0
    %2552 = vmatpush1.bf16.xpose.msra.mxu0 0
    %2553 = vmatprep.subr.bf16.mxu0 0
    %2554 = vmatpush1.bf16.xpose.msra.mxu0 %v2539
    %2555 = vmatprep.subr.bf16.mxu0 0
    %2556 = vmatpush1.bf16.xpose.msra.mxu0 %v2536
    %2557 = vmatprep.subr.bf16.mxu0 0
    %2558 = vmatpush2.bf16.xpose.msra.mxu0 0
    %2559 = vmatprep.subr.bf16.mxu0 0
    %2560 = vmatpush2.bf16.xpose.msra.mxu0 0
    %2561 = vmatprep.subr.bf16.mxu0 0
    %2562 = vmatpush2.bf16.xpose.msra.mxu0 0
    %2563 = vmatprep.subr.bf16.mxu0 0
    %2564 = vmatpush2.bf16.xpose.msra.mxu0 0
    %2565 = vmatprep.subr.bf16.mxu0 0
    %2566 = vmatpush2.bf16.xpose.msra.mxu0 0
    %2567 = vmatprep.subr.bf16.mxu0 0
    %2568 = vmatpush2.bf16.xpose.msra.mxu0 0
    %2569 = vmatprep.subr.bf16.mxu0 0
    %2570 = vmatpush2.bf16.xpose.msra.mxu0 0
    %2571 = vmatprep.subr.bf16.mxu0 0
    %2572 = vmatpush2.bf16.xpose.msra.mxu0 0
    %2573 = vmatprep.mubr.bf16.mxu0 0
    %2574 = vmatmul.mubr.bf16.gmra.mxu0 %v2530
    %v2575 = vpop.f32.mrf.mxu0
    %v2576 = vadd.f32 0.0, %v2575
    %v2577 = vpop.f32.mrf.mxu0
    %v2578 = vpop.f32.mrf.mxu0
    %v2579 = vadd.f32 0.0, %v2578
    %v2580 = vpop.f32.mrf.mxu0
    %2581 = vmatprep.mubr.bf16.mxu0 0
    %2582 = vmatmul.mubr.bf16.gmra.mxu0 %v2533
    %v2583 = vpop.f32.mrf.mxu0
    %v2584 = vadd.f32 0.0, %v2583
    %v2585 = vpop.f32.mrf.mxu0
    %v2586 = vpop.f32.mrf.mxu0
    %v2587 = vpop.f32.mrf.mxu0
    %2588 = vdwg.mxu0
    %2591 = vrot.lane.b32.xlu0 %v2389, 96
    %v2592 = vpop.permute.xlu0 %2591
    %2593 = vrot.lane.b32.xlu0 %v2390, 96
    %v2594 = vpop.permute.xlu0 %2593
    %v2596 = vsel %vm827, %v2389, 0
    %v2599 = vsel %vm827, %v2390, 0
    %v2602 = vsel %vm827, %v2592, 0
    %v2605 = vsel %vm827, %v2594, 0
    %2607 = vmatprep.subr.bf16.mxu0 0
    %2608 = vmatpush1.bf16.xpose.msra.mxu0 0
    %2609 = vmatprep.subr.bf16.mxu0 0
    %2610 = vmatpush1.bf16.xpose.msra.mxu0 0
    %2611 = vmatprep.subr.bf16.mxu0 0
    %2612 = vmatpush1.bf16.xpose.msra.mxu0 0
    %2613 = vmatprep.subr.bf16.mxu0 0
    %2614 = vmatpush1.bf16.xpose.msra.mxu0 0
    %2615 = vmatprep.subr.bf16.mxu0 0
    %2616 = vmatpush1.bf16.xpose.msra.mxu0 0
    %2617 = vmatprep.subr.bf16.mxu0 0
    %2618 = vmatpush1.bf16.xpose.msra.mxu0 0
    %2619 = vmatprep.subr.bf16.mxu0 0
    %2620 = vmatpush1.bf16.xpose.msra.mxu0 %v2605
    %2621 = vmatprep.subr.bf16.mxu0 0
    %2622 = vmatpush1.bf16.xpose.msra.mxu0 %v2602
    %2623 = vmatprep.subr.bf16.mxu0 0
    %2624 = vmatpush2.bf16.xpose.msra.mxu0 0
    %2625 = vmatprep.subr.bf16.mxu0 0
    %2626 = vmatpush2.bf16.xpose.msra.mxu0 0
    %2627 = vmatprep.subr.bf16.mxu0 0
    %2628 = vmatpush2.bf16.xpose.msra.mxu0 0
    %2629 = vmatprep.subr.bf16.mxu0 0
    %2630 = vmatpush2.bf16.xpose.msra.mxu0 0
    %2631 = vmatprep.subr.bf16.mxu0 0
    %2632 = vmatpush2.bf16.xpose.msra.mxu0 0
    %2633 = vmatprep.subr.bf16.mxu0 0
    %2634 = vmatpush2.bf16.xpose.msra.mxu0 0
    %2635 = vmatprep.subr.bf16.mxu0 0
    %2636 = vmatpush2.bf16.xpose.msra.mxu0 0
    %2637 = vmatprep.subr.bf16.mxu0 0
    %2638 = vmatpush2.bf16.xpose.msra.mxu0 0
    %2639 = vmatprep.mubr.bf16.mxu0 0
    %2640 = vmatmul.mubr.bf16.gmra.mxu0 %v2596
    %v2641 = vpop.f32.mrf.mxu0
    %v2642 = vadd.f32 0.0, %v2641
    %v2643 = vpop.f32.mrf.mxu0
    %v2644 = vpop.f32.mrf.mxu0
    %v2645 = vadd.f32 0.0, %v2644
    %v2646 = vpop.f32.mrf.mxu0
    %2647 = vmatprep.mubr.bf16.mxu0 0
    %2648 = vmatmul.mubr.bf16.gmra.mxu0 %v2599
    %v2649 = vpop.f32.mrf.mxu0
    %v2650 = vadd.f32 0.0, %v2649
    %v2651 = vpop.f32.mrf.mxu0
    %v2652 = vpop.f32.mrf.mxu0
    %v2653 = vpop.f32.mrf.mxu0
    %2654 = vdwg.mxu0
    %v2655 = vmul.f32 %v2444, 0.25
    %v2656 = vmul.f32 %v2447, 0.25
    %v2657 = vmul.f32 %v2452, 0.25
    %v2658 = vmul.f32 %v2510, 0.25
    %v2659 = vmul.f32 %v2513, 0.25
    %v2660 = vmul.f32 %v2518, 0.25
    %v2661 = vmul.f32 %v2576, 0.25
    %v2662 = vmul.f32 %v2579, 0.25
    %v2663 = vmul.f32 %v2584, 0.25
    %v2664 = vmul.f32 %v2642, 0.25
    %v2665 = vmul.f32 %v2645, 0.25
    %v2666 = vmul.f32 %v2650, 0.25
    %v2667 = vadd.f32 %v2655, %v588
    %v2668 = vadd.f32 %v2656, %v589
    %v2669 = vadd.f32 %v2657, %v590
    %v2670 = vadd.f32 %v2658, %v588
    %v2671 = vadd.f32 %v2659, %v589
    %v2672 = vadd.f32 %v2660, %v590
    %v2673 = vadd.f32 %v2661, %v588
    %v2674 = vadd.f32 %v2662, %v589
    %v2675 = vadd.f32 %v2663, %v590
    %v2676 = vadd.f32 %v2664, %v588
    %v2677 = vadd.f32 %v2665, %v589
    %v2678 = vadd.f32 %v2666, %v590
    %v2679 = vsel %vm1110, %v2667, -inf
    %2680 = vmax.xlane.f32.xlu0 %v2679
    %v2681 = vpop.xlane.xlu0 %2680
    %v2682 = vsel %vm1110, %v2668, -inf
    %2683 = vmax.xlane.f32.xlu0 %v2682
    %v2684 = vpop.xlane.xlu0 %2683
    %v2685 = vsel %vm1110, %v2669, -inf
    %2686 = vmax.xlane.f32.xlu0 %v2685
    %v2687 = vpop.xlane.xlu0 %2686
    %v2688 = vsel %vm1110, %v2670, -inf
    %2689 = vmax.xlane.f32.xlu0 %v2688
    %v2690 = vpop.xlane.xlu0 %2689
    %v2691 = vsel %vm1110, %v2671, -inf
    %2692 = vmax.xlane.f32.xlu0 %v2691
    %v2693 = vpop.xlane.xlu0 %2692
    %v2694 = vsel %vm1110, %v2672, -inf
    %2695 = vmax.xlane.f32.xlu0 %v2694
    %v2696 = vpop.xlane.xlu0 %2695
    %v2697 = vsel %vm1110, %v2673, -inf
    %2698 = vmax.xlane.f32.xlu0 %v2697
    %v2699 = vpop.xlane.xlu0 %2698
    %v2700 = vsel %vm1110, %v2674, -inf
    %2701 = vmax.xlane.f32.xlu0 %v2700
    %v2702 = vpop.xlane.xlu0 %2701
    %v2703 = vsel %vm1110, %v2675, -inf
    %2704 = vmax.xlane.f32.xlu0 %v2703
    %v2705 = vpop.xlane.xlu0 %2704
    %v2706 = vsel %vm1110, %v2676, -inf
    %2707 = vmax.xlane.f32.xlu0 %v2706
    %v2708 = vpop.xlane.xlu0 %2707
    %v2709 = vsel %vm1110, %v2677, -inf
    %2710 = vmax.xlane.f32.xlu0 %v2709
    %v2711 = vpop.xlane.xlu0 %2710
    %v2712 = vsel %vm1110, %v2678, -inf
    %2713 = vmax.xlane.f32.xlu0 %v2712
    %v2714 = vpop.xlane.xlu0 %2713
    %v2715 = vsub.f32 %v2667, %v2681
    %v2716 = vsub.f32 %v2668, %v2684
    %v2717 = vsub.f32 %v2669, %v2687
    %v2718 = vsub.f32 %v2670, %v2690
    %v2719 = vsub.f32 %v2671, %v2693
    %v2720 = vsub.f32 %v2672, %v2696
    %v2721 = vsub.f32 %v2673, %v2699
    %v2722 = vsub.f32 %v2674, %v2702
    %v2723 = vsub.f32 %v2675, %v2705
    %v2724 = vsub.f32 %v2676, %v2708
    %v2725 = vsub.f32 %v2677, %v2711
    %v2726 = vsub.f32 %v2678, %v2714
    %v2727 = vmul.f32 %v2715, 1.442695
    %v2728 = vpow.pop %v2727
    %v2729 = vmul.f32 %v2716, 1.442695
    %v2730 = vpow.pop %v2729
    %v2731 = vmul.f32 %v2717, 1.442695
    %v2732 = vpow.pop %v2731
    %v2733 = vmul.f32 %v2718, 1.442695
    %v2734 = vpow.pop %v2733
    %v2735 = vmul.f32 %v2719, 1.442695
    %v2736 = vpow.pop %v2735
    %v2737 = vmul.f32 %v2720, 1.442695
    %v2738 = vpow.pop %v2737
    %v2739 = vmul.f32 %v2721, 1.442695
    %v2740 = vpow.pop %v2739
    %v2741 = vmul.f32 %v2722, 1.442695
    %v2742 = vpow.pop %v2741
    %v2743 = vmul.f32 %v2723, 1.442695
    %v2744 = vpow.pop %v2743
    %v2745 = vmul.f32 %v2724, 1.442695
    %v2746 = vpow.pop %v2745
    %v2747 = vmul.f32 %v2725, 1.442695
    %v2748 = vpow.pop %v2747
    %v2749 = vmul.f32 %v2726, 1.442695
    %v2750 = vpow.pop %v2749
    %v2751 = vsel %vm1110, %v2728, 0.0
    %2752 = vadd.xlane.f32.xlu0 %v2751
    %v2753 = vpop.xlane.xlu0 %2752
    %v2754 = vsel %vm1110, %v2730, 0.0
    %2755 = vadd.xlane.f32.xlu0 %v2754
    %v2756 = vpop.xlane.xlu0 %2755
    %v2757 = vsel %vm1110, %v2732, 0.0
    %2758 = vadd.xlane.f32.xlu0 %v2757
    %v2759 = vpop.xlane.xlu0 %2758
    %v2760 = vsel %vm1110, %v2734, 0.0
    %2761 = vadd.xlane.f32.xlu0 %v2760
    %v2762 = vpop.xlane.xlu0 %2761
    %v2763 = vsel %vm1110, %v2736, 0.0
    %2764 = vadd.xlane.f32.xlu0 %v2763
    %v2765 = vpop.xlane.xlu0 %2764
    %v2766 = vsel %vm1110, %v2738, 0.0
    %2767 = vadd.xlane.f32.xlu0 %v2766
    %v2768 = vpop.xlane.xlu0 %2767
    %v2769 = vsel %vm1110, %v2740, 0.0
    %2770 = vadd.xlane.f32.xlu0 %v2769
    %v2771 = vpop.xlane.xlu0 %2770
    %v2772 = vsel %vm1110, %v2742, 0.0
    %2773 = vadd.xlane.f32.xlu0 %v2772
    %v2774 = vpop.xlane.xlu0 %2773
    %v2775 = vsel %vm1110, %v2744, 0.0
    %2776 = vadd.xlane.f32.xlu0 %v2775
    %v2777 = vpop.xlane.xlu0 %2776
    %v2778 = vsel %vm1110, %v2746, 0.0
    %2779 = vadd.xlane.f32.xlu0 %v2778
    %v2780 = vpop.xlane.xlu0 %2779
    %v2781 = vsel %vm1110, %v2748, 0.0
    %2782 = vadd.xlane.f32.xlu0 %v2781
    %v2783 = vpop.xlane.xlu0 %2782
    %v2784 = vsel %vm1110, %v2750, 0.0
    %2785 = vadd.xlane.f32.xlu0 %v2784
    %v2786 = vpop.xlane.xlu0 %2785
    %v2787 = vrcp.pop %v2753
    %v2788 = vrcp.pop %v2756
    %v2789 = vrcp.pop %v2759
    %v2790 = vrcp.pop %v2762
    %v2791 = vrcp.pop %v2765
    %v2792 = vrcp.pop %v2768
    %v2793 = vrcp.pop %v2771
    %v2794 = vrcp.pop %v2774
    %v2795 = vrcp.pop %v2777
    %v2796 = vrcp.pop %v2780
    %v2797 = vrcp.pop %v2783
    %v2798 = vrcp.pop %v2786
    %v2799 = vmul.f32 %v2728, %v2787
    %v2800 = vmul.f32 %v2730, %v2788
    %v2801 = vmul.f32 %v2732, %v2789
    %v2802 = vmul.f32 %v2734, %v2790
    %v2803 = vmul.f32 %v2736, %v2791
    %v2804 = vmul.f32 %v2738, %v2792
    %v2805 = vmul.f32 %v2740, %v2793
    %v2806 = vmul.f32 %v2742, %v2794
    %v2807 = vmul.f32 %v2744, %v2795
    %v2808 = vmul.f32 %v2746, %v2796
    %v2809 = vmul.f32 %v2748, %v2797
    %v2810 = vmul.f32 %v2750, %v2798
    %v2811 = vpack.c.bf16 %v2800, %v2799
    %v2812 = vpack.c.bf16 %v2801, %v2801
    %v2813 = vpack.c.bf16 %v2803, %v2802
    %v2814 = vpack.c.bf16 %v2804, %v2804
    %v2815 = vpack.c.bf16 %v2806, %v2805
    %v2816 = vpack.c.bf16 %v2807, %v2807
    %v2817 = vpack.c.bf16 %v2809, %v2808
    %v2818 = vpack.c.bf16 %v2810, %v2810
    %2819 = vrot.lane.b32.xlu0 %v2383, 64
    %v2820 = vpop.permute.xlu0 %2819
    %2821 = vrot.lane.b32.xlu0 %v2384, 64
    %v2822 = vpop.permute.xlu0 %2821
    %v2825 = vsel %vm1110, %v2811, 0
    %v2828 = vsel %vm1110, %v2812, 0
    %v2831 = vsel %vm1262, %v2822, 0
    %2833 = vmatprep.subr.bf16.mxu0 0
    %2834 = vmatpush1.bf16.msra.mxu0 0
    %2835 = vmatprep.subr.bf16.mxu0 0
    %2836 = vmatpush1.bf16.msra.mxu0 0
    %2837 = vmatprep.subr.bf16.mxu0 0
    %2838 = vmatpush1.bf16.msra.mxu0 0
    %2839 = vmatprep.subr.bf16.mxu0 0
    %2840 = vmatpush1.bf16.msra.mxu0 0
    %2841 = vmatprep.subr.bf16.mxu0 0
    %2842 = vmatpush1.bf16.msra.mxu0 0
    %2843 = vmatprep.subr.bf16.mxu0 0
    %2844 = vmatpush1.bf16.msra.mxu0 0
    %2845 = vmatprep.subr.bf16.mxu0 0
    %2846 = vmatpush1.bf16.msra.mxu0 %v2831
    %2847 = vmatprep.subr.bf16.mxu0 0
    %2848 = vmatpush1.bf16.msra.mxu0 %v2820
    %2849 = vmatprep.subr.bf16.mxu0 0
    %2850 = vmatpush2.bf16.msra.mxu0 0
    %2851 = vmatprep.subr.bf16.mxu0 0
    %2852 = vmatpush2.bf16.msra.mxu0 0
    %2853 = vmatprep.subr.bf16.mxu0 0
    %2854 = vmatpush2.bf16.msra.mxu0 0
    %2855 = vmatprep.subr.bf16.mxu0 0
    %2856 = vmatpush2.bf16.msra.mxu0 0
    %2857 = vmatprep.subr.bf16.mxu0 0
    %2858 = vmatpush2.bf16.msra.mxu0 0
    %2859 = vmatprep.subr.bf16.mxu0 0
    %2860 = vmatpush2.bf16.msra.mxu0 0
    %2861 = vmatprep.subr.bf16.mxu0 0
    %2862 = vmatpush2.bf16.msra.mxu0 0
    %2863 = vmatprep.subr.bf16.mxu0 0
    %2864 = vmatpush2.bf16.msra.mxu0 0
    %2865 = vmatprep.mubr.bf16.mxu0 0
    %2866 = vmatmul.mubr.bf16.gmra.mxu0 %v2825
    %v2867 = vpop.f32.mrf.mxu0
    %v2868 = vadd.f32 0.0, %v2867
    %v2869 = vpop.f32.mrf.mxu0
    %v2870 = vpop.f32.mrf.mxu0
    %v2871 = vadd.f32 0.0, %v2870
    %v2872 = vpop.f32.mrf.mxu0
    %2873 = vmatprep.mubr.bf16.mxu0 0
    %2874 = vmatmul.mubr.bf16.gmra.mxu0 %v2828
    %v2875 = vpop.f32.mrf.mxu0
    %v2876 = vadd.f32 0.0, %v2875
    %v2877 = vpop.f32.mrf.mxu0
    %v2878 = vpop.f32.mrf.mxu0
    %v2879 = vpop.f32.mrf.mxu0
    %2880 = vdwg.mxu0
    %2881 = vrot.lane.b32.xlu0 %v2385, 64
    %v2882 = vpop.permute.xlu0 %2881
    %2883 = vrot.lane.b32.xlu0 %v2386, 64
    %v2884 = vpop.permute.xlu0 %2883
    %v2887 = vsel %vm1110, %v2813, 0
    %v2890 = vsel %vm1110, %v2814, 0
    %v2893 = vsel %vm1262, %v2884, 0
    %2895 = vmatprep.subr.bf16.mxu0 0
    %2896 = vmatpush1.bf16.msra.mxu0 0
    %2897 = vmatprep.subr.bf16.mxu0 0
    %2898 = vmatpush1.bf16.msra.mxu0 0
    %2899 = vmatprep.subr.bf16.mxu0 0
    %2900 = vmatpush1.bf16.msra.mxu0 0
    %2901 = vmatprep.subr.bf16.mxu0 0
    %2902 = vmatpush1.bf16.msra.mxu0 0
    %2903 = vmatprep.subr.bf16.mxu0 0
    %2904 = vmatpush1.bf16.msra.mxu0 0
    %2905 = vmatprep.subr.bf16.mxu0 0
    %2906 = vmatpush1.bf16.msra.mxu0 0
    %2907 = vmatprep.subr.bf16.mxu0 0
    %2908 = vmatpush1.bf16.msra.mxu0 %v2893
    %2909 = vmatprep.subr.bf16.mxu0 0
    %2910 = vmatpush1.bf16.msra.mxu0 %v2882
    %2911 = vmatprep.subr.bf16.mxu0 0
    %2912 = vmatpush2.bf16.msra.mxu0 0
    %2913 = vmatprep.subr.bf16.mxu0 0
    %2914 = vmatpush2.bf16.msra.mxu0 0
    %2915 = vmatprep.subr.bf16.mxu0 0
    %2916 = vmatpush2.bf16.msra.mxu0 0
    %2917 = vmatprep.subr.bf16.mxu0 0
    %2918 = vmatpush2.bf16.msra.mxu0 0
    %2919 = vmatprep.subr.bf16.mxu0 0
    %2920 = vmatpush2.bf16.msra.mxu0 0
    %2921 = vmatprep.subr.bf16.mxu0 0
    %2922 = vmatpush2.bf16.msra.mxu0 0
    %2923 = vmatprep.subr.bf16.mxu0 0
    %2924 = vmatpush2.bf16.msra.mxu0 0
    %2925 = vmatprep.subr.bf16.mxu0 0
    %2926 = vmatpush2.bf16.msra.mxu0 0
    %2927 = vmatprep.mubr.bf16.mxu0 0
    %2928 = vmatmul.mubr.bf16.gmra.mxu0 %v2887
    %v2929 = vpop.f32.mrf.mxu0
    %v2930 = vadd.f32 0.0, %v2929
    %v2931 = vpop.f32.mrf.mxu0
    %v2932 = vpop.f32.mrf.mxu0
    %v2933 = vadd.f32 0.0, %v2932
    %v2934 = vpop.f32.mrf.mxu0
    %2935 = vmatprep.mubr.bf16.mxu0 0
    %2936 = vmatmul.mubr.bf16.gmra.mxu0 %v2890
    %v2937 = vpop.f32.mrf.mxu0
    %v2938 = vadd.f32 0.0, %v2937
    %v2939 = vpop.f32.mrf.mxu0
    %v2940 = vpop.f32.mrf.mxu0
    %v2941 = vpop.f32.mrf.mxu0
    %2942 = vdwg.mxu0
    %2943 = vrot.lane.b32.xlu0 %v2387, 64
    %v2944 = vpop.permute.xlu0 %2943
    %2945 = vrot.lane.b32.xlu0 %v2388, 64
    %v2946 = vpop.permute.xlu0 %2945
    %v2949 = vsel %vm1110, %v2815, 0
    %v2952 = vsel %vm1110, %v2816, 0
    %v2955 = vsel %vm1262, %v2946, 0
    %2957 = vmatprep.subr.bf16.mxu0 0
    %2958 = vmatpush1.bf16.msra.mxu0 0
    %2959 = vmatprep.subr.bf16.mxu0 0
    %2960 = vmatpush1.bf16.msra.mxu0 0
    %2961 = vmatprep.subr.bf16.mxu0 0
    %2962 = vmatpush1.bf16.msra.mxu0 0
    %2963 = vmatprep.subr.bf16.mxu0 0
    %2964 = vmatpush1.bf16.msra.mxu0 0
    %2965 = vmatprep.subr.bf16.mxu0 0
    %2966 = vmatpush1.bf16.msra.mxu0 0
    %2967 = vmatprep.subr.bf16.mxu0 0
    %2968 = vmatpush1.bf16.msra.mxu0 0
    %2969 = vmatprep.subr.bf16.mxu0 0
    %2970 = vmatpush1.bf16.msra.mxu0 %v2955
    %2971 = vmatprep.subr.bf16.mxu0 0
    %2972 = vmatpush1.bf16.msra.mxu0 %v2944
    %2973 = vmatprep.subr.bf16.mxu0 0
    %2974 = vmatpush2.bf16.msra.mxu0 0
    %2975 = vmatprep.subr.bf16.mxu0 0
    %2976 = vmatpush2.bf16.msra.mxu0 0
    %2977 = vmatprep.subr.bf16.mxu0 0
    %2978 = vmatpush2.bf16.msra.mxu0 0
    %2979 = vmatprep.subr.bf16.mxu0 0
    %2980 = vmatpush2.bf16.msra.mxu0 0
    %2981 = vmatprep.subr.bf16.mxu0 0
    %2982 = vmatpush2.bf16.msra.mxu0 0
    %2983 = vmatprep.subr.bf16.mxu0 0
    %2984 = vmatpush2.bf16.msra.mxu0 0
    %2985 = vmatprep.subr.bf16.mxu0 0
    %2986 = vmatpush2.bf16.msra.mxu0 0
    %2987 = vmatprep.subr.bf16.mxu0 0
    %2988 = vmatpush2.bf16.msra.mxu0 0
    %2989 = vmatprep.mubr.bf16.mxu0 0
    %2990 = vmatmul.mubr.bf16.gmra.mxu0 %v2949
    %v2991 = vpop.f32.mrf.mxu0
    %v2992 = vadd.f32 0.0, %v2991
    %v2993 = vpop.f32.mrf.mxu0
    %v2994 = vpop.f32.mrf.mxu0
    %v2995 = vadd.f32 0.0, %v2994
    %v2996 = vpop.f32.mrf.mxu0
    %2997 = vmatprep.mubr.bf16.mxu0 0
    %2998 = vmatmul.mubr.bf16.gmra.mxu0 %v2952
    %v2999 = vpop.f32.mrf.mxu0
    %v3000 = vadd.f32 0.0, %v2999
    %v3001 = vpop.f32.mrf.mxu0
    %v3002 = vpop.f32.mrf.mxu0
    %v3003 = vpop.f32.mrf.mxu0
    %3004 = vdwg.mxu0
    %3005 = vrot.lane.b32.xlu0 %v2389, 64
    %v3006 = vpop.permute.xlu0 %3005
    %3007 = vrot.lane.b32.xlu0 %v2390, 64
    %v3008 = vpop.permute.xlu0 %3007
    %v3011 = vsel %vm1110, %v2817, 0
    %v3014 = vsel %vm1110, %v2818, 0
    %v3017 = vsel %vm1262, %v3008, 0
    %3019 = vmatprep.subr.bf16.mxu0 0
    %3020 = vmatpush1.bf16.msra.mxu0 0
    %3021 = vmatprep.subr.bf16.mxu0 0
    %3022 = vmatpush1.bf16.msra.mxu0 0
    %3023 = vmatprep.subr.bf16.mxu0 0
    %3024 = vmatpush1.bf16.msra.mxu0 0
    %3025 = vmatprep.subr.bf16.mxu0 0
    %3026 = vmatpush1.bf16.msra.mxu0 0
    %3027 = vmatprep.subr.bf16.mxu0 0
    %3028 = vmatpush1.bf16.msra.mxu0 0
    %3029 = vmatprep.subr.bf16.mxu0 0
    %3030 = vmatpush1.bf16.msra.mxu0 0
    %3031 = vmatprep.subr.bf16.mxu0 0
    %3032 = vmatpush1.bf16.msra.mxu0 %v3017
    %3033 = vmatprep.subr.bf16.mxu0 0
    %3034 = vmatpush1.bf16.msra.mxu0 %v3006
    %3035 = vmatprep.subr.bf16.mxu0 0
    %3036 = vmatpush2.bf16.msra.mxu0 0
    %3037 = vmatprep.subr.bf16.mxu0 0
    %3038 = vmatpush2.bf16.msra.mxu0 0
    %3039 = vmatprep.subr.bf16.mxu0 0
    %3040 = vmatpush2.bf16.msra.mxu0 0
    %3041 = vmatprep.subr.bf16.mxu0 0
    %3042 = vmatpush2.bf16.msra.mxu0 0
    %3043 = vmatprep.subr.bf16.mxu0 0
    %3044 = vmatpush2.bf16.msra.mxu0 0
    %3045 = vmatprep.subr.bf16.mxu0 0
    %3046 = vmatpush2.bf16.msra.mxu0 0
    %3047 = vmatprep.subr.bf16.mxu0 0
    %3048 = vmatpush2.bf16.msra.mxu0 0
    %3049 = vmatprep.subr.bf16.mxu0 0
    %3050 = vmatpush2.bf16.msra.mxu0 0
    %3051 = vmatprep.mubr.bf16.mxu0 0
    %3052 = vmatmul.mubr.bf16.gmra.mxu0 %v3011
    %v3053 = vpop.f32.mrf.mxu0
    %v3054 = vadd.f32 0.0, %v3053
    %v3055 = vpop.f32.mrf.mxu0
    %v3056 = vpop.f32.mrf.mxu0
    %v3057 = vadd.f32 0.0, %v3056
    %v3058 = vpop.f32.mrf.mxu0
    %3059 = vmatprep.mubr.bf16.mxu0 0
    %3060 = vmatmul.mubr.bf16.gmra.mxu0 %v3014
    %v3061 = vpop.f32.mrf.mxu0
    %v3062 = vadd.f32 0.0, %v3061
    %v3063 = vpop.f32.mrf.mxu0
    %v3064 = vpop.f32.mrf.mxu0
    %v3065 = vpop.f32.mrf.mxu0
    %3066 = vdwg.mxu0
    %3073 = vrot.lane.b32.xlu0 %v2992, 16
    %v3074 = vpop.permute.xlu0 %3073
    %3075 = vrot.lane.b32.xlu0 %v2995, 16
    %v3076 = vpop.permute.xlu0 %3075
    %3077 = vrot.lane.b32.xlu0 %v3000, 16
    %v3078 = vpop.permute.xlu0 %3077
    %3079 = vrot.lane.b32.xlu0 %v3054, 16
    %v3080 = vpop.permute.xlu0 %3079
    %3081 = vrot.lane.b32.xlu0 %v3057, 16
    %v3082 = vpop.permute.xlu0 %3081
    %3083 = vrot.lane.b32.xlu0 %v3062, 16
    %v3084 = vpop.permute.xlu0 %3083
    %v3091 = vsel %vm827, %v2868, %v3074
    %v3092 = vsel %vm827, %v2871, %v3076
    %v3093 = vsel %vm827, %v2876, %v3078
    %v3094 = vsel %vm827, %v2930, %v3080
    %v3095 = vsel %vm827, %v2933, %v3082
    %v3096 = vsel %vm827, %v2938, %v3084
    %v3097 = vpack.c.bf16 %v3092, %v3091
    %v3098 = vpack.c.bf16 %v3094, %v3093
    %v3099 = vpack.c.bf16 %v3096, %v3095
    %s3100 = scalar_lea.vmem %s31, 16
    %v3101 = vld [vmem:[%s3100] sm:$0xf]
    %v3102 = vld [vmem:[%s3100 + $0x4] sm:$0xf]
    %v3103 = vld [vmem:[%s3100 + $0x8] sm:$0xf]
    %v3104 = vld [vmem:[%s3100 + $0xc] sm:$0xf]
    %v3109 = vunpack.c.l.b16 %v3101
    %v3110 = vunpack.c.l.b16 %v3102
    %v3111 = vunpack.c.l.b16 %v3103
    %v3112 = vunpack.c.l.b16 %v3104
    %v3113 = vpack.c.b16 %v3110, %v3109
    %v3114 = vpack.c.b16 %v3112, %v3111
    %v3118 = vsel %vm253, %v3097, 0
    %v3121 = vsel %vm253, %v3098, 0
    %v3124 = vsel %vm253, %v3099, 0
    %3126 = vmatprep.subr.bf16.mxu0 0
    %3127 = vmatpush1.bf16.msra.mxu0 0
    %3128 = vmatprep.subr.bf16.mxu0 0
    %3129 = vmatpush1.bf16.msra.mxu0 0
    %3130 = vmatprep.subr.bf16.mxu0 0
    %3131 = vmatpush1.bf16.msra.mxu0 0
    %3132 = vmatprep.subr.bf16.mxu0 0
    %3133 = vmatpush1.bf16.msra.mxu0 0
    %3134 = vmatprep.subr.bf16.mxu0 0
    %3135 = vmatpush1.bf16.msra.mxu0 0
    %3136 = vmatprep.subr.bf16.mxu0 0
    %3137 = vmatpush1.bf16.msra.mxu0 0
    %3138 = vmatprep.subr.bf16.mxu0 0
    %3139 = vmatpush1.bf16.msra.mxu0 %v3114
    %3140 = vmatprep.subr.bf16.mxu0 0
    %3141 = vmatpush1.bf16.msra.mxu0 %v3113
    %3142 = vmatprep.subr.bf16.mxu0 0
    %3143 = vmatpush2.bf16.msra.mxu0 0
    %3144 = vmatprep.subr.bf16.mxu0 0
    %3145 = vmatpush2.bf16.msra.mxu0 0
    %3146 = vmatprep.subr.bf16.mxu0 0
    %3147 = vmatpush2.bf16.msra.mxu0 0
    %3148 = vmatprep.subr.bf16.mxu0 0
    %3149 = vmatpush2.bf16.msra.mxu0 0
    %3150 = vmatprep.subr.bf16.mxu0 0
    %3151 = vmatpush2.bf16.msra.mxu0 0
    %3152 = vmatprep.subr.bf16.mxu0 0
    %3153 = vmatpush2.bf16.msra.mxu0 0
    %3154 = vmatprep.subr.bf16.mxu0 0
    %3155 = vmatpush2.bf16.msra.mxu0 0
    %3156 = vmatprep.subr.bf16.mxu0 0
    %3157 = vmatpush2.bf16.msra.mxu0 0
    %3158 = vmatprep.mubr.bf16.mxu0 0
    %3159 = vmatmul.mubr.bf16.gmra.mxu0 %v3118
    %v3160 = vpop.f32.mrf.mxu0
    %v3161 = vadd.f32 0.0, %v3160
    %v3162 = vpop.f32.mrf.mxu0
    %v3163 = vpop.f32.mrf.mxu0
    %v3164 = vadd.f32 0.0, %v3163
    %v3165 = vpop.f32.mrf.mxu0
    %3166 = vmatprep.mubr.bf16.mxu0 0
    %3167 = vmatmul.mubr.bf16.gmra.mxu0 %v3121
    %v3168 = vpop.f32.mrf.mxu0
    %v3169 = vadd.f32 0.0, %v3168
    %v3170 = vpop.f32.mrf.mxu0
    %v3171 = vpop.f32.mrf.mxu0
    %v3172 = vadd.f32 0.0, %v3171
    %v3173 = vpop.f32.mrf.mxu0
    %3174 = vmatprep.mubr.bf16.mxu0 0
    %3175 = vmatmul.mubr.bf16.gmra.mxu0 %v3124
    %v3176 = vpop.f32.mrf.mxu0
    %v3177 = vadd.f32 0.0, %v3176
    %v3178 = vpop.f32.mrf.mxu0
    %v3179 = vpop.f32.mrf.mxu0
    %v3180 = vadd.f32 0.0, %v3179
    %v3181 = vpop.f32.mrf.mxu0
    %3182 = vdwg.mxu0
    %v3183 = vadd.f32 %v2153, %v3161
    %v3184 = vadd.f32 %v2154, %v3164
    %v3185 = vadd.f32 %v2155, %v3169
    %v3186 = vadd.f32 %v2156, %v3172
    %v3187 = vadd.f32 %v2157, %v3177
    %v3188 = vadd.f32 %v2158, %v3180
    %s3189 = scalar_lea.vmem %s33, 1
    %v3190 = vld [vmem:[%s3189] sm:$0x1]
    %v3192 = vlaneseq
    %v3193 = vshrl.u32 %v3192, 7
    %v3194 = vsub.s32 0, %v3193
    %v3195 = vrot.slane %v3190, %v3194
    %v3197 = vadd.f32 %v3183, %v3195
    %v3198 = vadd.f32 %v3184, %v3195
    %v3199 = vadd.f32 %v3185, %v3195
    %v3200 = vadd.f32 %v3186, %v3195
    %v3201 = vadd.f32 %v3187, %v3195
    %v3202 = vadd.f32 %v3188, %v3195
    %s3203 = scalar_lea.vmem %s35, 1
    %v3204 = vld [vmem:[%s3203] sm:$0x1]
    %s3205 = scalar_lea.vmem %s37, 1
    %v3206 = vld [vmem:[%s3205] sm:$0x1]
    %v3207 = vsel %vm253, %v3197, 0.0
    %3208 = vadd.xlane.f32.xlu0 %v3207
    %v3209 = vpop.xlane.xlu0 %3208
    %v3210 = vsel %vm253, %v3198, 0.0
    %3211 = vadd.xlane.f32.xlu0 %v3210
    %v3212 = vpop.xlane.xlu0 %3211
    %v3213 = vsel %vm253, %v3199, 0.0
    %3214 = vadd.xlane.f32.xlu0 %v3213
    %v3215 = vpop.xlane.xlu0 %3214
    %v3216 = vsel %vm253, %v3200, 0.0
    %3217 = vadd.xlane.f32.xlu0 %v3216
    %v3218 = vpop.xlane.xlu0 %3217
    %v3219 = vsel %vm253, %v3201, 0.0
    %3220 = vadd.xlane.f32.xlu0 %v3219
    %v3221 = vpop.xlane.xlu0 %3220
    %v3222 = vsel %vm253, %v3202, 0.0
    %3223 = vadd.xlane.f32.xlu0 %v3222
    %v3224 = vpop.xlane.xlu0 %3223
    %v3225 = vmul.f32 %v3209, %v349
    %v3226 = vmul.f32 %v3212, %v349
    %v3227 = vmul.f32 %v3215, %v349
    %v3228 = vmul.f32 %v3218, %v349
    %v3229 = vmul.f32 %v3221, %v349
    %v3230 = vmul.f32 %v3224, %v349
    %v3231 = vsub.f32 %v3197, %v3225
    %v3232 = vsub.f32 %v3198, %v3226
    %v3233 = vsub.f32 %v3199, %v3227
    %v3234 = vsub.f32 %v3200, %v3228
    %v3235 = vsub.f32 %v3201, %v3229
    %v3236 = vsub.f32 %v3202, %v3230
    %v3237 = vmul.f32 %v3231, %v3231
    %v3238 = vmul.f32 %v3232, %v3232
    %v3239 = vmul.f32 %v3233, %v3233
    %v3240 = vmul.f32 %v3234, %v3234
    %v3241 = vmul.f32 %v3235, %v3235
    %v3242 = vmul.f32 %v3236, %v3236
    %v3243 = vsel %vm253, %v3237, 0.0
    %3244 = vadd.xlane.f32.xlu0 %v3243
    %v3245 = vpop.xlane.xlu0 %3244
    %v3246 = vsel %vm253, %v3238, 0.0
    %3247 = vadd.xlane.f32.xlu0 %v3246
    %v3248 = vpop.xlane.xlu0 %3247
    %v3249 = vsel %vm253, %v3239, 0.0
    %3250 = vadd.xlane.f32.xlu0 %v3249
    %v3251 = vpop.xlane.xlu0 %3250
    %v3252 = vsel %vm253, %v3240, 0.0
    %3253 = vadd.xlane.f32.xlu0 %v3252
    %v3254 = vpop.xlane.xlu0 %3253
    %v3255 = vsel %vm253, %v3241, 0.0
    %3256 = vadd.xlane.f32.xlu0 %v3255
    %v3257 = vpop.xlane.xlu0 %3256
    %v3258 = vsel %vm253, %v3242, 0.0
    %3259 = vadd.xlane.f32.xlu0 %v3258
    %v3260 = vpop.xlane.xlu0 %3259
    %v3261 = vmul.f32 %v3245, %v349
    %v3262 = vmul.f32 %v3248, %v349
    %v3263 = vmul.f32 %v3251, %v349
    %v3264 = vmul.f32 %v3254, %v349
    %v3265 = vmul.f32 %v3257, %v349
    %v3266 = vmul.f32 %v3260, %v349
    %v3267 = vadd.f32 %v3261, 1e-05
    %v3268 = vadd.f32 %v3262, 1e-05
    %v3269 = vadd.f32 %v3263, 1e-05
    %v3270 = vadd.f32 %v3264, 1e-05
    %v3271 = vadd.f32 %v3265, 1e-05
    %v3272 = vadd.f32 %v3266, 1e-05
    %v3273 = vrsqrt.pop %v3267
    %v3274 = vrsqrt.pop %v3268
    %v3275 = vrsqrt.pop %v3269
    %v3276 = vrsqrt.pop %v3270
    %v3277 = vrsqrt.pop %v3271
    %v3278 = vrsqrt.pop %v3272
    %v3279 = vmul.f32 %v3231, %v3273
    %v3280 = vmul.f32 %v3232, %v3274
    %v3281 = vmul.f32 %v3233, %v3275
    %v3282 = vmul.f32 %v3234, %v3276
    %v3283 = vmul.f32 %v3235, %v3277
    %v3284 = vmul.f32 %v3236, %v3278
    %v3286 = vlaneseq
    %v3287 = vshrl.u32 %v3286, 7
    %v3288 = vsub.s32 0, %v3287
    %v3289 = vrot.slane %v3204, %v3288
    %v3291 = vmul.f32 %v3279, %v3289
    %v3292 = vmul.f32 %v3280, %v3289
    %v3293 = vmul.f32 %v3281, %v3289
    %v3294 = vmul.f32 %v3282, %v3289
    %v3295 = vmul.f32 %v3283, %v3289
    %v3296 = vmul.f32 %v3284, %v3289
    %v3298 = vlaneseq
    %v3299 = vshrl.u32 %v3298, 7
    %v3300 = vsub.s32 0, %v3299
    %v3301 = vrot.slane %v3206, %v3300
    %v3303 = vadd.f32 %v3291, %v3301
    %v3304 = vadd.f32 %v3292, %v3301
    %v3305 = vadd.f32 %v3293, %v3301
    %v3306 = vadd.f32 %v3294, %v3301
    %v3307 = vadd.f32 %v3295, %v3301
    %v3308 = vadd.f32 %v3296, %v3301
    %v3309 = vpack.c.bf16 %v3304, %v3303
    %v3310 = vpack.c.bf16 %v3306, %v3305
    %v3311 = vpack.c.bf16 %v3308, %v3307
    %s3312 = scalar_lea.vmem %s39, 32
    %v3313 = vld [vmem:[%s3312] sm:$0xff]
    %v3314 = vld [vmem:[%s3312 + $0x8] sm:$0xff]
    %v3315 = vld [vmem:[%s3312 + $0x10] sm:$0xff]
    %v3316 = vld [vmem:[%s3312 + $0x18] sm:$0xff]
    %s3317 = scalar_lea.vmem %s41, 2
    %v3318 = vld [vmem:[%s3317] sm:$0x3]
    %v3320 = vlaneseq
    %v3321 = vshrl.u32 %v3320, 7
    %v3322 = vsub.s32 0, %v3321
    %v3323 = vrot.slane %v3318, %v3322
    %v3324 = vlaneseq
    %v3325 = vshrl.u32 %v3324, 7
    %v3326 = vsub.s32 1, %v3325
    %v3327 = vrot.slane %v3318, %v3326
    %v3334 = vunpack.c.l.b16 %v3313
    %v3335 = vunpack.c.h.b16 %v3313
    %v3336 = vunpack.c.l.b16 %v3314
    %v3337 = vunpack.c.h.b16 %v3314
    %v3338 = vunpack.c.l.b16 %v3315
    %v3339 = vunpack.c.h.b16 %v3315
    %v3340 = vunpack.c.l.b16 %v3316
    %v3341 = vunpack.c.h.b16 %v3316
    %v3342 = vpack.c.b16 %v3336, %v3334
    %v3343 = vpack.c.b16 %v3337, %v3335
    %v3344 = vpack.c.b16 %v3340, %v3338
    %v3345 = vpack.c.b16 %v3341, %v3339
    %v3351 = vsel %vm253, %v3309, 0
    %v3354 = vsel %vm253, %v3310, 0
    %v3357 = vsel %vm253, %v3311, 0
    %3359 = vmatprep.subr.bf16.mxu0 0
    %3360 = vmatpush1.bf16.msra.mxu0 0
    %3361 = vmatprep.subr.bf16.mxu0 0
    %3362 = vmatpush1.bf16.msra.mxu0 0
    %3363 = vmatprep.subr.bf16.mxu0 0
    %3364 = vmatpush1.bf16.msra.mxu0 0
    %3365 = vmatprep.subr.bf16.mxu0 0
    %3366 = vmatpush1.bf16.msra.mxu0 0
    %3367 = vmatprep.subr.bf16.mxu0 0
    %3368 = vmatpush1.bf16.msra.mxu0 0
    %3369 = vmatprep.subr.bf16.mxu0 0
    %3370 = vmatpush1.bf16.msra.mxu0 0
    %3371 = vmatprep.subr.bf16.mxu0 %v3345
    %3372 = vmatpush1.bf16.msra.mxu0 %v3344
    %3373 = vmatprep.subr.bf16.mxu0 %v3343
    %3374 = vmatpush1.bf16.msra.mxu0 %v3342
    %3375 = vmatprep.subr.bf16.mxu0 0
    %3376 = vmatpush2.bf16.msra.mxu0 0
    %3377 = vmatprep.subr.bf16.mxu0 0
    %3378 = vmatpush2.bf16.msra.mxu0 0
    %3379 = vmatprep.subr.bf16.mxu0 0
    %3380 = vmatpush2.bf16.msra.mxu0 0
    %3381 = vmatprep.subr.bf16.mxu0 0
    %3382 = vmatpush2.bf16.msra.mxu0 0
    %3383 = vmatprep.subr.bf16.mxu0 0
    %3384 = vmatpush2.bf16.msra.mxu0 0
    %3385 = vmatprep.subr.bf16.mxu0 0
    %3386 = vmatpush2.bf16.msra.mxu0 0
    %3387 = vmatprep.subr.bf16.mxu0 0
    %3388 = vmatpush2.bf16.msra.mxu0 0
    %3389 = vmatprep.subr.bf16.mxu0 0
    %3390 = vmatpush2.bf16.msra.mxu0 0
    %3391 = vmatprep.mubr.bf16.mxu0 0
    %3392 = vmatmul.mubr.bf16.gmra.mxu0 %v3351
    %v3393 = vpop.f32.mrf.mxu0
    %v3394 = vadd.f32 %v3323, %v3393
    %v3395 = vpop.f32.mrf.mxu0
    %v3396 = vadd.f32 %v3327, %v3395
    %v3397 = vpop.f32.mrf.mxu0
    %v3398 = vadd.f32 %v3323, %v3397
    %v3399 = vpop.f32.mrf.mxu0
    %v3400 = vadd.f32 %v3327, %v3399
    %3401 = vmatprep.mubr.bf16.mxu0 0
    %3402 = vmatmul.mubr.bf16.gmra.mxu0 %v3354
    %v3403 = vpop.f32.mrf.mxu0
    %v3404 = vadd.f32 %v3323, %v3403
    %v3405 = vpop.f32.mrf.mxu0
    %v3406 = vadd.f32 %v3327, %v3405
    %v3407 = vpop.f32.mrf.mxu0
    %v3408 = vadd.f32 %v3323, %v3407
    %v3409 = vpop.f32.mrf.mxu0
    %v3410 = vadd.f32 %v3327, %v3409
    %3411 = vmatprep.mubr.bf16.mxu0 0
    %3412 = vmatmul.mubr.bf16.gmra.mxu0 %v3357
    %v3413 = vpop.f32.mrf.mxu0
    %v3414 = vadd.f32 %v3323, %v3413
    %v3415 = vpop.f32.mrf.mxu0
    %v3416 = vadd.f32 %v3327, %v3415
    %v3417 = vpop.f32.mrf.mxu0
    %v3418 = vadd.f32 %v3323, %v3417
    %v3419 = vpop.f32.mrf.mxu0
    %v3420 = vadd.f32 %v3327, %v3419
    %3421 = vdwg.mxu0
    %v3422 = vmul.f32 %v3394, 1.702
    %v3423 = vmul.f32 %v3396, 1.702
    %v3424 = vmul.f32 %v3398, 1.702
    %v3425 = vmul.f32 %v3400, 1.702
    %v3426 = vmul.f32 %v3404, 1.702
    %v3427 = vmul.f32 %v3406, 1.702
    %v3428 = vmul.f32 %v3408, 1.702
    %v3429 = vmul.f32 %v3410, 1.702
    %v3430 = vmul.f32 %v3414, 1.702
    %v3431 = vmul.f32 %v3416, 1.702
    %v3432 = vmul.f32 %v3418, 1.702
    %v3433 = vmul.f32 %v3420, 1.702
    %v3434 = vxor.u32 %v3422, 2147483648
    %v3435 = vxor.u32 %v3423, 2147483648
    %v3436 = vxor.u32 %v3424, 2147483648
    %v3437 = vxor.u32 %v3425, 2147483648
    %v3438 = vxor.u32 %v3426, 2147483648
    %v3439 = vxor.u32 %v3427, 2147483648
    %v3440 = vxor.u32 %v3428, 2147483648
    %v3441 = vxor.u32 %v3429, 2147483648
    %v3442 = vxor.u32 %v3430, 2147483648
    %v3443 = vxor.u32 %v3431, 2147483648
    %v3444 = vxor.u32 %v3432, 2147483648
    %v3445 = vxor.u32 %v3433, 2147483648
    %v3446 = vmul.f32 %v3434, 1.442695
    %v3447 = vpow.pop %v3446
    %v3448 = vmul.f32 %v3435, 1.442695
    %v3449 = vpow.pop %v3448
    %v3450 = vmul.f32 %v3436, 1.442695
    %v3451 = vpow.pop %v3450
    %v3452 = vmul.f32 %v3437, 1.442695
    %v3453 = vpow.pop %v3452
    %v3454 = vmul.f32 %v3438, 1.442695
    %v3455 = vpow.pop %v3454
    %v3456 = vmul.f32 %v3439, 1.442695
    %v3457 = vpow.pop %v3456
    %v3458 = vmul.f32 %v3440, 1.442695
    %v3459 = vpow.pop %v3458
    %v3460 = vmul.f32 %v3441, 1.442695
    %v3461 = vpow.pop %v3460
    %v3462 = vmul.f32 %v3442, 1.442695
    %v3463 = vpow.pop %v3462
    %v3464 = vmul.f32 %v3443, 1.442695
    %v3465 = vpow.pop %v3464
    %v3466 = vmul.f32 %v3444, 1.442695
    %v3467 = vpow.pop %v3466
    %v3468 = vmul.f32 %v3445, 1.442695
    %v3469 = vpow.pop %v3468
    %v3470 = vadd.f32 %v3447, 1.0
    %v3471 = vadd.f32 %v3449, 1.0
    %v3472 = vadd.f32 %v3451, 1.0
    %v3473 = vadd.f32 %v3453, 1.0
    %v3474 = vadd.f32 %v3455, 1.0
    %v3475 = vadd.f32 %v3457, 1.0
    %v3476 = vadd.f32 %v3459, 1.0
    %v3477 = vadd.f32 %v3461, 1.0
    %v3478 = vadd.f32 %v3463, 1.0
    %v3479 = vadd.f32 %v3465, 1.0
    %v3480 = vadd.f32 %v3467, 1.0
    %v3481 = vadd.f32 %v3469, 1.0
    %v3482 = vrcp.pop %v3470
    %v3483 = vmul.f32 1.0, %v3482
    %v3484 = vrcp.pop %v3471
    %v3485 = vmul.f32 1.0, %v3484
    %v3486 = vrcp.pop %v3472
    %v3487 = vmul.f32 1.0, %v3486
    %v3488 = vrcp.pop %v3473
    %v3489 = vmul.f32 1.0, %v3488
    %v3490 = vrcp.pop %v3474
    %v3491 = vmul.f32 1.0, %v3490
    %v3492 = vrcp.pop %v3475
    %v3493 = vmul.f32 1.0, %v3492
    %v3494 = vrcp.pop %v3476
    %v3495 = vmul.f32 1.0, %v3494
    %v3496 = vrcp.pop %v3477
    %v3497 = vmul.f32 1.0, %v3496
    %v3498 = vrcp.pop %v3478
    %v3499 = vmul.f32 1.0, %v3498
    %v3500 = vrcp.pop %v3479
    %v3501 = vmul.f32 1.0, %v3500
    %v3502 = vrcp.pop %v3480
    %v3503 = vmul.f32 1.0, %v3502
    %v3504 = vrcp.pop %v3481
    %v3505 = vmul.f32 1.0, %v3504
    %v3506 = vmul.f32 %v3394, %v3483
    %v3507 = vmul.f32 %v3396, %v3485
    %v3508 = vmul.f32 %v3398, %v3487
    %v3509 = vmul.f32 %v3400, %v3489
    %v3510 = vmul.f32 %v3404, %v3491
    %v3511 = vmul.f32 %v3406, %v3493
    %v3512 = vmul.f32 %v3408, %v3495
    %v3513 = vmul.f32 %v3410, %v3497
    %v3514 = vmul.f32 %v3414, %v3499
    %v3515 = vmul.f32 %v3416, %v3501
    %v3516 = vmul.f32 %v3418, %v3503
    %v3517 = vmul.f32 %v3420, %v3505
    %v3518 = vmax.f32 %v3394, 0.0
    %v3519 = vmax.f32 %v3396, 0.0
    %v3520 = vmax.f32 %v3398, 0.0
    %v3521 = vmax.f32 %v3400, 0.0
    %v3522 = vmax.f32 %v3404, 0.0
    %v3523 = vmax.f32 %v3406, 0.0
    %v3524 = vmax.f32 %v3408, 0.0
    %v3525 = vmax.f32 %v3410, 0.0
    %v3526 = vmax.f32 %v3414, 0.0
    %v3527 = vmax.f32 %v3416, 0.0
    %v3528 = vmax.f32 %v3418, 0.0
    %v3529 = vmax.f32 %v3420, 0.0
    %v3530 = vsel %vm1850, %v3506, %v3518
    %v3531 = vsel %vm1851, %v3507, %v3519
    %v3532 = vsel %vm1850, %v3508, %v3520
    %v3533 = vsel %vm1851, %v3509, %v3521
    %v3534 = vsel %vm1850, %v3510, %v3522
    %v3535 = vsel %vm1851, %v3511, %v3523
    %v3536 = vsel %vm1850, %v3512, %v3524
    %v3537 = vsel %vm1851, %v3513, %v3525
    %v3538 = vsel %vm1850, %v3514, %v3526
    %v3539 = vsel %vm1851, %v3515, %v3527
    %v3540 = vsel %vm1850, %v3516, %v3528
    %v3541 = vsel %vm1851, %v3517, %v3529
    %v3542 = vpack.c.bf16 %v3532, %v3530
    %v3543 = vpack.c.bf16 %v3533, %v3531
    %v3544 = vpack.c.bf16 %v3536, %v3534
    %v3545 = vpack.c.bf16 %v3537, %v3535
    %v3546 = vpack.c.bf16 %v3540, %v3538
    %v3547 = vpack.c.bf16 %v3541, %v3539
    %s3548 = scalar_lea.vmem %s43, 96
    %v3549 = vld [vmem:[%s3548] sm:$0xf]
    %v3550 = vld [vmem:[%s3548 + $0x4] sm:$0xf]
    %v3551 = vld [vmem:[%s3548 + $0x8] sm:$0xf]
    %v3552 = vld [vmem:[%s3548 + $0xc] sm:$0xf]
    %v3553 = vld [vmem:[%s3548 + $0x10] sm:$0xf]
    %v3554 = vld [vmem:[%s3548 + $0x14] sm:$0xf]
    %v3555 = vld [vmem:[%s3548 + $0x18] sm:$0xf]
    %v3556 = vld [vmem:[%s3548 + $0x1c] sm:$0xf]
    %v3557 = vld [vmem:[%s3548 + $0x20] sm:$0xf]
    %v3558 = vld [vmem:[%s3548 + $0x24] sm:$0xf]
    %v3559 = vld [vmem:[%s3548 + $0x28] sm:$0xf]
    %v3560 = vld [vmem:[%s3548 + $0x2c] sm:$0xf]
    %v3561 = vld [vmem:[%s3548 + $0x30] sm:$0xf]
    %v3562 = vld [vmem:[%s3548 + $0x34] sm:$0xf]
    %v3563 = vld [vmem:[%s3548 + $0x38] sm:$0xf]
    %v3564 = vld [vmem:[%s3548 + $0x3c] sm:$0xf]
    %v3565 = vld [vmem:[%s3548 + $0x40] sm:$0xf]
    %v3566 = vld [vmem:[%s3548 + $0x44] sm:$0xf]
    %v3567 = vld [vmem:[%s3548 + $0x48] sm:$0xf]
    %v3568 = vld [vmem:[%s3548 + $0x4c] sm:$0xf]
    %v3569 = vld [vmem:[%s3548 + $0x50] sm:$0xf]
    %v3570 = vld [vmem:[%s3548 + $0x54] sm:$0xf]
    %v3571 = vld [vmem:[%s3548 + $0x58] sm:$0xf]
    %v3572 = vld [vmem:[%s3548 + $0x5c] sm:$0xf]
    %v3597 = vunpack.c.l.b16 %v3549
    %v3598 = vunpack.c.l.b16 %v3550
    %v3599 = vunpack.c.l.b16 %v3551
    %v3600 = vunpack.c.l.b16 %v3552
    %v3601 = vunpack.c.l.b16 %v3553
    %v3602 = vunpack.c.l.b16 %v3554
    %v3603 = vunpack.c.l.b16 %v3555
    %v3604 = vunpack.c.l.b16 %v3556
    %v3605 = vunpack.c.l.b16 %v3557
    %v3606 = vunpack.c.l.b16 %v3558
    %v3607 = vunpack.c.l.b16 %v3559
    %v3608 = vunpack.c.l.b16 %v3560
    %v3609 = vunpack.c.l.b16 %v3561
    %v3610 = vunpack.c.l.b16 %v3562
    %v3611 = vunpack.c.l.b16 %v3563
    %v3612 = vunpack.c.l.b16 %v3564
    %v3613 = vunpack.c.l.b16 %v3565
    %v3614 = vunpack.c.l.b16 %v3566
    %v3615 = vunpack.c.l.b16 %v3567
    %v3616 = vunpack.c.l.b16 %v3568
    %v3617 = vunpack.c.l.b16 %v3569
    %v3618 = vunpack.c.l.b16 %v3570
    %v3619 = vunpack.c.l.b16 %v3571
    %v3620 = vunpack.c.l.b16 %v3572
    %v3621 = vpack.c.b16 %v3598, %v3597
    %v3622 = vpack.c.b16 %v3600, %v3599
    %v3623 = vpack.c.b16 %v3602, %v3601
    %v3624 = vpack.c.b16 %v3604, %v3603
    %v3625 = vpack.c.b16 %v3606, %v3605
    %v3626 = vpack.c.b16 %v3608, %v3607
    %v3627 = vpack.c.b16 %v3610, %v3609
    %v3628 = vpack.c.b16 %v3612, %v3611
    %v3629 = vpack.c.b16 %v3614, %v3613
    %v3630 = vpack.c.b16 %v3616, %v3615
    %v3631 = vpack.c.b16 %v3618, %v3617
    %v3632 = vpack.c.b16 %v3620, %v3619
    %v3646 = vsel %vm513, %v3543, 0
    %v3649 = vsel %vm513, %v3545, 0
    %v3652 = vsel %vm513, %v3547, 0
    %3654 = vmatprep.subr.bf16.mxu0 0
    %3655 = vmatpush1.bf16.msra.mxu0 %v3628
    %3656 = vmatprep.subr.bf16.mxu0 0
    %3657 = vmatpush1.bf16.msra.mxu0 %v3627
    %3658 = vmatprep.subr.bf16.mxu0 0
    %3659 = vmatpush1.bf16.msra.mxu0 %v3626
    %3660 = vmatprep.subr.bf16.mxu0 0
    %3661 = vmatpush1.bf16.msra.mxu0 %v3625
    %3662 = vmatprep.subr.bf16.mxu0 0
    %3663 = vmatpush1.bf16.msra.mxu0 %v3624
    %3664 = vmatprep.subr.bf16.mxu0 0
    %3665 = vmatpush1.bf16.msra.mxu0 %v3623
    %3666 = vmatprep.subr.bf16.mxu0 0
    %3667 = vmatpush1.bf16.msra.mxu0 %v3622
    %3668 = vmatprep.subr.bf16.mxu0 0
    %3669 = vmatpush1.bf16.msra.mxu0 %v3621
    %3670 = vmatprep.subr.bf16.mxu0 0
    %3671 = vmatpush2.bf16.msra.mxu0 0
    %3672 = vmatprep.subr.bf16.mxu0 0
    %3673 = vmatpush2.bf16.msra.mxu0 0
    %3674 = vmatprep.subr.bf16.mxu0 0
    %3675 = vmatpush2.bf16.msra.mxu0 0
    %3676 = vmatprep.subr.bf16.mxu0 0
    %3677 = vmatpush2.bf16.msra.mxu0 0
    %3678 = vmatprep.subr.bf16.mxu0 0
    %3679 = vmatpush2.bf16.msra.mxu0 %v3632
    %3680 = vmatprep.subr.bf16.mxu0 0
    %3681 = vmatpush2.bf16.msra.mxu0 %v3631
    %3682 = vmatprep.subr.bf16.mxu0 0
    %3683 = vmatpush2.bf16.msra.mxu0 %v3630
    %3684 = vmatprep.subr.bf16.mxu0 0
    %3685 = vmatpush2.bf16.msra.mxu0 %v3629
    %3686 = vmatprep.mubr.bf16.mxu0 %v3646
    %3687 = vmatmul.mubr.bf16.gmra.mxu0 %v3542
    %v3688 = vpop.f32.mrf.mxu0
    %v3689 = vadd.f32 0.0, %v3688
    %v3690 = vpop.f32.mrf.mxu0
    %v3691 = vpop.f32.mrf.mxu0
    %v3692 = vadd.f32 0.0, %v3691
    %v3693 = vpop.f32.mrf.mxu0
    %3694 = vmatprep.mubr.bf16.mxu0 %v3649
    %3695 = vmatmul.mubr.bf16.gmra.mxu0 %v3544
    %v3696 = vpop.f32.mrf.mxu0
    %v3697 = vadd.f32 0.0, %v3696
    %v3698 = vpop.f32.mrf.mxu0
    %v3699 = vpop.f32.mrf.mxu0
    %v3700 = vadd.f32 0.0, %v3699
    %v3701 = vpop.f32.mrf.mxu0
    %3702 = vmatprep.mubr.bf16.mxu0 %v3652
    %3703 = vmatmul.mubr.bf16.gmra.mxu0 %v3546
    %v3704 = vpop.f32.mrf.mxu0
    %v3705 = vadd.f32 0.0, %v3704
    %v3706 = vpop.f32.mrf.mxu0
    %v3707 = vpop.f32.mrf.mxu0
    %v3708 = vadd.f32 0.0, %v3707
    %v3709 = vpop.f32.mrf.mxu0
    %3710 = vdwg.mxu0
    %v3711 = vadd.f32 %v3197, %v3689
    %v3712 = vadd.f32 %v3198, %v3692
    %v3713 = vadd.f32 %v3199, %v3697
    %v3714 = vadd.f32 %v3200, %v3700
    %v3715 = vadd.f32 %v3201, %v3705
    %v3716 = vadd.f32 %v3202, %v3708
    %s3717 = scalar_lea.vmem %s45, 1
    %v3718 = vld [vmem:[%s3717] sm:$0x1]
    %v3720 = vlaneseq
    %v3721 = vshrl.u32 %v3720, 7
    %v3722 = vsub.s32 0, %v3721
    %v3723 = vrot.slane %v3718, %v3722
    %v3725 = vadd.f32 %v3711, %v3723
    %v3726 = vadd.f32 %v3712, %v3723
    %v3727 = vadd.f32 %v3713, %v3723
    %v3728 = vadd.f32 %v3714, %v3723
    %v3729 = vadd.f32 %v3715, %v3723
    %v3730 = vadd.f32 %v3716, %v3723
    %s3731 = scalar_lea.vmem %s23, 2
    %v3732 = vld [vmem:[%s3731] sm:$0x1]
    %s3733 = scalar_lea.vmem %s25, 2
    %v3734 = vld [vmem:[%s3733] sm:$0x1]
    %v3735 = vsel %vm253, %v582, 0.0
    %3736 = vadd.xlane.f32.xlu0 %v3735
    %v3737 = vpop.xlane.xlu0 %3736
    %v3738 = vsel %vm253, %v583, 0.0
    %3739 = vadd.xlane.f32.xlu0 %v3738
    %v3740 = vpop.xlane.xlu0 %3739
    %v3741 = vsel %vm253, %v584, 0.0
    %3742 = vadd.xlane.f32.xlu0 %v3741
    %v3743 = vpop.xlane.xlu0 %3742
    %v3744 = vsel %vm253, %v585, 0.0
    %3745 = vadd.xlane.f32.xlu0 %v3744
    %v3746 = vpop.xlane.xlu0 %3745
    %v3747 = vsel %vm253, %v586, 0.0
    %3748 = vadd.xlane.f32.xlu0 %v3747
    %v3749 = vpop.xlane.xlu0 %3748
    %v3750 = vsel %vm253, %v587, 0.0
    %3751 = vadd.xlane.f32.xlu0 %v3750
    %v3752 = vpop.xlane.xlu0 %3751
    %v3753 = vmul.f32 %v3737, %v349
    %v3754 = vmul.f32 %v3740, %v349
    %v3755 = vmul.f32 %v3743, %v349
    %v3756 = vmul.f32 %v3746, %v349
    %v3757 = vmul.f32 %v3749, %v349
    %v3758 = vmul.f32 %v3752, %v349
    %v3759 = vsub.f32 %v582, %v3753
    %v3760 = vsub.f32 %v583, %v3754
    %v3761 = vsub.f32 %v584, %v3755
    %v3762 = vsub.f32 %v585, %v3756
    %v3763 = vsub.f32 %v586, %v3757
    %v3764 = vsub.f32 %v587, %v3758
    %v3765 = vmul.f32 %v3759, %v3759
    %v3766 = vmul.f32 %v3760, %v3760
    %v3767 = vmul.f32 %v3761, %v3761
    %v3768 = vmul.f32 %v3762, %v3762
    %v3769 = vmul.f32 %v3763, %v3763
    %v3770 = vmul.f32 %v3764, %v3764
    %v3771 = vsel %vm253, %v3765, 0.0
    %3772 = vadd.xlane.f32.xlu0 %v3771
    %v3773 = vpop.xlane.xlu0 %3772
    %v3774 = vsel %vm253, %v3766, 0.0
    %3775 = vadd.xlane.f32.xlu0 %v3774
    %v3776 = vpop.xlane.xlu0 %3775
    %v3777 = vsel %vm253, %v3767, 0.0
    %3778 = vadd.xlane.f32.xlu0 %v3777
    %v3779 = vpop.xlane.xlu0 %3778
    %v3780 = vsel %vm253, %v3768, 0.0
    %3781 = vadd.xlane.f32.xlu0 %v3780
    %v3782 = vpop.xlane.xlu0 %3781
    %v3783 = vsel %vm253, %v3769, 0.0
    %3784 = vadd.xlane.f32.xlu0 %v3783
    %v3785 = vpop.xlane.xlu0 %3784
    %v3786 = vsel %vm253, %v3770, 0.0
    %3787 = vadd.xlane.f32.xlu0 %v3786
    %v3788 = vpop.xlane.xlu0 %3787
    %v3789 = vmul.f32 %v3773, %v349
    %v3790 = vmul.f32 %v3776, %v349
    %v3791 = vmul.f32 %v3779, %v349
    %v3792 = vmul.f32 %v3782, %v349
    %v3793 = vmul.f32 %v3785, %v349
    %v3794 = vmul.f32 %v3788, %v349
    %v3795 = vadd.f32 %v3789, 1e-05
    %v3796 = vadd.f32 %v3790, 1e-05
    %v3797 = vadd.f32 %v3791, 1e-05
    %v3798 = vadd.f32 %v3792, 1e-05
    %v3799 = vadd.f32 %v3793, 1e-05
    %v3800 = vadd.f32 %v3794, 1e-05
    %v3801 = vrsqrt.pop %v3795
    %v3802 = vrsqrt.pop %v3796
    %v3803 = vrsqrt.pop %v3797
    %v3804 = vrsqrt.pop %v3798
    %v3805 = vrsqrt.pop %v3799
    %v3806 = vrsqrt.pop %v3800
    %v3807 = vmul.f32 %v3759, %v3801
    %v3808 = vmul.f32 %v3760, %v3802
    %v3809 = vmul.f32 %v3761, %v3803
    %v3810 = vmul.f32 %v3762, %v3804
    %v3811 = vmul.f32 %v3763, %v3805
    %v3812 = vmul.f32 %v3764, %v3806
    %v3814 = vlaneseq
    %v3815 = vshrl.u32 %v3814, 7
    %v3816 = vsub.s32 0, %v3815
    %v3817 = vrot.slane %v3732, %v3816
    %v3819 = vmul.f32 %v3807, %v3817
    %v3820 = vmul.f32 %v3808, %v3817
    %v3821 = vmul.f32 %v3809, %v3817
    %v3822 = vmul.f32 %v3810, %v3817
    %v3823 = vmul.f32 %v3811, %v3817
    %v3824 = vmul.f32 %v3812, %v3817
    %v3826 = vlaneseq
    %v3827 = vshrl.u32 %v3826, 7
    %v3828 = vsub.s32 0, %v3827
    %v3829 = vrot.slane %v3734, %v3828
    %v3831 = vadd.f32 %v3819, %v3829
    %v3832 = vadd.f32 %v3820, %v3829
    %v3833 = vadd.f32 %v3821, %v3829
    %v3834 = vadd.f32 %v3822, %v3829
    %v3835 = vadd.f32 %v3823, %v3829
    %v3836 = vadd.f32 %v3824, %v3829
    %v3837 = vpack.c.bf16 %v3832, %v3831
    %v3838 = vpack.c.bf16 %v3834, %v3833
    %v3839 = vpack.c.bf16 %v3836, %v3835
    %s3840 = scalar_lea.vmem %s27, 32
    %v3841 = vld [vmem:[%s3840] sm:$0xf]
    %v3842 = vld [vmem:[%s3840 + $0x4] sm:$0xf]
    %v3843 = vld [vmem:[%s3840 + $0x8] sm:$0xf]
    %v3844 = vld [vmem:[%s3840 + $0xc] sm:$0xf]
    %s3845 = scalar_lea.vmem %s29, 2
    %v3846 = vld [vmem:[%s3845] sm:$0x1]
    %v3848 = vlaneseq
    %v3849 = vshrl.u32 %v3848, 7
    %v3850 = vsub.s32 0, %v3849
    %v3851 = vrot.slane %v3846, %v3850
    %v3857 = vunpack.c.l.b16 %v3841
    %v3858 = vunpack.c.l.b16 %v3842
    %v3859 = vunpack.c.l.b16 %v3843
    %v3860 = vunpack.c.l.b16 %v3844
    %v3861 = vpack.c.b16 %v3858, %v3857
    %v3862 = vpack.c.b16 %v3860, %v3859
    %v3866 = vsel %vm253, %v3837, 0
    %v3869 = vsel %vm253, %v3838, 0
    %v3872 = vsel %vm253, %v3839, 0
    %3874 = vmatprep.subr.bf16.mxu0 0
    %3875 = vmatpush1.bf16.msra.mxu0 0
    %3876 = vmatprep.subr.bf16.mxu0 0
    %3877 = vmatpush1.bf16.msra.mxu0 0
    %3878 = vmatprep.subr.bf16.mxu0 0
    %3879 = vmatpush1.bf16.msra.mxu0 0
    %3880 = vmatprep.subr.bf16.mxu0 0
    %3881 = vmatpush1.bf16.msra.mxu0 0
    %3882 = vmatprep.subr.bf16.mxu0 0
    %3883 = vmatpush1.bf16.msra.mxu0 0
    %3884 = vmatprep.subr.bf16.mxu0 0
    %3885 = vmatpush1.bf16.msra.mxu0 0
    %3886 = vmatprep.subr.bf16.mxu0 0
    %3887 = vmatpush1.bf16.msra.mxu0 %v3862
    %3888 = vmatprep.subr.bf16.mxu0 0
    %3889 = vmatpush1.bf16.msra.mxu0 %v3861
    %3890 = vmatprep.subr.bf16.mxu0 0
    %3891 = vmatpush2.bf16.msra.mxu0 0
    %3892 = vmatprep.subr.bf16.mxu0 0
    %3893 = vmatpush2.bf16.msra.mxu0 0
    %3894 = vmatprep.subr.bf16.mxu0 0
    %3895 = vmatpush2.bf16.msra.mxu0 0
    %3896 = vmatprep.subr.bf16.mxu0 0
    %3897 = vmatpush2.bf16.msra.mxu0 0
    %3898 = vmatprep.subr.bf16.mxu0 0
    %3899 = vmatpush2.bf16.msra.mxu0 0
    %3900 = vmatprep.subr.bf16.mxu0 0
    %3901 = vmatpush2.bf16.msra.mxu0 0
    %3902 = vmatprep.subr.bf16.mxu0 0
    %3903 = vmatpush2.bf16.msra.mxu0 0
    %3904 = vmatprep.subr.bf16.mxu0 0
    %3905 = vmatpush2.bf16.msra.mxu0 0
    %3906 = vmatprep.mubr.bf16.mxu0 0
    %3907 = vmatmul.mubr.bf16.gmra.mxu0 %v3866
    %v3908 = vpop.f32.mrf.mxu0
    %v3909 = vadd.f32 %v3851, %v3908
    %v3910 = vpop.f32.mrf.mxu0
    %v3911 = vpop.f32.mrf.mxu0
    %v3912 = vadd.f32 %v3851, %v3911
    %v3913 = vpop.f32.mrf.mxu0
    %3914 = vmatprep.mubr.bf16.mxu0 0
    %3915 = vmatmul.mubr.bf16.gmra.mxu0 %v3869
    %v3916 = vpop.f32.mrf.mxu0
    %v3917 = vadd.f32 %v3851, %v3916
    %v3918 = vpop.f32.mrf.mxu0
    %v3919 = vpop.f32.mrf.mxu0
    %v3920 = vadd.f32 %v3851, %v3919
    %v3921 = vpop.f32.mrf.mxu0
    %3922 = vmatprep.mubr.bf16.mxu0 0
    %3923 = vmatmul.mubr.bf16.gmra.mxu0 %v3872
    %v3924 = vpop.f32.mrf.mxu0
    %v3925 = vadd.f32 %v3851, %v3924
    %v3926 = vpop.f32.mrf.mxu0
    %v3927 = vpop.f32.mrf.mxu0
    %v3928 = vadd.f32 %v3851, %v3927
    %v3929 = vpop.f32.mrf.mxu0
    %3930 = vdwg.mxu0
    %3937 = vrot.lane.b32.xlu0 %v3909, 112
    %v3938 = vpop.permute.xlu0 %3937
    %3939 = vrot.lane.b32.xlu0 %v3912, 112
    %v3940 = vpop.permute.xlu0 %3939
    %3941 = vrot.lane.b32.xlu0 %v3917, 112
    %v3942 = vpop.permute.xlu0 %3941
    %3943 = vrot.lane.b32.xlu0 %v3920, 112
    %v3944 = vpop.permute.xlu0 %3943
    %3945 = vrot.lane.b32.xlu0 %v3925, 112
    %v3946 = vpop.permute.xlu0 %3945
    %3947 = vrot.lane.b32.xlu0 %v3928, 112
    %v3948 = vpop.permute.xlu0 %3947
    %v3955 = vpack.c.bf16 %v3912, %v3909
    %v3956 = vpack.c.bf16 %v3920, %v3917
    %v3957 = vpack.c.bf16 %v3928, %v3925
    %v3958 = vpack.c.bf16 %v3940, %v3938
    %v3959 = vpack.c.bf16 %v3944, %v3942
    %v3960 = vpack.c.bf16 %v3948, %v3946
    %3962 = vrot.lane.b32.xlu0 %v3955, 96
    %v3963 = vpop.permute.xlu0 %3962
    %v3965 = vsel %vm827, %v3955, 0
    %v3968 = vsel %vm827, %v3963, 0
    %3970 = vmatprep.subr.bf16.mxu0 0
    %3971 = vmatpush1.bf16.xpose.msra.mxu0 0
    %3972 = vmatprep.subr.bf16.mxu0 0
    %3973 = vmatpush1.bf16.xpose.msra.mxu0 0
    %3974 = vmatprep.subr.bf16.mxu0 0
    %3975 = vmatpush1.bf16.xpose.msra.mxu0 0
    %3976 = vmatprep.subr.bf16.mxu0 0
    %3977 = vmatpush1.bf16.xpose.msra.mxu0 0
    %3978 = vmatprep.subr.bf16.mxu0 0
    %3979 = vmatpush1.bf16.xpose.msra.mxu0 0
    %3980 = vmatprep.subr.bf16.mxu0 0
    %3981 = vmatpush1.bf16.xpose.msra.mxu0 0
    %3982 = vmatprep.subr.bf16.mxu0 0
    %3983 = vmatpush1.bf16.xpose.msra.mxu0 0
    %3984 = vmatprep.subr.bf16.mxu0 0
    %3985 = vmatpush1.bf16.xpose.msra.mxu0 %v3968
    %3986 = vmatprep.subr.bf16.mxu0 0
    %3987 = vmatpush2.bf16.xpose.msra.mxu0 0
    %3988 = vmatprep.subr.bf16.mxu0 0
    %3989 = vmatpush2.bf16.xpose.msra.mxu0 0
    %3990 = vmatprep.subr.bf16.mxu0 0
    %3991 = vmatpush2.bf16.xpose.msra.mxu0 0
    %3992 = vmatprep.subr.bf16.mxu0 0
    %3993 = vmatpush2.bf16.xpose.msra.mxu0 0
    %3994 = vmatprep.subr.bf16.mxu0 0
    %3995 = vmatpush2.bf16.xpose.msra.mxu0 0
    %3996 = vmatprep.subr.bf16.mxu0 0
    %3997 = vmatpush2.bf16.xpose.msra.mxu0 0
    %3998 = vmatprep.subr.bf16.mxu0 0
    %3999 = vmatpush2.bf16.xpose.msra.mxu0 0
    %4000 = vmatprep.subr.bf16.mxu0 0
    %4001 = vmatpush2.bf16.xpose.msra.mxu0 0
    %4002 = vmatprep.mubr.bf16.mxu0 0
    %4003 = vmatmul.mubr.bf16.gmra.mxu0 %v3965
    %v4004 = vpop.f32.mrf.mxu0
    %v4005 = vadd.f32 0.0, %v4004
    %v4006 = vpop.f32.mrf.mxu0
    %v4007 = vpop.f32.mrf.mxu0
    %v4008 = vadd.f32 0.0, %v4007
    %v4009 = vpop.f32.mrf.mxu0
    %4010 = vdwg.mxu0
    %4012 = vrot.lane.b32.xlu0 %v3956, 96
    %v4013 = vpop.permute.xlu0 %4012
    %v4015 = vsel %vm827, %v3956, 0
    %v4018 = vsel %vm827, %v4013, 0
    %4020 = vmatprep.subr.bf16.mxu0 0
    %4021 = vmatpush1.bf16.xpose.msra.mxu0 0
    %4022 = vmatprep.subr.bf16.mxu0 0
    %4023 = vmatpush1.bf16.xpose.msra.mxu0 0
    %4024 = vmatprep.subr.bf16.mxu0 0
    %4025 = vmatpush1.bf16.xpose.msra.mxu0 0
    %4026 = vmatprep.subr.bf16.mxu0 0
    %4027 = vmatpush1.bf16.xpose.msra.mxu0 0
    %4028 = vmatprep.subr.bf16.mxu0 0
    %4029 = vmatpush1.bf16.xpose.msra.mxu0 0
    %4030 = vmatprep.subr.bf16.mxu0 0
    %4031 = vmatpush1.bf16.xpose.msra.mxu0 0
    %4032 = vmatprep.subr.bf16.mxu0 0
    %4033 = vmatpush1.bf16.xpose.msra.mxu0 0
    %4034 = vmatprep.subr.bf16.mxu0 0
    %4035 = vmatpush1.bf16.xpose.msra.mxu0 %v4018
    %4036 = vmatprep.subr.bf16.mxu0 0
    %4037 = vmatpush2.bf16.xpose.msra.mxu0 0
    %4038 = vmatprep.subr.bf16.mxu0 0
    %4039 = vmatpush2.bf16.xpose.msra.mxu0 0
    %4040 = vmatprep.subr.bf16.mxu0 0
    %4041 = vmatpush2.bf16.xpose.msra.mxu0 0
    %4042 = vmatprep.subr.bf16.mxu0 0
    %4043 = vmatpush2.bf16.xpose.msra.mxu0 0
    %4044 = vmatprep.subr.bf16.mxu0 0
    %4045 = vmatpush2.bf16.xpose.msra.mxu0 0
    %4046 = vmatprep.subr.bf16.mxu0 0
    %4047 = vmatpush2.bf16.xpose.msra.mxu0 0
    %4048 = vmatprep.subr.bf16.mxu0 0
    %4049 = vmatpush2.bf16.xpose.msra.mxu0 0
    %4050 = vmatprep.subr.bf16.mxu0 0
    %4051 = vmatpush2.bf16.xpose.msra.mxu0 0
    %4052 = vmatprep.mubr.bf16.mxu0 0
    %4053 = vmatmul.mubr.bf16.gmra.mxu0 %v4015
    %v4054 = vpop.f32.mrf.mxu0
    %v4055 = vadd.f32 0.0, %v4054
    %v4056 = vpop.f32.mrf.mxu0
    %v4057 = vpop.f32.mrf.mxu0
    %v4058 = vadd.f32 0.0, %v4057
    %v4059 = vpop.f32.mrf.mxu0
    %4060 = vdwg.mxu0
    %4062 = vrot.lane.b32.xlu0 %v3957, 96
    %v4063 = vpop.permute.xlu0 %4062
    %v4065 = vsel %vm827, %v3957, 0
    %v4068 = vsel %vm827, %v4063, 0
    %4070 = vmatprep.subr.bf16.mxu0 0
    %4071 = vmatpush1.bf16.xpose.msra.mxu0 0
    %4072 = vmatprep.subr.bf16.mxu0 0
    %4073 = vmatpush1.bf16.xpose.msra.mxu0 0
    %4074 = vmatprep.subr.bf16.mxu0 0
    %4075 = vmatpush1.bf16.xpose.msra.mxu0 0
    %4076 = vmatprep.subr.bf16.mxu0 0
    %4077 = vmatpush1.bf16.xpose.msra.mxu0 0
    %4078 = vmatprep.subr.bf16.mxu0 0
    %4079 = vmatpush1.bf16.xpose.msra.mxu0 0
    %4080 = vmatprep.subr.bf16.mxu0 0
    %4081 = vmatpush1.bf16.xpose.msra.mxu0 0
    %4082 = vmatprep.subr.bf16.mxu0 0
    %4083 = vmatpush1.bf16.xpose.msra.mxu0 0
    %4084 = vmatprep.subr.bf16.mxu0 0
    %4085 = vmatpush1.bf16.xpose.msra.mxu0 %v4068
    %4086 = vmatprep.subr.bf16.mxu0 0
    %4087 = vmatpush2.bf16.xpose.msra.mxu0 0
    %4088 = vmatprep.subr.bf16.mxu0 0
    %4089 = vmatpush2.bf16.xpose.msra.mxu0 0
    %4090 = vmatprep.subr.bf16.mxu0 0
    %4091 = vmatpush2.bf16.xpose.msra.mxu0 0
    %4092 = vmatprep.subr.bf16.mxu0 0
    %4093 = vmatpush2.bf16.xpose.msra.mxu0 0
    %4094 = vmatprep.subr.bf16.mxu0 0
    %4095 = vmatpush2.bf16.xpose.msra.mxu0 0
    %4096 = vmatprep.subr.bf16.mxu0 0
    %4097 = vmatpush2.bf16.xpose.msra.mxu0 0
    %4098 = vmatprep.subr.bf16.mxu0 0
    %4099 = vmatpush2.bf16.xpose.msra.mxu0 0
    %4100 = vmatprep.subr.bf16.mxu0 0
    %4101 = vmatpush2.bf16.xpose.msra.mxu0 0
    %4102 = vmatprep.mubr.bf16.mxu0 0
    %4103 = vmatmul.mubr.bf16.gmra.mxu0 %v4065
    %v4104 = vpop.f32.mrf.mxu0
    %v4105 = vadd.f32 0.0, %v4104
    %v4106 = vpop.f32.mrf.mxu0
    %v4107 = vpop.f32.mrf.mxu0
    %v4108 = vadd.f32 0.0, %v4107
    %v4109 = vpop.f32.mrf.mxu0
    %4110 = vdwg.mxu0
    %4112 = vrot.lane.b32.xlu0 %v3958, 96
    %v4113 = vpop.permute.xlu0 %4112
    %v4115 = vsel %vm827, %v3958, 0
    %v4118 = vsel %vm827, %v4113, 0
    %4120 = vmatprep.subr.bf16.mxu0 0
    %4121 = vmatpush1.bf16.xpose.msra.mxu0 0
    %4122 = vmatprep.subr.bf16.mxu0 0
    %4123 = vmatpush1.bf16.xpose.msra.mxu0 0
    %4124 = vmatprep.subr.bf16.mxu0 0
    %4125 = vmatpush1.bf16.xpose.msra.mxu0 0
    %4126 = vmatprep.subr.bf16.mxu0 0
    %4127 = vmatpush1.bf16.xpose.msra.mxu0 0
    %4128 = vmatprep.subr.bf16.mxu0 0
    %4129 = vmatpush1.bf16.xpose.msra.mxu0 0
    %4130 = vmatprep.subr.bf16.mxu0 0
    %4131 = vmatpush1.bf16.xpose.msra.mxu0 0
    %4132 = vmatprep.subr.bf16.mxu0 0
    %4133 = vmatpush1.bf16.xpose.msra.mxu0 0
    %4134 = vmatprep.subr.bf16.mxu0 0
    %4135 = vmatpush1.bf16.xpose.msra.mxu0 %v4118
    %4136 = vmatprep.subr.bf16.mxu0 0
    %4137 = vmatpush2.bf16.xpose.msra.mxu0 0
    %4138 = vmatprep.subr.bf16.mxu0 0
    %4139 = vmatpush2.bf16.xpose.msra.mxu0 0
    %4140 = vmatprep.subr.bf16.mxu0 0
    %4141 = vmatpush2.bf16.xpose.msra.mxu0 0
    %4142 = vmatprep.subr.bf16.mxu0 0
    %4143 = vmatpush2.bf16.xpose.msra.mxu0 0
    %4144 = vmatprep.subr.bf16.mxu0 0
    %4145 = vmatpush2.bf16.xpose.msra.mxu0 0
    %4146 = vmatprep.subr.bf16.mxu0 0
    %4147 = vmatpush2.bf16.xpose.msra.mxu0 0
    %4148 = vmatprep.subr.bf16.mxu0 0
    %4149 = vmatpush2.bf16.xpose.msra.mxu0 0
    %4150 = vmatprep.subr.bf16.mxu0 0
    %4151 = vmatpush2.bf16.xpose.msra.mxu0 0
    %4152 = vmatprep.mubr.bf16.mxu0 0
    %4153 = vmatmul.mubr.bf16.gmra.mxu0 %v4115
    %v4154 = vpop.f32.mrf.mxu0
    %v4155 = vadd.f32 0.0, %v4154
    %v4156 = vpop.f32.mrf.mxu0
    %v4157 = vpop.f32.mrf.mxu0
    %v4158 = vadd.f32 0.0, %v4157
    %v4159 = vpop.f32.mrf.mxu0
    %4160 = vdwg.mxu0
    %4162 = vrot.lane.b32.xlu0 %v3959, 96
    %v4163 = vpop.permute.xlu0 %4162
    %v4165 = vsel %vm827, %v3959, 0
    %v4168 = vsel %vm827, %v4163, 0
    %4170 = vmatprep.subr.bf16.mxu0 0
    %4171 = vmatpush1.bf16.xpose.msra.mxu0 0
    %4172 = vmatprep.subr.bf16.mxu0 0
    %4173 = vmatpush1.bf16.xpose.msra.mxu0 0
    %4174 = vmatprep.subr.bf16.mxu0 0
    %4175 = vmatpush1.bf16.xpose.msra.mxu0 0
    %4176 = vmatprep.subr.bf16.mxu0 0
    %4177 = vmatpush1.bf16.xpose.msra.mxu0 0
    %4178 = vmatprep.subr.bf16.mxu0 0
    %4179 = vmatpush1.bf16.xpose.msra.mxu0 0
    %4180 = vmatprep.subr.bf16.mxu0 0
    %4181 = vmatpush1.bf16.xpose.msra.mxu0 0
    %4182 = vmatprep.subr.bf16.mxu0 0
    %4183 = vmatpush1.bf16.xpose.msra.mxu0 0
    %4184 = vmatprep.subr.bf16.mxu0 0
    %4185 = vmatpush1.bf16.xpose.msra.mxu0 %v4168
    %4186 = vmatprep.subr.bf16.mxu0 0
    %4187 = vmatpush2.bf16.xpose.msra.mxu0 0
    %4188 = vmatprep.subr.bf16.mxu0 0
    %4189 = vmatpush2.bf16.xpose.msra.mxu0 0
    %4190 = vmatprep.subr.bf16.mxu0 0
    %4191 = vmatpush2.bf16.xpose.msra.mxu0 0
    %4192 = vmatprep.subr.bf16.mxu0 0
    %4193 = vmatpush2.bf16.xpose.msra.mxu0 0
    %4194 = vmatprep.subr.bf16.mxu0 0
    %4195 = vmatpush2.bf16.xpose.msra.mxu0 0
    %4196 = vmatprep.subr.bf16.mxu0 0
    %4197 = vmatpush2.bf16.xpose.msra.mxu0 0
    %4198 = vmatprep.subr.bf16.mxu0 0
    %4199 = vmatpush2.bf16.xpose.msra.mxu0 0
    %4200 = vmatprep.subr.bf16.mxu0 0
    %4201 = vmatpush2.bf16.xpose.msra.mxu0 0
    %4202 = vmatprep.mubr.bf16.mxu0 0
    %4203 = vmatmul.mubr.bf16.gmra.mxu0 %v4165
    %v4204 = vpop.f32.mrf.mxu0
    %v4205 = vadd.f32 0.0, %v4204
    %v4206 = vpop.f32.mrf.mxu0
    %v4207 = vpop.f32.mrf.mxu0
    %v4208 = vadd.f32 0.0, %v4207
    %v4209 = vpop.f32.mrf.mxu0
    %4210 = vdwg.mxu0
    %4212 = vrot.lane.b32.xlu0 %v3960, 96
    %v4213 = vpop.permute.xlu0 %4212
    %v4215 = vsel %vm827, %v3960, 0
    %v4218 = vsel %vm827, %v4213, 0
    %4220 = vmatprep.subr.bf16.mxu0 0
    %4221 = vmatpush1.bf16.xpose.msra.mxu0 0
    %4222 = vmatprep.subr.bf16.mxu0 0
    %4223 = vmatpush1.bf16.xpose.msra.mxu0 0
    %4224 = vmatprep.subr.bf16.mxu0 0
    %4225 = vmatpush1.bf16.xpose.msra.mxu0 0
    %4226 = vmatprep.subr.bf16.mxu0 0
    %4227 = vmatpush1.bf16.xpose.msra.mxu0 0
    %4228 = vmatprep.subr.bf16.mxu0 0
    %4229 = vmatpush1.bf16.xpose.msra.mxu0 0
    %4230 = vmatprep.subr.bf16.mxu0 0
    %4231 = vmatpush1.bf16.xpose.msra.mxu0 0
    %4232 = vmatprep.subr.bf16.mxu0 0
    %4233 = vmatpush1.bf16.xpose.msra.mxu0 0
    %4234 = vmatprep.subr.bf16.mxu0 0
    %4235 = vmatpush1.bf16.xpose.msra.mxu0 %v4218
    %4236 = vmatprep.subr.bf16.mxu0 0
    %4237 = vmatpush2.bf16.xpose.msra.mxu0 0
    %4238 = vmatprep.subr.bf16.mxu0 0
    %4239 = vmatpush2.bf16.xpose.msra.mxu0 0
    %4240 = vmatprep.subr.bf16.mxu0 0
    %4241 = vmatpush2.bf16.xpose.msra.mxu0 0
    %4242 = vmatprep.subr.bf16.mxu0 0
    %4243 = vmatpush2.bf16.xpose.msra.mxu0 0
    %4244 = vmatprep.subr.bf16.mxu0 0
    %4245 = vmatpush2.bf16.xpose.msra.mxu0 0
    %4246 = vmatprep.subr.bf16.mxu0 0
    %4247 = vmatpush2.bf16.xpose.msra.mxu0 0
    %4248 = vmatprep.subr.bf16.mxu0 0
    %4249 = vmatpush2.bf16.xpose.msra.mxu0 0
    %4250 = vmatprep.subr.bf16.mxu0 0
    %4251 = vmatpush2.bf16.xpose.msra.mxu0 0
    %4252 = vmatprep.mubr.bf16.mxu0 0
    %4253 = vmatmul.mubr.bf16.gmra.mxu0 %v4215
    %v4254 = vpop.f32.mrf.mxu0
    %v4255 = vadd.f32 0.0, %v4254
    %v4256 = vpop.f32.mrf.mxu0
    %v4257 = vpop.f32.mrf.mxu0
    %v4258 = vadd.f32 0.0, %v4257
    %v4259 = vpop.f32.mrf.mxu0
    %4260 = vdwg.mxu0
    %v4261 = vmul.f32 %v4005, 0.25
    %v4262 = vmul.f32 %v4008, 0.25
    %v4263 = vmul.f32 %v4055, 0.25
    %v4264 = vmul.f32 %v4058, 0.25
    %v4265 = vmul.f32 %v4105, 0.25
    %v4266 = vmul.f32 %v4108, 0.25
    %v4267 = vmul.f32 %v4155, 0.25
    %v4268 = vmul.f32 %v4158, 0.25
    %v4269 = vmul.f32 %v4205, 0.25
    %v4270 = vmul.f32 %v4208, 0.25
    %v4271 = vmul.f32 %v4255, 0.25
    %v4272 = vmul.f32 %v4258, 0.25
    %v4273 = vadd.f32 %v4261, %v591
    %v4274 = vadd.f32 %v4262, %v592
    %v4275 = vadd.f32 %v4263, %v591
    %v4276 = vadd.f32 %v4264, %v592
    %v4277 = vadd.f32 %v4265, %v591
    %v4278 = vadd.f32 %v4266, %v592
    %v4279 = vadd.f32 %v4267, %v591
    %v4280 = vadd.f32 %v4268, %v592
    %v4281 = vadd.f32 %v4269, %v591
    %v4282 = vadd.f32 %v4270, %v592
    %v4283 = vadd.f32 %v4271, %v591
    %v4284 = vadd.f32 %v4272, %v592
    %v4285 = vsel %vm827, %v4273, -inf
    %4286 = vmax.xlane.f32.xlu0 %v4285
    %v4287 = vpop.xlane.xlu0 %4286
    %v4288 = vsel %vm827, %v4274, -inf
    %4289 = vmax.xlane.f32.xlu0 %v4288
    %v4290 = vpop.xlane.xlu0 %4289
    %v4291 = vsel %vm827, %v4275, -inf
    %4292 = vmax.xlane.f32.xlu0 %v4291
    %v4293 = vpop.xlane.xlu0 %4292
    %v4294 = vsel %vm827, %v4276, -inf
    %4295 = vmax.xlane.f32.xlu0 %v4294
    %v4296 = vpop.xlane.xlu0 %4295
    %v4297 = vsel %vm827, %v4277, -inf
    %4298 = vmax.xlane.f32.xlu0 %v4297
    %v4299 = vpop.xlane.xlu0 %4298
    %v4300 = vsel %vm827, %v4278, -inf
    %4301 = vmax.xlane.f32.xlu0 %v4300
    %v4302 = vpop.xlane.xlu0 %4301
    %v4303 = vsel %vm827, %v4279, -inf
    %4304 = vmax.xlane.f32.xlu0 %v4303
    %v4305 = vpop.xlane.xlu0 %4304
    %v4306 = vsel %vm827, %v4280, -inf
    %4307 = vmax.xlane.f32.xlu0 %v4306
    %v4308 = vpop.xlane.xlu0 %4307
    %v4309 = vsel %vm827, %v4281, -inf
    %4310 = vmax.xlane.f32.xlu0 %v4309
    %v4311 = vpop.xlane.xlu0 %4310
    %v4312 = vsel %vm827, %v4282, -inf
    %4313 = vmax.xlane.f32.xlu0 %v4312
    %v4314 = vpop.xlane.xlu0 %4313
    %v4315 = vsel %vm827, %v4283, -inf
    %4316 = vmax.xlane.f32.xlu0 %v4315
    %v4317 = vpop.xlane.xlu0 %4316
    %v4318 = vsel %vm827, %v4284, -inf
    %4319 = vmax.xlane.f32.xlu0 %v4318
    %v4320 = vpop.xlane.xlu0 %4319
    %v4321 = vsub.f32 %v4273, %v4287
    %v4322 = vsub.f32 %v4274, %v4290
    %v4323 = vsub.f32 %v4275, %v4293
    %v4324 = vsub.f32 %v4276, %v4296
    %v4325 = vsub.f32 %v4277, %v4299
    %v4326 = vsub.f32 %v4278, %v4302
    %v4327 = vsub.f32 %v4279, %v4305
    %v4328 = vsub.f32 %v4280, %v4308
    %v4329 = vsub.f32 %v4281, %v4311
    %v4330 = vsub.f32 %v4282, %v4314
    %v4331 = vsub.f32 %v4283, %v4317
    %v4332 = vsub.f32 %v4284, %v4320
    %v4333 = vmul.f32 %v4321, 1.442695
    %v4334 = vpow.pop %v4333
    %v4335 = vmul.f32 %v4322, 1.442695
    %v4336 = vpow.pop %v4335
    %v4337 = vmul.f32 %v4323, 1.442695
    %v4338 = vpow.pop %v4337
    %v4339 = vmul.f32 %v4324, 1.442695
    %v4340 = vpow.pop %v4339
    %v4341 = vmul.f32 %v4325, 1.442695
    %v4342 = vpow.pop %v4341
    %v4343 = vmul.f32 %v4326, 1.442695
    %v4344 = vpow.pop %v4343
    %v4345 = vmul.f32 %v4327, 1.442695
    %v4346 = vpow.pop %v4345
    %v4347 = vmul.f32 %v4328, 1.442695
    %v4348 = vpow.pop %v4347
    %v4349 = vmul.f32 %v4329, 1.442695
    %v4350 = vpow.pop %v4349
    %v4351 = vmul.f32 %v4330, 1.442695
    %v4352 = vpow.pop %v4351
    %v4353 = vmul.f32 %v4331, 1.442695
    %v4354 = vpow.pop %v4353
    %v4355 = vmul.f32 %v4332, 1.442695
    %v4356 = vpow.pop %v4355
    %v4357 = vsel %vm827, %v4334, 0.0
    %4358 = vadd.xlane.f32.xlu0 %v4357
    %v4359 = vpop.xlane.xlu0 %4358
    %v4360 = vsel %vm827, %v4336, 0.0
    %4361 = vadd.xlane.f32.xlu0 %v4360
    %v4362 = vpop.xlane.xlu0 %4361
    %v4363 = vsel %vm827, %v4338, 0.0
    %4364 = vadd.xlane.f32.xlu0 %v4363
    %v4365 = vpop.xlane.xlu0 %4364
    %v4366 = vsel %vm827, %v4340, 0.0
    %4367 = vadd.xlane.f32.xlu0 %v4366
    %v4368 = vpop.xlane.xlu0 %4367
    %v4369 = vsel %vm827, %v4342, 0.0
    %4370 = vadd.xlane.f32.xlu0 %v4369
    %v4371 = vpop.xlane.xlu0 %4370
    %v4372 = vsel %vm827, %v4344, 0.0
    %4373 = vadd.xlane.f32.xlu0 %v4372
    %v4374 = vpop.xlane.xlu0 %4373
    %v4375 = vsel %vm827, %v4346, 0.0
    %4376 = vadd.xlane.f32.xlu0 %v4375
    %v4377 = vpop.xlane.xlu0 %4376
    %v4378 = vsel %vm827, %v4348, 0.0
    %4379 = vadd.xlane.f32.xlu0 %v4378
    %v4380 = vpop.xlane.xlu0 %4379
    %v4381 = vsel %vm827, %v4350, 0.0
    %4382 = vadd.xlane.f32.xlu0 %v4381
    %v4383 = vpop.xlane.xlu0 %4382
    %v4384 = vsel %vm827, %v4352, 0.0
    %4385 = vadd.xlane.f32.xlu0 %v4384
    %v4386 = vpop.xlane.xlu0 %4385
    %v4387 = vsel %vm827, %v4354, 0.0
    %4388 = vadd.xlane.f32.xlu0 %v4387
    %v4389 = vpop.xlane.xlu0 %4388
    %v4390 = vsel %vm827, %v4356, 0.0
    %4391 = vadd.xlane.f32.xlu0 %v4390
    %v4392 = vpop.xlane.xlu0 %4391
    %v4393 = vrcp.pop %v4359
    %v4394 = vrcp.pop %v4362
    %v4395 = vrcp.pop %v4365
    %v4396 = vrcp.pop %v4368
    %v4397 = vrcp.pop %v4371
    %v4398 = vrcp.pop %v4374
    %v4399 = vrcp.pop %v4377
    %v4400 = vrcp.pop %v4380
    %v4401 = vrcp.pop %v4383
    %v4402 = vrcp.pop %v4386
    %v4403 = vrcp.pop %v4389
    %v4404 = vrcp.pop %v4392
    %v4405 = vmul.f32 %v4334, %v4393
    %v4406 = vmul.f32 %v4336, %v4394
    %v4407 = vmul.f32 %v4338, %v4395
    %v4408 = vmul.f32 %v4340, %v4396
    %v4409 = vmul.f32 %v4342, %v4397
    %v4410 = vmul.f32 %v4344, %v4398
    %v4411 = vmul.f32 %v4346, %v4399
    %v4412 = vmul.f32 %v4348, %v4400
    %v4413 = vmul.f32 %v4350, %v4401
    %v4414 = vmul.f32 %v4352, %v4402
    %v4415 = vmul.f32 %v4354, %v4403
    %v4416 = vmul.f32 %v4356, %v4404
    %v4417 = vpack.c.bf16 %v4406, %v4405
    %v4418 = vpack.c.bf16 %v4408, %v4407
    %v4419 = vpack.c.bf16 %v4410, %v4409
    %v4420 = vpack.c.bf16 %v4412, %v4411
    %v4421 = vpack.c.bf16 %v4414, %v4413
    %v4422 = vpack.c.bf16 %v4416, %v4415
    %4423 = vrot.lane.b32.xlu0 %v3955, 64
    %v4424 = vpop.permute.xlu0 %4423
    %v4427 = vsel %vm827, %v4417, 0
    %4429 = vmatprep.subr.bf16.mxu0 0
    %4430 = vmatpush1.bf16.msra.mxu0 0
    %4431 = vmatprep.subr.bf16.mxu0 0
    %4432 = vmatpush1.bf16.msra.mxu0 0
    %4433 = vmatprep.subr.bf16.mxu0 0
    %4434 = vmatpush1.bf16.msra.mxu0 0
    %4435 = vmatprep.subr.bf16.mxu0 0
    %4436 = vmatpush1.bf16.msra.mxu0 0
    %4437 = vmatprep.subr.bf16.mxu0 0
    %4438 = vmatpush1.bf16.msra.mxu0 0
    %4439 = vmatprep.subr.bf16.mxu0 0
    %4440 = vmatpush1.bf16.msra.mxu0 0
    %4441 = vmatprep.subr.bf16.mxu0 0
    %4442 = vmatpush1.bf16.msra.mxu0 0
    %4443 = vmatprep.subr.bf16.mxu0 0
    %4444 = vmatpush1.bf16.msra.mxu0 %v4424
    %4445 = vmatprep.subr.bf16.mxu0 0
    %4446 = vmatpush2.bf16.msra.mxu0 0
    %4447 = vmatprep.subr.bf16.mxu0 0
    %4448 = vmatpush2.bf16.msra.mxu0 0
    %4449 = vmatprep.subr.bf16.mxu0 0
    %4450 = vmatpush2.bf16.msra.mxu0 0
    %4451 = vmatprep.subr.bf16.mxu0 0
    %4452 = vmatpush2.bf16.msra.mxu0 0
    %4453 = vmatprep.subr.bf16.mxu0 0
    %4454 = vmatpush2.bf16.msra.mxu0 0
    %4455 = vmatprep.subr.bf16.mxu0 0
    %4456 = vmatpush2.bf16.msra.mxu0 0
    %4457 = vmatprep.subr.bf16.mxu0 0
    %4458 = vmatpush2.bf16.msra.mxu0 0
    %4459 = vmatprep.subr.bf16.mxu0 0
    %4460 = vmatpush2.bf16.msra.mxu0 0
    %4461 = vmatprep.mubr.bf16.mxu0 0
    %4462 = vmatmul.mubr.bf16.gmra.mxu0 %v4427
    %v4463 = vpop.f32.mrf.mxu0
    %v4464 = vadd.f32 0.0, %v4463
    %v4465 = vpop.f32.mrf.mxu0
    %v4466 = vpop.f32.mrf.mxu0
    %v4467 = vadd.f32 0.0, %v4466
    %v4468 = vpop.f32.mrf.mxu0
    %4469 = vdwg.mxu0
    %4470 = vrot.lane.b32.xlu0 %v3956, 64
    %v4471 = vpop.permute.xlu0 %4470
    %v4474 = vsel %vm827, %v4418, 0
    %4476 = vmatprep.subr.bf16.mxu0 0
    %4477 = vmatpush1.bf16.msra.mxu0 0
    %4478 = vmatprep.subr.bf16.mxu0 0
    %4479 = vmatpush1.bf16.msra.mxu0 0
    %4480 = vmatprep.subr.bf16.mxu0 0
    %4481 = vmatpush1.bf16.msra.mxu0 0
    %4482 = vmatprep.subr.bf16.mxu0 0
    %4483 = vmatpush1.bf16.msra.mxu0 0
    %4484 = vmatprep.subr.bf16.mxu0 0
    %4485 = vmatpush1.bf16.msra.mxu0 0
    %4486 = vmatprep.subr.bf16.mxu0 0
    %4487 = vmatpush1.bf16.msra.mxu0 0
    %4488 = vmatprep.subr.bf16.mxu0 0
    %4489 = vmatpush1.bf16.msra.mxu0 0
    %4490 = vmatprep.subr.bf16.mxu0 0
    %4491 = vmatpush1.bf16.msra.mxu0 %v4471
    %4492 = vmatprep.subr.bf16.mxu0 0
    %4493 = vmatpush2.bf16.msra.mxu0 0
    %4494 = vmatprep.subr.bf16.mxu0 0
    %4495 = vmatpush2.bf16.msra.mxu0 0
    %4496 = vmatprep.subr.bf16.mxu0 0
    %4497 = vmatpush2.bf16.msra.mxu0 0
    %4498 = vmatprep.subr.bf16.mxu0 0
    %4499 = vmatpush2.bf16.msra.mxu0 0
    %4500 = vmatprep.subr.bf16.mxu0 0
    %4501 = vmatpush2.bf16.msra.mxu0 0
    %4502 = vmatprep.subr.bf16.mxu0 0
    %4503 = vmatpush2.bf16.msra.mxu0 0
    %4504 = vmatprep.subr.bf16.mxu0 0
    %4505 = vmatpush2.bf16.msra.mxu0 0
    %4506 = vmatprep.subr.bf16.mxu0 0
    %4507 = vmatpush2.bf16.msra.mxu0 0
    %4508 = vmatprep.mubr.bf16.mxu0 0
    %4509 = vmatmul.mubr.bf16.gmra.mxu0 %v4474
    %v4510 = vpop.f32.mrf.mxu0
    %v4511 = vadd.f32 0.0, %v4510
    %v4512 = vpop.f32.mrf.mxu0
    %v4513 = vpop.f32.mrf.mxu0
    %v4514 = vadd.f32 0.0, %v4513
    %v4515 = vpop.f32.mrf.mxu0
    %4516 = vdwg.mxu0
    %4517 = vrot.lane.b32.xlu0 %v3957, 64
    %v4518 = vpop.permute.xlu0 %4517
    %v4521 = vsel %vm827, %v4419, 0
    %4523 = vmatprep.subr.bf16.mxu0 0
    %4524 = vmatpush1.bf16.msra.mxu0 0
    %4525 = vmatprep.subr.bf16.mxu0 0
    %4526 = vmatpush1.bf16.msra.mxu0 0
    %4527 = vmatprep.subr.bf16.mxu0 0
    %4528 = vmatpush1.bf16.msra.mxu0 0
    %4529 = vmatprep.subr.bf16.mxu0 0
    %4530 = vmatpush1.bf16.msra.mxu0 0
    %4531 = vmatprep.subr.bf16.mxu0 0
    %4532 = vmatpush1.bf16.msra.mxu0 0
    %4533 = vmatprep.subr.bf16.mxu0 0
    %4534 = vmatpush1.bf16.msra.mxu0 0
    %4535 = vmatprep.subr.bf16.mxu0 0
    %4536 = vmatpush1.bf16.msra.mxu0 0
    %4537 = vmatprep.subr.bf16.mxu0 0
    %4538 = vmatpush1.bf16.msra.mxu0 %v4518
    %4539 = vmatprep.subr.bf16.mxu0 0
    %4540 = vmatpush2.bf16.msra.mxu0 0
    %4541 = vmatprep.subr.bf16.mxu0 0
    %4542 = vmatpush2.bf16.msra.mxu0 0
    %4543 = vmatprep.subr.bf16.mxu0 0
    %4544 = vmatpush2.bf16.msra.mxu0 0
    %4545 = vmatprep.subr.bf16.mxu0 0
    %4546 = vmatpush2.bf16.msra.mxu0 0
    %4547 = vmatprep.subr.bf16.mxu0 0
    %4548 = vmatpush2.bf16.msra.mxu0 0
    %4549 = vmatprep.subr.bf16.mxu0 0
    %4550 = vmatpush2.bf16.msra.mxu0 0
    %4551 = vmatprep.subr.bf16.mxu0 0
    %4552 = vmatpush2.bf16.msra.mxu0 0
    %4553 = vmatprep.subr.bf16.mxu0 0
    %4554 = vmatpush2.bf16.msra.mxu0 0
    %4555 = vmatprep.mubr.bf16.mxu0 0
    %4556 = vmatmul.mubr.bf16.gmra.mxu0 %v4521
    %v4557 = vpop.f32.mrf.mxu0
    %v4558 = vadd.f32 0.0, %v4557
    %v4559 = vpop.f32.mrf.mxu0
    %v4560 = vpop.f32.mrf.mxu0
    %v4561 = vadd.f32 0.0, %v4560
    %v4562 = vpop.f32.mrf.mxu0
    %4563 = vdwg.mxu0
    %4564 = vrot.lane.b32.xlu0 %v3958, 64
    %v4565 = vpop.permute.xlu0 %4564
    %v4568 = vsel %vm827, %v4420, 0
    %4570 = vmatprep.subr.bf16.mxu0 0
    %4571 = vmatpush1.bf16.msra.mxu0 0
    %4572 = vmatprep.subr.bf16.mxu0 0
    %4573 = vmatpush1.bf16.msra.mxu0 0
    %4574 = vmatprep.subr.bf16.mxu0 0
    %4575 = vmatpush1.bf16.msra.mxu0 0
    %4576 = vmatprep.subr.bf16.mxu0 0
    %4577 = vmatpush1.bf16.msra.mxu0 0
    %4578 = vmatprep.subr.bf16.mxu0 0
    %4579 = vmatpush1.bf16.msra.mxu0 0
    %4580 = vmatprep.subr.bf16.mxu0 0
    %4581 = vmatpush1.bf16.msra.mxu0 0
    %4582 = vmatprep.subr.bf16.mxu0 0
    %4583 = vmatpush1.bf16.msra.mxu0 0
    %4584 = vmatprep.subr.bf16.mxu0 0
    %4585 = vmatpush1.bf16.msra.mxu0 %v4565
    %4586 = vmatprep.subr.bf16.mxu0 0
    %4587 = vmatpush2.bf16.msra.mxu0 0
    %4588 = vmatprep.subr.bf16.mxu0 0
    %4589 = vmatpush2.bf16.msra.mxu0 0
    %4590 = vmatprep.subr.bf16.mxu0 0
    %4591 = vmatpush2.bf16.msra.mxu0 0
    %4592 = vmatprep.subr.bf16.mxu0 0
    %4593 = vmatpush2.bf16.msra.mxu0 0
    %4594 = vmatprep.subr.bf16.mxu0 0
    %4595 = vmatpush2.bf16.msra.mxu0 0
    %4596 = vmatprep.subr.bf16.mxu0 0
    %4597 = vmatpush2.bf16.msra.mxu0 0
    %4598 = vmatprep.subr.bf16.mxu0 0
    %4599 = vmatpush2.bf16.msra.mxu0 0
    %4600 = vmatprep.subr.bf16.mxu0 0
    %4601 = vmatpush2.bf16.msra.mxu0 0
    %4602 = vmatprep.mubr.bf16.mxu0 0
    %4603 = vmatmul.mubr.bf16.gmra.mxu0 %v4568
    %v4604 = vpop.f32.mrf.mxu0
    %v4605 = vadd.f32 0.0, %v4604
    %v4606 = vpop.f32.mrf.mxu0
    %v4607 = vpop.f32.mrf.mxu0
    %v4608 = vadd.f32 0.0, %v4607
    %v4609 = vpop.f32.mrf.mxu0
    %4610 = vdwg.mxu0
    %4611 = vrot.lane.b32.xlu0 %v3959, 64
    %v4612 = vpop.permute.xlu0 %4611
    %v4615 = vsel %vm827, %v4421, 0
    %4617 = vmatprep.subr.bf16.mxu0 0
    %4618 = vmatpush1.bf16.msra.mxu0 0
    %4619 = vmatprep.subr.bf16.mxu0 0
    %4620 = vmatpush1.bf16.msra.mxu0 0
    %4621 = vmatprep.subr.bf16.mxu0 0
    %4622 = vmatpush1.bf16.msra.mxu0 0
    %4623 = vmatprep.subr.bf16.mxu0 0
    %4624 = vmatpush1.bf16.msra.mxu0 0
    %4625 = vmatprep.subr.bf16.mxu0 0
    %4626 = vmatpush1.bf16.msra.mxu0 0
    %4627 = vmatprep.subr.bf16.mxu0 0
    %4628 = vmatpush1.bf16.msra.mxu0 0
    %4629 = vmatprep.subr.bf16.mxu0 0
    %4630 = vmatpush1.bf16.msra.mxu0 0
    %4631 = vmatprep.subr.bf16.mxu0 0
    %4632 = vmatpush1.bf16.msra.mxu0 %v4612
    %4633 = vmatprep.subr.bf16.mxu0 0
    %4634 = vmatpush2.bf16.msra.mxu0 0
    %4635 = vmatprep.subr.bf16.mxu0 0
    %4636 = vmatpush2.bf16.msra.mxu0 0
    %4637 = vmatprep.subr.bf16.mxu0 0
    %4638 = vmatpush2.bf16.msra.mxu0 0
    %4639 = vmatprep.subr.bf16.mxu0 0
    %4640 = vmatpush2.bf16.msra.mxu0 0
    %4641 = vmatprep.subr.bf16.mxu0 0
    %4642 = vmatpush2.bf16.msra.mxu0 0
    %4643 = vmatprep.subr.bf16.mxu0 0
    %4644 = vmatpush2.bf16.msra.mxu0 0
    %4645 = vmatprep.subr.bf16.mxu0 0
    %4646 = vmatpush2.bf16.msra.mxu0 0
    %4647 = vmatprep.subr.bf16.mxu0 0
    %4648 = vmatpush2.bf16.msra.mxu0 0
    %4649 = vmatprep.mubr.bf16.mxu0 0
    %4650 = vmatmul.mubr.bf16.gmra.mxu0 %v4615
    %v4651 = vpop.f32.mrf.mxu0
    %v4652 = vadd.f32 0.0, %v4651
    %v4653 = vpop.f32.mrf.mxu0
    %v4654 = vpop.f32.mrf.mxu0
    %v4655 = vadd.f32 0.0, %v4654
    %v4656 = vpop.f32.mrf.mxu0
    %4657 = vdwg.mxu0
    %4658 = vrot.lane.b32.xlu0 %v3960, 64
    %v4659 = vpop.permute.xlu0 %4658
    %v4662 = vsel %vm827, %v4422, 0
    %4664 = vmatprep.subr.bf16.mxu0 0
    %4665 = vmatpush1.bf16.msra.mxu0 0
    %4666 = vmatprep.subr.bf16.mxu0 0
    %4667 = vmatpush1.bf16.msra.mxu0 0
    %4668 = vmatprep.subr.bf16.mxu0 0
    %4669 = vmatpush1.bf16.msra.mxu0 0
    %4670 = vmatprep.subr.bf16.mxu0 0
    %4671 = vmatpush1.bf16.msra.mxu0 0
    %4672 = vmatprep.subr.bf16.mxu0 0
    %4673 = vmatpush1.bf16.msra.mxu0 0
    %4674 = vmatprep.subr.bf16.mxu0 0
    %4675 = vmatpush1.bf16.msra.mxu0 0
    %4676 = vmatprep.subr.bf16.mxu0 0
    %4677 = vmatpush1.bf16.msra.mxu0 0
    %4678 = vmatprep.subr.bf16.mxu0 0
    %4679 = vmatpush1.bf16.msra.mxu0 %v4659
    %4680 = vmatprep.subr.bf16.mxu0 0
    %4681 = vmatpush2.bf16.msra.mxu0 0
    %4682 = vmatprep.subr.bf16.mxu0 0
    %4683 = vmatpush2.bf16.msra.mxu0 0
    %4684 = vmatprep.subr.bf16.mxu0 0
    %4685 = vmatpush2.bf16.msra.mxu0 0
    %4686 = vmatprep.subr.bf16.mxu0 0
    %4687 = vmatpush2.bf16.msra.mxu0 0
    %4688 = vmatprep.subr.bf16.mxu0 0
    %4689 = vmatpush2.bf16.msra.mxu0 0
    %4690 = vmatprep.subr.bf16.mxu0 0
    %4691 = vmatpush2.bf16.msra.mxu0 0
    %4692 = vmatprep.subr.bf16.mxu0 0
    %4693 = vmatpush2.bf16.msra.mxu0 0
    %4694 = vmatprep.subr.bf16.mxu0 0
    %4695 = vmatpush2.bf16.msra.mxu0 0
    %4696 = vmatprep.mubr.bf16.mxu0 0
    %4697 = vmatmul.mubr.bf16.gmra.mxu0 %v4662
    %v4698 = vpop.f32.mrf.mxu0
    %v4699 = vadd.f32 0.0, %v4698
    %v4700 = vpop.f32.mrf.mxu0
    %v4701 = vpop.f32.mrf.mxu0
    %v4702 = vadd.f32 0.0, %v4701
    %v4703 = vpop.f32.mrf.mxu0
    %4704 = vdwg.mxu0
    %4711 = vrot.lane.b32.xlu0 %v4605, 16
    %v4712 = vpop.permute.xlu0 %4711
    %4713 = vrot.lane.b32.xlu0 %v4608, 16
    %v4714 = vpop.permute.xlu0 %4713
    %4715 = vrot.lane.b32.xlu0 %v4652, 16
    %v4716 = vpop.permute.xlu0 %4715
    %4717 = vrot.lane.b32.xlu0 %v4655, 16
    %v4718 = vpop.permute.xlu0 %4717
    %4719 = vrot.lane.b32.xlu0 %v4699, 16
    %v4720 = vpop.permute.xlu0 %4719
    %4721 = vrot.lane.b32.xlu0 %v4702, 16
    %v4722 = vpop.permute.xlu0 %4721
    %v4729 = vsel %vm827, %v4464, %v4712
    %v4730 = vsel %vm827, %v4467, %v4714
    %v4731 = vsel %vm827, %v4511, %v4716
    %v4732 = vsel %vm827, %v4514, %v4718
    %v4733 = vsel %vm827, %v4558, %v4720
    %v4734 = vsel %vm827, %v4561, %v4722
    %v4735 = vpack.c.bf16 %v4730, %v4729
    %v4736 = vpack.c.bf16 %v4732, %v4731
    %v4737 = vpack.c.bf16 %v4734, %v4733
    %s4738 = scalar_lea.vmem %s31, 32
    %v4739 = vld [vmem:[%s4738] sm:$0xf]
    %v4740 = vld [vmem:[%s4738 + $0x4] sm:$0xf]
    %v4741 = vld [vmem:[%s4738 + $0x8] sm:$0xf]
    %v4742 = vld [vmem:[%s4738 + $0xc] sm:$0xf]
    %v4747 = vunpack.c.l.b16 %v4739
    %v4748 = vunpack.c.l.b16 %v4740
    %v4749 = vunpack.c.l.b16 %v4741
    %v4750 = vunpack.c.l.b16 %v4742
    %v4751 = vpack.c.b16 %v4748, %v4747
    %v4752 = vpack.c.b16 %v4750, %v4749
    %v4756 = vsel %vm253, %v4735, 0
    %v4759 = vsel %vm253, %v4736, 0
    %v4762 = vsel %vm253, %v4737, 0
    %4764 = vmatprep.subr.bf16.mxu0 0
    %4765 = vmatpush1.bf16.msra.mxu0 0
    %4766 = vmatprep.subr.bf16.mxu0 0
    %4767 = vmatpush1.bf16.msra.mxu0 0
    %4768 = vmatprep.subr.bf16.mxu0 0
    %4769 = vmatpush1.bf16.msra.mxu0 0
    %4770 = vmatprep.subr.bf16.mxu0 0
    %4771 = vmatpush1.bf16.msra.mxu0 0
    %4772 = vmatprep.subr.bf16.mxu0 0
    %4773 = vmatpush1.bf16.msra.mxu0 0
    %4774 = vmatprep.subr.bf16.mxu0 0
    %4775 = vmatpush1.bf16.msra.mxu0 0
    %4776 = vmatprep.subr.bf16.mxu0 0
    %4777 = vmatpush1.bf16.msra.mxu0 %v4752
    %4778 = vmatprep.subr.bf16.mxu0 0
    %4779 = vmatpush1.bf16.msra.mxu0 %v4751
    %4780 = vmatprep.subr.bf16.mxu0 0
    %4781 = vmatpush2.bf16.msra.mxu0 0
    %4782 = vmatprep.subr.bf16.mxu0 0
    %4783 = vmatpush2.bf16.msra.mxu0 0
    %4784 = vmatprep.subr.bf16.mxu0 0
    %4785 = vmatpush2.bf16.msra.mxu0 0
    %4786 = vmatprep.subr.bf16.mxu0 0
    %4787 = vmatpush2.bf16.msra.mxu0 0
    %4788 = vmatprep.subr.bf16.mxu0 0
    %4789 = vmatpush2.bf16.msra.mxu0 0
    %4790 = vmatprep.subr.bf16.mxu0 0
    %4791 = vmatpush2.bf16.msra.mxu0 0
    %4792 = vmatprep.subr.bf16.mxu0 0
    %4793 = vmatpush2.bf16.msra.mxu0 0
    %4794 = vmatprep.subr.bf16.mxu0 0
    %4795 = vmatpush2.bf16.msra.mxu0 0
    %4796 = vmatprep.mubr.bf16.mxu0 0
    %4797 = vmatmul.mubr.bf16.gmra.mxu0 %v4756
    %v4798 = vpop.f32.mrf.mxu0
    %v4799 = vadd.f32 0.0, %v4798
    %v4800 = vpop.f32.mrf.mxu0
    %v4801 = vpop.f32.mrf.mxu0
    %v4802 = vadd.f32 0.0, %v4801
    %v4803 = vpop.f32.mrf.mxu0
    %4804 = vmatprep.mubr.bf16.mxu0 0
    %4805 = vmatmul.mubr.bf16.gmra.mxu0 %v4759
    %v4806 = vpop.f32.mrf.mxu0
    %v4807 = vadd.f32 0.0, %v4806
    %v4808 = vpop.f32.mrf.mxu0
    %v4809 = vpop.f32.mrf.mxu0
    %v4810 = vadd.f32 0.0, %v4809
    %v4811 = vpop.f32.mrf.mxu0
    %4812 = vmatprep.mubr.bf16.mxu0 0
    %4813 = vmatmul.mubr.bf16.gmra.mxu0 %v4762
    %v4814 = vpop.f32.mrf.mxu0
    %v4815 = vadd.f32 0.0, %v4814
    %v4816 = vpop.f32.mrf.mxu0
    %v4817 = vpop.f32.mrf.mxu0
    %v4818 = vadd.f32 0.0, %v4817
    %v4819 = vpop.f32.mrf.mxu0
    %4820 = vdwg.mxu0
    %v4821 = vadd.f32 %v582, %v4799
    %v4822 = vadd.f32 %v583, %v4802
    %v4823 = vadd.f32 %v584, %v4807
    %v4824 = vadd.f32 %v585, %v4810
    %v4825 = vadd.f32 %v586, %v4815
    %v4826 = vadd.f32 %v587, %v4818
    %s4827 = scalar_lea.vmem %s33, 2
    %v4828 = vld [vmem:[%s4827] sm:$0x1]
    %v4830 = vlaneseq
    %v4831 = vshrl.u32 %v4830, 7
    %v4832 = vsub.s32 0, %v4831
    %v4833 = vrot.slane %v4828, %v4832
    %v4835 = vadd.f32 %v4821, %v4833
    %v4836 = vadd.f32 %v4822, %v4833
    %v4837 = vadd.f32 %v4823, %v4833
    %v4838 = vadd.f32 %v4824, %v4833
    %v4839 = vadd.f32 %v4825, %v4833
    %v4840 = vadd.f32 %v4826, %v4833
    %s4841 = scalar_lea.vmem %s35, 2
    %v4842 = vld [vmem:[%s4841] sm:$0x1]
    %s4843 = scalar_lea.vmem %s37, 2
    %v4844 = vld [vmem:[%s4843] sm:$0x1]
    %v4845 = vsel %vm253, %v4835, 0.0
    %4846 = vadd.xlane.f32.xlu0 %v4845
    %v4847 = vpop.xlane.xlu0 %4846
    %v4848 = vsel %vm253, %v4836, 0.0
    %4849 = vadd.xlane.f32.xlu0 %v4848
    %v4850 = vpop.xlane.xlu0 %4849
    %v4851 = vsel %vm253, %v4837, 0.0
    %4852 = vadd.xlane.f32.xlu0 %v4851
    %v4853 = vpop.xlane.xlu0 %4852
    %v4854 = vsel %vm253, %v4838, 0.0
    %4855 = vadd.xlane.f32.xlu0 %v4854
    %v4856 = vpop.xlane.xlu0 %4855
    %v4857 = vsel %vm253, %v4839, 0.0
    %4858 = vadd.xlane.f32.xlu0 %v4857
    %v4859 = vpop.xlane.xlu0 %4858
    %v4860 = vsel %vm253, %v4840, 0.0
    %4861 = vadd.xlane.f32.xlu0 %v4860
    %v4862 = vpop.xlane.xlu0 %4861
    %v4863 = vmul.f32 %v4847, %v349
    %v4864 = vmul.f32 %v4850, %v349
    %v4865 = vmul.f32 %v4853, %v349
    %v4866 = vmul.f32 %v4856, %v349
    %v4867 = vmul.f32 %v4859, %v349
    %v4868 = vmul.f32 %v4862, %v349
    %v4869 = vsub.f32 %v4835, %v4863
    %v4870 = vsub.f32 %v4836, %v4864
    %v4871 = vsub.f32 %v4837, %v4865
    %v4872 = vsub.f32 %v4838, %v4866
    %v4873 = vsub.f32 %v4839, %v4867
    %v4874 = vsub.f32 %v4840, %v4868
    %v4875 = vmul.f32 %v4869, %v4869
    %v4876 = vmul.f32 %v4870, %v4870
    %v4877 = vmul.f32 %v4871, %v4871
    %v4878 = vmul.f32 %v4872, %v4872
    %v4879 = vmul.f32 %v4873, %v4873
    %v4880 = vmul.f32 %v4874, %v4874
    %v4881 = vsel %vm253, %v4875, 0.0
    %4882 = vadd.xlane.f32.xlu0 %v4881
    %v4883 = vpop.xlane.xlu0 %4882
    %v4884 = vsel %vm253, %v4876, 0.0
    %4885 = vadd.xlane.f32.xlu0 %v4884
    %v4886 = vpop.xlane.xlu0 %4885
    %v4887 = vsel %vm253, %v4877, 0.0
    %4888 = vadd.xlane.f32.xlu0 %v4887
    %v4889 = vpop.xlane.xlu0 %4888
    %v4890 = vsel %vm253, %v4878, 0.0
    %4891 = vadd.xlane.f32.xlu0 %v4890
    %v4892 = vpop.xlane.xlu0 %4891
    %v4893 = vsel %vm253, %v4879, 0.0
    %4894 = vadd.xlane.f32.xlu0 %v4893
    %v4895 = vpop.xlane.xlu0 %4894
    %v4896 = vsel %vm253, %v4880, 0.0
    %4897 = vadd.xlane.f32.xlu0 %v4896
    %v4898 = vpop.xlane.xlu0 %4897
    %v4899 = vmul.f32 %v4883, %v349
    %v4900 = vmul.f32 %v4886, %v349
    %v4901 = vmul.f32 %v4889, %v349
    %v4902 = vmul.f32 %v4892, %v349
    %v4903 = vmul.f32 %v4895, %v349
    %v4904 = vmul.f32 %v4898, %v349
    %v4905 = vadd.f32 %v4899, 1e-05
    %v4906 = vadd.f32 %v4900, 1e-05
    %v4907 = vadd.f32 %v4901, 1e-05
    %v4908 = vadd.f32 %v4902, 1e-05
    %v4909 = vadd.f32 %v4903, 1e-05
    %v4910 = vadd.f32 %v4904, 1e-05
    %v4911 = vrsqrt.pop %v4905
    %v4912 = vrsqrt.pop %v4906
    %v4913 = vrsqrt.pop %v4907
    %v4914 = vrsqrt.pop %v4908
    %v4915 = vrsqrt.pop %v4909
    %v4916 = vrsqrt.pop %v4910
    %v4917 = vmul.f32 %v4869, %v4911
    %v4918 = vmul.f32 %v4870, %v4912
    %v4919 = vmul.f32 %v4871, %v4913
    %v4920 = vmul.f32 %v4872, %v4914
    %v4921 = vmul.f32 %v4873, %v4915
    %v4922 = vmul.f32 %v4874, %v4916
    %v4924 = vlaneseq
    %v4925 = vshrl.u32 %v4924, 7
    %v4926 = vsub.s32 0, %v4925
    %v4927 = vrot.slane %v4842, %v4926
    %v4929 = vmul.f32 %v4917, %v4927
    %v4930 = vmul.f32 %v4918, %v4927
    %v4931 = vmul.f32 %v4919, %v4927
    %v4932 = vmul.f32 %v4920, %v4927
    %v4933 = vmul.f32 %v4921, %v4927
    %v4934 = vmul.f32 %v4922, %v4927
    %v4936 = vlaneseq
    %v4937 = vshrl.u32 %v4936, 7
    %v4938 = vsub.s32 0, %v4937
    %v4939 = vrot.slane %v4844, %v4938
    %v4941 = vadd.f32 %v4929, %v4939
    %v4942 = vadd.f32 %v4930, %v4939
    %v4943 = vadd.f32 %v4931, %v4939
    %v4944 = vadd.f32 %v4932, %v4939
    %v4945 = vadd.f32 %v4933, %v4939
    %v4946 = vadd.f32 %v4934, %v4939
    %v4947 = vpack.c.bf16 %v4942, %v4941
    %v4948 = vpack.c.bf16 %v4944, %v4943
    %v4949 = vpack.c.bf16 %v4946, %v4945
    %s4950 = scalar_lea.vmem %s39, 64
    %v4951 = vld [vmem:[%s4950] sm:$0xff]
    %v4952 = vld [vmem:[%s4950 + $0x8] sm:$0xff]
    %v4953 = vld [vmem:[%s4950 + $0x10] sm:$0xff]
    %v4954 = vld [vmem:[%s4950 + $0x18] sm:$0xff]
    %s4955 = scalar_lea.vmem %s41, 4
    %v4956 = vld [vmem:[%s4955] sm:$0x3]
    %v4958 = vlaneseq
    %v4959 = vshrl.u32 %v4958, 7
    %v4960 = vsub.s32 0, %v4959
    %v4961 = vrot.slane %v4956, %v4960
    %v4962 = vlaneseq
    %v4963 = vshrl.u32 %v4962, 7
    %v4964 = vsub.s32 1, %v4963
    %v4965 = vrot.slane %v4956, %v4964
    %v4972 = vunpack.c.l.b16 %v4951
    %v4973 = vunpack.c.h.b16 %v4951
    %v4974 = vunpack.c.l.b16 %v4952
    %v4975 = vunpack.c.h.b16 %v4952
    %v4976 = vunpack.c.l.b16 %v4953
    %v4977 = vunpack.c.h.b16 %v4953
    %v4978 = vunpack.c.l.b16 %v4954
    %v4979 = vunpack.c.h.b16 %v4954
    %v4980 = vpack.c.b16 %v4974, %v4972
    %v4981 = vpack.c.b16 %v4975, %v4973
    %v4982 = vpack.c.b16 %v4978, %v4976
    %v4983 = vpack.c.b16 %v4979, %v4977
    %v4989 = vsel %vm253, %v4947, 0
    %v4992 = vsel %vm253, %v4948, 0
    %v4995 = vsel %vm253, %v4949, 0
    %4997 = vmatprep.subr.bf16.mxu0 0
    %4998 = vmatpush1.bf16.msra.mxu0 0
    %4999 = vmatprep.subr.bf16.mxu0 0
    %5000 = vmatpush1.bf16.msra.mxu0 0
    %5001 = vmatprep.subr.bf16.mxu0 0
    %5002 = vmatpush1.bf16.msra.mxu0 0
    %5003 = vmatprep.subr.bf16.mxu0 0
    %5004 = vmatpush1.bf16.msra.mxu0 0
    %5005 = vmatprep.subr.bf16.mxu0 0
    %5006 = vmatpush1.bf16.msra.mxu0 0
    %5007 = vmatprep.subr.bf16.mxu0 0
    %5008 = vmatpush1.bf16.msra.mxu0 0
    %5009 = vmatprep.subr.bf16.mxu0 %v4983
    %5010 = vmatpush1.bf16.msra.mxu0 %v4982
    %5011 = vmatprep.subr.bf16.mxu0 %v4981
    %5012 = vmatpush1.bf16.msra.mxu0 %v4980
    %5013 = vmatprep.subr.bf16.mxu0 0
    %5014 = vmatpush2.bf16.msra.mxu0 0
    %5015 = vmatprep.subr.bf16.mxu0 0
    %5016 = vmatpush2.bf16.msra.mxu0 0
    %5017 = vmatprep.subr.bf16.mxu0 0
    %5018 = vmatpush2.bf16.msra.mxu0 0
    %5019 = vmatprep.subr.bf16.mxu0 0
    %5020 = vmatpush2.bf16.msra.mxu0 0
    %5021 = vmatprep.subr.bf16.mxu0 0
    %5022 = vmatpush2.bf16.msra.mxu0 0
    %5023 = vmatprep.subr.bf16.mxu0 0
    %5024 = vmatpush2.bf16.msra.mxu0 0
    %5025 = vmatprep.subr.bf16.mxu0 0
    %5026 = vmatpush2.bf16.msra.mxu0 0
    %5027 = vmatprep.subr.bf16.mxu0 0
    %5028 = vmatpush2.bf16.msra.mxu0 0
    %5029 = vmatprep.mubr.bf16.mxu0 0
    %5030 = vmatmul.mubr.bf16.gmra.mxu0 %v4989
    %v5031 = vpop.f32.mrf.mxu0
    %v5032 = vadd.f32 %v4961, %v5031
    %v5033 = vpop.f32.mrf.mxu0
    %v5034 = vadd.f32 %v4965, %v5033
    %v5035 = vpop.f32.mrf.mxu0
    %v5036 = vadd.f32 %v4961, %v5035
    %v5037 = vpop.f32.mrf.mxu0
    %v5038 = vadd.f32 %v4965, %v5037
    %5039 = vmatprep.mubr.bf16.mxu0 0
    %5040 = vmatmul.mubr.bf16.gmra.mxu0 %v4992
    %v5041 = vpop.f32.mrf.mxu0
    %v5042 = vadd.f32 %v4961, %v5041
    %v5043 = vpop.f32.mrf.mxu0
    %v5044 = vadd.f32 %v4965, %v5043
    %v5045 = vpop.f32.mrf.mxu0
    %v5046 = vadd.f32 %v4961, %v5045
    %v5047 = vpop.f32.mrf.mxu0
    %v5048 = vadd.f32 %v4965, %v5047
    %5049 = vmatprep.mubr.bf16.mxu0 0
    %5050 = vmatmul.mubr.bf16.gmra.mxu0 %v4995
    %v5051 = vpop.f32.mrf.mxu0
    %v5052 = vadd.f32 %v4961, %v5051
    %v5053 = vpop.f32.mrf.mxu0
    %v5054 = vadd.f32 %v4965, %v5053
    %v5055 = vpop.f32.mrf.mxu0
    %v5056 = vadd.f32 %v4961, %v5055
    %v5057 = vpop.f32.mrf.mxu0
    %v5058 = vadd.f32 %v4965, %v5057
    %5059 = vdwg.mxu0
    %v5060 = vmul.f32 %v5032, 1.702
    %v5061 = vmul.f32 %v5034, 1.702
    %v5062 = vmul.f32 %v5036, 1.702
    %v5063 = vmul.f32 %v5038, 1.702
    %v5064 = vmul.f32 %v5042, 1.702
    %v5065 = vmul.f32 %v5044, 1.702
    %v5066 = vmul.f32 %v5046, 1.702
    %v5067 = vmul.f32 %v5048, 1.702
    %v5068 = vmul.f32 %v5052, 1.702
    %v5069 = vmul.f32 %v5054, 1.702
    %v5070 = vmul.f32 %v5056, 1.702
    %v5071 = vmul.f32 %v5058, 1.702
    %v5072 = vxor.u32 %v5060, 2147483648
    %v5073 = vxor.u32 %v5061, 2147483648
    %v5074 = vxor.u32 %v5062, 2147483648
    %v5075 = vxor.u32 %v5063, 2147483648
    %v5076 = vxor.u32 %v5064, 2147483648
    %v5077 = vxor.u32 %v5065, 2147483648
    %v5078 = vxor.u32 %v5066, 2147483648
    %v5079 = vxor.u32 %v5067, 2147483648
    %v5080 = vxor.u32 %v5068, 2147483648
    %v5081 = vxor.u32 %v5069, 2147483648
    %v5082 = vxor.u32 %v5070, 2147483648
    %v5083 = vxor.u32 %v5071, 2147483648
    %v5084 = vmul.f32 %v5072, 1.442695
    %v5085 = vpow.pop %v5084
    %v5086 = vmul.f32 %v5073, 1.442695
    %v5087 = vpow.pop %v5086
    %v5088 = vmul.f32 %v5074, 1.442695
    %v5089 = vpow.pop %v5088
    %v5090 = vmul.f32 %v5075, 1.442695
    %v5091 = vpow.pop %v5090
    %v5092 = vmul.f32 %v5076, 1.442695
    %v5093 = vpow.pop %v5092
    %v5094 = vmul.f32 %v5077, 1.442695
    %v5095 = vpow.pop %v5094
    %v5096 = vmul.f32 %v5078, 1.442695
    %v5097 = vpow.pop %v5096
    %v5098 = vmul.f32 %v5079, 1.442695
    %v5099 = vpow.pop %v5098
    %v5100 = vmul.f32 %v5080, 1.442695
    %v5101 = vpow.pop %v5100
    %v5102 = vmul.f32 %v5081, 1.442695
    %v5103 = vpow.pop %v5102
    %v5104 = vmul.f32 %v5082, 1.442695
    %v5105 = vpow.pop %v5104
    %v5106 = vmul.f32 %v5083, 1.442695
    %v5107 = vpow.pop %v5106
    %v5108 = vadd.f32 %v5085, 1.0
    %v5109 = vadd.f32 %v5087, 1.0
    %v5110 = vadd.f32 %v5089, 1.0
    %v5111 = vadd.f32 %v5091, 1.0
    %v5112 = vadd.f32 %v5093, 1.0
    %v5113 = vadd.f32 %v5095, 1.0
    %v5114 = vadd.f32 %v5097, 1.0
    %v5115 = vadd.f32 %v5099, 1.0
    %v5116 = vadd.f32 %v5101, 1.0
    %v5117 = vadd.f32 %v5103, 1.0
    %v5118 = vadd.f32 %v5105, 1.0
    %v5119 = vadd.f32 %v5107, 1.0
    %v5120 = vrcp.pop %v5108
    %v5121 = vmul.f32 1.0, %v5120
    %v5122 = vrcp.pop %v5109
    %v5123 = vmul.f32 1.0, %v5122
    %v5124 = vrcp.pop %v5110
    %v5125 = vmul.f32 1.0, %v5124
    %v5126 = vrcp.pop %v5111
    %v5127 = vmul.f32 1.0, %v5126
    %v5128 = vrcp.pop %v5112
    %v5129 = vmul.f32 1.0, %v5128
    %v5130 = vrcp.pop %v5113
    %v5131 = vmul.f32 1.0, %v5130
    %v5132 = vrcp.pop %v5114
    %v5133 = vmul.f32 1.0, %v5132
    %v5134 = vrcp.pop %v5115
    %v5135 = vmul.f32 1.0, %v5134
    %v5136 = vrcp.pop %v5116
    %v5137 = vmul.f32 1.0, %v5136
    %v5138 = vrcp.pop %v5117
    %v5139 = vmul.f32 1.0, %v5138
    %v5140 = vrcp.pop %v5118
    %v5141 = vmul.f32 1.0, %v5140
    %v5142 = vrcp.pop %v5119
    %v5143 = vmul.f32 1.0, %v5142
    %v5144 = vmul.f32 %v5032, %v5121
    %v5145 = vmul.f32 %v5034, %v5123
    %v5146 = vmul.f32 %v5036, %v5125
    %v5147 = vmul.f32 %v5038, %v5127
    %v5148 = vmul.f32 %v5042, %v5129
    %v5149 = vmul.f32 %v5044, %v5131
    %v5150 = vmul.f32 %v5046, %v5133
    %v5151 = vmul.f32 %v5048, %v5135
    %v5152 = vmul.f32 %v5052, %v5137
    %v5153 = vmul.f32 %v5054, %v5139
    %v5154 = vmul.f32 %v5056, %v5141
    %v5155 = vmul.f32 %v5058, %v5143
    %v5156 = vmax.f32 %v5032, 0.0
    %v5157 = vmax.f32 %v5034, 0.0
    %v5158 = vmax.f32 %v5036, 0.0
    %v5159 = vmax.f32 %v5038, 0.0
    %v5160 = vmax.f32 %v5042, 0.0
    %v5161 = vmax.f32 %v5044, 0.0
    %v5162 = vmax.f32 %v5046, 0.0
    %v5163 = vmax.f32 %v5048, 0.0
    %v5164 = vmax.f32 %v5052, 0.0
    %v5165 = vmax.f32 %v5054, 0.0
    %v5166 = vmax.f32 %v5056, 0.0
    %v5167 = vmax.f32 %v5058, 0.0
    %v5168 = vsel %vm1850, %v5144, %v5156
    %v5169 = vsel %vm1851, %v5145, %v5157
    %v5170 = vsel %vm1850, %v5146, %v5158
    %v5171 = vsel %vm1851, %v5147, %v5159
    %v5172 = vsel %vm1850, %v5148, %v5160
    %v5173 = vsel %vm1851, %v5149, %v5161
    %v5174 = vsel %vm1850, %v5150, %v5162
    %v5175 = vsel %vm1851, %v5151, %v5163
    %v5176 = vsel %vm1850, %v5152, %v5164
    %v5177 = vsel %vm1851, %v5153, %v5165
    %v5178 = vsel %vm1850, %v5154, %v5166
    %v5179 = vsel %vm1851, %v5155, %v5167
    %v5180 = vpack.c.bf16 %v5170, %v5168
    %v5181 = vpack.c.bf16 %v5171, %v5169
    %v5182 = vpack.c.bf16 %v5174, %v5172
    %v5183 = vpack.c.bf16 %v5175, %v5173
    %v5184 = vpack.c.bf16 %v5178, %v5176
    %v5185 = vpack.c.bf16 %v5179, %v5177
    %s5186 = scalar_lea.vmem %s43, 192
    %v5187 = vld [vmem:[%s5186] sm:$0xf]
    %v5188 = vld [vmem:[%s5186 + $0x4] sm:$0xf]
    %v5189 = vld [vmem:[%s5186 + $0x8] sm:$0xf]
    %v5190 = vld [vmem:[%s5186 + $0xc] sm:$0xf]
    %v5191 = vld [vmem:[%s5186 + $0x10] sm:$0xf]
    %v5192 = vld [vmem:[%s5186 + $0x14] sm:$0xf]
    %v5193 = vld [vmem:[%s5186 + $0x18] sm:$0xf]
    %v5194 = vld [vmem:[%s5186 + $0x1c] sm:$0xf]
    %v5195 = vld [vmem:[%s5186 + $0x20] sm:$0xf]
    %v5196 = vld [vmem:[%s5186 + $0x24] sm:$0xf]
    %v5197 = vld [vmem:[%s5186 + $0x28] sm:$0xf]
    %v5198 = vld [vmem:[%s5186 + $0x2c] sm:$0xf]
    %v5199 = vld [vmem:[%s5186 + $0x30] sm:$0xf]
    %v5200 = vld [vmem:[%s5186 + $0x34] sm:$0xf]
    %v5201 = vld [vmem:[%s5186 + $0x38] sm:$0xf]
    %v5202 = vld [vmem:[%s5186 + $0x3c] sm:$0xf]
    %v5203 = vld [vmem:[%s5186 + $0x40] sm:$0xf]
    %v5204 = vld [vmem:[%s5186 + $0x44] sm:$0xf]
    %v5205 = vld [vmem:[%s5186 + $0x48] sm:$0xf]
    %v5206 = vld [vmem:[%s5186 + $0x4c] sm:$0xf]
    %v5207 = vld [vmem:[%s5186 + $0x50] sm:$0xf]
    %v5208 = vld [vmem:[%s5186 + $0x54] sm:$0xf]
    %v5209 = vld [vmem:[%s5186 + $0x58] sm:$0xf]
    %v5210 = vld [vmem:[%s5186 + $0x5c] sm:$0xf]
    %v5235 = vunpack.c.l.b16 %v5187
    %v5236 = vunpack.c.l.b16 %v5188
    %v5237 = vunpack.c.l.b16 %v5189
    %v5238 = vunpack.c.l.b16 %v5190
    %v5239 = vunpack.c.l.b16 %v5191
    %v5240 = vunpack.c.l.b16 %v5192
    %v5241 = vunpack.c.l.b16 %v5193
    %v5242 = vunpack.c.l.b16 %v5194
    %v5243 = vunpack.c.l.b16 %v5195
    %v5244 = vunpack.c.l.b16 %v5196
    %v5245 = vunpack.c.l.b16 %v5197
    %v5246 = vunpack.c.l.b16 %v5198
    %v5247 = vunpack.c.l.b16 %v5199
    %v5248 = vunpack.c.l.b16 %v5200
    %v5249 = vunpack.c.l.b16 %v5201
    %v5250 = vunpack.c.l.b16 %v5202
    %v5251 = vunpack.c.l.b16 %v5203
    %v5252 = vunpack.c.l.b16 %v5204
    %v5253 = vunpack.c.l.b16 %v5205
    %v5254 = vunpack.c.l.b16 %v5206
    %v5255 = vunpack.c.l.b16 %v5207
    %v5256 = vunpack.c.l.b16 %v5208
    %v5257 = vunpack.c.l.b16 %v5209
    %v5258 = vunpack.c.l.b16 %v5210
    %v5259 = vpack.c.b16 %v5236, %v5235
    %v5260 = vpack.c.b16 %v5238, %v5237
    %v5261 = vpack.c.b16 %v5240, %v5239
    %v5262 = vpack.c.b16 %v5242, %v5241
    %v5263 = vpack.c.b16 %v5244, %v5243
    %v5264 = vpack.c.b16 %v5246, %v5245
    %v5265 = vpack.c.b16 %v5248, %v5247
    %v5266 = vpack.c.b16 %v5250, %v5249
    %v5267 = vpack.c.b16 %v5252, %v5251
    %v5268 = vpack.c.b16 %v5254, %v5253
    %v5269 = vpack.c.b16 %v5256, %v5255
    %v5270 = vpack.c.b16 %v5258, %v5257
    %v5284 = vsel %vm513, %v5181, 0
    %v5287 = vsel %vm513, %v5183, 0
    %v5290 = vsel %vm513, %v5185, 0
    %5292 = vmatprep.subr.bf16.mxu0 0
    %5293 = vmatpush1.bf16.msra.mxu0 %v5266
    %5294 = vmatprep.subr.bf16.mxu0 0
    %5295 = vmatpush1.bf16.msra.mxu0 %v5265
    %5296 = vmatprep.subr.bf16.mxu0 0
    %5297 = vmatpush1.bf16.msra.mxu0 %v5264
    %5298 = vmatprep.subr.bf16.mxu0 0
    %5299 = vmatpush1.bf16.msra.mxu0 %v5263
    %5300 = vmatprep.subr.bf16.mxu0 0
    %5301 = vmatpush1.bf16.msra.mxu0 %v5262
    %5302 = vmatprep.subr.bf16.mxu0 0
    %5303 = vmatpush1.bf16.msra.mxu0 %v5261
    %5304 = vmatprep.subr.bf16.mxu0 0
    %5305 = vmatpush1.bf16.msra.mxu0 %v5260
    %5306 = vmatprep.subr.bf16.mxu0 0
    %5307 = vmatpush1.bf16.msra.mxu0 %v5259
    %5308 = vmatprep.subr.bf16.mxu0 0
    %5309 = vmatpush2.bf16.msra.mxu0 0
    %5310 = vmatprep.subr.bf16.mxu0 0
    %5311 = vmatpush2.bf16.msra.mxu0 0
    %5312 = vmatprep.subr.bf16.mxu0 0
    %5313 = vmatpush2.bf16.msra.mxu0 0
    %5314 = vmatprep.subr.bf16.mxu0 0
    %5315 = vmatpush2.bf16.msra.mxu0 0
    %5316 = vmatprep.subr.bf16.mxu0 0
    %5317 = vmatpush2.bf16.msra.mxu0 %v5270
    %5318 = vmatprep.subr.bf16.mxu0 0
    %5319 = vmatpush2.bf16.msra.mxu0 %v5269
    %5320 = vmatprep.subr.bf16.mxu0 0
    %5321 = vmatpush2.bf16.msra.mxu0 %v5268
    %5322 = vmatprep.subr.bf16.mxu0 0
    %5323 = vmatpush2.bf16.msra.mxu0 %v5267
    %5324 = vmatprep.mubr.bf16.mxu0 %v5284
    %5325 = vmatmul.mubr.bf16.gmra.mxu0 %v5180
    %v5326 = vpop.f32.mrf.mxu0
    %v5327 = vadd.f32 0.0, %v5326
    %v5328 = vpop.f32.mrf.mxu0
    %v5329 = vpop.f32.mrf.mxu0
    %v5330 = vadd.f32 0.0, %v5329
    %v5331 = vpop.f32.mrf.mxu0
    %5332 = vmatprep.mubr.bf16.mxu0 %v5287
    %5333 = vmatmul.mubr.bf16.gmra.mxu0 %v5182
    %v5334 = vpop.f32.mrf.mxu0
    %v5335 = vadd.f32 0.0, %v5334
    %v5336 = vpop.f32.mrf.mxu0
    %v5337 = vpop.f32.mrf.mxu0
    %v5338 = vadd.f32 0.0, %v5337
    %v5339 = vpop.f32.mrf.mxu0
    %5340 = vmatprep.mubr.bf16.mxu0 %v5290
    %5341 = vmatmul.mubr.bf16.gmra.mxu0 %v5184
    %v5342 = vpop.f32.mrf.mxu0
    %v5343 = vadd.f32 0.0, %v5342
    %v5344 = vpop.f32.mrf.mxu0
    %v5345 = vpop.f32.mrf.mxu0
    %v5346 = vadd.f32 0.0, %v5345
    %v5347 = vpop.f32.mrf.mxu0
    %5348 = vdwg.mxu0
    %v5349 = vadd.f32 %v4835, %v5327
    %v5350 = vadd.f32 %v4836, %v5330
    %v5351 = vadd.f32 %v4837, %v5335
    %v5352 = vadd.f32 %v4838, %v5338
    %v5353 = vadd.f32 %v4839, %v5343
    %v5354 = vadd.f32 %v4840, %v5346
    %s5355 = scalar_lea.vmem %s45, 2
    %v5356 = vld [vmem:[%s5355] sm:$0x1]
    %v5358 = vlaneseq
    %v5359 = vshrl.u32 %v5358, 7
    %v5360 = vsub.s32 0, %v5359
    %v5361 = vrot.slane %v5356, %v5360
    %v5363 = vadd.f32 %v5349, %v5361
    %v5364 = vadd.f32 %v5350, %v5361
    %v5365 = vadd.f32 %v5351, %v5361
    %v5366 = vadd.f32 %v5352, %v5361
    %v5367 = vadd.f32 %v5353, %v5361
    %v5368 = vadd.f32 %v5354, %v5361
    %s5369 = scalar_lea.vmem %s23, 3
    %v5370 = vld [vmem:[%s5369] sm:$0x1]
    %s5371 = scalar_lea.vmem %s25, 3
    %v5372 = vld [vmem:[%s5371] sm:$0x1]
    %v5373 = vsel %vm253, %v5363, 0.0
    %5374 = vadd.xlane.f32.xlu0 %v5373
    %v5375 = vpop.xlane.xlu0 %5374
    %v5376 = vsel %vm253, %v5364, 0.0
    %5377 = vadd.xlane.f32.xlu0 %v5376
    %v5378 = vpop.xlane.xlu0 %5377
    %v5379 = vsel %vm253, %v5365, 0.0
    %5380 = vadd.xlane.f32.xlu0 %v5379
    %v5381 = vpop.xlane.xlu0 %5380
    %v5382 = vsel %vm253, %v5366, 0.0
    %5383 = vadd.xlane.f32.xlu0 %v5382
    %v5384 = vpop.xlane.xlu0 %5383
    %v5385 = vsel %vm253, %v5367, 0.0
    %5386 = vadd.xlane.f32.xlu0 %v5385
    %v5387 = vpop.xlane.xlu0 %5386
    %v5388 = vsel %vm253, %v5368, 0.0
    %5389 = vadd.xlane.f32.xlu0 %v5388
    %v5390 = vpop.xlane.xlu0 %5389
    %v5391 = vmul.f32 %v5375, %v349
    %v5392 = vmul.f32 %v5378, %v349
    %v5393 = vmul.f32 %v5381, %v349
    %v5394 = vmul.f32 %v5384, %v349
    %v5395 = vmul.f32 %v5387, %v349
    %v5396 = vmul.f32 %v5390, %v349
    %v5397 = vsub.f32 %v5363, %v5391
    %v5398 = vsub.f32 %v5364, %v5392
    %v5399 = vsub.f32 %v5365, %v5393
    %v5400 = vsub.f32 %v5366, %v5394
    %v5401 = vsub.f32 %v5367, %v5395
    %v5402 = vsub.f32 %v5368, %v5396
    %v5403 = vmul.f32 %v5397, %v5397
    %v5404 = vmul.f32 %v5398, %v5398
    %v5405 = vmul.f32 %v5399, %v5399
    %v5406 = vmul.f32 %v5400, %v5400
    %v5407 = vmul.f32 %v5401, %v5401
    %v5408 = vmul.f32 %v5402, %v5402
    %v5409 = vsel %vm253, %v5403, 0.0
    %5410 = vadd.xlane.f32.xlu0 %v5409
    %v5411 = vpop.xlane.xlu0 %5410
    %v5412 = vsel %vm253, %v5404, 0.0
    %5413 = vadd.xlane.f32.xlu0 %v5412
    %v5414 = vpop.xlane.xlu0 %5413
    %v5415 = vsel %vm253, %v5405, 0.0
    %5416 = vadd.xlane.f32.xlu0 %v5415
    %v5417 = vpop.xlane.xlu0 %5416
    %v5418 = vsel %vm253, %v5406, 0.0
    %5419 = vadd.xlane.f32.xlu0 %v5418
    %v5420 = vpop.xlane.xlu0 %5419
    %v5421 = vsel %vm253, %v5407, 0.0
    %5422 = vadd.xlane.f32.xlu0 %v5421
    %v5423 = vpop.xlane.xlu0 %5422
    %v5424 = vsel %vm253, %v5408, 0.0
    %5425 = vadd.xlane.f32.xlu0 %v5424
    %v5426 = vpop.xlane.xlu0 %5425
    %v5427 = vmul.f32 %v5411, %v349
    %v5428 = vmul.f32 %v5414, %v349
    %v5429 = vmul.f32 %v5417, %v349
    %v5430 = vmul.f32 %v5420, %v349
    %v5431 = vmul.f32 %v5423, %v349
    %v5432 = vmul.f32 %v5426, %v349
    %v5433 = vadd.f32 %v5427, 1e-05
    %v5434 = vadd.f32 %v5428, 1e-05
    %v5435 = vadd.f32 %v5429, 1e-05
    %v5436 = vadd.f32 %v5430, 1e-05
    %v5437 = vadd.f32 %v5431, 1e-05
    %v5438 = vadd.f32 %v5432, 1e-05
    %v5439 = vrsqrt.pop %v5433
    %v5440 = vrsqrt.pop %v5434
    %v5441 = vrsqrt.pop %v5435
    %v5442 = vrsqrt.pop %v5436
    %v5443 = vrsqrt.pop %v5437
    %v5444 = vrsqrt.pop %v5438
    %v5445 = vmul.f32 %v5397, %v5439
    %v5446 = vmul.f32 %v5398, %v5440
    %v5447 = vmul.f32 %v5399, %v5441
    %v5448 = vmul.f32 %v5400, %v5442
    %v5449 = vmul.f32 %v5401, %v5443
    %v5450 = vmul.f32 %v5402, %v5444
    %v5452 = vlaneseq
    %v5453 = vshrl.u32 %v5452, 7
    %v5454 = vsub.s32 0, %v5453
    %v5455 = vrot.slane %v5370, %v5454
    %v5457 = vmul.f32 %v5445, %v5455
    %v5458 = vmul.f32 %v5446, %v5455
    %v5459 = vmul.f32 %v5447, %v5455
    %v5460 = vmul.f32 %v5448, %v5455
    %v5461 = vmul.f32 %v5449, %v5455
    %v5462 = vmul.f32 %v5450, %v5455
    %v5464 = vlaneseq
    %v5465 = vshrl.u32 %v5464, 7
    %v5466 = vsub.s32 0, %v5465
    %v5467 = vrot.slane %v5372, %v5466
    %v5469 = vadd.f32 %v5457, %v5467
    %v5470 = vadd.f32 %v5458, %v5467
    %v5471 = vadd.f32 %v5459, %v5467
    %v5472 = vadd.f32 %v5460, %v5467
    %v5473 = vadd.f32 %v5461, %v5467
    %v5474 = vadd.f32 %v5462, %v5467
    %v5475 = vpack.c.bf16 %v5470, %v5469
    %v5476 = vpack.c.bf16 %v5472, %v5471
    %v5477 = vpack.c.bf16 %v5474, %v5473
    %s5478 = scalar_lea.vmem %s27, 48
    %v5479 = vld [vmem:[%s5478] sm:$0xf]
    %v5480 = vld [vmem:[%s5478 + $0x4] sm:$0xf]
    %v5481 = vld [vmem:[%s5478 + $0x8] sm:$0xf]
    %v5482 = vld [vmem:[%s5478 + $0xc] sm:$0xf]
    %s5483 = scalar_lea.vmem %s29, 3
    %v5484 = vld [vmem:[%s5483] sm:$0x1]
    %v5486 = vlaneseq
    %v5487 = vshrl.u32 %v5486, 7
    %v5488 = vsub.s32 0, %v5487
    %v5489 = vrot.slane %v5484, %v5488
    %v5495 = vunpack.c.l.b16 %v5479
    %v5496 = vunpack.c.l.b16 %v5480
    %v5497 = vunpack.c.l.b16 %v5481
    %v5498 = vunpack.c.l.b16 %v5482
    %v5499 = vpack.c.b16 %v5496, %v5495
    %v5500 = vpack.c.b16 %v5498, %v5497
    %v5504 = vsel %vm253, %v5475, 0
    %v5507 = vsel %vm253, %v5476, 0
    %v5510 = vsel %vm253, %v5477, 0
    %5512 = vmatprep.subr.bf16.mxu0 0
    %5513 = vmatpush1.bf16.msra.mxu0 0
    %5514 = vmatprep.subr.bf16.mxu0 0
    %5515 = vmatpush1.bf16.msra.mxu0 0
    %5516 = vmatprep.subr.bf16.mxu0 0
    %5517 = vmatpush1.bf16.msra.mxu0 0
    %5518 = vmatprep.subr.bf16.mxu0 0
    %5519 = vmatpush1.bf16.msra.mxu0 0
    %5520 = vmatprep.subr.bf16.mxu0 0
    %5521 = vmatpush1.bf16.msra.mxu0 0
    %5522 = vmatprep.subr.bf16.mxu0 0
    %5523 = vmatpush1.bf16.msra.mxu0 0
    %5524 = vmatprep.subr.bf16.mxu0 0
    %5525 = vmatpush1.bf16.msra.mxu0 %v5500
    %5526 = vmatprep.subr.bf16.mxu0 0
    %5527 = vmatpush1.bf16.msra.mxu0 %v5499
    %5528 = vmatprep.subr.bf16.mxu0 0
    %5529 = vmatpush2.bf16.msra.mxu0 0
    %5530 = vmatprep.subr.bf16.mxu0 0
    %5531 = vmatpush2.bf16.msra.mxu0 0
    %5532 = vmatprep.subr.bf16.mxu0 0
    %5533 = vmatpush2.bf16.msra.mxu0 0
    %5534 = vmatprep.subr.bf16.mxu0 0
    %5535 = vmatpush2.bf16.msra.mxu0 0
    %5536 = vmatprep.subr.bf16.mxu0 0
    %5537 = vmatpush2.bf16.msra.mxu0 0
    %5538 = vmatprep.subr.bf16.mxu0 0
    %5539 = vmatpush2.bf16.msra.mxu0 0
    %5540 = vmatprep.subr.bf16.mxu0 0
    %5541 = vmatpush2.bf16.msra.mxu0 0
    %5542 = vmatprep.subr.bf16.mxu0 0
    %5543 = vmatpush2.bf16.msra.mxu0 0
    %5544 = vmatprep.mubr.bf16.mxu0 0
    %5545 = vmatmul.mubr.bf16.gmra.mxu0 %v5504
    %v5546 = vpop.f32.mrf.mxu0
    %v5547 = vadd.f32 %v5489, %v5546
    %v5548 = vpop.f32.mrf.mxu0
    %v5549 = vpop.f32.mrf.mxu0
    %v5550 = vadd.f32 %v5489, %v5549
    %v5551 = vpop.f32.mrf.mxu0
    %5552 = vmatprep.mubr.bf16.mxu0 0
    %5553 = vmatmul.mubr.bf16.gmra.mxu0 %v5507
    %v5554 = vpop.f32.mrf.mxu0
    %v5555 = vadd.f32 %v5489, %v5554
    %v5556 = vpop.f32.mrf.mxu0
    %v5557 = vpop.f32.mrf.mxu0
    %v5558 = vadd.f32 %v5489, %v5557
    %v5559 = vpop.f32.mrf.mxu0
    %5560 = vmatprep.mubr.bf16.mxu0 0
    %5561 = vmatmul.mubr.bf16.gmra.mxu0 %v5510
    %v5562 = vpop.f32.mrf.mxu0
    %v5563 = vadd.f32 %v5489, %v5562
    %v5564 = vpop.f32.mrf.mxu0
    %v5565 = vpop.f32.mrf.mxu0
    %v5566 = vadd.f32 %v5489, %v5565
    %v5567 = vpop.f32.mrf.mxu0
    %5568 = vdwg.mxu0
    %5575 = vrot.lane.b32.xlu0 %v5547, 112
    %v5576 = vpop.permute.xlu0 %5575
    %5577 = vrot.lane.b32.xlu0 %v5550, 112
    %v5578 = vpop.permute.xlu0 %5577
    %5579 = vrot.lane.b32.xlu0 %v5555, 112
    %v5580 = vpop.permute.xlu0 %5579
    %5581 = vrot.lane.b32.xlu0 %v5558, 112
    %v5582 = vpop.permute.xlu0 %5581
    %5583 = vrot.lane.b32.xlu0 %v5563, 112
    %v5584 = vpop.permute.xlu0 %5583
    %5585 = vrot.lane.b32.xlu0 %v5566, 112
    %v5586 = vpop.permute.xlu0 %5585
    %v5593 = vpack.c.bf16 %v5550, %v5547
    %v5594 = vpack.c.bf16 %v5558, %v5555
    %v5595 = vpack.c.bf16 %v5566, %v5563
    %v5596 = vpack.c.bf16 %v5578, %v5576
    %v5597 = vpack.c.bf16 %v5582, %v5580
    %v5598 = vpack.c.bf16 %v5586, %v5584
    %5600 = vrot.lane.b32.xlu0 %v5593, 96
    %v5601 = vpop.permute.xlu0 %5600
    %v5603 = vsel %vm827, %v5593, 0
    %v5606 = vsel %vm827, %v5601, 0
    %5608 = vmatprep.subr.bf16.mxu0 0
    %5609 = vmatpush1.bf16.xpose.msra.mxu0 0
    %5610 = vmatprep.subr.bf16.mxu0 0
    %5611 = vmatpush1.bf16.xpose.msra.mxu0 0
    %5612 = vmatprep.subr.bf16.mxu0 0
    %5613 = vmatpush1.bf16.xpose.msra.mxu0 0
    %5614 = vmatprep.subr.bf16.mxu0 0
    %5615 = vmatpush1.bf16.xpose.msra.mxu0 0
    %5616 = vmatprep.subr.bf16.mxu0 0
    %5617 = vmatpush1.bf16.xpose.msra.mxu0 0
    %5618 = vmatprep.subr.bf16.mxu0 0
    %5619 = vmatpush1.bf16.xpose.msra.mxu0 0
    %5620 = vmatprep.subr.bf16.mxu0 0
    %5621 = vmatpush1.bf16.xpose.msra.mxu0 0
    %5622 = vmatprep.subr.bf16.mxu0 0
    %5623 = vmatpush1.bf16.xpose.msra.mxu0 %v5606
    %5624 = vmatprep.subr.bf16.mxu0 0
    %5625 = vmatpush2.bf16.xpose.msra.mxu0 0
    %5626 = vmatprep.subr.bf16.mxu0 0
    %5627 = vmatpush2.bf16.xpose.msra.mxu0 0
    %5628 = vmatprep.subr.bf16.mxu0 0
    %5629 = vmatpush2.bf16.xpose.msra.mxu0 0
    %5630 = vmatprep.subr.bf16.mxu0 0
    %5631 = vmatpush2.bf16.xpose.msra.mxu0 0
    %5632 = vmatprep.subr.bf16.mxu0 0
    %5633 = vmatpush2.bf16.xpose.msra.mxu0 0
    %5634 = vmatprep.subr.bf16.mxu0 0
    %5635 = vmatpush2.bf16.xpose.msra.mxu0 0
    %5636 = vmatprep.subr.bf16.mxu0 0
    %5637 = vmatpush2.bf16.xpose.msra.mxu0 0
    %5638 = vmatprep.subr.bf16.mxu0 0
    %5639 = vmatpush2.bf16.xpose.msra.mxu0 0
    %5640 = vmatprep.mubr.bf16.mxu0 0
    %5641 = vmatmul.mubr.bf16.gmra.mxu0 %v5603
    %v5642 = vpop.f32.mrf.mxu0
    %v5643 = vadd.f32 0.0, %v5642
    %v5644 = vpop.f32.mrf.mxu0
    %v5645 = vpop.f32.mrf.mxu0
    %v5646 = vadd.f32 0.0, %v5645
    %v5647 = vpop.f32.mrf.mxu0
    %5648 = vdwg.mxu0
    %5650 = vrot.lane.b32.xlu0 %v5594, 96
    %v5651 = vpop.permute.xlu0 %5650
    %v5653 = vsel %vm827, %v5594, 0
    %v5656 = vsel %vm827, %v5651, 0
    %5658 = vmatprep.subr.bf16.mxu0 0
    %5659 = vmatpush1.bf16.xpose.msra.mxu0 0
    %5660 = vmatprep.subr.bf16.mxu0 0
    %5661 = vmatpush1.bf16.xpose.msra.mxu0 0
    %5662 = vmatprep.subr.bf16.mxu0 0
    %5663 = vmatpush1.bf16.xpose.msra.mxu0 0
    %5664 = vmatprep.subr.bf16.mxu0 0
    %5665 = vmatpush1.bf16.xpose.msra.mxu0 0
    %5666 = vmatprep.subr.bf16.mxu0 0
    %5667 = vmatpush1.bf16.xpose.msra.mxu0 0
    %5668 = vmatprep.subr.bf16.mxu0 0
    %5669 = vmatpush1.bf16.xpose.msra.mxu0 0
    %5670 = vmatprep.subr.bf16.mxu0 0
    %5671 = vmatpush1.bf16.xpose.msra.mxu0 0
    %5672 = vmatprep.subr.bf16.mxu0 0
    %5673 = vmatpush1.bf16.xpose.msra.mxu0 %v5656
    %5674 = vmatprep.subr.bf16.mxu0 0
    %5675 = vmatpush2.bf16.xpose.msra.mxu0 0
    %5676 = vmatprep.subr.bf16.mxu0 0
    %5677 = vmatpush2.bf16.xpose.msra.mxu0 0
    %5678 = vmatprep.subr.bf16.mxu0 0
    %5679 = vmatpush2.bf16.xpose.msra.mxu0 0
    %5680 = vmatprep.subr.bf16.mxu0 0
    %5681 = vmatpush2.bf16.xpose.msra.mxu0 0
    %5682 = vmatprep.subr.bf16.mxu0 0
    %5683 = vmatpush2.bf16.xpose.msra.mxu0 0
    %5684 = vmatprep.subr.bf16.mxu0 0
    %5685 = vmatpush2.bf16.xpose.msra.mxu0 0
    %5686 = vmatprep.subr.bf16.mxu0 0
    %5687 = vmatpush2.bf16.xpose.msra.mxu0 0
    %5688 = vmatprep.subr.bf16.mxu0 0
    %5689 = vmatpush2.bf16.xpose.msra.mxu0 0
    %5690 = vmatprep.mubr.bf16.mxu0 0
    %5691 = vmatmul.mubr.bf16.gmra.mxu0 %v5653
    %v5692 = vpop.f32.mrf.mxu0
    %v5693 = vadd.f32 0.0, %v5692
    %v5694 = vpop.f32.mrf.mxu0
    %v5695 = vpop.f32.mrf.mxu0
    %v5696 = vadd.f32 0.0, %v5695
    %v5697 = vpop.f32.mrf.mxu0
    %5698 = vdwg.mxu0
    %5700 = vrot.lane.b32.xlu0 %v5595, 96
    %v5701 = vpop.permute.xlu0 %5700
    %v5703 = vsel %vm827, %v5595, 0
    %v5706 = vsel %vm827, %v5701, 0
    %5708 = vmatprep.subr.bf16.mxu0 0
    %5709 = vmatpush1.bf16.xpose.msra.mxu0 0
    %5710 = vmatprep.subr.bf16.mxu0 0
    %5711 = vmatpush1.bf16.xpose.msra.mxu0 0
    %5712 = vmatprep.subr.bf16.mxu0 0
    %5713 = vmatpush1.bf16.xpose.msra.mxu0 0
    %5714 = vmatprep.subr.bf16.mxu0 0
    %5715 = vmatpush1.bf16.xpose.msra.mxu0 0
    %5716 = vmatprep.subr.bf16.mxu0 0
    %5717 = vmatpush1.bf16.xpose.msra.mxu0 0
    %5718 = vmatprep.subr.bf16.mxu0 0
    %5719 = vmatpush1.bf16.xpose.msra.mxu0 0
    %5720 = vmatprep.subr.bf16.mxu0 0
    %5721 = vmatpush1.bf16.xpose.msra.mxu0 0
    %5722 = vmatprep.subr.bf16.mxu0 0
    %5723 = vmatpush1.bf16.xpose.msra.mxu0 %v5706
    %5724 = vmatprep.subr.bf16.mxu0 0
    %5725 = vmatpush2.bf16.xpose.msra.mxu0 0
    %5726 = vmatprep.subr.bf16.mxu0 0
    %5727 = vmatpush2.bf16.xpose.msra.mxu0 0
    %5728 = vmatprep.subr.bf16.mxu0 0
    %5729 = vmatpush2.bf16.xpose.msra.mxu0 0
    %5730 = vmatprep.subr.bf16.mxu0 0
    %5731 = vmatpush2.bf16.xpose.msra.mxu0 0
    %5732 = vmatprep.subr.bf16.mxu0 0
    %5733 = vmatpush2.bf16.xpose.msra.mxu0 0
    %5734 = vmatprep.subr.bf16.mxu0 0
    %5735 = vmatpush2.bf16.xpose.msra.mxu0 0
    %5736 = vmatprep.subr.bf16.mxu0 0
    %5737 = vmatpush2.bf16.xpose.msra.mxu0 0
    %5738 = vmatprep.subr.bf16.mxu0 0
    %5739 = vmatpush2.bf16.xpose.msra.mxu0 0
    %5740 = vmatprep.mubr.bf16.mxu0 0
    %5741 = vmatmul.mubr.bf16.gmra.mxu0 %v5703
    %v5742 = vpop.f32.mrf.mxu0
    %v5743 = vadd.f32 0.0, %v5742
    %v5744 = vpop.f32.mrf.mxu0
    %v5745 = vpop.f32.mrf.mxu0
    %v5746 = vadd.f32 0.0, %v5745
    %v5747 = vpop.f32.mrf.mxu0
    %5748 = vdwg.mxu0
    %5750 = vrot.lane.b32.xlu0 %v5596, 96
    %v5751 = vpop.permute.xlu0 %5750
    %v5753 = vsel %vm827, %v5596, 0
    %v5756 = vsel %vm827, %v5751, 0
    %5758 = vmatprep.subr.bf16.mxu0 0
    %5759 = vmatpush1.bf16.xpose.msra.mxu0 0
    %5760 = vmatprep.subr.bf16.mxu0 0
    %5761 = vmatpush1.bf16.xpose.msra.mxu0 0
    %5762 = vmatprep.subr.bf16.mxu0 0
    %5763 = vmatpush1.bf16.xpose.msra.mxu0 0
    %5764 = vmatprep.subr.bf16.mxu0 0
    %5765 = vmatpush1.bf16.xpose.msra.mxu0 0
    %5766 = vmatprep.subr.bf16.mxu0 0
    %5767 = vmatpush1.bf16.xpose.msra.mxu0 0
    %5768 = vmatprep.subr.bf16.mxu0 0
    %5769 = vmatpush1.bf16.xpose.msra.mxu0 0
    %5770 = vmatprep.subr.bf16.mxu0 0
    %5771 = vmatpush1.bf16.xpose.msra.mxu0 0
    %5772 = vmatprep.subr.bf16.mxu0 0
    %5773 = vmatpush1.bf16.xpose.msra.mxu0 %v5756
    %5774 = vmatprep.subr.bf16.mxu0 0
    %5775 = vmatpush2.bf16.xpose.msra.mxu0 0
    %5776 = vmatprep.subr.bf16.mxu0 0
    %5777 = vmatpush2.bf16.xpose.msra.mxu0 0
    %5778 = vmatprep.subr.bf16.mxu0 0
    %5779 = vmatpush2.bf16.xpose.msra.mxu0 0
    %5780 = vmatprep.subr.bf16.mxu0 0
    %5781 = vmatpush2.bf16.xpose.msra.mxu0 0
    %5782 = vmatprep.subr.bf16.mxu0 0
    %5783 = vmatpush2.bf16.xpose.msra.mxu0 0
    %5784 = vmatprep.subr.bf16.mxu0 0
    %5785 = vmatpush2.bf16.xpose.msra.mxu0 0
    %5786 = vmatprep.subr.bf16.mxu0 0
    %5787 = vmatpush2.bf16.xpose.msra.mxu0 0
    %5788 = vmatprep.subr.bf16.mxu0 0
    %5789 = vmatpush2.bf16.xpose.msra.mxu0 0
    %5790 = vmatprep.mubr.bf16.mxu0 0
    %5791 = vmatmul.mubr.bf16.gmra.mxu0 %v5753
    %v5792 = vpop.f32.mrf.mxu0
    %v5793 = vadd.f32 0.0, %v5792
    %v5794 = vpop.f32.mrf.mxu0
    %v5795 = vpop.f32.mrf.mxu0
    %v5796 = vadd.f32 0.0, %v5795
    %v5797 = vpop.f32.mrf.mxu0
    %5798 = vdwg.mxu0
    %5800 = vrot.lane.b32.xlu0 %v5597, 96
    %v5801 = vpop.permute.xlu0 %5800
    %v5803 = vsel %vm827, %v5597, 0
    %v5806 = vsel %vm827, %v5801, 0
    %5808 = vmatprep.subr.bf16.mxu0 0
    %5809 = vmatpush1.bf16.xpose.msra.mxu0 0
    %5810 = vmatprep.subr.bf16.mxu0 0
    %5811 = vmatpush1.bf16.xpose.msra.mxu0 0
    %5812 = vmatprep.subr.bf16.mxu0 0
    %5813 = vmatpush1.bf16.xpose.msra.mxu0 0
    %5814 = vmatprep.subr.bf16.mxu0 0
    %5815 = vmatpush1.bf16.xpose.msra.mxu0 0
    %5816 = vmatprep.subr.bf16.mxu0 0
    %5817 = vmatpush1.bf16.xpose.msra.mxu0 0
    %5818 = vmatprep.subr.bf16.mxu0 0
    %5819 = vmatpush1.bf16.xpose.msra.mxu0 0
    %5820 = vmatprep.subr.bf16.mxu0 0
    %5821 = vmatpush1.bf16.xpose.msra.mxu0 0
    %5822 = vmatprep.subr.bf16.mxu0 0
    %5823 = vmatpush1.bf16.xpose.msra.mxu0 %v5806
    %5824 = vmatprep.subr.bf16.mxu0 0
    %5825 = vmatpush2.bf16.xpose.msra.mxu0 0
    %5826 = vmatprep.subr.bf16.mxu0 0
    %5827 = vmatpush2.bf16.xpose.msra.mxu0 0
    %5828 = vmatprep.subr.bf16.mxu0 0
    %5829 = vmatpush2.bf16.xpose.msra.mxu0 0
    %5830 = vmatprep.subr.bf16.mxu0 0
    %5831 = vmatpush2.bf16.xpose.msra.mxu0 0
    %5832 = vmatprep.subr.bf16.mxu0 0
    %5833 = vmatpush2.bf16.xpose.msra.mxu0 0
    %5834 = vmatprep.subr.bf16.mxu0 0
    %5835 = vmatpush2.bf16.xpose.msra.mxu0 0
    %5836 = vmatprep.subr.bf16.mxu0 0
    %5837 = vmatpush2.bf16.xpose.msra.mxu0 0
    %5838 = vmatprep.subr.bf16.mxu0 0
    %5839 = vmatpush2.bf16.xpose.msra.mxu0 0
    %5840 = vmatprep.mubr.bf16.mxu0 0
    %5841 = vmatmul.mubr.bf16.gmra.mxu0 %v5803
    %v5842 = vpop.f32.mrf.mxu0
    %v5843 = vadd.f32 0.0, %v5842
    %v5844 = vpop.f32.mrf.mxu0
    %v5845 = vpop.f32.mrf.mxu0
    %v5846 = vadd.f32 0.0, %v5845
    %v5847 = vpop.f32.mrf.mxu0
    %5848 = vdwg.mxu0
    %5850 = vrot.lane.b32.xlu0 %v5598, 96
    %v5851 = vpop.permute.xlu0 %5850
    %v5853 = vsel %vm827, %v5598, 0
    %v5856 = vsel %vm827, %v5851, 0
    %5858 = vmatprep.subr.bf16.mxu0 0
    %5859 = vmatpush1.bf16.xpose.msra.mxu0 0
    %5860 = vmatprep.subr.bf16.mxu0 0
    %5861 = vmatpush1.bf16.xpose.msra.mxu0 0
    %5862 = vmatprep.subr.bf16.mxu0 0
    %5863 = vmatpush1.bf16.xpose.msra.mxu0 0
    %5864 = vmatprep.subr.bf16.mxu0 0
    %5865 = vmatpush1.bf16.xpose.msra.mxu0 0
    %5866 = vmatprep.subr.bf16.mxu0 0
    %5867 = vmatpush1.bf16.xpose.msra.mxu0 0
    %5868 = vmatprep.subr.bf16.mxu0 0
    %5869 = vmatpush1.bf16.xpose.msra.mxu0 0
    %5870 = vmatprep.subr.bf16.mxu0 0
    %5871 = vmatpush1.bf16.xpose.msra.mxu0 0
    %5872 = vmatprep.subr.bf16.mxu0 0
    %5873 = vmatpush1.bf16.xpose.msra.mxu0 %v5856
    %5874 = vmatprep.subr.bf16.mxu0 0
    %5875 = vmatpush2.bf16.xpose.msra.mxu0 0
    %5876 = vmatprep.subr.bf16.mxu0 0
    %5877 = vmatpush2.bf16.xpose.msra.mxu0 0
    %5878 = vmatprep.subr.bf16.mxu0 0
    %5879 = vmatpush2.bf16.xpose.msra.mxu0 0
    %5880 = vmatprep.subr.bf16.mxu0 0
    %5881 = vmatpush2.bf16.xpose.msra.mxu0 0
    %5882 = vmatprep.subr.bf16.mxu0 0
    %5883 = vmatpush2.bf16.xpose.msra.mxu0 0
    %5884 = vmatprep.subr.bf16.mxu0 0
    %5885 = vmatpush2.bf16.xpose.msra.mxu0 0
    %5886 = vmatprep.subr.bf16.mxu0 0
    %5887 = vmatpush2.bf16.xpose.msra.mxu0 0
    %5888 = vmatprep.subr.bf16.mxu0 0
    %5889 = vmatpush2.bf16.xpose.msra.mxu0 0
    %5890 = vmatprep.mubr.bf16.mxu0 0
    %5891 = vmatmul.mubr.bf16.gmra.mxu0 %v5853
    %v5892 = vpop.f32.mrf.mxu0
    %v5893 = vadd.f32 0.0, %v5892
    %v5894 = vpop.f32.mrf.mxu0
    %v5895 = vpop.f32.mrf.mxu0
    %v5896 = vadd.f32 0.0, %v5895
    %v5897 = vpop.f32.mrf.mxu0
    %5898 = vdwg.mxu0
    %v5899 = vmul.f32 %v5643, 0.25
    %v5900 = vmul.f32 %v5646, 0.25
    %v5901 = vmul.f32 %v5693, 0.25
    %v5902 = vmul.f32 %v5696, 0.25
    %v5903 = vmul.f32 %v5743, 0.25
    %v5904 = vmul.f32 %v5746, 0.25
    %v5905 = vmul.f32 %v5793, 0.25
    %v5906 = vmul.f32 %v5796, 0.25
    %v5907 = vmul.f32 %v5843, 0.25
    %v5908 = vmul.f32 %v5846, 0.25
    %v5909 = vmul.f32 %v5893, 0.25
    %v5910 = vmul.f32 %v5896, 0.25
    %v5911 = vadd.f32 %v5899, %v591
    %v5912 = vadd.f32 %v5900, %v592
    %v5913 = vadd.f32 %v5901, %v591
    %v5914 = vadd.f32 %v5902, %v592
    %v5915 = vadd.f32 %v5903, %v591
    %v5916 = vadd.f32 %v5904, %v592
    %v5917 = vadd.f32 %v5905, %v591
    %v5918 = vadd.f32 %v5906, %v592
    %v5919 = vadd.f32 %v5907, %v591
    %v5920 = vadd.f32 %v5908, %v592
    %v5921 = vadd.f32 %v5909, %v591
    %v5922 = vadd.f32 %v5910, %v592
    %v5923 = vsel %vm827, %v5911, -inf
    %5924 = vmax.xlane.f32.xlu0 %v5923
    %v5925 = vpop.xlane.xlu0 %5924
    %v5926 = vsel %vm827, %v5912, -inf
    %5927 = vmax.xlane.f32.xlu0 %v5926
    %v5928 = vpop.xlane.xlu0 %5927
    %v5929 = vsel %vm827, %v5913, -inf
    %5930 = vmax.xlane.f32.xlu0 %v5929
    %v5931 = vpop.xlane.xlu0 %5930
    %v5932 = vsel %vm827, %v5914, -inf
    %5933 = vmax.xlane.f32.xlu0 %v5932
    %v5934 = vpop.xlane.xlu0 %5933
    %v5935 = vsel %vm827, %v5915, -inf
    %5936 = vmax.xlane.f32.xlu0 %v5935
    %v5937 = vpop.xlane.xlu0 %5936
    %v5938 = vsel %vm827, %v5916, -inf
    %5939 = vmax.xlane.f32.xlu0 %v5938
    %v5940 = vpop.xlane.xlu0 %5939
    %v5941 = vsel %vm827, %v5917, -inf
    %5942 = vmax.xlane.f32.xlu0 %v5941
    %v5943 = vpop.xlane.xlu0 %5942
    %v5944 = vsel %vm827, %v5918, -inf
    %5945 = vmax.xlane.f32.xlu0 %v5944
    %v5946 = vpop.xlane.xlu0 %5945
    %v5947 = vsel %vm827, %v5919, -inf
    %5948 = vmax.xlane.f32.xlu0 %v5947
    %v5949 = vpop.xlane.xlu0 %5948
    %v5950 = vsel %vm827, %v5920, -inf
    %5951 = vmax.xlane.f32.xlu0 %v5950
    %v5952 = vpop.xlane.xlu0 %5951
    %v5953 = vsel %vm827, %v5921, -inf
    %5954 = vmax.xlane.f32.xlu0 %v5953
    %v5955 = vpop.xlane.xlu0 %5954
    %v5956 = vsel %vm827, %v5922, -inf
    %5957 = vmax.xlane.f32.xlu0 %v5956
    %v5958 = vpop.xlane.xlu0 %5957
    %v5959 = vsub.f32 %v5911, %v5925
    %v5960 = vsub.f32 %v5912, %v5928
    %v5961 = vsub.f32 %v5913, %v5931
    %v5962 = vsub.f32 %v5914, %v5934
    %v5963 = vsub.f32 %v5915, %v5937
    %v5964 = vsub.f32 %v5916, %v5940
    %v5965 = vsub.f32 %v5917, %v5943
    %v5966 = vsub.f32 %v5918, %v5946
    %v5967 = vsub.f32 %v5919, %v5949
    %v5968 = vsub.f32 %v5920, %v5952
    %v5969 = vsub.f32 %v5921, %v5955
    %v5970 = vsub.f32 %v5922, %v5958
    %v5971 = vmul.f32 %v5959, 1.442695
    %v5972 = vpow.pop %v5971
    %v5973 = vmul.f32 %v5960, 1.442695
    %v5974 = vpow.pop %v5973
    %v5975 = vmul.f32 %v5961, 1.442695
    %v5976 = vpow.pop %v5975
    %v5977 = vmul.f32 %v5962, 1.442695
    %v5978 = vpow.pop %v5977
    %v5979 = vmul.f32 %v5963, 1.442695
    %v5980 = vpow.pop %v5979
    %v5981 = vmul.f32 %v5964, 1.442695
    %v5982 = vpow.pop %v5981
    %v5983 = vmul.f32 %v5965, 1.442695
    %v5984 = vpow.pop %v5983
    %v5985 = vmul.f32 %v5966, 1.442695
    %v5986 = vpow.pop %v5985
    %v5987 = vmul.f32 %v5967, 1.442695
    %v5988 = vpow.pop %v5987
    %v5989 = vmul.f32 %v5968, 1.442695
    %v5990 = vpow.pop %v5989
    %v5991 = vmul.f32 %v5969, 1.442695
    %v5992 = vpow.pop %v5991
    %v5993 = vmul.f32 %v5970, 1.442695
    %v5994 = vpow.pop %v5993
    %v5995 = vsel %vm827, %v5972, 0.0
    %5996 = vadd.xlane.f32.xlu0 %v5995
    %v5997 = vpop.xlane.xlu0 %5996
    %v5998 = vsel %vm827, %v5974, 0.0
    %5999 = vadd.xlane.f32.xlu0 %v5998
    %v6000 = vpop.xlane.xlu0 %5999
    %v6001 = vsel %vm827, %v5976, 0.0
    %6002 = vadd.xlane.f32.xlu0 %v6001
    %v6003 = vpop.xlane.xlu0 %6002
    %v6004 = vsel %vm827, %v5978, 0.0
    %6005 = vadd.xlane.f32.xlu0 %v6004
    %v6006 = vpop.xlane.xlu0 %6005
    %v6007 = vsel %vm827, %v5980, 0.0
    %6008 = vadd.xlane.f32.xlu0 %v6007
    %v6009 = vpop.xlane.xlu0 %6008
    %v6010 = vsel %vm827, %v5982, 0.0
    %6011 = vadd.xlane.f32.xlu0 %v6010
    %v6012 = vpop.xlane.xlu0 %6011
    %v6013 = vsel %vm827, %v5984, 0.0
    %6014 = vadd.xlane.f32.xlu0 %v6013
    %v6015 = vpop.xlane.xlu0 %6014
    %v6016 = vsel %vm827, %v5986, 0.0
    %6017 = vadd.xlane.f32.xlu0 %v6016
    %v6018 = vpop.xlane.xlu0 %6017
    %v6019 = vsel %vm827, %v5988, 0.0
    %6020 = vadd.xlane.f32.xlu0 %v6019
    %v6021 = vpop.xlane.xlu0 %6020
    %v6022 = vsel %vm827, %v5990, 0.0
    %6023 = vadd.xlane.f32.xlu0 %v6022
    %v6024 = vpop.xlane.xlu0 %6023
    %v6025 = vsel %vm827, %v5992, 0.0
    %6026 = vadd.xlane.f32.xlu0 %v6025
    %v6027 = vpop.xlane.xlu0 %6026
    %v6028 = vsel %vm827, %v5994, 0.0
    %6029 = vadd.xlane.f32.xlu0 %v6028
    %v6030 = vpop.xlane.xlu0 %6029
    %v6031 = vrcp.pop %v5997
    %v6032 = vrcp.pop %v6000
    %v6033 = vrcp.pop %v6003
    %v6034 = vrcp.pop %v6006
    %v6035 = vrcp.pop %v6009
    %v6036 = vrcp.pop %v6012
    %v6037 = vrcp.pop %v6015
    %v6038 = vrcp.pop %v6018
    %v6039 = vrcp.pop %v6021
    %v6040 = vrcp.pop %v6024
    %v6041 = vrcp.pop %v6027
    %v6042 = vrcp.pop %v6030
    %v6043 = vmul.f32 %v5972, %v6031
    %v6044 = vmul.f32 %v5974, %v6032
    %v6045 = vmul.f32 %v5976, %v6033
    %v6046 = vmul.f32 %v5978, %v6034
    %v6047 = vmul.f32 %v5980, %v6035
    %v6048 = vmul.f32 %v5982, %v6036
    %v6049 = vmul.f32 %v5984, %v6037
    %v6050 = vmul.f32 %v5986, %v6038
    %v6051 = vmul.f32 %v5988, %v6039
    %v6052 = vmul.f32 %v5990, %v6040
    %v6053 = vmul.f32 %v5992, %v6041
    %v6054 = vmul.f32 %v5994, %v6042
    %v6055 = vpack.c.bf16 %v6044, %v6043
    %v6056 = vpack.c.bf16 %v6046, %v6045
    %v6057 = vpack.c.bf16 %v6048, %v6047
    %v6058 = vpack.c.bf16 %v6050, %v6049
    %v6059 = vpack.c.bf16 %v6052, %v6051
    %v6060 = vpack.c.bf16 %v6054, %v6053
    %6061 = vrot.lane.b32.xlu0 %v5593, 64
    %v6062 = vpop.permute.xlu0 %6061
    %v6065 = vsel %vm827, %v6055, 0
    %6067 = vmatprep.subr.bf16.mxu0 0
    %6068 = vmatpush1.bf16.msra.mxu0 0
    %6069 = vmatprep.subr.bf16.mxu0 0
    %6070 = vmatpush1.bf16.msra.mxu0 0
    %6071 = vmatprep.subr.bf16.mxu0 0
    %6072 = vmatpush1.bf16.msra.mxu0 0
    %6073 = vmatprep.subr.bf16.mxu0 0
    %6074 = vmatpush1.bf16.msra.mxu0 0
    %6075 = vmatprep.subr.bf16.mxu0 0
    %6076 = vmatpush1.bf16.msra.mxu0 0
    %6077 = vmatprep.subr.bf16.mxu0 0
    %6078 = vmatpush1.bf16.msra.mxu0 0
    %6079 = vmatprep.subr.bf16.mxu0 0
    %6080 = vmatpush1.bf16.msra.mxu0 0
    %6081 = vmatprep.subr.bf16.mxu0 0
    %6082 = vmatpush1.bf16.msra.mxu0 %v6062
    %6083 = vmatprep.subr.bf16.mxu0 0
    %6084 = vmatpush2.bf16.msra.mxu0 0
    %6085 = vmatprep.subr.bf16.mxu0 0
    %6086 = vmatpush2.bf16.msra.mxu0 0
    %6087 = vmatprep.subr.bf16.mxu0 0
    %6088 = vmatpush2.bf16.msra.mxu0 0
    %6089 = vmatprep.subr.bf16.mxu0 0
    %6090 = vmatpush2.bf16.msra.mxu0 0
    %6091 = vmatprep.subr.bf16.mxu0 0
    %6092 = vmatpush2.bf16.msra.mxu0 0
    %6093 = vmatprep.subr.bf16.mxu0 0
    %6094 = vmatpush2.bf16.msra.mxu0 0
    %6095 = vmatprep.subr.bf16.mxu0 0
    %6096 = vmatpush2.bf16.msra.mxu0 0
    %6097 = vmatprep.subr.bf16.mxu0 0
    %6098 = vmatpush2.bf16.msra.mxu0 0
    %6099 = vmatprep.mubr.bf16.mxu0 0
    %6100 = vmatmul.mubr.bf16.gmra.mxu0 %v6065
    %v6101 = vpop.f32.mrf.mxu0
    %v6102 = vadd.f32 0.0, %v6101
    %v6103 = vpop.f32.mrf.mxu0
    %v6104 = vpop.f32.mrf.mxu0
    %v6105 = vadd.f32 0.0, %v6104
    %v6106 = vpop.f32.mrf.mxu0
    %6107 = vdwg.mxu0
    %6108 = vrot.lane.b32.xlu0 %v5594, 64
    %v6109 = vpop.permute.xlu0 %6108
    %v6112 = vsel %vm827, %v6056, 0
    %6114 = vmatprep.subr.bf16.mxu0 0
    %6115 = vmatpush1.bf16.msra.mxu0 0
    %6116 = vmatprep.subr.bf16.mxu0 0
    %6117 = vmatpush1.bf16.msra.mxu0 0
    %6118 = vmatprep.subr.bf16.mxu0 0
    %6119 = vmatpush1.bf16.msra.mxu0 0
    %6120 = vmatprep.subr.bf16.mxu0 0
    %6121 = vmatpush1.bf16.msra.mxu0 0
    %6122 = vmatprep.subr.bf16.mxu0 0
    %6123 = vmatpush1.bf16.msra.mxu0 0
    %6124 = vmatprep.subr.bf16.mxu0 0
    %6125 = vmatpush1.bf16.msra.mxu0 0
    %6126 = vmatprep.subr.bf16.mxu0 0
    %6127 = vmatpush1.bf16.msra.mxu0 0
    %6128 = vmatprep.subr.bf16.mxu0 0
    %6129 = vmatpush1.bf16.msra.mxu0 %v6109
    %6130 = vmatprep.subr.bf16.mxu0 0
    %6131 = vmatpush2.bf16.msra.mxu0 0
    %6132 = vmatprep.subr.bf16.mxu0 0
    %6133 = vmatpush2.bf16.msra.mxu0 0
    %6134 = vmatprep.subr.bf16.mxu0 0
    %6135 = vmatpush2.bf16.msra.mxu0 0
    %6136 = vmatprep.subr.bf16.mxu0 0
    %6137 = vmatpush2.bf16.msra.mxu0 0
    %6138 = vmatprep.subr.bf16.mxu0 0
    %6139 = vmatpush2.bf16.msra.mxu0 0
    %6140 = vmatprep.subr.bf16.mxu0 0
    %6141 = vmatpush2.bf16.msra.mxu0 0
    %6142 = vmatprep.subr.bf16.mxu0 0
    %6143 = vmatpush2.bf16.msra.mxu0 0
    %6144 = vmatprep.subr.bf16.mxu0 0
    %6145 = vmatpush2.bf16.msra.mxu0 0
    %6146 = vmatprep.mubr.bf16.mxu0 0
    %6147 = vmatmul.mubr.bf16.gmra.mxu0 %v6112
    %v6148 = vpop.f32.mrf.mxu0
    %v6149 = vadd.f32 0.0, %v6148
    %v6150 = vpop.f32.mrf.mxu0
    %v6151 = vpop.f32.mrf.mxu0
    %v6152 = vadd.f32 0.0, %v6151
    %v6153 = vpop.f32.mrf.mxu0
    %6154 = vdwg.mxu0
    %6155 = vrot.lane.b32.xlu0 %v5595, 64
    %v6156 = vpop.permute.xlu0 %6155
    %v6159 = vsel %vm827, %v6057, 0
    %6161 = vmatprep.subr.bf16.mxu0 0
    %6162 = vmatpush1.bf16.msra.mxu0 0
    %6163 = vmatprep.subr.bf16.mxu0 0
    %6164 = vmatpush1.bf16.msra.mxu0 0
    %6165 = vmatprep.subr.bf16.mxu0 0
    %6166 = vmatpush1.bf16.msra.mxu0 0
    %6167 = vmatprep.subr.bf16.mxu0 0
    %6168 = vmatpush1.bf16.msra.mxu0 0
    %6169 = vmatprep.subr.bf16.mxu0 0
    %6170 = vmatpush1.bf16.msra.mxu0 0
    %6171 = vmatprep.subr.bf16.mxu0 0
    %6172 = vmatpush1.bf16.msra.mxu0 0
    %6173 = vmatprep.subr.bf16.mxu0 0
    %6174 = vmatpush1.bf16.msra.mxu0 0
    %6175 = vmatprep.subr.bf16.mxu0 0
    %6176 = vmatpush1.bf16.msra.mxu0 %v6156
    %6177 = vmatprep.subr.bf16.mxu0 0
    %6178 = vmatpush2.bf16.msra.mxu0 0
    %6179 = vmatprep.subr.bf16.mxu0 0
    %6180 = vmatpush2.bf16.msra.mxu0 0
    %6181 = vmatprep.subr.bf16.mxu0 0
    %6182 = vmatpush2.bf16.msra.mxu0 0
    %6183 = vmatprep.subr.bf16.mxu0 0
    %6184 = vmatpush2.bf16.msra.mxu0 0
    %6185 = vmatprep.subr.bf16.mxu0 0
    %6186 = vmatpush2.bf16.msra.mxu0 0
    %6187 = vmatprep.subr.bf16.mxu0 0
    %6188 = vmatpush2.bf16.msra.mxu0 0
    %6189 = vmatprep.subr.bf16.mxu0 0
    %6190 = vmatpush2.bf16.msra.mxu0 0
    %6191 = vmatprep.subr.bf16.mxu0 0
    %6192 = vmatpush2.bf16.msra.mxu0 0
    %6193 = vmatprep.mubr.bf16.mxu0 0
    %6194 = vmatmul.mubr.bf16.gmra.mxu0 %v6159
    %v6195 = vpop.f32.mrf.mxu0
    %v6196 = vadd.f32 0.0, %v6195
    %v6197 = vpop.f32.mrf.mxu0
    %v6198 = vpop.f32.mrf.mxu0
    %v6199 = vadd.f32 0.0, %v6198
    %v6200 = vpop.f32.mrf.mxu0
    %6201 = vdwg.mxu0
    %6202 = vrot.lane.b32.xlu0 %v5596, 64
    %v6203 = vpop.permute.xlu0 %6202
    %v6206 = vsel %vm827, %v6058, 0
    %6208 = vmatprep.subr.bf16.mxu0 0
    %6209 = vmatpush1.bf16.msra.mxu0 0
    %6210 = vmatprep.subr.bf16.mxu0 0
    %6211 = vmatpush1.bf16.msra.mxu0 0
    %6212 = vmatprep.subr.bf16.mxu0 0
    %6213 = vmatpush1.bf16.msra.mxu0 0
    %6214 = vmatprep.subr.bf16.mxu0 0
    %6215 = vmatpush1.bf16.msra.mxu0 0
    %6216 = vmatprep.subr.bf16.mxu0 0
    %6217 = vmatpush1.bf16.msra.mxu0 0
    %6218 = vmatprep.subr.bf16.mxu0 0
    %6219 = vmatpush1.bf16.msra.mxu0 0
    %6220 = vmatprep.subr.bf16.mxu0 0
    %6221 = vmatpush1.bf16.msra.mxu0 0
    %6222 = vmatprep.subr.bf16.mxu0 0
    %6223 = vmatpush1.bf16.msra.mxu0 %v6203
    %6224 = vmatprep.subr.bf16.mxu0 0
    %6225 = vmatpush2.bf16.msra.mxu0 0
    %6226 = vmatprep.subr.bf16.mxu0 0
    %6227 = vmatpush2.bf16.msra.mxu0 0
    %6228 = vmatprep.subr.bf16.mxu0 0
    %6229 = vmatpush2.bf16.msra.mxu0 0
    %6230 = vmatprep.subr.bf16.mxu0 0
    %6231 = vmatpush2.bf16.msra.mxu0 0
    %6232 = vmatprep.subr.bf16.mxu0 0
    %6233 = vmatpush2.bf16.msra.mxu0 0
    %6234 = vmatprep.subr.bf16.mxu0 0
    %6235 = vmatpush2.bf16.msra.mxu0 0
    %6236 = vmatprep.subr.bf16.mxu0 0
    %6237 = vmatpush2.bf16.msra.mxu0 0
    %6238 = vmatprep.subr.bf16.mxu0 0
    %6239 = vmatpush2.bf16.msra.mxu0 0
    %6240 = vmatprep.mubr.bf16.mxu0 0
    %6241 = vmatmul.mubr.bf16.gmra.mxu0 %v6206
    %v6242 = vpop.f32.mrf.mxu0
    %v6243 = vadd.f32 0.0, %v6242
    %v6244 = vpop.f32.mrf.mxu0
    %v6245 = vpop.f32.mrf.mxu0
    %v6246 = vadd.f32 0.0, %v6245
    %v6247 = vpop.f32.mrf.mxu0
    %6248 = vdwg.mxu0
    %6249 = vrot.lane.b32.xlu0 %v5597, 64
    %v6250 = vpop.permute.xlu0 %6249
    %v6253 = vsel %vm827, %v6059, 0
    %6255 = vmatprep.subr.bf16.mxu0 0
    %6256 = vmatpush1.bf16.msra.mxu0 0
    %6257 = vmatprep.subr.bf16.mxu0 0
    %6258 = vmatpush1.bf16.msra.mxu0 0
    %6259 = vmatprep.subr.bf16.mxu0 0
    %6260 = vmatpush1.bf16.msra.mxu0 0
    %6261 = vmatprep.subr.bf16.mxu0 0
    %6262 = vmatpush1.bf16.msra.mxu0 0
    %6263 = vmatprep.subr.bf16.mxu0 0
    %6264 = vmatpush1.bf16.msra.mxu0 0
    %6265 = vmatprep.subr.bf16.mxu0 0
    %6266 = vmatpush1.bf16.msra.mxu0 0
    %6267 = vmatprep.subr.bf16.mxu0 0
    %6268 = vmatpush1.bf16.msra.mxu0 0
    %6269 = vmatprep.subr.bf16.mxu0 0
    %6270 = vmatpush1.bf16.msra.mxu0 %v6250
    %6271 = vmatprep.subr.bf16.mxu0 0
    %6272 = vmatpush2.bf16.msra.mxu0 0
    %6273 = vmatprep.subr.bf16.mxu0 0
    %6274 = vmatpush2.bf16.msra.mxu0 0
    %6275 = vmatprep.subr.bf16.mxu0 0
    %6276 = vmatpush2.bf16.msra.mxu0 0
    %6277 = vmatprep.subr.bf16.mxu0 0
    %6278 = vmatpush2.bf16.msra.mxu0 0
    %6279 = vmatprep.subr.bf16.mxu0 0
    %6280 = vmatpush2.bf16.msra.mxu0 0
    %6281 = vmatprep.subr.bf16.mxu0 0
    %6282 = vmatpush2.bf16.msra.mxu0 0
    %6283 = vmatprep.subr.bf16.mxu0 0
    %6284 = vmatpush2.bf16.msra.mxu0 0
    %6285 = vmatprep.subr.bf16.mxu0 0
    %6286 = vmatpush2.bf16.msra.mxu0 0
    %6287 = vmatprep.mubr.bf16.mxu0 0
    %6288 = vmatmul.mubr.bf16.gmra.mxu0 %v6253
    %v6289 = vpop.f32.mrf.mxu0
    %v6290 = vadd.f32 0.0, %v6289
    %v6291 = vpop.f32.mrf.mxu0
    %v6292 = vpop.f32.mrf.mxu0
    %v6293 = vadd.f32 0.0, %v6292
    %v6294 = vpop.f32.mrf.mxu0
    %6295 = vdwg.mxu0
    %6296 = vrot.lane.b32.xlu0 %v5598, 64
    %v6297 = vpop.permute.xlu0 %6296
    %v6300 = vsel %vm827, %v6060, 0
    %6302 = vmatprep.subr.bf16.mxu0 0
    %6303 = vmatpush1.bf16.msra.mxu0 0
    %6304 = vmatprep.subr.bf16.mxu0 0
    %6305 = vmatpush1.bf16.msra.mxu0 0
    %6306 = vmatprep.subr.bf16.mxu0 0
    %6307 = vmatpush1.bf16.msra.mxu0 0
    %6308 = vmatprep.subr.bf16.mxu0 0
    %6309 = vmatpush1.bf16.msra.mxu0 0
    %6310 = vmatprep.subr.bf16.mxu0 0
    %6311 = vmatpush1.bf16.msra.mxu0 0
    %6312 = vmatprep.subr.bf16.mxu0 0
    %6313 = vmatpush1.bf16.msra.mxu0 0
    %6314 = vmatprep.subr.bf16.mxu0 0
    %6315 = vmatpush1.bf16.msra.mxu0 0
    %6316 = vmatprep.subr.bf16.mxu0 0
    %6317 = vmatpush1.bf16.msra.mxu0 %v6297
    %6318 = vmatprep.subr.bf16.mxu0 0
    %6319 = vmatpush2.bf16.msra.mxu0 0
    %6320 = vmatprep.subr.bf16.mxu0 0
    %6321 = vmatpush2.bf16.msra.mxu0 0
    %6322 = vmatprep.subr.bf16.mxu0 0
    %6323 = vmatpush2.bf16.msra.mxu0 0
    %6324 = vmatprep.subr.bf16.mxu0 0
    %6325 = vmatpush2.bf16.msra.mxu0 0
    %6326 = vmatprep.subr.bf16.mxu0 0
    %6327 = vmatpush2.bf16.msra.mxu0 0
    %6328 = vmatprep.subr.bf16.mxu0 0
    %6329 = vmatpush2.bf16.msra.mxu0 0
    %6330 = vmatprep.subr.bf16.mxu0 0
    %6331 = vmatpush2.bf16.msra.mxu0 0
    %6332 = vmatprep.subr.bf16.mxu0 0
    %6333 = vmatpush2.bf16.msra.mxu0 0
    %6334 = vmatprep.mubr.bf16.mxu0 0
    %6335 = vmatmul.mubr.bf16.gmra.mxu0 %v6300
    %v6336 = vpop.f32.mrf.mxu0
    %v6337 = vadd.f32 0.0, %v6336
    %v6338 = vpop.f32.mrf.mxu0
    %v6339 = vpop.f32.mrf.mxu0
    %v6340 = vadd.f32 0.0, %v6339
    %v6341 = vpop.f32.mrf.mxu0
    %6342 = vdwg.mxu0
    %6349 = vrot.lane.b32.xlu0 %v6243, 16
    %v6350 = vpop.permute.xlu0 %6349
    %6351 = vrot.lane.b32.xlu0 %v6246, 16
    %v6352 = vpop.permute.xlu0 %6351
    %6353 = vrot.lane.b32.xlu0 %v6290, 16
    %v6354 = vpop.permute.xlu0 %6353
    %6355 = vrot.lane.b32.xlu0 %v6293, 16
    %v6356 = vpop.permute.xlu0 %6355
    %6357 = vrot.lane.b32.xlu0 %v6337, 16
    %v6358 = vpop.permute.xlu0 %6357
    %6359 = vrot.lane.b32.xlu0 %v6340, 16
    %v6360 = vpop.permute.xlu0 %6359
    %v6367 = vsel %vm827, %v6102, %v6350
    %v6368 = vsel %vm827, %v6105, %v6352
    %v6369 = vsel %vm827, %v6149, %v6354
    %v6370 = vsel %vm827, %v6152, %v6356
    %v6371 = vsel %vm827, %v6196, %v6358
    %v6372 = vsel %vm827, %v6199, %v6360
    %v6373 = vpack.c.bf16 %v6368, %v6367
    %v6374 = vpack.c.bf16 %v6370, %v6369
    %v6375 = vpack.c.bf16 %v6372, %v6371
    %s6376 = scalar_lea.vmem %s31, 48
    %v6377 = vld [vmem:[%s6376] sm:$0xf]
    %v6378 = vld [vmem:[%s6376 + $0x4] sm:$0xf]
    %v6379 = vld [vmem:[%s6376 + $0x8] sm:$0xf]
    %v6380 = vld [vmem:[%s6376 + $0xc] sm:$0xf]
    %v6385 = vunpack.c.l.b16 %v6377
    %v6386 = vunpack.c.l.b16 %v6378
    %v6387 = vunpack.c.l.b16 %v6379
    %v6388 = vunpack.c.l.b16 %v6380
    %v6389 = vpack.c.b16 %v6386, %v6385
    %v6390 = vpack.c.b16 %v6388, %v6387
    %v6394 = vsel %vm253, %v6373, 0
    %v6397 = vsel %vm253, %v6374, 0
    %v6400 = vsel %vm253, %v6375, 0
    %6402 = vmatprep.subr.bf16.mxu0 0
    %6403 = vmatpush1.bf16.msra.mxu0 0
    %6404 = vmatprep.subr.bf16.mxu0 0
    %6405 = vmatpush1.bf16.msra.mxu0 0
    %6406 = vmatprep.subr.bf16.mxu0 0
    %6407 = vmatpush1.bf16.msra.mxu0 0
    %6408 = vmatprep.subr.bf16.mxu0 0
    %6409 = vmatpush1.bf16.msra.mxu0 0
    %6410 = vmatprep.subr.bf16.mxu0 0
    %6411 = vmatpush1.bf16.msra.mxu0 0
    %6412 = vmatprep.subr.bf16.mxu0 0
    %6413 = vmatpush1.bf16.msra.mxu0 0
    %6414 = vmatprep.subr.bf16.mxu0 0
    %6415 = vmatpush1.bf16.msra.mxu0 %v6390
    %6416 = vmatprep.subr.bf16.mxu0 0
    %6417 = vmatpush1.bf16.msra.mxu0 %v6389
    %6418 = vmatprep.subr.bf16.mxu0 0
    %6419 = vmatpush2.bf16.msra.mxu0 0
    %6420 = vmatprep.subr.bf16.mxu0 0
    %6421 = vmatpush2.bf16.msra.mxu0 0
    %6422 = vmatprep.subr.bf16.mxu0 0
    %6423 = vmatpush2.bf16.msra.mxu0 0
    %6424 = vmatprep.subr.bf16.mxu0 0
    %6425 = vmatpush2.bf16.msra.mxu0 0
    %6426 = vmatprep.subr.bf16.mxu0 0
    %6427 = vmatpush2.bf16.msra.mxu0 0
    %6428 = vmatprep.subr.bf16.mxu0 0
    %6429 = vmatpush2.bf16.msra.mxu0 0
    %6430 = vmatprep.subr.bf16.mxu0 0
    %6431 = vmatpush2.bf16.msra.mxu0 0
    %6432 = vmatprep.subr.bf16.mxu0 0
    %6433 = vmatpush2.bf16.msra.mxu0 0
    %6434 = vmatprep.mubr.bf16.mxu0 0
    %6435 = vmatmul.mubr.bf16.gmra.mxu0 %v6394
    %v6436 = vpop.f32.mrf.mxu0
    %v6437 = vadd.f32 0.0, %v6436
    %v6438 = vpop.f32.mrf.mxu0
    %v6439 = vpop.f32.mrf.mxu0
    %v6440 = vadd.f32 0.0, %v6439
    %v6441 = vpop.f32.mrf.mxu0
    %6442 = vmatprep.mubr.bf16.mxu0 0
    %6443 = vmatmul.mubr.bf16.gmra.mxu0 %v6397
    %v6444 = vpop.f32.mrf.mxu0
    %v6445 = vadd.f32 0.0, %v6444
    %v6446 = vpop.f32.mrf.mxu0
    %v6447 = vpop.f32.mrf.mxu0
    %v6448 = vadd.f32 0.0, %v6447
    %v6449 = vpop.f32.mrf.mxu0
    %6450 = vmatprep.mubr.bf16.mxu0 0
    %6451 = vmatmul.mubr.bf16.gmra.mxu0 %v6400
    %v6452 = vpop.f32.mrf.mxu0
    %v6453 = vadd.f32 0.0, %v6452
    %v6454 = vpop.f32.mrf.mxu0
    %v6455 = vpop.f32.mrf.mxu0
    %v6456 = vadd.f32 0.0, %v6455
    %v6457 = vpop.f32.mrf.mxu0
    %6458 = vdwg.mxu0
    %v6459 = vadd.f32 %v5363, %v6437
    %v6460 = vadd.f32 %v5364, %v6440
    %v6461 = vadd.f32 %v5365, %v6445
    %v6462 = vadd.f32 %v5366, %v6448
    %v6463 = vadd.f32 %v5367, %v6453
    %v6464 = vadd.f32 %v5368, %v6456
    %s6465 = scalar_lea.vmem %s33, 3
    %v6466 = vld [vmem:[%s6465] sm:$0x1]
    %v6468 = vlaneseq
    %v6469 = vshrl.u32 %v6468, 7
    %v6470 = vsub.s32 0, %v6469
    %v6471 = vrot.slane %v6466, %v6470
    %v6473 = vadd.f32 %v6459, %v6471
    %v6474 = vadd.f32 %v6460, %v6471
    %v6475 = vadd.f32 %v6461, %v6471
    %v6476 = vadd.f32 %v6462, %v6471
    %v6477 = vadd.f32 %v6463, %v6471
    %v6478 = vadd.f32 %v6464, %v6471
    %s6479 = scalar_lea.vmem %s35, 3
    %v6480 = vld [vmem:[%s6479] sm:$0x1]
    %s6481 = scalar_lea.vmem %s37, 3
    %v6482 = vld [vmem:[%s6481] sm:$0x1]
    %v6483 = vsel %vm253, %v6473, 0.0
    %6484 = vadd.xlane.f32.xlu0 %v6483
    %v6485 = vpop.xlane.xlu0 %6484
    %v6486 = vsel %vm253, %v6474, 0.0
    %6487 = vadd.xlane.f32.xlu0 %v6486
    %v6488 = vpop.xlane.xlu0 %6487
    %v6489 = vsel %vm253, %v6475, 0.0
    %6490 = vadd.xlane.f32.xlu0 %v6489
    %v6491 = vpop.xlane.xlu0 %6490
    %v6492 = vsel %vm253, %v6476, 0.0
    %6493 = vadd.xlane.f32.xlu0 %v6492
    %v6494 = vpop.xlane.xlu0 %6493
    %v6495 = vsel %vm253, %v6477, 0.0
    %6496 = vadd.xlane.f32.xlu0 %v6495
    %v6497 = vpop.xlane.xlu0 %6496
    %v6498 = vsel %vm253, %v6478, 0.0
    %6499 = vadd.xlane.f32.xlu0 %v6498
    %v6500 = vpop.xlane.xlu0 %6499
    %v6501 = vmul.f32 %v6485, %v349
    %v6502 = vmul.f32 %v6488, %v349
    %v6503 = vmul.f32 %v6491, %v349
    %v6504 = vmul.f32 %v6494, %v349
    %v6505 = vmul.f32 %v6497, %v349
    %v6506 = vmul.f32 %v6500, %v349
    %v6507 = vsub.f32 %v6473, %v6501
    %v6508 = vsub.f32 %v6474, %v6502
    %v6509 = vsub.f32 %v6475, %v6503
    %v6510 = vsub.f32 %v6476, %v6504
    %v6511 = vsub.f32 %v6477, %v6505
    %v6512 = vsub.f32 %v6478, %v6506
    %v6513 = vmul.f32 %v6507, %v6507
    %v6514 = vmul.f32 %v6508, %v6508
    %v6515 = vmul.f32 %v6509, %v6509
    %v6516 = vmul.f32 %v6510, %v6510
    %v6517 = vmul.f32 %v6511, %v6511
    %v6518 = vmul.f32 %v6512, %v6512
    %v6519 = vsel %vm253, %v6513, 0.0
    %6520 = vadd.xlane.f32.xlu0 %v6519
    %v6521 = vpop.xlane.xlu0 %6520
    %v6522 = vsel %vm253, %v6514, 0.0
    %6523 = vadd.xlane.f32.xlu0 %v6522
    %v6524 = vpop.xlane.xlu0 %6523
    %v6525 = vsel %vm253, %v6515, 0.0
    %6526 = vadd.xlane.f32.xlu0 %v6525
    %v6527 = vpop.xlane.xlu0 %6526
    %v6528 = vsel %vm253, %v6516, 0.0
    %6529 = vadd.xlane.f32.xlu0 %v6528
    %v6530 = vpop.xlane.xlu0 %6529
    %v6531 = vsel %vm253, %v6517, 0.0
    %6532 = vadd.xlane.f32.xlu0 %v6531
    %v6533 = vpop.xlane.xlu0 %6532
    %v6534 = vsel %vm253, %v6518, 0.0
    %6535 = vadd.xlane.f32.xlu0 %v6534
    %v6536 = vpop.xlane.xlu0 %6535
    %v6537 = vmul.f32 %v6521, %v349
    %v6538 = vmul.f32 %v6524, %v349
    %v6539 = vmul.f32 %v6527, %v349
    %v6540 = vmul.f32 %v6530, %v349
    %v6541 = vmul.f32 %v6533, %v349
    %v6542 = vmul.f32 %v6536, %v349
    %v6543 = vadd.f32 %v6537, 1e-05
    %v6544 = vadd.f32 %v6538, 1e-05
    %v6545 = vadd.f32 %v6539, 1e-05
    %v6546 = vadd.f32 %v6540, 1e-05
    %v6547 = vadd.f32 %v6541, 1e-05
    %v6548 = vadd.f32 %v6542, 1e-05
    %v6549 = vrsqrt.pop %v6543
    %v6550 = vrsqrt.pop %v6544
    %v6551 = vrsqrt.pop %v6545
    %v6552 = vrsqrt.pop %v6546
    %v6553 = vrsqrt.pop %v6547
    %v6554 = vrsqrt.pop %v6548
    %v6555 = vmul.f32 %v6507, %v6549
    %v6556 = vmul.f32 %v6508, %v6550
    %v6557 = vmul.f32 %v6509, %v6551
    %v6558 = vmul.f32 %v6510, %v6552
    %v6559 = vmul.f32 %v6511, %v6553
    %v6560 = vmul.f32 %v6512, %v6554
    %v6562 = vlaneseq
    %v6563 = vshrl.u32 %v6562, 7
    %v6564 = vsub.s32 0, %v6563
    %v6565 = vrot.slane %v6480, %v6564
    %v6567 = vmul.f32 %v6555, %v6565
    %v6568 = vmul.f32 %v6556, %v6565
    %v6569 = vmul.f32 %v6557, %v6565
    %v6570 = vmul.f32 %v6558, %v6565
    %v6571 = vmul.f32 %v6559, %v6565
    %v6572 = vmul.f32 %v6560, %v6565
    %v6574 = vlaneseq
    %v6575 = vshrl.u32 %v6574, 7
    %v6576 = vsub.s32 0, %v6575
    %v6577 = vrot.slane %v6482, %v6576
    %v6579 = vadd.f32 %v6567, %v6577
    %v6580 = vadd.f32 %v6568, %v6577
    %v6581 = vadd.f32 %v6569, %v6577
    %v6582 = vadd.f32 %v6570, %v6577
    %v6583 = vadd.f32 %v6571, %v6577
    %v6584 = vadd.f32 %v6572, %v6577
    %v6585 = vpack.c.bf16 %v6580, %v6579
    %v6586 = vpack.c.bf16 %v6582, %v6581
    %v6587 = vpack.c.bf16 %v6584, %v6583
    %s6588 = scalar_lea.vmem %s39, 96
    %v6589 = vld [vmem:[%s6588] sm:$0xff]
    %v6590 = vld [vmem:[%s6588 + $0x8] sm:$0xff]
    %v6591 = vld [vmem:[%s6588 + $0x10] sm:$0xff]
    %v6592 = vld [vmem:[%s6588 + $0x18] sm:$0xff]
    %s6593 = scalar_lea.vmem %s41, 6
    %v6594 = vld [vmem:[%s6593] sm:$0x3]
    %v6596 = vlaneseq
    %v6597 = vshrl.u32 %v6596, 7
    %v6598 = vsub.s32 0, %v6597
    %v6599 = vrot.slane %v6594, %v6598
    %v6600 = vlaneseq
    %v6601 = vshrl.u32 %v6600, 7
    %v6602 = vsub.s32 1, %v6601
    %v6603 = vrot.slane %v6594, %v6602
    %v6610 = vunpack.c.l.b16 %v6589
    %v6611 = vunpack.c.h.b16 %v6589
    %v6612 = vunpack.c.l.b16 %v6590
    %v6613 = vunpack.c.h.b16 %v6590
    %v6614 = vunpack.c.l.b16 %v6591
    %v6615 = vunpack.c.h.b16 %v6591
    %v6616 = vunpack.c.l.b16 %v6592
    %v6617 = vunpack.c.h.b16 %v6592
    %v6618 = vpack.c.b16 %v6612, %v6610
    %v6619 = vpack.c.b16 %v6613, %v6611
    %v6620 = vpack.c.b16 %v6616, %v6614
    %v6621 = vpack.c.b16 %v6617, %v6615
    %v6627 = vsel %vm253, %v6585, 0
    %v6630 = vsel %vm253, %v6586, 0
    %v6633 = vsel %vm253, %v6587, 0
    %6635 = vmatprep.subr.bf16.mxu0 0
    %6636 = vmatpush1.bf16.msra.mxu0 0
    %6637 = vmatprep.subr.bf16.mxu0 0
    %6638 = vmatpush1.bf16.msra.mxu0 0
    %6639 = vmatprep.subr.bf16.mxu0 0
    %6640 = vmatpush1.bf16.msra.mxu0 0
    %6641 = vmatprep.subr.bf16.mxu0 0
    %6642 = vmatpush1.bf16.msra.mxu0 0
    %6643 = vmatprep.subr.bf16.mxu0 0
    %6644 = vmatpush1.bf16.msra.mxu0 0
    %6645 = vmatprep.subr.bf16.mxu0 0
    %6646 = vmatpush1.bf16.msra.mxu0 0
    %6647 = vmatprep.subr.bf16.mxu0 %v6621
    %6648 = vmatpush1.bf16.msra.mxu0 %v6620
    %6649 = vmatprep.subr.bf16.mxu0 %v6619
    %6650 = vmatpush1.bf16.msra.mxu0 %v6618
    %6651 = vmatprep.subr.bf16.mxu0 0
    %6652 = vmatpush2.bf16.msra.mxu0 0
    %6653 = vmatprep.subr.bf16.mxu0 0
    %6654 = vmatpush2.bf16.msra.mxu0 0
    %6655 = vmatprep.subr.bf16.mxu0 0
    %6656 = vmatpush2.bf16.msra.mxu0 0
    %6657 = vmatprep.subr.bf16.mxu0 0
    %6658 = vmatpush2.bf16.msra.mxu0 0
    %6659 = vmatprep.subr.bf16.mxu0 0
    %6660 = vmatpush2.bf16.msra.mxu0 0
    %6661 = vmatprep.subr.bf16.mxu0 0
    %6662 = vmatpush2.bf16.msra.mxu0 0
    %6663 = vmatprep.subr.bf16.mxu0 0
    %6664 = vmatpush2.bf16.msra.mxu0 0
    %6665 = vmatprep.subr.bf16.mxu0 0
    %6666 = vmatpush2.bf16.msra.mxu0 0
    %6667 = vmatprep.mubr.bf16.mxu0 0
    %6668 = vmatmul.mubr.bf16.gmra.mxu0 %v6627
    %v6669 = vpop.f32.mrf.mxu0
    %v6670 = vadd.f32 %v6599, %v6669
    %v6671 = vpop.f32.mrf.mxu0
    %v6672 = vadd.f32 %v6603, %v6671
    %v6673 = vpop.f32.mrf.mxu0
    %v6674 = vadd.f32 %v6599, %v6673
    %v6675 = vpop.f32.mrf.mxu0
    %v6676 = vadd.f32 %v6603, %v6675
    %6677 = vmatprep.mubr.bf16.mxu0 0
    %6678 = vmatmul.mubr.bf16.gmra.mxu0 %v6630
    %v6679 = vpop.f32.mrf.mxu0
    %v6680 = vadd.f32 %v6599, %v6679
    %v6681 = vpop.f32.mrf.mxu0
    %v6682 = vadd.f32 %v6603, %v6681
    %v6683 = vpop.f32.mrf.mxu0
    %v6684 = vadd.f32 %v6599, %v6683
    %v6685 = vpop.f32.mrf.mxu0
    %v6686 = vadd.f32 %v6603, %v6685
    %6687 = vmatprep.mubr.bf16.mxu0 0
    %6688 = vmatmul.mubr.bf16.gmra.mxu0 %v6633
    %v6689 = vpop.f32.mrf.mxu0
    %v6690 = vadd.f32 %v6599, %v6689
    %v6691 = vpop.f32.mrf.mxu0
    %v6692 = vadd.f32 %v6603, %v6691
    %v6693 = vpop.f32.mrf.mxu0
    %v6694 = vadd.f32 %v6599, %v6693
    %v6695 = vpop.f32.mrf.mxu0
    %v6696 = vadd.f32 %v6603, %v6695
    %6697 = vdwg.mxu0
    %v6698 = vmul.f32 %v6670, 1.702
    %v6699 = vmul.f32 %v6672, 1.702
    %v6700 = vmul.f32 %v6674, 1.702
    %v6701 = vmul.f32 %v6676, 1.702
    %v6702 = vmul.f32 %v6680, 1.702
    %v6703 = vmul.f32 %v6682, 1.702
    %v6704 = vmul.f32 %v6684, 1.702
    %v6705 = vmul.f32 %v6686, 1.702
    %v6706 = vmul.f32 %v6690, 1.702
    %v6707 = vmul.f32 %v6692, 1.702
    %v6708 = vmul.f32 %v6694, 1.702
    %v6709 = vmul.f32 %v6696, 1.702
    %v6710 = vxor.u32 %v6698, 2147483648
    %v6711 = vxor.u32 %v6699, 2147483648
    %v6712 = vxor.u32 %v6700, 2147483648
    %v6713 = vxor.u32 %v6701, 2147483648
    %v6714 = vxor.u32 %v6702, 2147483648
    %v6715 = vxor.u32 %v6703, 2147483648
    %v6716 = vxor.u32 %v6704, 2147483648
    %v6717 = vxor.u32 %v6705, 2147483648
    %v6718 = vxor.u32 %v6706, 2147483648
    %v6719 = vxor.u32 %v6707, 2147483648
    %v6720 = vxor.u32 %v6708, 2147483648
    %v6721 = vxor.u32 %v6709, 2147483648
    %v6722 = vmul.f32 %v6710, 1.442695
    %v6723 = vpow.pop %v6722
    %v6724 = vmul.f32 %v6711, 1.442695
    %v6725 = vpow.pop %v6724
    %v6726 = vmul.f32 %v6712, 1.442695
    %v6727 = vpow.pop %v6726
    %v6728 = vmul.f32 %v6713, 1.442695
    %v6729 = vpow.pop %v6728
    %v6730 = vmul.f32 %v6714, 1.442695
    %v6731 = vpow.pop %v6730
    %v6732 = vmul.f32 %v6715, 1.442695
    %v6733 = vpow.pop %v6732
    %v6734 = vmul.f32 %v6716, 1.442695
    %v6735 = vpow.pop %v6734
    %v6736 = vmul.f32 %v6717, 1.442695
    %v6737 = vpow.pop %v6736
    %v6738 = vmul.f32 %v6718, 1.442695
    %v6739 = vpow.pop %v6738
    %v6740 = vmul.f32 %v6719, 1.442695
    %v6741 = vpow.pop %v6740
    %v6742 = vmul.f32 %v6720, 1.442695
    %v6743 = vpow.pop %v6742
    %v6744 = vmul.f32 %v6721, 1.442695
    %v6745 = vpow.pop %v6744
    %v6746 = vadd.f32 %v6723, 1.0
    %v6747 = vadd.f32 %v6725, 1.0
    %v6748 = vadd.f32 %v6727, 1.0
    %v6749 = vadd.f32 %v6729, 1.0
    %v6750 = vadd.f32 %v6731, 1.0
    %v6751 = vadd.f32 %v6733, 1.0
    %v6752 = vadd.f32 %v6735, 1.0
    %v6753 = vadd.f32 %v6737, 1.0
    %v6754 = vadd.f32 %v6739, 1.0
    %v6755 = vadd.f32 %v6741, 1.0
    %v6756 = vadd.f32 %v6743, 1.0
    %v6757 = vadd.f32 %v6745, 1.0
    %v6758 = vrcp.pop %v6746
    %v6759 = vmul.f32 1.0, %v6758
    %v6760 = vrcp.pop %v6747
    %v6761 = vmul.f32 1.0, %v6760
    %v6762 = vrcp.pop %v6748
    %v6763 = vmul.f32 1.0, %v6762
    %v6764 = vrcp.pop %v6749
    %v6765 = vmul.f32 1.0, %v6764
    %v6766 = vrcp.pop %v6750
    %v6767 = vmul.f32 1.0, %v6766
    %v6768 = vrcp.pop %v6751
    %v6769 = vmul.f32 1.0, %v6768
    %v6770 = vrcp.pop %v6752
    %v6771 = vmul.f32 1.0, %v6770
    %v6772 = vrcp.pop %v6753
    %v6773 = vmul.f32 1.0, %v6772
    %v6774 = vrcp.pop %v6754
    %v6775 = vmul.f32 1.0, %v6774
    %v6776 = vrcp.pop %v6755
    %v6777 = vmul.f32 1.0, %v6776
    %v6778 = vrcp.pop %v6756
    %v6779 = vmul.f32 1.0, %v6778
    %v6780 = vrcp.pop %v6757
    %v6781 = vmul.f32 1.0, %v6780
    %v6782 = vmul.f32 %v6670, %v6759
    %v6783 = vmul.f32 %v6672, %v6761
    %v6784 = vmul.f32 %v6674, %v6763
    %v6785 = vmul.f32 %v6676, %v6765
    %v6786 = vmul.f32 %v6680, %v6767
    %v6787 = vmul.f32 %v6682, %v6769
    %v6788 = vmul.f32 %v6684, %v6771
    %v6789 = vmul.f32 %v6686, %v6773
    %v6790 = vmul.f32 %v6690, %v6775
    %v6791 = vmul.f32 %v6692, %v6777
    %v6792 = vmul.f32 %v6694, %v6779
    %v6793 = vmul.f32 %v6696, %v6781
    %v6794 = vmax.f32 %v6670, 0.0
    %v6795 = vmax.f32 %v6672, 0.0
    %v6796 = vmax.f32 %v6674, 0.0
    %v6797 = vmax.f32 %v6676, 0.0
    %v6798 = vmax.f32 %v6680, 0.0
    %v6799 = vmax.f32 %v6682, 0.0
    %v6800 = vmax.f32 %v6684, 0.0
    %v6801 = vmax.f32 %v6686, 0.0
    %v6802 = vmax.f32 %v6690, 0.0
    %v6803 = vmax.f32 %v6692, 0.0
    %v6804 = vmax.f32 %v6694, 0.0
    %v6805 = vmax.f32 %v6696, 0.0
    %v6806 = vsel %vm1850, %v6782, %v6794
    %v6807 = vsel %vm1851, %v6783, %v6795
    %v6808 = vsel %vm1850, %v6784, %v6796
    %v6809 = vsel %vm1851, %v6785, %v6797
    %v6810 = vsel %vm1850, %v6786, %v6798
    %v6811 = vsel %vm1851, %v6787, %v6799
    %v6812 = vsel %vm1850, %v6788, %v6800
    %v6813 = vsel %vm1851, %v6789, %v6801
    %v6814 = vsel %vm1850, %v6790, %v6802
    %v6815 = vsel %vm1851, %v6791, %v6803
    %v6816 = vsel %vm1850, %v6792, %v6804
    %v6817 = vsel %vm1851, %v6793, %v6805
    %v6818 = vpack.c.bf16 %v6808, %v6806
    %v6819 = vpack.c.bf16 %v6809, %v6807
    %v6820 = vpack.c.bf16 %v6812, %v6810
    %v6821 = vpack.c.bf16 %v6813, %v6811
    %v6822 = vpack.c.bf16 %v6816, %v6814
    %v6823 = vpack.c.bf16 %v6817, %v6815
    %s6824 = scalar_lea.vmem %s43, 288
    %v6825 = vld [vmem:[%s6824] sm:$0xf]
    %v6826 = vld [vmem:[%s6824 + $0x4] sm:$0xf]
    %v6827 = vld [vmem:[%s6824 + $0x8] sm:$0xf]
    %v6828 = vld [vmem:[%s6824 + $0xc] sm:$0xf]
    %v6829 = vld [vmem:[%s6824 + $0x10] sm:$0xf]
    %v6830 = vld [vmem:[%s6824 + $0x14] sm:$0xf]
    %v6831 = vld [vmem:[%s6824 + $0x18] sm:$0xf]
    %v6832 = vld [vmem:[%s6824 + $0x1c] sm:$0xf]
    %v6833 = vld [vmem:[%s6824 + $0x20] sm:$0xf]
    %v6834 = vld [vmem:[%s6824 + $0x24] sm:$0xf]
    %v6835 = vld [vmem:[%s6824 + $0x28] sm:$0xf]
    %v6836 = vld [vmem:[%s6824 + $0x2c] sm:$0xf]
    %v6837 = vld [vmem:[%s6824 + $0x30] sm:$0xf]
    %v6838 = vld [vmem:[%s6824 + $0x34] sm:$0xf]
    %v6839 = vld [vmem:[%s6824 + $0x38] sm:$0xf]
    %v6840 = vld [vmem:[%s6824 + $0x3c] sm:$0xf]
    %v6841 = vld [vmem:[%s6824 + $0x40] sm:$0xf]
    %v6842 = vld [vmem:[%s6824 + $0x44] sm:$0xf]
    %v6843 = vld [vmem:[%s6824 + $0x48] sm:$0xf]
    %v6844 = vld [vmem:[%s6824 + $0x4c] sm:$0xf]
    %v6845 = vld [vmem:[%s6824 + $0x50] sm:$0xf]
    %v6846 = vld [vmem:[%s6824 + $0x54] sm:$0xf]
    %v6847 = vld [vmem:[%s6824 + $0x58] sm:$0xf]
    %v6848 = vld [vmem:[%s6824 + $0x5c] sm:$0xf]
    %v6873 = vunpack.c.l.b16 %v6825
    %v6874 = vunpack.c.l.b16 %v6826
    %v6875 = vunpack.c.l.b16 %v6827
    %v6876 = vunpack.c.l.b16 %v6828
    %v6877 = vunpack.c.l.b16 %v6829
    %v6878 = vunpack.c.l.b16 %v6830
    %v6879 = vunpack.c.l.b16 %v6831
    %v6880 = vunpack.c.l.b16 %v6832
    %v6881 = vunpack.c.l.b16 %v6833
    %v6882 = vunpack.c.l.b16 %v6834
    %v6883 = vunpack.c.l.b16 %v6835
    %v6884 = vunpack.c.l.b16 %v6836
    %v6885 = vunpack.c.l.b16 %v6837
    %v6886 = vunpack.c.l.b16 %v6838
    %v6887 = vunpack.c.l.b16 %v6839
    %v6888 = vunpack.c.l.b16 %v6840
    %v6889 = vunpack.c.l.b16 %v6841
    %v6890 = vunpack.c.l.b16 %v6842
    %v6891 = vunpack.c.l.b16 %v6843
    %v6892 = vunpack.c.l.b16 %v6844
    %v6893 = vunpack.c.l.b16 %v6845
    %v6894 = vunpack.c.l.b16 %v6846
    %v6895 = vunpack.c.l.b16 %v6847
    %v6896 = vunpack.c.l.b16 %v6848
    %v6897 = vpack.c.b16 %v6874, %v6873
    %v6898 = vpack.c.b16 %v6876, %v6875
    %v6899 = vpack.c.b16 %v6878, %v6877
    %v6900 = vpack.c.b16 %v6880, %v6879
    %v6901 = vpack.c.b16 %v6882, %v6881
    %v6902 = vpack.c.b16 %v6884, %v6883
    %v6903 = vpack.c.b16 %v6886, %v6885
    %v6904 = vpack.c.b16 %v6888, %v6887
    %v6905 = vpack.c.b16 %v6890, %v6889
    %v6906 = vpack.c.b16 %v6892, %v6891
    %v6907 = vpack.c.b16 %v6894, %v6893
    %v6908 = vpack.c.b16 %v6896, %v6895
    %v6922 = vsel %vm513, %v6819, 0
    %v6925 = vsel %vm513, %v6821, 0
    %v6928 = vsel %vm513, %v6823, 0
    %6930 = vmatprep.subr.bf16.mxu0 0
    %6931 = vmatpush1.bf16.msra.mxu0 %v6904
    %6932 = vmatprep.subr.bf16.mxu0 0
    %6933 = vmatpush1.bf16.msra.mxu0 %v6903
    %6934 = vmatprep.subr.bf16.mxu0 0
    %6935 = vmatpush1.bf16.msra.mxu0 %v6902
    %6936 = vmatprep.subr.bf16.mxu0 0
    %6937 = vmatpush1.bf16.msra.mxu0 %v6901
    %6938 = vmatprep.subr.bf16.mxu0 0
    %6939 = vmatpush1.bf16.msra.mxu0 %v6900
    %6940 = vmatprep.subr.bf16.mxu0 0
    %6941 = vmatpush1.bf16.msra.mxu0 %v6899
    %6942 = vmatprep.subr.bf16.mxu0 0
    %6943 = vmatpush1.bf16.msra.mxu0 %v6898
    %6944 = vmatprep.subr.bf16.mxu0 0
    %6945 = vmatpush1.bf16.msra.mxu0 %v6897
    %6946 = vmatprep.subr.bf16.mxu0 0
    %6947 = vmatpush2.bf16.msra.mxu0 0
    %6948 = vmatprep.subr.bf16.mxu0 0
    %6949 = vmatpush2.bf16.msra.mxu0 0
    %6950 = vmatprep.subr.bf16.mxu0 0
    %6951 = vmatpush2.bf16.msra.mxu0 0
    %6952 = vmatprep.subr.bf16.mxu0 0
    %6953 = vmatpush2.bf16.msra.mxu0 0
    %6954 = vmatprep.subr.bf16.mxu0 0
    %6955 = vmatpush2.bf16.msra.mxu0 %v6908
    %6956 = vmatprep.subr.bf16.mxu0 0
    %6957 = vmatpush2.bf16.msra.mxu0 %v6907
    %6958 = vmatprep.subr.bf16.mxu0 0
    %6959 = vmatpush2.bf16.msra.mxu0 %v6906
    %6960 = vmatprep.subr.bf16.mxu0 0
    %6961 = vmatpush2.bf16.msra.mxu0 %v6905
    %6962 = vmatprep.mubr.bf16.mxu0 %v6922
    %6963 = vmatmul.mubr.bf16.gmra.mxu0 %v6818
    %v6964 = vpop.f32.mrf.mxu0
    %v6965 = vadd.f32 0.0, %v6964
    %v6966 = vpop.f32.mrf.mxu0
    %v6967 = vpop.f32.mrf.mxu0
    %v6968 = vadd.f32 0.0, %v6967
    %v6969 = vpop.f32.mrf.mxu0
    %6970 = vmatprep.mubr.bf16.mxu0 %v6925
    %6971 = vmatmul.mubr.bf16.gmra.mxu0 %v6820
    %v6972 = vpop.f32.mrf.mxu0
    %v6973 = vadd.f32 0.0, %v6972
    %v6974 = vpop.f32.mrf.mxu0
    %v6975 = vpop.f32.mrf.mxu0
    %v6976 = vadd.f32 0.0, %v6975
    %v6977 = vpop.f32.mrf.mxu0
    %6978 = vmatprep.mubr.bf16.mxu0 %v6928
    %6979 = vmatmul.mubr.bf16.gmra.mxu0 %v6822
    %v6980 = vpop.f32.mrf.mxu0
    %v6981 = vadd.f32 0.0, %v6980
    %v6982 = vpop.f32.mrf.mxu0
    %v6983 = vpop.f32.mrf.mxu0
    %v6984 = vadd.f32 0.0, %v6983
    %v6985 = vpop.f32.mrf.mxu0
    %6986 = vdwg.mxu0
    %v6987 = vadd.f32 %v6473, %v6965
    %v6988 = vadd.f32 %v6474, %v6968
    %v6989 = vadd.f32 %v6475, %v6973
    %v6990 = vadd.f32 %v6476, %v6976
    %v6991 = vadd.f32 %v6477, %v6981
    %v6992 = vadd.f32 %v6478, %v6984
    %s6993 = scalar_lea.vmem %s45, 3
    %v6994 = vld [vmem:[%s6993] sm:$0x1]
    %v6996 = vlaneseq
    %v6997 = vshrl.u32 %v6996, 7
    %v6998 = vsub.s32 0, %v6997
    %v6999 = vrot.slane %v6994, %v6998
    %v7001 = vadd.f32 %v6987, %v6999
    %v7002 = vadd.f32 %v6988, %v6999
    %v7003 = vadd.f32 %v6989, %v6999
    %v7004 = vadd.f32 %v6990, %v6999
    %v7005 = vadd.f32 %v6991, %v6999
    %v7006 = vadd.f32 %v6992, %v6999
    %v7007 = vld [vmem:[%s59] sm:$0x3]
    %v7009 = vsel %vm174, %v7007, 0
    %7011 = vmatprep.subr.mxu0 0.0
    %7012 = vmatpush1.msra.mxu0 0.0
    %7013 = vmatprep.subr.mxu0 0.0
    %7014 = vmatpush1.msra.mxu0 0.0
    %7015 = vmatprep.subr.mxu0 0.0
    %7016 = vmatpush1.msra.mxu0 0.0
    %7017 = vmatprep.subr.mxu0 0.0
    %7018 = vmatpush1.msra.mxu0 0.0
    %7019 = vmatprep.subr.mxu0 0.0
    %7020 = vmatpush1.msra.mxu0 0.0
    %7021 = vmatprep.subr.mxu0 0.0
    %7022 = vmatpush1.msra.mxu0 0.0
    %7023 = vmatprep.subr.mxu0 0.0
    %7024 = vmatpush1.msra.mxu0 0.0
    %7025 = vmatprep.subr.mxu0 0.0
    %7026 = vmatpush1.msra.mxu0 0.0
    %7027 = vmatprep.subr.mxu0 0.0
    %7028 = vmatpush1.msra.mxu0 0.0
    %7029 = vmatprep.subr.mxu0 0.0
    %7030 = vmatpush1.msra.mxu0 0.0
    %7031 = vmatprep.subr.mxu0 0.0
    %7032 = vmatpush1.msra.mxu0 %v3730
    %7033 = vmatprep.subr.mxu0 0.0
    %7034 = vmatpush1.msra.mxu0 %v3729
    %7035 = vmatprep.subr.mxu0 0.0
    %7036 = vmatpush1.msra.mxu0 %v3728
    %7037 = vmatprep.subr.mxu0 0.0
    %7038 = vmatpush1.msra.mxu0 %v3727
    %7039 = vmatprep.subr.mxu0 0.0
    %7040 = vmatpush1.msra.mxu0 %v3726
    %7041 = vmatprep.subr.mxu0 0.0
    %7042 = vmatpush1.msra.mxu0 %v3725
    %7043 = vmatprep.subr.mxu0 0.0
    %7044 = vmatpush2.msra.mxu0 0.0
    %7045 = vmatprep.subr.mxu0 0.0
    %7046 = vmatpush2.msra.mxu0 0.0
    %7047 = vmatprep.subr.mxu0 0.0
    %7048 = vmatpush2.msra.mxu0 0.0
    %7049 = vmatprep.subr.mxu0 0.0
    %7050 = vmatpush2.msra.mxu0 0.0
    %7051 = vmatprep.subr.mxu0 0.0
    %7052 = vmatpush2.msra.mxu0 0.0
    %7053 = vmatprep.subr.mxu0 0.0
    %7054 = vmatpush2.msra.mxu0 0.0
    %7055 = vmatprep.subr.mxu0 0.0
    %7056 = vmatpush2.msra.mxu0 0.0
    %7057 = vmatprep.subr.mxu0 0.0
    %7058 = vmatpush2.msra.mxu0 0.0
    %7059 = vmatprep.subr.mxu0 0.0
    %7060 = vmatpush2.msra.mxu0 0.0
    %7061 = vmatprep.subr.mxu0 0.0
    %7062 = vmatpush2.msra.mxu0 0.0
    %7063 = vmatprep.subr.mxu0 0.0
    %7064 = vmatpush2.msra.mxu0 0.0
    %7065 = vmatprep.subr.mxu0 0.0
    %7066 = vmatpush2.msra.mxu0 0.0
    %7067 = vmatprep.subr.mxu0 0.0
    %7068 = vmatpush2.msra.mxu0 0.0
    %7069 = vmatprep.subr.mxu0 0.0
    %7070 = vmatpush2.msra.mxu0 0.0
    %7071 = vmatprep.subr.mxu0 0.0
    %7072 = vmatpush2.msra.mxu0 0.0
    %7073 = vmatprep.subr.mxu0 0.0
    %7074 = vmatpush2.msra.mxu0 0.0
    %7075 = vmatprep.mubr.f32.mxu0 0.0
    %7076 = vmatmul.mubr.f32.gmra.mxu0 %v7009
    %v7077 = vpop.f32.mrf.mxu0
    %v7078 = vadd.f32 0.0, %v7077
    %v7079 = vpop.f32.mrf.mxu0
    %7080 = vdwg.mxu0
    %v7081 = vld [vmem:[%s47] sm:$0x1]
    %v7082 = vld [vmem:[%s49] sm:$0x1]
    %vm7083 = vcmask 254976
    %v7084 = vsel %vm7083, %v7078, 0.0
    %7085 = vadd.xlane.f32.xlu0 %v7084
    %v7086 = vpop.xlane.xlu0 %7085
    %v7087 = vmul.f32 %v7086, %v349
    %v7088 = vsub.f32 %v7078, %v7087
    %v7089 = vmul.f32 %v7088, %v7088
    %v7090 = vsel %vm7083, %v7089, 0.0
    %7091 = vadd.xlane.f32.xlu0 %v7090
    %v7092 = vpop.xlane.xlu0 %7091
    %v7093 = vmul.f32 %v7092, %v349
    %v7094 = vadd.f32 %v7093, 1e-05
    %v7095 = vrsqrt.pop %v7094
    %v7096 = vmul.f32 %v7088, %v7095
    %v7098 = vlaneseq
    %v7099 = vshrl.u32 %v7098, 7
    %v7100 = vsub.s32 0, %v7099
    %v7101 = vrot.slane %v7081, %v7100
    %v7103 = vmul.f32 %v7096, %v7101
    %v7105 = vlaneseq
    %v7106 = vshrl.u32 %v7105, 7
    %v7107 = vsub.s32 0, %v7106
    %v7108 = vrot.slane %v7082, %v7107
    %v7110 = vadd.f32 %v7103, %v7108
    %v7111 = vpack.c.bf16 %v7110, %v7110
    %v7112 = vld [vmem:[%s55] sm:$0xf]
    %v7113 = vld [vmem:[%s55 + $0x4] sm:$0xf]
    %v7114 = vld [vmem:[%s55 + $0x8] sm:$0xf]
    %v7115 = vld [vmem:[%s55 + $0xc] sm:$0xf]
    %v7120 = vunpack.c.l.b16 %v7112
    %v7121 = vunpack.c.l.b16 %v7113
    %v7122 = vunpack.c.l.b16 %v7114
    %v7123 = vunpack.c.l.b16 %v7115
    %v7124 = vpack.c.b16 %v7121, %v7120
    %v7125 = vpack.c.b16 %v7123, %v7122
    %v7129 = vsel %vm253, %v7111, 0
    %7131 = vmatprep.subr.bf16.mxu0 0
    %7132 = vmatpush1.bf16.msra.mxu0 0
    %7133 = vmatprep.subr.bf16.mxu0 0
    %7134 = vmatpush1.bf16.msra.mxu0 0
    %7135 = vmatprep.subr.bf16.mxu0 0
    %7136 = vmatpush1.bf16.msra.mxu0 0
    %7137 = vmatprep.subr.bf16.mxu0 0
    %7138 = vmatpush1.bf16.msra.mxu0 0
    %7139 = vmatprep.subr.bf16.mxu0 0
    %7140 = vmatpush1.bf16.msra.mxu0 0
    %7141 = vmatprep.subr.bf16.mxu0 0
    %7142 = vmatpush1.bf16.msra.mxu0 0
    %7143 = vmatprep.subr.bf16.mxu0 0
    %7144 = vmatpush1.bf16.msra.mxu0 %v7125
    %7145 = vmatprep.subr.bf16.mxu0 0
    %7146 = vmatpush1.bf16.msra.mxu0 %v7124
    %7147 = vmatprep.subr.bf16.mxu0 0
    %7148 = vmatpush2.bf16.msra.mxu0 0
    %7149 = vmatprep.subr.bf16.mxu0 0
    %7150 = vmatpush2.bf16.msra.mxu0 0
    %7151 = vmatprep.subr.bf16.mxu0 0
    %7152 = vmatpush2.bf16.msra.mxu0 0
    %7153 = vmatprep.subr.bf16.mxu0 0
    %7154 = vmatpush2.bf16.msra.mxu0 0
    %7155 = vmatprep.subr.bf16.mxu0 0
    %7156 = vmatpush2.bf16.msra.mxu0 0
    %7157 = vmatprep.subr.bf16.mxu0 0
    %7158 = vmatpush2.bf16.msra.mxu0 0
    %7159 = vmatprep.subr.bf16.mxu0 0
    %7160 = vmatpush2.bf16.msra.mxu0 0
    %7161 = vmatprep.subr.bf16.mxu0 0
    %7162 = vmatpush2.bf16.msra.mxu0 0
    %7163 = vmatprep.mubr.bf16.mxu0 0
    %7164 = vmatmul.mubr.bf16.gmra.mxu0 %v7129
    %v7165 = vpop.f32.mrf.mxu0
    %v7166 = vadd.f32 0.0, %v7165
    %v7167 = vpop.f32.mrf.mxu0
    %v7168 = vpop.f32.mrf.mxu0
    %v7169 = vpop.f32.mrf.mxu0
    %7170 = vdwg.mxu0
    %v7171 = vld [vmem:[%s61] sm:$0x7]
    %v7173 = vsel %vm174, %v7171, 0
    %7175 = vmatprep.subr.mxu0 0.0
    %7176 = vmatpush1.msra.mxu0 0.0
    %7177 = vmatprep.subr.mxu0 0.0
    %7178 = vmatpush1.msra.mxu0 0.0
    %7179 = vmatprep.subr.mxu0 0.0
    %7180 = vmatpush1.msra.mxu0 0.0
    %7181 = vmatprep.subr.mxu0 0.0
    %7182 = vmatpush1.msra.mxu0 0.0
    %7183 = vmatprep.subr.mxu0 0.0
    %7184 = vmatpush1.msra.mxu0 0.0
    %7185 = vmatprep.subr.mxu0 0.0
    %7186 = vmatpush1.msra.mxu0 0.0
    %7187 = vmatprep.subr.mxu0 0.0
    %7188 = vmatpush1.msra.mxu0 0.0
    %7189 = vmatprep.subr.mxu0 0.0
    %7190 = vmatpush1.msra.mxu0 0.0
    %7191 = vmatprep.subr.mxu0 0.0
    %7192 = vmatpush1.msra.mxu0 0.0
    %7193 = vmatprep.subr.mxu0 0.0
    %7194 = vmatpush1.msra.mxu0 0.0
    %7195 = vmatprep.subr.mxu0 0.0
    %7196 = vmatpush1.msra.mxu0 %v7006
    %7197 = vmatprep.subr.mxu0 0.0
    %7198 = vmatpush1.msra.mxu0 %v7005
    %7199 = vmatprep.subr.mxu0 0.0
    %7200 = vmatpush1.msra.mxu0 %v7004
    %7201 = vmatprep.subr.mxu0 0.0
    %7202 = vmatpush1.msra.mxu0 %v7003
    %7203 = vmatprep.subr.mxu0 0.0
    %7204 = vmatpush1.msra.mxu0 %v7002
    %7205 = vmatprep.subr.mxu0 0.0
    %7206 = vmatpush1.msra.mxu0 %v7001
    %7207 = vmatprep.subr.mxu0 0.0
    %7208 = vmatpush2.msra.mxu0 0.0
    %7209 = vmatprep.subr.mxu0 0.0
    %7210 = vmatpush2.msra.mxu0 0.0
    %7211 = vmatprep.subr.mxu0 0.0
    %7212 = vmatpush2.msra.mxu0 0.0
    %7213 = vmatprep.subr.mxu0 0.0
    %7214 = vmatpush2.msra.mxu0 0.0
    %7215 = vmatprep.subr.mxu0 0.0
    %7216 = vmatpush2.msra.mxu0 0.0
    %7217 = vmatprep.subr.mxu0 0.0
    %7218 = vmatpush2.msra.mxu0 0.0
    %7219 = vmatprep.subr.mxu0 0.0
    %7220 = vmatpush2.msra.mxu0 0.0
    %7221 = vmatprep.subr.mxu0 0.0
    %7222 = vmatpush2.msra.mxu0 0.0
    %7223 = vmatprep.subr.mxu0 0.0
    %7224 = vmatpush2.msra.mxu0 0.0
    %7225 = vmatprep.subr.mxu0 0.0
    %7226 = vmatpush2.msra.mxu0 0.0
    %7227 = vmatprep.subr.mxu0 0.0
    %7228 = vmatpush2.msra.mxu0 0.0
    %7229 = vmatprep.subr.mxu0 0.0
    %7230 = vmatpush2.msra.mxu0 0.0
    %7231 = vmatprep.subr.mxu0 0.0
    %7232 = vmatpush2.msra.mxu0 0.0
    %7233 = vmatprep.subr.mxu0 0.0
    %7234 = vmatpush2.msra.mxu0 0.0
    %7235 = vmatprep.subr.mxu0 0.0
    %7236 = vmatpush2.msra.mxu0 0.0
    %7237 = vmatprep.subr.mxu0 0.0
    %7238 = vmatpush2.msra.mxu0 0.0
    %7239 = vmatprep.mubr.f32.mxu0 0.0
    %7240 = vmatmul.mubr.f32.gmra.mxu0 %v7173
    %v7241 = vpop.f32.mrf.mxu0
    %v7242 = vadd.f32 0.0, %v7241
    %v7243 = vpop.f32.mrf.mxu0
    %7244 = vdwg.mxu0
    %v7245 = vld [vmem:[%s51] sm:$0x1]
    %v7246 = vld [vmem:[%s53] sm:$0x1]
    %vm7247 = vcmask 256000
    %v7248 = vsel %vm7247, %v7242, 0.0
    %7249 = vadd.xlane.f32.xlu0 %v7248
    %v7250 = vpop.xlane.xlu0 %7249
    %v7251 = vmul.f32 %v7250, %v349
    %v7252 = vsub.f32 %v7242, %v7251
    %v7253 = vmul.f32 %v7252, %v7252
    %v7254 = vsel %vm7247, %v7253, 0.0
    %7255 = vadd.xlane.f32.xlu0 %v7254
    %v7256 = vpop.xlane.xlu0 %7255
    %v7257 = vmul.f32 %v7256, %v349
    %v7258 = vadd.f32 %v7257, 1e-05
    %v7259 = vrsqrt.pop %v7258
    %v7260 = vmul.f32 %v7252, %v7259
    %v7262 = vlaneseq
    %v7263 = vshrl.u32 %v7262, 7
    %v7264 = vsub.s32 0, %v7263
    %v7265 = vrot.slane %v7245, %v7264
    %v7267 = vmul.f32 %v7260, %v7265
    %v7269 = vlaneseq
    %v7270 = vshrl.u32 %v7269, 7
    %v7271 = vsub.s32 0, %v7270
    %v7272 = vrot.slane %v7246, %v7271
    %v7274 = vadd.f32 %v7267, %v7272
    %v7275 = vpack.c.bf16 %v7274, %v7274
    %v7276 = vld [vmem:[%s57] sm:$0xf]
    %v7277 = vld [vmem:[%s57 + $0x4] sm:$0xf]
    %v7278 = vld [vmem:[%s57 + $0x8] sm:$0xf]
    %v7279 = vld [vmem:[%s57 + $0xc] sm:$0xf]
    %v7284 = vunpack.c.l.b16 %v7276
    %v7285 = vunpack.c.l.b16 %v7277
    %v7286 = vunpack.c.l.b16 %v7278
    %v7287 = vunpack.c.l.b16 %v7279
    %v7288 = vpack.c.b16 %v7285, %v7284
    %v7289 = vpack.c.b16 %v7287, %v7286
    %v7293 = vsel %vm253, %v7275, 0
    %7295 = vmatprep.subr.bf16.mxu0 0
    %7296 = vmatpush1.bf16.msra.mxu0 0
    %7297 = vmatprep.subr.bf16.mxu0 0
    %7298 = vmatpush1.bf16.msra.mxu0 0
    %7299 = vmatprep.subr.bf16.mxu0 0
    %7300 = vmatpush1.bf16.msra.mxu0 0
    %7301 = vmatprep.subr.bf16.mxu0 0
    %7302 = vmatpush1.bf16.msra.mxu0 0
    %7303 = vmatprep.subr.bf16.mxu0 0
    %7304 = vmatpush1.bf16.msra.mxu0 0
    %7305 = vmatprep.subr.bf16.mxu0 0
    %7306 = vmatpush1.bf16.msra.mxu0 0
    %7307 = vmatprep.subr.bf16.mxu0 0
    %7308 = vmatpush1.bf16.msra.mxu0 %v7289
    %7309 = vmatprep.subr.bf16.mxu0 0
    %7310 = vmatpush1.bf16.msra.mxu0 %v7288
    %7311 = vmatprep.subr.bf16.mxu0 0
    %7312 = vmatpush2.bf16.msra.mxu0 0
    %7313 = vmatprep.subr.bf16.mxu0 0
    %7314 = vmatpush2.bf16.msra.mxu0 0
    %7315 = vmatprep.subr.bf16.mxu0 0
    %7316 = vmatpush2.bf16.msra.mxu0 0
    %7317 = vmatprep.subr.bf16.mxu0 0
    %7318 = vmatpush2.bf16.msra.mxu0 0
    %7319 = vmatprep.subr.bf16.mxu0 0
    %7320 = vmatpush2.bf16.msra.mxu0 0
    %7321 = vmatprep.subr.bf16.mxu0 0
    %7322 = vmatpush2.bf16.msra.mxu0 0
    %7323 = vmatprep.subr.bf16.mxu0 0
    %7324 = vmatpush2.bf16.msra.mxu0 0
    %7325 = vmatprep.subr.bf16.mxu0 0
    %7326 = vmatpush2.bf16.msra.mxu0 0
    %7327 = vmatprep.mubr.bf16.mxu0 0
    %7328 = vmatmul.mubr.bf16.gmra.mxu0 %v7293
    %v7329 = vpop.f32.mrf.mxu0
    %v7330 = vadd.f32 0.0, %v7329
    %v7331 = vpop.f32.mrf.mxu0
    %v7332 = vpop.f32.mrf.mxu0
    %v7333 = vpop.f32.mrf.mxu0
    %7334 = vdwg.mxu0
    %v7335 = vmul.f32 %v7166, %v7166
    %v7336 = vsel %vm7083, %v7335, 0.0
    %7337 = vadd.xlane.f32.xlu0 %v7336
    %v7338 = vpop.xlane.xlu0 %7337
    %v7339 = vadd.f32 %v7338, 1e-12
    %v7340 = vrsqrt.pop %v7339
    %v7341 = vmul.f32 %v7166, %v7340
    %v7342 = vmul.f32 %v7330, %v7330
    %v7343 = vsel %vm7247, %v7342, 0.0
    %7344 = vadd.xlane.f32.xlu0 %v7343
    %v7345 = vpop.xlane.xlu0 %7344
    %v7346 = vadd.f32 %v7345, 1e-12
    %v7347 = vrsqrt.pop %v7346
    %v7348 = vmul.f32 %v7330, %v7347
    %v7349 = vld [vmem:[#allocation2] sm:$0x1]
    %v7350 = vmin.f32 %v7349, 4.6051702
    %v7351 = vmul.f32 %v7350, 1.442695
    %v7352 = vpow.pop %v7351
    %v7354 = vsel %vm253, %v7341, 0
    %v7357 = vsel %vm253, %v7348, 0
    %7359 = vmatprep.subr.mxu0 0.0
    %7360 = vmatpush1.xpose.msra.mxu0 0.0
    %7361 = vmatprep.subr.mxu0 0.0
    %7362 = vmatpush1.xpose.msra.mxu0 0.0
    %7363 = vmatprep.subr.mxu0 0.0
    %7364 = vmatpush1.xpose.msra.mxu0 0.0
    %7365 = vmatprep.subr.mxu0 0.0
    %7366 = vmatpush1.xpose.msra.mxu0 0.0
    %7367 = vmatprep.subr.mxu0 0.0
    %7368 = vmatpush1.xpose.msra.mxu0 0.0
    %7369 = vmatprep.subr.mxu0 0.0
    %7370 = vmatpush1.xpose.msra.mxu0 0.0
    %7371 = vmatprep.subr.mxu0 0.0
    %7372 = vmatpush1.xpose.msra.mxu0 0.0
    %7373 = vmatprep.subr.mxu0 0.0
    %7374 = vmatpush1.xpose.msra.mxu0 0.0
    %7375 = vmatprep.subr.mxu0 0.0
    %7376 = vmatpush1.xpose.msra.mxu0 0.0
    %7377 = vmatprep.subr.mxu0 0.0
    %7378 = vmatpush1.xpose.msra.mxu0 0.0
    %7379 = vmatprep.subr.mxu0 0.0
    %7380 = vmatpush1.xpose.msra.mxu0 0.0
    %7381 = vmatprep.subr.mxu0 0.0
    %7382 = vmatpush1.xpose.msra.mxu0 0.0
    %7383 = vmatprep.subr.mxu0 0.0
    %7384 = vmatpush1.xpose.msra.mxu0 0.0
    %7385 = vmatprep.subr.mxu0 0.0
    %7386 = vmatpush1.xpose.msra.mxu0 0.0
    %7387 = vmatprep.subr.mxu0 0.0
    %7388 = vmatpush1.xpose.msra.mxu0 0.0
    %7389 = vmatprep.subr.mxu0 0.0
    %7390 = vmatpush1.xpose.msra.mxu0 %v7357
    %7391 = vmatprep.subr.mxu0 0.0
    %7392 = vmatpush2.xpose.msra.mxu0 0.0
    %7393 = vmatprep.subr.mxu0 0.0
    %7394 = vmatpush2.xpose.msra.mxu0 0.0
    %7395 = vmatprep.subr.mxu0 0.0
    %7396 = vmatpush2.xpose.msra.mxu0 0.0
    %7397 = vmatprep.subr.mxu0 0.0
    %7398 = vmatpush2.xpose.msra.mxu0 0.0
    %7399 = vmatprep.subr.mxu0 0.0
    %7400 = vmatpush2.xpose.msra.mxu0 0.0
    %7401 = vmatprep.subr.mxu0 0.0
    %7402 = vmatpush2.xpose.msra.mxu0 0.0
    %7403 = vmatprep.subr.mxu0 0.0
    %7404 = vmatpush2.xpose.msra.mxu0 0.0
    %7405 = vmatprep.subr.mxu0 0.0
    %7406 = vmatpush2.xpose.msra.mxu0 0.0
    %7407 = vmatprep.subr.mxu0 0.0
    %7408 = vmatpush2.xpose.msra.mxu0 0.0
    %7409 = vmatprep.subr.mxu0 0.0
    %7410 = vmatpush2.xpose.msra.mxu0 0.0
    %7411 = vmatprep.subr.mxu0 0.0
    %7412 = vmatpush2.xpose.msra.mxu0 0.0
    %7413 = vmatprep.subr.mxu0 0.0
    %7414 = vmatpush2.xpose.msra.mxu0 0.0
    %7415 = vmatprep.subr.mxu0 0.0
    %7416 = vmatpush2.xpose.msra.mxu0 0.0
    %7417 = vmatprep.subr.mxu0 0.0
    %7418 = vmatpush2.xpose.msra.mxu0 0.0
    %7419 = vmatprep.subr.mxu0 0.0
    %7420 = vmatpush2.xpose.msra.mxu0 0.0
    %7421 = vmatprep.subr.mxu0 0.0
    %7422 = vmatpush2.xpose.msra.mxu0 0.0
    %7423 = vmatprep.mubr.f32.mxu0 0.0
    %7424 = vmatmul.mubr.f32.gmra.mxu0 %v7354
    %v7425 = vpop.f32.mrf.mxu0
    %v7426 = vadd.f32 0.0, %v7425
    %v7427 = vpop.f32.mrf.mxu0
    %7428 = vdwg.mxu0
    %v7430 = vlaneseq
    %v7431 = vshrl.u32 %v7430, 7
    %v7432 = vsub.s32 0, %v7431
    %v7433 = vrot.slane %v7352, %v7432
    %7434 = vset.pattern.permute.xlu0 0
    %7435 = vperm.xlu0 %7434, %v7433
    %v7436 = vpop.permute.xlu0 %7435
    %v7438 = vmul.f32 %v7436, %v7426
    %vm7439 = vcmask 17408
    %v7440 = vsel %vm7439, %v7438, -inf
    %7441 = vmax.xlane.f32.xlu0 %v7440
    %v7442 = vpop.xlane.xlu0 %7441
    %v7443 = vsub.f32 %v7438, %v7442
    %v7444 = vmul.f32 %v7443, 1.442695
    %v7445 = vpow.pop %v7444
    %v7446 = vsel %vm7439, %v7445, 0.0
    %7447 = vadd.xlane.f32.xlu0 %v7446
    %v7448 = vpop.xlane.xlu0 %7447
    %v7449 = vrcp.pop %v7448
    %v7450 = vmul.f32 %v7445, %v7449
    %7451 = vst.msk [vmem:[#allocation3] sm:$0x3] %vm7439, %v7450
    %7452 = vst.msk [vmem:[#allocation5] sm:$0x3] %vm7083, %v7341
    %7453 = vst.msk [vmem:[#allocation7] sm:$0x7] %vm7247, %v7348
    // Predicated region
    $region130: #{adapter_clip_forward.1} parent=1 // pred_check
      _
    $region131: #{adapter_clip_forward.1} parent=1 // pred_check_branch
      %7455 = sbr.rel (0) target = $region133
    $region132: #{adapter_clip_forward.1} parent=1 // pred_region
      %s7457 = ssub.s32 32, 32
      %7458 = vsyncadd [#allocation4], %s7457
      %s7460 = sshll.u32 [#allocation3], 4
      %s7461 = int_to_ptr.vmem [resolvable:$true] %s7460
      %7463 = dma.vmem_to_hbm [thread:$0]  %s7461, 32, %s65, [#allocation4]
    $region133: #{adapter_clip_forward.1} parent=1 // pred_fallthru
      _
    // Predicated region
    $region134: #{adapter_clip_forward.1} parent=1 // pred_check
      _
    $region135: #{adapter_clip_forward.1} parent=1 // pred_check_branch
      %7465 = sbr.rel (0) target = $region137
    $region136: #{adapter_clip_forward.1} parent=1 // pred_region
      %s7467 = ssub.s32 32, 32
      %7468 = vsyncadd [#allocation6], %s7467
      %s7470 = sshll.u32 [#allocation5], 4
      %s7471 = int_to_ptr.vmem [resolvable:$true] %s7470
      %7473 = dma.vmem_to_hbm [thread:$0]  %s7471, 32, %s67, [#allocation6]
    $region137: #{adapter_clip_forward.1} parent=1 // pred_fallthru
      _
    // Predicated region
    $region138: #{adapter_clip_forward.1} parent=1 // pred_check
      _
    $region139: #{adapter_clip_forward.1} parent=1 // pred_check_branch
      %7475 = sbr.rel (0) target = $region141
    $region140: #{adapter_clip_forward.1} parent=1 // pred_region
      %s7477 = ssub.s32 64, 64
      %7478 = vsyncadd [#allocation6], %s7477
      %s7480 = sshll.u32 [#allocation7], 4
      %s7481 = int_to_ptr.vmem [resolvable:$true] %s7480
      %7483 = dma.vmem_to_hbm [thread:$0]  %s7481, 64, %s69, [#allocation6]
    $region141: #{adapter_clip_forward.1} parent=1 // pred_fallthru
      _
    // Predicated region
    $region142: #{adapter_clip_forward.1} parent=1 // pred_check
      _
    $region143: #{adapter_clip_forward.1} parent=1 // pred_check_branch
      %7485 = sbr.rel (0) target = $region145
    $region144: #{adapter_clip_forward.1} parent=1 // pred_region
      %7486 = dma.done [#allocation4], 32
    $region145: #{adapter_clip_forward.1} parent=1 // pred_fallthru
      _
    // Predicated region
    $region146: #{adapter_clip_forward.1} parent=1 // pred_check
      _
    $region147: #{adapter_clip_forward.1} parent=1 // pred_check_branch
      %7488 = sbr.rel (0) target = $region149
    $region148: #{adapter_clip_forward.1} parent=1 // pred_region
      %7489 = dma.done [#allocation6], 32
    $region149: #{adapter_clip_forward.1} parent=1 // pred_fallthru
      _
    // Predicated region
    $region150: #{adapter_clip_forward.1} parent=1 // pred_check
      _
    $region151: #{adapter_clip_forward.1} parent=1 // pred_check_branch
      %7491 = sbr.rel (0) target = $region153
    $region152: #{adapter_clip_forward.1} parent=1 // pred_region
      %7492 = dma.done [#allocation6], 64
    $region153: #{adapter_clip_forward.1} parent=1 // pred_fallthru
      _
    %7493 = vsyncpa [#allocation4], 1
    %7494 = vsyncpa [#allocation6], 1

</llo_original>
